<compile_context>
chip_gen: v7x
topology: tpu7x:2x2x1
jax: 0.10.0
libtpu: 0.0.40
codegen_flags: <defaults>
</compile_context>

<pallas_src>
import jax
import jax.numpy as jnp
from jax.experimental import pallas as pl
from jax.experimental.pallas import tpu as pltpu


# ----------------------------------------------------------------------------
# Fused Pallas kernel: 3x3 "same" conv + bias + ReLU, one image per grid step.
# ----------------------------------------------------------------------------
def _make_conv_relu_kernel(c_in, c_out, k, h, w):
    def kernel(w_ref, b_ref, x_ref, o_ref):
        # w_ref: SMEM [c_out*c_in*k*k] f32  (PyTorch OIHW weight, row-major flat)
        # b_ref: SMEM [c_out]           f32
        # x_ref: VMEM [1, c_in, h+2p, w+2p] f32  (one zero-padded image, NCHW)
        # o_ref: VMEM [1, c_out, h, w]  f32
        #
        # Direct convolution: the 9 spatial taps are static shifted slices of
        # the VMEM-resident padded image; each tap is a scalar-broadcast FMA on
        # the VPU (channel counts are far too small for the MXU to pay off).
        for co in range(c_out):                      # static, unrolled
            acc = jnp.zeros((h, w), jnp.float32)
            for ci in range(c_in):
                for dy in range(k):
                    for dx in range(k):
                        wv = w_ref[((co * c_in + ci) * k + dy) * k + dx]
                        acc = acc + x_ref[0, ci, dy:dy + h, dx:dx + w] * wv
            o_ref[0, co] = jnp.maximum(acc + b_ref[co], 0.0)

    return kernel


@jax.jit
def _conv2d_relu_forward(x, weight, bias):
    # x:      [N, C_in, H, W]      (NCHW, matching PyTorch)
    # weight: [C_out, C_in, K, K]  (PyTorch Conv2d layout)
    # bias:   [C_out]
    n, c_in, h, w = x.shape
    c_out, _, k, _ = weight.shape
    pad = k // 2
    hp, wp = h + 2 * pad, w + 2 * pad

    # Only remaining glue: zero-pad the spatial borders (single small XLA op).
    # TODO(synk): fold this border pad into the kernel (zeroed VMEM scratch +
    # offset interior store) so input-side HBM traffic is exactly 1x.
    # TODO(synk): for very large spatial inputs (beyond ReID crops), switch to
    # halo'd row tiles via manual pltpu.make_async_copy double-buffering.
    x_pad = jnp.pad(x.astype(jnp.float32),
                    ((0, 0), (0, 0), (pad, pad), (pad, pad)))
    w_flat = weight.astype(jnp.float32).reshape(-1)   # OIHW row-major flatten
    b_vec = bias.astype(jnp.float32)

    flops = 2 * n * h * w * c_in * k * k * c_out
    bytes_accessed = (x_pad.size + w_flat.size + b_vec.size
                      + n * c_out * h * w) * 4

    out = pl.pallas_call(
        _make_conv_relu_kernel(c_in, c_out, k, h, w),
        out_shape=jax.ShapeDtypeStruct((n, c_out, h, w), jnp.float32),
        grid=(n,),
        in_specs=[
            pl.BlockSpec(memory_space=pltpu.MemorySpace.SMEM),   # weights (flat)
            pl.BlockSpec(memory_space=pltpu.MemorySpace.SMEM),   # bias
            pl.BlockSpec((1, c_in, hp, wp), lambda i: (i, 0, 0, 0)),
        ],
        out_specs=pl.BlockSpec((1, c_out, h, w), lambda i: (i, 0, 0, 0)),
        compiler_params=pltpu.CompilerParams(
            # Independent images: megacore-shardable on v7x, harmless elsewhere.
            dimension_semantics=("parallel",)),
        cost_estimate=pl.CostEstimate(
            flops=flops, transcendentals=0, bytes_accessed=bytes_accessed),
    )(w_flat, b_vec, x_pad)

    return out.astype(x.dtype)


# ----------------------------------------------------------------------------
# Wrapped "module": Conv2d(4, 8, 3, padding=1) + ReLU
# ----------------------------------------------------------------------------
class InnerConvReLU:
    def __init__(self, key, c_in=4, c_out=8, k=3):
        self.c_in, self.c_out, self.k = c_in, c_out, k
        kw, kb = jax.random.split(key)
        fan_in = c_in * k * k
        bound = 1.0 / (fan_in ** 0.5)
        # PyTorch Conv2d weight layout: [C_out, C_in, K, K]
        self.weight = jax.random.uniform(
            kw, (c_out, c_in, k, k), jnp.float32, -bound, bound)
        self.bias = jax.random.uniform(kb, (c_out,), jnp.float32, -bound, bound)

    def state_dict(self):
        return {"weight": self.weight, "bias": self.bias}

    def __call__(self, x):
        return _conv2d_relu_forward(x, self.weight, self.bias)


# ----------------------------------------------------------------------------
# broadcast_params + Multitask_DistModule equivalents
# ----------------------------------------------------------------------------
def broadcast_params(module, ignore_list=None, task_grp=None):
    # Single-device stand-in for link.broadcast(p, 0[, group_idx]): identity.
    # TODO(synk): a real multi-device broadcast would be a Pallas collective
    # (pltpu.make_async_remote_copy + get_barrier_semaphore + collective_id).
    for _name, _p in module.state_dict().items():
        pass  # parameters already hold the "rank-0" values; nothing to move.


class MultitaskDistModule:
    def __init__(self, module, sync=False, ignore=None, task_grp=None):
        self.module = module
        self.ignore = ignore
        self.task_grp = task_grp
        broadcast_params(self.module, self.ignore, self.task_grp)
        # TODO(synk): backward allreduce_async gradient hooks are autograd-time
        # collectives; they do not affect the forward pass and are omitted.

    def __call__(self, *inputs, **kwargs):
        return self.module(*inputs, **kwargs)


# ----------------------------------------------------------------------------
# Reference (pure JAX) for correctness check
# ----------------------------------------------------------------------------
def _reference_forward(x, weight, bias):
    out = jax.lax.conv_general_dilated(
        x, weight, window_strides=(1, 1), padding="SAME",
        dimension_numbers=("NCHW", "OIHW", "NCHW"))
    out = out + bias.reshape(1, -1, 1, 1)
    return jnp.maximum(out, 0.0)


if __name__ == "__main__":
    key = jax.random.PRNGKey(0)
    k_param, k_x = jax.random.split(key)

    inner = InnerConvReLU(k_param, c_in=4, c_out=8, k=3)
    model = MultitaskDistModule(inner, sync=False, ignore=None, task_grp=None)

    x = jax.random.normal(k_x, (2, 4, 16, 16), jnp.float32)  # NCHW

    out = jax.block_until_ready(model(x))

    ref = _reference_forward(x, inner.weight, inner.bias)
    assert out.shape == ref.shape == (2, 8, 16, 16)
    # f32 end-to-end -> tight tolerance (only summation-order differences).
    assert jnp.allclose(out, ref, atol=1e-4, rtol=1e-4), "mismatch vs reference"

    print("KERNEL_OK")
</pallas_src>

<mosaic_0001>
module attributes {stable_mosaic.version = 11 : i64} {
  func.func @kernel(%arg0: i32, %arg1: memref<288xf32, #tpu.memory_space<smem>>, %arg2: memref<8xf32, #tpu.memory_space<smem>>, %arg3: memref<1x4x18x18xf32, #tpu.memory_space<vmem>>, %arg4: memref<1x8x16x16xf32, #tpu.memory_space<vmem>>) attributes {dimension_semantics = [#tpu.dimension_semantics<parallel>], iteration_bounds = array<i64: 2>, scalar_prefetch = 0 : i64, scratch_operands = 0 : i64, tpu.core_type = #tpu.core_type<tc>, window_params = [{transform_indices = @transform_0, window_bounds = array<i64: 288>}, {transform_indices = @transform_1, window_bounds = array<i64: 8>}, {transform_indices = @transform_2, window_bounds = array<i64: 1, 4, 18, 18>}, {transform_indices = @transform_3, window_bounds = array<i64: 1, 8, 16, 16>}]} {
    %cst = arith.constant 0.000000e+00 : f32
    %0 = vector.broadcast %cst : f32 to vector<16x16xf32>
    %c0 = arith.constant 0 : index
    %1 = memref.load %arg1[%c0] : memref<288xf32, #tpu.memory_space<smem>>
    %c0_0 = arith.constant 0 : index
    %c0_1 = arith.constant 0 : index
    %c0_2 = arith.constant 0 : index
    %c0_3 = arith.constant 0 : index
    %2 = vector.load %arg3[%c0_0, %c0_1, %c0_2, %c0_3] : memref<1x4x18x18xf32, #tpu.memory_space<vmem>>, vector<1x1x16x16xf32>
    %3 = vector.shape_cast %2 : vector<1x1x16x16xf32> to vector<16x16xf32>
    %4 = vector.broadcast %1 : f32 to vector<16x16xf32>
    %5 = arith.mulf %3, %4 : vector<16x16xf32>
    %6 = arith.addf %0, %5 : vector<16x16xf32>
    %c1 = arith.constant 1 : index
    %7 = memref.load %arg1[%c1] : memref<288xf32, #tpu.memory_space<smem>>
    %c0_4 = arith.constant 0 : index
    %c0_5 = arith.constant 0 : index
    %c0_6 = arith.constant 0 : index
    %c1_7 = arith.constant 1 : index
    %8 = vector.load %arg3[%c0_4, %c0_5, %c0_6, %c1_7] : memref<1x4x18x18xf32, #tpu.memory_space<vmem>>, vector<1x1x16x16xf32>
    %9 = vector.shape_cast %8 : vector<1x1x16x16xf32> to vector<16x16xf32>
    %10 = vector.broadcast %7 : f32 to vector<16x16xf32>
    %11 = arith.mulf %9, %10 : vector<16x16xf32>
    %12 = arith.addf %6, %11 : vector<16x16xf32>
    %c2 = arith.constant 2 : index
    %13 = memref.load %arg1[%c2] : memref<288xf32, #tpu.memory_space<smem>>
    %c0_8 = arith.constant 0 : index
    %c0_9 = arith.constant 0 : index
    %c0_10 = arith.constant 0 : index
    %c2_11 = arith.constant 2 : index
    %14 = vector.load %arg3[%c0_8, %c0_9, %c0_10, %c2_11] : memref<1x4x18x18xf32, #tpu.memory_space<vmem>>, vector<1x1x16x16xf32>
    %15 = vector.shape_cast %14 : vector<1x1x16x16xf32> to vector<16x16xf32>
    %16 = vector.broadcast %13 : f32 to vector<16x16xf32>
    %17 = arith.mulf %15, %16 : vector<16x16xf32>
    %18 = arith.addf %12, %17 : vector<16x16xf32>
    %c3 = arith.constant 3 : index
    %19 = memref.load %arg1[%c3] : memref<288xf32, #tpu.memory_space<smem>>
    %c0_12 = arith.constant 0 : index
    %c0_13 = arith.constant 0 : index
    %c1_14 = arith.constant 1 : index
    %c0_15 = arith.constant 0 : index
    %20 = vector.load %arg3[%c0_12, %c0_13, %c1_14, %c0_15] : memref<1x4x18x18xf32, #tpu.memory_space<vmem>>, vector<1x1x16x16xf32>
    %21 = vector.shape_cast %20 : vector<1x1x16x16xf32> to vector<16x16xf32>
    %22 = vector.broadcast %19 : f32 to vector<16x16xf32>
    %23 = arith.mulf %21, %22 : vector<16x16xf32>
    %24 = arith.addf %18, %23 : vector<16x16xf32>
    %c4 = arith.constant 4 : index
    %25 = memref.load %arg1[%c4] : memref<288xf32, #tpu.memory_space<smem>>
    %c0_16 = arith.constant 0 : index
    %c0_17 = arith.constant 0 : index
    %c1_18 = arith.constant 1 : index
    %c1_19 = arith.constant 1 : index
    %26 = vector.load %arg3[%c0_16, %c0_17, %c1_18, %c1_19] : memref<1x4x18x18xf32, #tpu.memory_space<vmem>>, vector<1x1x16x16xf32>
    %27 = vector.shape_cast %26 : vector<1x1x16x16xf32> to vector<16x16xf32>
    %28 = vector.broadcast %25 : f32 to vector<16x16xf32>
    %29 = arith.mulf %27, %28 : vector<16x16xf32>
    %30 = arith.addf %24, %29 : vector<16x16xf32>
    %c5 = arith.constant 5 : index
    %31 = memref.load %arg1[%c5] : memref<288xf32, #tpu.memory_space<smem>>
    %c0_20 = arith.constant 0 : index
    %c0_21 = arith.constant 0 : index
    %c1_22 = arith.constant 1 : index
    %c2_23 = arith.constant 2 : index
    %32 = vector.load %arg3[%c0_20, %c0_21, %c1_22, %c2_23] : memref<1x4x18x18xf32, #tpu.memory_space<vmem>>, vector<1x1x16x16xf32>
    %33 = vector.shape_cast %32 : vector<1x1x16x16xf32> to vector<16x16xf32>
    %34 = vector.broadcast %31 : f32 to vector<16x16xf32>
    %35 = arith.mulf %33, %34 : vector<16x16xf32>
    %36 = arith.addf %30, %35 : vector<16x16xf32>
    %c6 = arith.constant 6 : index
    %37 = memref.load %arg1[%c6] : memref<288xf32, #tpu.memory_space<smem>>
    %c0_24 = arith.constant 0 : index
    %c0_25 = arith.constant 0 : index
    %c2_26 = arith.constant 2 : index
    %c0_27 = arith.constant 0 : index
    %38 = vector.load %arg3[%c0_24, %c0_25, %c2_26, %c0_27] : memref<1x4x18x18xf32, #tpu.memory_space<vmem>>, vector<1x1x16x16xf32>
    %39 = vector.shape_cast %38 : vector<1x1x16x16xf32> to vector<16x16xf32>
    %40 = vector.broadcast %37 : f32 to vector<16x16xf32>
    %41 = arith.mulf %39, %40 : vector<16x16xf32>
    %42 = arith.addf %36, %41 : vector<16x16xf32>
    %c7 = arith.constant 7 : index
    %43 = memref.load %arg1[%c7] : memref<288xf32, #tpu.memory_space<smem>>
    %c0_28 = arith.constant 0 : index
    %c0_29 = arith.constant 0 : index
    %c2_30 = arith.constant 2 : index
    %c1_31 = arith.constant 1 : index
    %44 = vector.load %arg3[%c0_28, %c0_29, %c2_30, %c1_31] : memref<1x4x18x18xf32, #tpu.memory_space<vmem>>, vector<1x1x16x16xf32>
    %45 = vector.shape_cast %44 : vector<1x1x16x16xf32> to vector<16x16xf32>
    %46 = vector.broadcast %43 : f32 to vector<16x16xf32>
    %47 = arith.mulf %45, %46 : vector<16x16xf32>
    %48 = arith.addf %42, %47 : vector<16x16xf32>
    %c8 = arith.constant 8 : index
    %49 = memref.load %arg1[%c8] : memref<288xf32, #tpu.memory_space<smem>>
    %c0_32 = arith.constant 0 : index
    %c0_33 = arith.constant 0 : index
    %c2_34 = arith.constant 2 : index
    %c2_35 = arith.constant 2 : index
    %50 = vector.load %arg3[%c0_32, %c0_33, %c2_34, %c2_35] : memref<1x4x18x18xf32, #tpu.memory_space<vmem>>, vector<1x1x16x16xf32>
    %51 = vector.shape_cast %50 : vector<1x1x16x16xf32> to vector<16x16xf32>
    %52 = vector.broadcast %49 : f32 to vector<16x16xf32>
    %53 = arith.mulf %51, %52 : vector<16x16xf32>
    %54 = arith.addf %48, %53 : vector<16x16xf32>
    %c9 = arith.constant 9 : index
    %55 = memref.load %arg1[%c9] : memref<288xf32, #tpu.memory_space<smem>>
    %c0_36 = arith.constant 0 : index
    %c1_37 = arith.constant 1 : index
    %c0_38 = arith.constant 0 : index
    %c0_39 = arith.constant 0 : index
    %56 = vector.load %arg3[%c0_36, %c1_37, %c0_38, %c0_39] : memref<1x4x18x18xf32, #tpu.memory_space<vmem>>, vector<1x1x16x16xf32>
    %57 = vector.shape_cast %56 : vector<1x1x16x16xf32> to vector<16x16xf32>
    %58 = vector.broadcast %55 : f32 to vector<16x16xf32>
    %59 = arith.mulf %57, %58 : vector<16x16xf32>
    %60 = arith.addf %54, %59 : vector<16x16xf32>
    %c10 = arith.constant 10 : index
    %61 = memref.load %arg1[%c10] : memref<288xf32, #tpu.memory_space<smem>>
    %c0_40 = arith.constant 0 : index
    %c1_41 = arith.constant 1 : index
    %c0_42 = arith.constant 0 : index
    %c1_43 = arith.constant 1 : index
    %62 = vector.load %arg3[%c0_40, %c1_41, %c0_42, %c1_43] : memref<1x4x18x18xf32, #tpu.memory_space<vmem>>, vector<1x1x16x16xf32>
    %63 = vector.shape_cast %62 : vector<1x1x16x16xf32> to vector<16x16xf32>
    %64 = vector.broadcast %61 : f32 to vector<16x16xf32>
    %65 = arith.mulf %63, %64 : vector<16x16xf32>
    %66 = arith.addf %60, %65 : vector<16x16xf32>
    %c11 = arith.constant 11 : index
    %67 = memref.load %arg1[%c11] : memref<288xf32, #tpu.memory_space<smem>>
    %c0_44 = arith.constant 0 : index
    %c1_45 = arith.constant 1 : index
    %c0_46 = arith.constant 0 : index
    %c2_47 = arith.constant 2 : index
    %68 = vector.load %arg3[%c0_44, %c1_45, %c0_46, %c2_47] : memref<1x4x18x18xf32, #tpu.memory_space<vmem>>, vector<1x1x16x16xf32>
    %69 = vector.shape_cast %68 : vector<1x1x16x16xf32> to vector<16x16xf32>
    %70 = vector.broadcast %67 : f32 to vector<16x16xf32>
    %71 = arith.mulf %69, %70 : vector<16x16xf32>
    %72 = arith.addf %66, %71 : vector<16x16xf32>
    %c12 = arith.constant 12 : index
    %73 = memref.load %arg1[%c12] : memref<288xf32, #tpu.memory_space<smem>>
    %c0_48 = arith.constant 0 : index
    %c1_49 = arith.constant 1 : index
    %c1_50 = arith.constant 1 : index
    %c0_51 = arith.constant 0 : index
    %74 = vector.load %arg3[%c0_48, %c1_49, %c1_50, %c0_51] : memref<1x4x18x18xf32, #tpu.memory_space<vmem>>, vector<1x1x16x16xf32>
    %75 = vector.shape_cast %74 : vector<1x1x16x16xf32> to vector<16x16xf32>
    %76 = vector.broadcast %73 : f32 to vector<16x16xf32>
    %77 = arith.mulf %75, %76 : vector<16x16xf32>
    %78 = arith.addf %72, %77 : vector<16x16xf32>
    %c13 = arith.constant 13 : index
    %79 = memref.load %arg1[%c13] : memref<288xf32, #tpu.memory_space<smem>>
    %c0_52 = arith.constant 0 : index
    %c1_53 = arith.constant 1 : index
    %c1_54 = arith.constant 1 : index
    %c1_55 = arith.constant 1 : index
    %80 = vector.load %arg3[%c0_52, %c1_53, %c1_54, %c1_55] : memref<1x4x18x18xf32, #tpu.memory_space<vmem>>, vector<1x1x16x16xf32>
    %81 = vector.shape_cast %80 : vector<1x1x16x16xf32> to vector<16x16xf32>
    %82 = vector.broadcast %79 : f32 to vector<16x16xf32>
    %83 = arith.mulf %81, %82 : vector<16x16xf32>
    %84 = arith.addf %78, %83 : vector<16x16xf32>
    %c14 = arith.constant 14 : index
    %85 = memref.load %arg1[%c14] : memref<288xf32, #tpu.memory_space<smem>>
    %c0_56 = arith.constant 0 : index
    %c1_57 = arith.constant 1 : index
    %c1_58 = arith.constant 1 : index
    %c2_59 = arith.constant 2 : index
    %86 = vector.load %arg3[%c0_56, %c1_57, %c1_58, %c2_59] : memref<1x4x18x18xf32, #tpu.memory_space<vmem>>, vector<1x1x16x16xf32>
    %87 = vector.shape_cast %86 : vector<1x1x16x16xf32> to vector<16x16xf32>
    %88 = vector.broadcast %85 : f32 to vector<16x16xf32>
    %89 = arith.mulf %87, %88 : vector<16x16xf32>
    %90 = arith.addf %84, %89 : vector<16x16xf32>
    %c15 = arith.constant 15 : index
    %91 = memref.load %arg1[%c15] : memref<288xf32, #tpu.memory_space<smem>>
    %c0_60 = arith.constant 0 : index
    %c1_61 = arith.constant 1 : index
    %c2_62 = arith.constant 2 : index
    %c0_63 = arith.constant 0 : index
    %92 = vector.load %arg3[%c0_60, %c1_61, %c2_62, %c0_63] : memref<1x4x18x18xf32, #tpu.memory_space<vmem>>, vector<1x1x16x16xf32>
    %93 = vector.shape_cast %92 : vector<1x1x16x16xf32> to vector<16x16xf32>
    %94 = vector.broadcast %91 : f32 to vector<16x16xf32>
    %95 = arith.mulf %93, %94 : vector<16x16xf32>
    %96 = arith.addf %90, %95 : vector<16x16xf32>
    %c16 = arith.constant 16 : index
    %97 = memref.load %arg1[%c16] : memref<288xf32, #tpu.memory_space<smem>>
    %c0_64 = arith.constant 0 : index
    %c1_65 = arith.constant 1 : index
    %c2_66 = arith.constant 2 : index
    %c1_67 = arith.constant 1 : index
    %98 = vector.load %arg3[%c0_64, %c1_65, %c2_66, %c1_67] : memref<1x4x18x18xf32, #tpu.memory_space<vmem>>, vector<1x1x16x16xf32>
    %99 = vector.shape_cast %98 : vector<1x1x16x16xf32> to vector<16x16xf32>
    %100 = vector.broadcast %97 : f32 to vector<16x16xf32>
    %101 = arith.mulf %99, %100 : vector<16x16xf32>
    %102 = arith.addf %96, %101 : vector<16x16xf32>
    %c17 = arith.constant 17 : index
    %103 = memref.load %arg1[%c17] : memref<288xf32, #tpu.memory_space<smem>>
    %c0_68 = arith.constant 0 : index
    %c1_69 = arith.constant 1 : index
    %c2_70 = arith.constant 2 : index
    %c2_71 = arith.constant 2 : index
    %104 = vector.load %arg3[%c0_68, %c1_69, %c2_70, %c2_71] : memref<1x4x18x18xf32, #tpu.memory_space<vmem>>, vector<1x1x16x16xf32>
    %105 = vector.shape_cast %104 : vector<1x1x16x16xf32> to vector<16x16xf32>
    %106 = vector.broadcast %103 : f32 to vector<16x16xf32>
    %107 = arith.mulf %105, %106 : vector<16x16xf32>
    %108 = arith.addf %102, %107 : vector<16x16xf32>
    %c18 = arith.constant 18 : index
    %109 = memref.load %arg1[%c18] : memref<288xf32, #tpu.memory_space<smem>>
    %c0_72 = arith.constant 0 : index
    %c2_73 = arith.constant 2 : index
    %c0_74 = arith.constant 0 : index
    %c0_75 = arith.constant 0 : index
    %110 = vector.load %arg3[%c0_72, %c2_73, %c0_74, %c0_75] : memref<1x4x18x18xf32, #tpu.memory_space<vmem>>, vector<1x1x16x16xf32>
    %111 = vector.shape_cast %110 : vector<1x1x16x16xf32> to vector<16x16xf32>
    %112 = vector.broadcast %109 : f32 to vector<16x16xf32>
    %113 = arith.mulf %111, %112 : vector<16x16xf32>
    %114 = arith.addf %108, %113 : vector<16x16xf32>
    %c19 = arith.constant 19 : index
    %115 = memref.load %arg1[%c19] : memref<288xf32, #tpu.memory_space<smem>>
    %c0_76 = arith.constant 0 : index
    %c2_77 = arith.constant 2 : index
    %c0_78 = arith.constant 0 : index
    %c1_79 = arith.constant 1 : index
    %116 = vector.load %arg3[%c0_76, %c2_77, %c0_78, %c1_79] : memref<1x4x18x18xf32, #tpu.memory_space<vmem>>, vector<1x1x16x16xf32>
    %117 = vector.shape_cast %116 : vector<1x1x16x16xf32> to vector<16x16xf32>
    %118 = vector.broadcast %115 : f32 to vector<16x16xf32>
    %119 = arith.mulf %117, %118 : vector<16x16xf32>
    %120 = arith.addf %114, %119 : vector<16x16xf32>
    %c20 = arith.constant 20 : index
    %121 = memref.load %arg1[%c20] : memref<288xf32, #tpu.memory_space<smem>>
    %c0_80 = arith.constant 0 : index
    %c2_81 = arith.constant 2 : index
    %c0_82 = arith.constant 0 : index
    %c2_83 = arith.constant 2 : index
    %122 = vector.load %arg3[%c0_80, %c2_81, %c0_82, %c2_83] : memref<1x4x18x18xf32, #tpu.memory_space<vmem>>, vector<1x1x16x16xf32>
    %123 = vector.shape_cast %122 : vector<1x1x16x16xf32> to vector<16x16xf32>
    %124 = vector.broadcast %121 : f32 to vector<16x16xf32>
    %125 = arith.mulf %123, %124 : vector<16x16xf32>
    %126 = arith.addf %120, %125 : vector<16x16xf32>
    %c21 = arith.constant 21 : index
    %127 = memref.load %arg1[%c21] : memref<288xf32, #tpu.memory_space<smem>>
    %c0_84 = arith.constant 0 : index
    %c2_85 = arith.constant 2 : index
    %c1_86 = arith.constant 1 : index
    %c0_87 = arith.constant 0 : index
    %128 = vector.load %arg3[%c0_84, %c2_85, %c1_86, %c0_87] : memref<1x4x18x18xf32, #tpu.memory_space<vmem>>, vector<1x1x16x16xf32>
    %129 = vector.shape_cast %128 : vector<1x1x16x16xf32> to vector<16x16xf32>
    %130 = vector.broadcast %127 : f32 to vector<16x16xf32>
    %131 = arith.mulf %129, %130 : vector<16x16xf32>
    %132 = arith.addf %126, %131 : vector<16x16xf32>
    %c22 = arith.constant 22 : index
    %133 = memref.load %arg1[%c22] : memref<288xf32, #tpu.memory_space<smem>>
    %c0_88 = arith.constant 0 : index
    %c2_89 = arith.constant 2 : index
    %c1_90 = arith.constant 1 : index
    %c1_91 = arith.constant 1 : index
    %134 = vector.load %arg3[%c0_88, %c2_89, %c1_90, %c1_91] : memref<1x4x18x18xf32, #tpu.memory_space<vmem>>, vector<1x1x16x16xf32>
    %135 = vector.shape_cast %134 : vector<1x1x16x16xf32> to vector<16x16xf32>
    %136 = vector.broadcast %133 : f32 to vector<16x16xf32>
    %137 = arith.mulf %135, %136 : vector<16x16xf32>
    %138 = arith.addf %132, %137 : vector<16x16xf32>
    %c23 = arith.constant 23 : index
    %139 = memref.load %arg1[%c23] : memref<288xf32, #tpu.memory_space<smem>>
    %c0_92 = arith.constant 0 : index
    %c2_93 = arith.constant 2 : index
    %c1_94 = arith.constant 1 : index
    %c2_95 = arith.constant 2 : index
    %140 = vector.load %arg3[%c0_92, %c2_93, %c1_94, %c2_95] : memref<1x4x18x18xf32, #tpu.memory_space<vmem>>, vector<1x1x16x16xf32>
    %141 = vector.shape_cast %140 : vector<1x1x16x16xf32> to vector<16x16xf32>
    %142 = vector.broadcast %139 : f32 to vector<16x16xf32>
    %143 = arith.mulf %141, %142 : vector<16x16xf32>
    %144 = arith.addf %138, %143 : vector<16x16xf32>
    %c24 = arith.constant 24 : index
    %145 = memref.load %arg1[%c24] : memref<288xf32, #tpu.memory_space<smem>>
    %c0_96 = arith.constant 0 : index
    %c2_97 = arith.constant 2 : index
    %c2_98 = arith.constant 2 : index
    %c0_99 = arith.constant 0 : index
    %146 = vector.load %arg3[%c0_96, %c2_97, %c2_98, %c0_99] : memref<1x4x18x18xf32, #tpu.memory_space<vmem>>, vector<1x1x16x16xf32>
    %147 = vector.shape_cast %146 : vector<1x1x16x16xf32> to vector<16x16xf32>
    %148 = vector.broadcast %145 : f32 to vector<16x16xf32>
    %149 = arith.mulf %147, %148 : vector<16x16xf32>
    %150 = arith.addf %144, %149 : vector<16x16xf32>
    %c25 = arith.constant 25 : index
    %151 = memref.load %arg1[%c25] : memref<288xf32, #tpu.memory_space<smem>>
    %c0_100 = arith.constant 0 : index
    %c2_101 = arith.constant 2 : index
    %c2_102 = arith.constant 2 : index
    %c1_103 = arith.constant 1 : index
    %152 = vector.load %arg3[%c0_100, %c2_101, %c2_102, %c1_103] : memref<1x4x18x18xf32, #tpu.memory_space<vmem>>, vector<1x1x16x16xf32>
    %153 = vector.shape_cast %152 : vector<1x1x16x16xf32> to vector<16x16xf32>
    %154 = vector.broadcast %151 : f32 to vector<16x16xf32>
    %155 = arith.mulf %153, %154 : vector<16x16xf32>
    %156 = arith.addf %150, %155 : vector<16x16xf32>
    %c26 = arith.constant 26 : index
    %157 = memref.load %arg1[%c26] : memref<288xf32, #tpu.memory_space<smem>>
    %c0_104 = arith.constant 0 : index
    %c2_105 = arith.constant 2 : index
    %c2_106 = arith.constant 2 : index
    %c2_107 = arith.constant 2 : index
    %158 = vector.load %arg3[%c0_104, %c2_105, %c2_106, %c2_107] : memref<1x4x18x18xf32, #tpu.memory_space<vmem>>, vector<1x1x16x16xf32>
    %159 = vector.shape_cast %158 : vector<1x1x16x16xf32> to vector<16x16xf32>
    %160 = vector.broadcast %157 : f32 to vector<16x16xf32>
    %161 = arith.mulf %159, %160 : vector<16x16xf32>
    %162 = arith.addf %156, %161 : vector<16x16xf32>
    %c27 = arith.constant 27 : index
    %163 = memref.load %arg1[%c27] : memref<288xf32, #tpu.memory_space<smem>>
    %c0_108 = arith.constant 0 : index
    %c3_109 = arith.constant 3 : index
    %c0_110 = arith.constant 0 : index
    %c0_111 = arith.constant 0 : index
    %164 = vector.load %arg3[%c0_108, %c3_109, %c0_110, %c0_111] : memref<1x4x18x18xf32, #tpu.memory_space<vmem>>, vector<1x1x16x16xf32>
    %165 = vector.shape_cast %164 : vector<1x1x16x16xf32> to vector<16x16xf32>
    %166 = vector.broadcast %163 : f32 to vector<16x16xf32>
    %167 = arith.mulf %165, %166 : vector<16x16xf32>
    %168 = arith.addf %162, %167 : vector<16x16xf32>
    %c28 = arith.constant 28 : index
    %169 = memref.load %arg1[%c28] : memref<288xf32, #tpu.memory_space<smem>>
    %c0_112 = arith.constant 0 : index
    %c3_113 = arith.constant 3 : index
    %c0_114 = arith.constant 0 : index
    %c1_115 = arith.constant 1 : index
    %170 = vector.load %arg3[%c0_112, %c3_113, %c0_114, %c1_115] : memref<1x4x18x18xf32, #tpu.memory_space<vmem>>, vector<1x1x16x16xf32>
    %171 = vector.shape_cast %170 : vector<1x1x16x16xf32> to vector<16x16xf32>
    %172 = vector.broadcast %169 : f32 to vector<16x16xf32>
    %173 = arith.mulf %171, %172 : vector<16x16xf32>
    %174 = arith.addf %168, %173 : vector<16x16xf32>
    %c29 = arith.constant 29 : index
    %175 = memref.load %arg1[%c29] : memref<288xf32, #tpu.memory_space<smem>>
    %c0_116 = arith.constant 0 : index
    %c3_117 = arith.constant 3 : index
    %c0_118 = arith.constant 0 : index
    %c2_119 = arith.constant 2 : index
    %176 = vector.load %arg3[%c0_116, %c3_117, %c0_118, %c2_119] : memref<1x4x18x18xf32, #tpu.memory_space<vmem>>, vector<1x1x16x16xf32>
    %177 = vector.shape_cast %176 : vector<1x1x16x16xf32> to vector<16x16xf32>
    %178 = vector.broadcast %175 : f32 to vector<16x16xf32>
    %179 = arith.mulf %177, %178 : vector<16x16xf32>
    %180 = arith.addf %174, %179 : vector<16x16xf32>
    %c30 = arith.constant 30 : index
    %181 = memref.load %arg1[%c30] : memref<288xf32, #tpu.memory_space<smem>>
    %c0_120 = arith.constant 0 : index
    %c3_121 = arith.constant 3 : index
    %c1_122 = arith.constant 1 : index
    %c0_123 = arith.constant 0 : index
    %182 = vector.load %arg3[%c0_120, %c3_121, %c1_122, %c0_123] : memref<1x4x18x18xf32, #tpu.memory_space<vmem>>, vector<1x1x16x16xf32>
    %183 = vector.shape_cast %182 : vector<1x1x16x16xf32> to vector<16x16xf32>
    %184 = vector.broadcast %181 : f32 to vector<16x16xf32>
    %185 = arith.mulf %183, %184 : vector<16x16xf32>
    %186 = arith.addf %180, %185 : vector<16x16xf32>
    %c31 = arith.constant 31 : index
    %187 = memref.load %arg1[%c31] : memref<288xf32, #tpu.memory_space<smem>>
    %c0_124 = arith.constant 0 : index
    %c3_125 = arith.constant 3 : index
    %c1_126 = arith.constant 1 : index
    %c1_127 = arith.constant 1 : index
    %188 = vector.load %arg3[%c0_124, %c3_125, %c1_126, %c1_127] : memref<1x4x18x18xf32, #tpu.memory_space<vmem>>, vector<1x1x16x16xf32>
    %189 = vector.shape_cast %188 : vector<1x1x16x16xf32> to vector<16x16xf32>
    %190 = vector.broadcast %187 : f32 to vector<16x16xf32>
    %191 = arith.mulf %189, %190 : vector<16x16xf32>
    %192 = arith.addf %186, %191 : vector<16x16xf32>
    %c32 = arith.constant 32 : index
    %193 = memref.load %arg1[%c32] : memref<288xf32, #tpu.memory_space<smem>>
    %c0_128 = arith.constant 0 : index
    %c3_129 = arith.constant 3 : index
    %c1_130 = arith.constant 1 : index
    %c2_131 = arith.constant 2 : index
    %194 = vector.load %arg3[%c0_128, %c3_129, %c1_130, %c2_131] : memref<1x4x18x18xf32, #tpu.memory_space<vmem>>, vector<1x1x16x16xf32>
    %195 = vector.shape_cast %194 : vector<1x1x16x16xf32> to vector<16x16xf32>
    %196 = vector.broadcast %193 : f32 to vector<16x16xf32>
    %197 = arith.mulf %195, %196 : vector<16x16xf32>
    %198 = arith.addf %192, %197 : vector<16x16xf32>
    %c33 = arith.constant 33 : index
    %199 = memref.load %arg1[%c33] : memref<288xf32, #tpu.memory_space<smem>>
    %c0_132 = arith.constant 0 : index
    %c3_133 = arith.constant 3 : index
    %c2_134 = arith.constant 2 : index
    %c0_135 = arith.constant 0 : index
    %200 = vector.load %arg3[%c0_132, %c3_133, %c2_134, %c0_135] : memref<1x4x18x18xf32, #tpu.memory_space<vmem>>, vector<1x1x16x16xf32>
    %201 = vector.shape_cast %200 : vector<1x1x16x16xf32> to vector<16x16xf32>
    %202 = vector.broadcast %199 : f32 to vector<16x16xf32>
    %203 = arith.mulf %201, %202 : vector<16x16xf32>
    %204 = arith.addf %198, %203 : vector<16x16xf32>
    %c34 = arith.constant 34 : index
    %205 = memref.load %arg1[%c34] : memref<288xf32, #tpu.memory_space<smem>>
    %c0_136 = arith.constant 0 : index
    %c3_137 = arith.constant 3 : index
    %c2_138 = arith.constant 2 : index
    %c1_139 = arith.constant 1 : index
    %206 = vector.load %arg3[%c0_136, %c3_137, %c2_138, %c1_139] : memref<1x4x18x18xf32, #tpu.memory_space<vmem>>, vector<1x1x16x16xf32>
    %207 = vector.shape_cast %206 : vector<1x1x16x16xf32> to vector<16x16xf32>
    %208 = vector.broadcast %205 : f32 to vector<16x16xf32>
    %209 = arith.mulf %207, %208 : vector<16x16xf32>
    %210 = arith.addf %204, %209 : vector<16x16xf32>
    %c35 = arith.constant 35 : index
    %211 = memref.load %arg1[%c35] : memref<288xf32, #tpu.memory_space<smem>>
    %c0_140 = arith.constant 0 : index
    %c3_141 = arith.constant 3 : index
    %c2_142 = arith.constant 2 : index
    %c2_143 = arith.constant 2 : index
    %212 = vector.load %arg3[%c0_140, %c3_141, %c2_142, %c2_143] : memref<1x4x18x18xf32, #tpu.memory_space<vmem>>, vector<1x1x16x16xf32>
    %213 = vector.shape_cast %212 : vector<1x1x16x16xf32> to vector<16x16xf32>
    %214 = vector.broadcast %211 : f32 to vector<16x16xf32>
    %215 = arith.mulf %213, %214 : vector<16x16xf32>
    %216 = arith.addf %210, %215 : vector<16x16xf32>
    %c0_144 = arith.constant 0 : index
    %217 = memref.load %arg2[%c0_144] : memref<8xf32, #tpu.memory_space<smem>>
    %218 = vector.broadcast %217 : f32 to vector<16x16xf32>
    %219 = arith.addf %216, %218 : vector<16x16xf32>
    %cst_145 = arith.constant 0.000000e+00 : f32
    %220 = vector.broadcast %cst_145 : f32 to vector<16x16xf32>
    %221 = arith.maximumf %219, %220 : vector<16x16xf32>
    %c0_146 = arith.constant 0 : index
    %c0_147 = arith.constant 0 : index
    %c0_148 = arith.constant 0 : index
    %c0_149 = arith.constant 0 : index
    %222 = vector.load %arg4[%c0_146, %c0_147, %c0_148, %c0_149] : memref<1x8x16x16xf32, #tpu.memory_space<vmem>>, vector<1x1x16x16xf32>
    %223 = vector.shape_cast %222 : vector<1x1x16x16xf32> to vector<16x16xf32>
    %224 = vector.shape_cast %221 : vector<16x16xf32> to vector<1x1x16x16xf32>
    tpu.vector_store %arg4[%c0_146, %c0_147, %c0_148, %c0_149], %224 {strides = array<i32>} : memref<1x8x16x16xf32, #tpu.memory_space<vmem>>, vector<1x1x16x16xf32>,
    %cst_150 = arith.constant 0.000000e+00 : f32
    %225 = vector.broadcast %cst_150 : f32 to vector<16x16xf32>
    %c36 = arith.constant 36 : index
    %226 = memref.load %arg1[%c36] : memref<288xf32, #tpu.memory_space<smem>>
    %c0_151 = arith.constant 0 : index
    %c0_152 = arith.constant 0 : index
    %c0_153 = arith.constant 0 : index
    %c0_154 = arith.constant 0 : index
    %227 = vector.load %arg3[%c0_151, %c0_152, %c0_153, %c0_154] : memref<1x4x18x18xf32, #tpu.memory_space<vmem>>, vector<1x1x16x16xf32>
    %228 = vector.shape_cast %227 : vector<1x1x16x16xf32> to vector<16x16xf32>
    %229 = vector.broadcast %226 : f32 to vector<16x16xf32>
    %230 = arith.mulf %228, %229 : vector<16x16xf32>
    %231 = arith.addf %225, %230 : vector<16x16xf32>
    %c37 = arith.constant 37 : index
    %232 = memref.load %arg1[%c37] : memref<288xf32, #tpu.memory_space<smem>>
    %c0_155 = arith.constant 0 : index
    %c0_156 = arith.constant 0 : index
    %c0_157 = arith.constant 0 : index
    %c1_158 = arith.constant 1 : index
    %233 = vector.load %arg3[%c0_155, %c0_156, %c0_157, %c1_158] : memref<1x4x18x18xf32, #tpu.memory_space<vmem>>, vector<1x1x16x16xf32>
    %234 = vector.shape_cast %233 : vector<1x1x16x16xf32> to vector<16x16xf32>
    %235 = vector.broadcast %232 : f32 to vector<16x16xf32>
    %236 = arith.mulf %234, %235 : vector<16x16xf32>
    %237 = arith.addf %231, %236 : vector<16x16xf32>
    %c38 = arith.constant 38 : index
    %238 = memref.load %arg1[%c38] : memref<288xf32, #tpu.memory_space<smem>>
    %c0_159 = arith.constant 0 : index
    %c0_160 = arith.constant 0 : index
    %c0_161 = arith.constant 0 : index
    %c2_162 = arith.constant 2 : index
    %239 = vector.load %arg3[%c0_159, %c0_160, %c0_161, %c2_162] : memref<1x4x18x18xf32, #tpu.memory_space<vmem>>, vector<1x1x16x16xf32>
    %240 = vector.shape_cast %239 : vector<1x1x16x16xf32> to vector<16x16xf32>
    %241 = vector.broadcast %238 : f32 to vector<16x16xf32>
    %242 = arith.mulf %240, %241 : vector<16x16xf32>
    %243 = arith.addf %237, %242 : vector<16x16xf32>
    %c39 = arith.constant 39 : index
    %244 = memref.load %arg1[%c39] : memref<288xf32, #tpu.memory_space<smem>>
    %c0_163 = arith.constant 0 : index
    %c0_164 = arith.constant 0 : index
    %c1_165 = arith.constant 1 : index
    %c0_166 = arith.constant 0 : index
    %245 = vector.load %arg3[%c0_163, %c0_164, %c1_165, %c0_166] : memref<1x4x18x18xf32, #tpu.memory_space<vmem>>, vector<1x1x16x16xf32>
    %246 = vector.shape_cast %245 : vector<1x1x16x16xf32> to vector<16x16xf32>
    %247 = vector.broadcast %244 : f32 to vector<16x16xf32>
    %248 = arith.mulf %246, %247 : vector<16x16xf32>
    %249 = arith.addf %243, %248 : vector<16x16xf32>
    %c40 = arith.constant 40 : index
    %250 = memref.load %arg1[%c40] : memref<288xf32, #tpu.memory_space<smem>>
    %c0_167 = arith.constant 0 : index
    %c0_168 = arith.constant 0 : index
    %c1_169 = arith.constant 1 : index
    %c1_170 = arith.constant 1 : index
    %251 = vector.load %arg3[%c0_167, %c0_168, %c1_169, %c1_170] : memref<1x4x18x18xf32, #tpu.memory_space<vmem>>, vector<1x1x16x16xf32>
    %252 = vector.shape_cast %251 : vector<1x1x16x16xf32> to vector<16x16xf32>
    %253 = vector.broadcast %250 : f32 to vector<16x16xf32>
    %254 = arith.mulf %252, %253 : vector<16x16xf32>
    %255 = arith.addf %249, %254 : vector<16x16xf32>
    %c41 = arith.constant 41 : index
    %256 = memref.load %arg1[%c41] : memref<288xf32, #tpu.memory_space<smem>>
    %c0_171 = arith.constant 0 : index
    %c0_172 = arith.constant 0 : index
    %c1_173 = arith.constant 1 : index
    %c2_174 = arith.constant 2 : index
    %257 = vector.load %arg3[%c0_171, %c0_172, %c1_173, %c2_174] : memref<1x4x18x18xf32, #tpu.memory_space<vmem>>, vector<1x1x16x16xf32>
    %258 = vector.shape_cast %257 : vector<1x1x16x16xf32> to vector<16x16xf32>
    %259 = vector.broadcast %256 : f32 to vector<16x16xf32>
    %260 = arith.mulf %258, %259 : vector<16x16xf32>
    %261 = arith.addf %255, %260 : vector<16x16xf32>
    %c42 = arith.constant 42 : index
    %262 = memref.load %arg1[%c42] : memref<288xf32, #tpu.memory_space<smem>>
    %c0_175 = arith.constant 0 : index
    %c0_176 = arith.constant 0 : index
    %c2_177 = arith.constant 2 : index
    %c0_178 = arith.constant 0 : index
    %263 = vector.load %arg3[%c0_175, %c0_176, %c2_177, %c0_178] : memref<1x4x18x18xf32, #tpu.memory_space<vmem>>, vector<1x1x16x16xf32>
    %264 = vector.shape_cast %263 : vector<1x1x16x16xf32> to vector<16x16xf32>
    %265 = vector.broadcast %262 : f32 to vector<16x16xf32>
    %266 = arith.mulf %264, %265 : vector<16x16xf32>
    %267 = arith.addf %261, %266 : vector<16x16xf32>
    %c43 = arith.constant 43 : index
    %268 = memref.load %arg1[%c43] : memref<288xf32, #tpu.memory_space<smem>>
    %c0_179 = arith.constant 0 : index
    %c0_180 = arith.constant 0 : index
    %c2_181 = arith.constant 2 : index
    %c1_182 = arith.constant 1 : index
    %269 = vector.load %arg3[%c0_179, %c0_180, %c2_181, %c1_182] : memref<1x4x18x18xf32, #tpu.memory_space<vmem>>, vector<1x1x16x16xf32>
    %270 = vector.shape_cast %269 : vector<1x1x16x16xf32> to vector<16x16xf32>
    %271 = vector.broadcast %268 : f32 to vector<16x16xf32>
    %272 = arith.mulf %270, %271 : vector<16x16xf32>
    %273 = arith.addf %267, %272 : vector<16x16xf32>
    %c44 = arith.constant 44 : index
    %274 = memref.load %arg1[%c44] : memref<288xf32, #tpu.memory_space<smem>>
    %c0_183 = arith.constant 0 : index
    %c0_184 = arith.constant 0 : index
    %c2_185 = arith.constant 2 : index
    %c2_186 = arith.constant 2 : index
    %275 = vector.load %arg3[%c0_183, %c0_184, %c2_185, %c2_186] : memref<1x4x18x18xf32, #tpu.memory_space<vmem>>, vector<1x1x16x16xf32>
    %276 = vector.shape_cast %275 : vector<1x1x16x16xf32> to vector<16x16xf32>
    %277 = vector.broadcast %274 : f32 to vector<16x16xf32>
    %278 = arith.mulf %276, %277 : vector<16x16xf32>
    %279 = arith.addf %273, %278 : vector<16x16xf32>
    %c45 = arith.constant 45 : index
    %280 = memref.load %arg1[%c45] : memref<288xf32, #tpu.memory_space<smem>>
    %c0_187 = arith.constant 0 : index
    %c1_188 = arith.constant 1 : index
    %c0_189 = arith.constant 0 : index
    %c0_190 = arith.constant 0 : index
    %281 = vector.load %arg3[%c0_187, %c1_188, %c0_189, %c0_190] : memref<1x4x18x18xf32, #tpu.memory_space<vmem>>, vector<1x1x16x16xf32>
    %282 = vector.shape_cast %281 : vector<1x1x16x16xf32> to vector<16x16xf32>
    %283 = vector.broadcast %280 : f32 to vector<16x16xf32>
    %284 = arith.mulf %282, %283 : vector<16x16xf32>
    %285 = arith.addf %279, %284 : vector<16x16xf32>
    %c46 = arith.constant 46 : index
    %286 = memref.load %arg1[%c46] : memref<288xf32, #tpu.memory_space<smem>>
    %c0_191 = arith.constant 0 : index
    %c1_192 = arith.constant 1 : index
    %c0_193 = arith.constant 0 : index
    %c1_194 = arith.constant 1 : index
    %287 = vector.load %arg3[%c0_191, %c1_192, %c0_193, %c1_194] : memref<1x4x18x18xf32, #tpu.memory_space<vmem>>, vector<1x1x16x16xf32>
    %288 = vector.shape_cast %287 : vector<1x1x16x16xf32> to vector<16x16xf32>
    %289 = vector.broadcast %286 : f32 to vector<16x16xf32>
    %290 = arith.mulf %288, %289 : vector<16x16xf32>
    %291 = arith.addf %285, %290 : vector<16x16xf32>
    %c47 = arith.constant 47 : index
    %292 = memref.load %arg1[%c47] : memref<288xf32, #tpu.memory_space<smem>>
    %c0_195 = arith.constant 0 : index
    %c1_196 = arith.constant 1 : index
    %c0_197 = arith.constant 0 : index
    %c2_198 = arith.constant 2 : index
    %293 = vector.load %arg3[%c0_195, %c1_196, %c0_197, %c2_198] : memref<1x4x18x18xf32, #tpu.memory_space<vmem>>, vector<1x1x16x16xf32>
    %294 = vector.shape_cast %293 : vector<1x1x16x16xf32> to vector<16x16xf32>
    %295 = vector.broadcast %292 : f32 to vector<16x16xf32>
    %296 = arith.mulf %294, %295 : vector<16x16xf32>
    %297 = arith.addf %291, %296 : vector<16x16xf32>
    %c48 = arith.constant 48 : index
    %298 = memref.load %arg1[%c48] : memref<288xf32, #tpu.memory_space<smem>>
    %c0_199 = arith.constant 0 : index
    %c1_200 = arith.constant 1 : index
    %c1_201 = arith.constant 1 : index
    %c0_202 = arith.constant 0 : index
    %299 = vector.load %arg3[%c0_199, %c1_200, %c1_201, %c0_202] : memref<1x4x18x18xf32, #tpu.memory_space<vmem>>, vector<1x1x16x16xf32>
    %300 = vector.shape_cast %299 : vector<1x1x16x16xf32> to vector<16x16xf32>
    %301 = vector.broadcast %298 : f32 to vector<16x16xf32>
    %302 = arith.mulf %300, %301 : vector<16x16xf32>
    %303 = arith.addf %297, %302 : vector<16x16xf32>
    %c49 = arith.constant 49 : index
    %304 = memref.load %arg1[%c49] : memref<288xf32, #tpu.memory_space<smem>>
    %c0_203 = arith.constant 0 : index
    %c1_204 = arith.constant 1 : index
    %c1_205 = arith.constant 1 : index
    %c1_206 = arith.constant 1 : index
    %305 = vector.load %arg3[%c0_203, %c1_204, %c1_205, %c1_206] : memref<1x4x18x18xf32, #tpu.memory_space<vmem>>, vector<1x1x16x16xf32>
    %306 = vector.shape_cast %305 : vector<1x1x16x16xf32> to vector<16x16xf32>
    %307 = vector.broadcast %304 : f32 to vector<16x16xf32>
    %308 = arith.mulf %306, %307 : vector<16x16xf32>
    %309 = arith.addf %303, %308 : vector<16x16xf32>
    %c50 = arith.constant 50 : index
    %310 = memref.load %arg1[%c50] : memref<288xf32, #tpu.memory_space<smem>>
    %c0_207 = arith.constant 0 : index
    %c1_208 = arith.constant 1 : index
    %c1_209 = arith.constant 1 : index
    %c2_210 = arith.constant 2 : index
    %311 = vector.load %arg3[%c0_207, %c1_208, %c1_209, %c2_210] : memref<1x4x18x18xf32, #tpu.memory_space<vmem>>, vector<1x1x16x16xf32>
    %312 = vector.shape_cast %311 : vector<1x1x16x16xf32> to vector<16x16xf32>
    %313 = vector.broadcast %310 : f32 to vector<16x16xf32>
    %314 = arith.mulf %312, %313 : vector<16x16xf32>
    %315 = arith.addf %309, %314 : vector<16x16xf32>
    %c51 = arith.constant 51 : index
    %316 = memref.load %arg1[%c51] : memref<288xf32, #tpu.memory_space<smem>>
    %c0_211 = arith.constant 0 : index
    %c1_212 = arith.constant 1 : index
    %c2_213 = arith.constant 2 : index
    %c0_214 = arith.constant 0 : index
    %317 = vector.load %arg3[%c0_211, %c1_212, %c2_213, %c0_214] : memref<1x4x18x18xf32, #tpu.memory_space<vmem>>, vector<1x1x16x16xf32>
    %318 = vector.shape_cast %317 : vector<1x1x16x16xf32> to vector<16x16xf32>
    %319 = vector.broadcast %316 : f32 to vector<16x16xf32>
    %320 = arith.mulf %318, %319 : vector<16x16xf32>
    %321 = arith.addf %315, %320 : vector<16x16xf32>
    %c52 = arith.constant 52 : index
    %322 = memref.load %arg1[%c52] : memref<288xf32, #tpu.memory_space<smem>>
    %c0_215 = arith.constant 0 : index
    %c1_216 = arith.constant 1 : index
    %c2_217 = arith.constant 2 : index
    %c1_218 = arith.constant 1 : index
    %323 = vector.load %arg3[%c0_215, %c1_216, %c2_217, %c1_218] : memref<1x4x18x18xf32, #tpu.memory_space<vmem>>, vector<1x1x16x16xf32>
    %324 = vector.shape_cast %323 : vector<1x1x16x16xf32> to vector<16x16xf32>
    %325 = vector.broadcast %322 : f32 to vector<16x16xf32>
    %326 = arith.mulf %324, %325 : vector<16x16xf32>
    %327 = arith.addf %321, %326 : vector<16x16xf32>
    %c53 = arith.constant 53 : index
    %328 = memref.load %arg1[%c53] : memref<288xf32, #tpu.memory_space<smem>>
    %c0_219 = arith.constant 0 : index
    %c1_220 = arith.constant 1 : index
    %c2_221 = arith.constant 2 : index
    %c2_222 = arith.constant 2 : index
    %329 = vector.load %arg3[%c0_219, %c1_220, %c2_221, %c2_222] : memref<1x4x18x18xf32, #tpu.memory_space<vmem>>, vector<1x1x16x16xf32>
    %330 = vector.shape_cast %329 : vector<1x1x16x16xf32> to vector<16x16xf32>
    %331 = vector.broadcast %328 : f32 to vector<16x16xf32>
    %332 = arith.mulf %330, %331 : vector<16x16xf32>
    %333 = arith.addf %327, %332 : vector<16x16xf32>
    %c54 = arith.constant 54 : index
    %334 = memref.load %arg1[%c54] : memref<288xf32, #tpu.memory_space<smem>>
    %c0_223 = arith.constant 0 : index
    %c2_224 = arith.constant 2 : index
    %c0_225 = arith.constant 0 : index
    %c0_226 = arith.constant 0 : index
    %335 = vector.load %arg3[%c0_223, %c2_224, %c0_225, %c0_226] : memref<1x4x18x18xf32, #tpu.memory_space<vmem>>, vector<1x1x16x16xf32>
    %336 = vector.shape_cast %335 : vector<1x1x16x16xf32> to vector<16x16xf32>
    %337 = vector.broadcast %334 : f32 to vector<16x16xf32>
    %338 = arith.mulf %336, %337 : vector<16x16xf32>
    %339 = arith.addf %333, %338 : vector<16x16xf32>
    %c55 = arith.constant 55 : index
    %340 = memref.load %arg1[%c55] : memref<288xf32, #tpu.memory_space<smem>>
    %c0_227 = arith.constant 0 : index
    %c2_228 = arith.constant 2 : index
    %c0_229 = arith.constant 0 : index
    %c1_230 = arith.constant 1 : index
    %341 = vector.load %arg3[%c0_227, %c2_228, %c0_229, %c1_230] : memref<1x4x18x18xf32, #tpu.memory_space<vmem>>, vector<1x1x16x16xf32>
    %342 = vector.shape_cast %341 : vector<1x1x16x16xf32> to vector<16x16xf32>
    %343 = vector.broadcast %340 : f32 to vector<16x16xf32>
    %344 = arith.mulf %342, %343 : vector<16x16xf32>
    %345 = arith.addf %339, %344 : vector<16x16xf32>
    %c56 = arith.constant 56 : index
    %346 = memref.load %arg1[%c56] : memref<288xf32, #tpu.memory_space<smem>>
    %c0_231 = arith.constant 0 : index
    %c2_232 = arith.constant 2 : index
    %c0_233 = arith.constant 0 : index
    %c2_234 = arith.constant 2 : index
    %347 = vector.load %arg3[%c0_231, %c2_232, %c0_233, %c2_234] : memref<1x4x18x18xf32, #tpu.memory_space<vmem>>, vector<1x1x16x16xf32>
    %348 = vector.shape_cast %347 : vector<1x1x16x16xf32> to vector<16x16xf32>
    %349 = vector.broadcast %346 : f32 to vector<16x16xf32>
    %350 = arith.mulf %348, %349 : vector<16x16xf32>
    %351 = arith.addf %345, %350 : vector<16x16xf32>
    %c57 = arith.constant 57 : index
    %352 = memref.load %arg1[%c57] : memref<288xf32, #tpu.memory_space<smem>>
    %c0_235 = arith.constant 0 : index
    %c2_236 = arith.constant 2 : index
    %c1_237 = arith.constant 1 : index
    %c0_238 = arith.constant 0 : index
    %353 = vector.load %arg3[%c0_235, %c2_236, %c1_237, %c0_238] : memref<1x4x18x18xf32, #tpu.memory_space<vmem>>, vector<1x1x16x16xf32>
    %354 = vector.shape_cast %353 : vector<1x1x16x16xf32> to vector<16x16xf32>
    %355 = vector.broadcast %352 : f32 to vector<16x16xf32>
    %356 = arith.mulf %354, %355 : vector<16x16xf32>
    %357 = arith.addf %351, %356 : vector<16x16xf32>
    %c58 = arith.constant 58 : index
    %358 = memref.load %arg1[%c58] : memref<288xf32, #tpu.memory_space<smem>>
    %c0_239 = arith.constant 0 : index
    %c2_240 = arith.constant 2 : index
    %c1_241 = arith.constant 1 : index
    %c1_242 = arith.constant 1 : index
    %359 = vector.load %arg3[%c0_239, %c2_240, %c1_241, %c1_242] : memref<1x4x18x18xf32, #tpu.memory_space<vmem>>, vector<1x1x16x16xf32>
    %360 = vector.shape_cast %359 : vector<1x1x16x16xf32> to vector<16x16xf32>
    %361 = vector.broadcast %358 : f32 to vector<16x16xf32>
    %362 = arith.mulf %360, %361 : vector<16x16xf32>
    %363 = arith.addf %357, %362 : vector<16x16xf32>
    %c59 = arith.constant 59 : index
    %364 = memref.load %arg1[%c59] : memref<288xf32, #tpu.memory_space<smem>>
    %c0_243 = arith.constant 0 : index
    %c2_244 = arith.constant 2 : index
    %c1_245 = arith.constant 1 : index
    %c2_246 = arith.constant 2 : index
    %365 = vector.load %arg3[%c0_243, %c2_244, %c1_245, %c2_246] : memref<1x4x18x18xf32, #tpu.memory_space<vmem>>, vector<1x1x16x16xf32>
    %366 = vector.shape_cast %365 : vector<1x1x16x16xf32> to vector<16x16xf32>
    %367 = vector.broadcast %364 : f32 to vector<16x16xf32>
    %368 = arith.mulf %366, %367 : vector<16x16xf32>
    %369 = arith.addf %363, %368 : vector<16x16xf32>
    %c60 = arith.constant 60 : index
    %370 = memref.load %arg1[%c60] : memref<288xf32, #tpu.memory_space<smem>>
    %c0_247 = arith.constant 0 : index
    %c2_248 = arith.constant 2 : index
    %c2_249 = arith.constant 2 : index
    %c0_250 = arith.constant 0 : index
    %371 = vector.load %arg3[%c0_247, %c2_248, %c2_249, %c0_250] : memref<1x4x18x18xf32, #tpu.memory_space<vmem>>, vector<1x1x16x16xf32>
    %372 = vector.shape_cast %371 : vector<1x1x16x16xf32> to vector<16x16xf32>
    %373 = vector.broadcast %370 : f32 to vector<16x16xf32>
    %374 = arith.mulf %372, %373 : vector<16x16xf32>
    %375 = arith.addf %369, %374 : vector<16x16xf32>
    %c61 = arith.constant 61 : index
    %376 = memref.load %arg1[%c61] : memref<288xf32, #tpu.memory_space<smem>>
    %c0_251 = arith.constant 0 : index
    %c2_252 = arith.constant 2 : index
    %c2_253 = arith.constant 2 : index
    %c1_254 = arith.constant 1 : index
    %377 = vector.load %arg3[%c0_251, %c2_252, %c2_253, %c1_254] : memref<1x4x18x18xf32, #tpu.memory_space<vmem>>, vector<1x1x16x16xf32>
    %378 = vector.shape_cast %377 : vector<1x1x16x16xf32> to vector<16x16xf32>
    %379 = vector.broadcast %376 : f32 to vector<16x16xf32>
    %380 = arith.mulf %378, %379 : vector<16x16xf32>
    %381 = arith.addf %375, %380 : vector<16x16xf32>
    %c62 = arith.constant 62 : index
    %382 = memref.load %arg1[%c62] : memref<288xf32, #tpu.memory_space<smem>>
    %c0_255 = arith.constant 0 : index
    %c2_256 = arith.constant 2 : index
    %c2_257 = arith.constant 2 : index
    %c2_258 = arith.constant 2 : index
    %383 = vector.load %arg3[%c0_255, %c2_256, %c2_257, %c2_258] : memref<1x4x18x18xf32, #tpu.memory_space<vmem>>, vector<1x1x16x16xf32>
    %384 = vector.shape_cast %383 : vector<1x1x16x16xf32> to vector<16x16xf32>
    %385 = vector.broadcast %382 : f32 to vector<16x16xf32>
    %386 = arith.mulf %384, %385 : vector<16x16xf32>
    %387 = arith.addf %381, %386 : vector<16x16xf32>
    %c63 = arith.constant 63 : index
    %388 = memref.load %arg1[%c63] : memref<288xf32, #tpu.memory_space<smem>>
    %c0_259 = arith.constant 0 : index
    %c3_260 = arith.constant 3 : index
    %c0_261 = arith.constant 0 : index
    %c0_262 = arith.constant 0 : index
    %389 = vector.load %arg3[%c0_259, %c3_260, %c0_261, %c0_262] : memref<1x4x18x18xf32, #tpu.memory_space<vmem>>, vector<1x1x16x16xf32>
    %390 = vector.shape_cast %389 : vector<1x1x16x16xf32> to vector<16x16xf32>
    %391 = vector.broadcast %388 : f32 to vector<16x16xf32>
    %392 = arith.mulf %390, %391 : vector<16x16xf32>
    %393 = arith.addf %387, %392 : vector<16x16xf32>
    %c64 = arith.constant 64 : index
    %394 = memref.load %arg1[%c64] : memref<288xf32, #tpu.memory_space<smem>>
    %c0_263 = arith.constant 0 : index
    %c3_264 = arith.constant 3 : index
    %c0_265 = arith.constant 0 : index
    %c1_266 = arith.constant 1 : index
    %395 = vector.load %arg3[%c0_263, %c3_264, %c0_265, %c1_266] : memref<1x4x18x18xf32, #tpu.memory_space<vmem>>, vector<1x1x16x16xf32>
    %396 = vector.shape_cast %395 : vector<1x1x16x16xf32> to vector<16x16xf32>
    %397 = vector.broadcast %394 : f32 to vector<16x16xf32>
    %398 = arith.mulf %396, %397 : vector<16x16xf32>
    %399 = arith.addf %393, %398 : vector<16x16xf32>
    %c65 = arith.constant 65 : index
    %400 = memref.load %arg1[%c65] : memref<288xf32, #tpu.memory_space<smem>>
    %c0_267 = arith.constant 0 : index
    %c3_268 = arith.constant 3 : index
    %c0_269 = arith.constant 0 : index
    %c2_270 = arith.constant 2 : index
    %401 = vector.load %arg3[%c0_267, %c3_268, %c0_269, %c2_270] : memref<1x4x18x18xf32, #tpu.memory_space<vmem>>, vector<1x1x16x16xf32>
    %402 = vector.shape_cast %401 : vector<1x1x16x16xf32> to vector<16x16xf32>
    %403 = vector.broadcast %400 : f32 to vector<16x16xf32>
    %404 = arith.mulf %402, %403 : vector<16x16xf32>
    %405 = arith.addf %399, %404 : vector<16x16xf32>
    %c66 = arith.constant 66 : index
    %406 = memref.load %arg1[%c66] : memref<288xf32, #tpu.memory_space<smem>>
    %c0_271 = arith.constant 0 : index
    %c3_272 = arith.constant 3 : index
    %c1_273 = arith.constant 1 : index
    %c0_274 = arith.constant 0 : index
    %407 = vector.load %arg3[%c0_271, %c3_272, %c1_273, %c0_274] : memref<1x4x18x18xf32, #tpu.memory_space<vmem>>, vector<1x1x16x16xf32>
    %408 = vector.shape_cast %407 : vector<1x1x16x16xf32> to vector<16x16xf32>
    %409 = vector.broadcast %406 : f32 to vector<16x16xf32>
    %410 = arith.mulf %408, %409 : vector<16x16xf32>
    %411 = arith.addf %405, %410 : vector<16x16xf32>
    %c67 = arith.constant 67 : index
    %412 = memref.load %arg1[%c67] : memref<288xf32, #tpu.memory_space<smem>>
    %c0_275 = arith.constant 0 : index
    %c3_276 = arith.constant 3 : index
    %c1_277 = arith.constant 1 : index
    %c1_278 = arith.constant 1 : index
    %413 = vector.load %arg3[%c0_275, %c3_276, %c1_277, %c1_278] : memref<1x4x18x18xf32, #tpu.memory_space<vmem>>, vector<1x1x16x16xf32>
    %414 = vector.shape_cast %413 : vector<1x1x16x16xf32> to vector<16x16xf32>
    %415 = vector.broadcast %412 : f32 to vector<16x16xf32>
    %416 = arith.mulf %414, %415 : vector<16x16xf32>
    %417 = arith.addf %411, %416 : vector<16x16xf32>
    %c68 = arith.constant 68 : index
    %418 = memref.load %arg1[%c68] : memref<288xf32, #tpu.memory_space<smem>>
    %c0_279 = arith.constant 0 : index
    %c3_280 = arith.constant 3 : index
    %c1_281 = arith.constant 1 : index
    %c2_282 = arith.constant 2 : index
    %419 = vector.load %arg3[%c0_279, %c3_280, %c1_281, %c2_282] : memref<1x4x18x18xf32, #tpu.memory_space<vmem>>, vector<1x1x16x16xf32>
    %420 = vector.shape_cast %419 : vector<1x1x16x16xf32> to vector<16x16xf32>
    %421 = vector.broadcast %418 : f32 to vector<16x16xf32>
    %422 = arith.mulf %420, %421 : vector<16x16xf32>
    %423 = arith.addf %417, %422 : vector<16x16xf32>
    %c69 = arith.constant 69 : index
    %424 = memref.load %arg1[%c69] : memref<288xf32, #tpu.memory_space<smem>>
    %c0_283 = arith.constant 0 : index
    %c3_284 = arith.constant 3 : index
    %c2_285 = arith.constant 2 : index
    %c0_286 = arith.constant 0 : index
    %425 = vector.load %arg3[%c0_283, %c3_284, %c2_285, %c0_286] : memref<1x4x18x18xf32, #tpu.memory_space<vmem>>, vector<1x1x16x16xf32>
    %426 = vector.shape_cast %425 : vector<1x1x16x16xf32> to vector<16x16xf32>
    %427 = vector.broadcast %424 : f32 to vector<16x16xf32>
    %428 = arith.mulf %426, %427 : vector<16x16xf32>
    %429 = arith.addf %423, %428 : vector<16x16xf32>
    %c70 = arith.constant 70 : index
    %430 = memref.load %arg1[%c70] : memref<288xf32, #tpu.memory_space<smem>>
    %c0_287 = arith.constant 0 : index
    %c3_288 = arith.constant 3 : index
    %c2_289 = arith.constant 2 : index
    %c1_290 = arith.constant 1 : index
    %431 = vector.load %arg3[%c0_287, %c3_288, %c2_289, %c1_290] : memref<1x4x18x18xf32, #tpu.memory_space<vmem>>, vector<1x1x16x16xf32>
    %432 = vector.shape_cast %431 : vector<1x1x16x16xf32> to vector<16x16xf32>
    %433 = vector.broadcast %430 : f32 to vector<16x16xf32>
    %434 = arith.mulf %432, %433 : vector<16x16xf32>
    %435 = arith.addf %429, %434 : vector<16x16xf32>
    %c71 = arith.constant 71 : index
    %436 = memref.load %arg1[%c71] : memref<288xf32, #tpu.memory_space<smem>>
    %c0_291 = arith.constant 0 : index
    %c3_292 = arith.constant 3 : index
    %c2_293 = arith.constant 2 : index
    %c2_294 = arith.constant 2 : index
    %437 = vector.load %arg3[%c0_291, %c3_292, %c2_293, %c2_294] : memref<1x4x18x18xf32, #tpu.memory_space<vmem>>, vector<1x1x16x16xf32>
    %438 = vector.shape_cast %437 : vector<1x1x16x16xf32> to vector<16x16xf32>
    %439 = vector.broadcast %436 : f32 to vector<16x16xf32>
    %440 = arith.mulf %438, %439 : vector<16x16xf32>
    %441 = arith.addf %435, %440 : vector<16x16xf32>
    %c1_295 = arith.constant 1 : index
    %442 = memref.load %arg2[%c1_295] : memref<8xf32, #tpu.memory_space<smem>>
    %443 = vector.broadcast %442 : f32 to vector<16x16xf32>
    %444 = arith.addf %441, %443 : vector<16x16xf32>
    %cst_296 = arith.constant 0.000000e+00 : f32
    %445 = vector.broadcast %cst_296 : f32 to vector<16x16xf32>
    %446 = arith.maximumf %444, %445 : vector<16x16xf32>
    %c0_297 = arith.constant 0 : index
    %c1_298 = arith.constant 1 : index
    %c0_299 = arith.constant 0 : index
    %c0_300 = arith.constant 0 : index
    %447 = vector.load %arg4[%c0_297, %c1_298, %c0_299, %c0_300] : memref<1x8x16x16xf32, #tpu.memory_space<vmem>>, vector<1x1x16x16xf32>
    %448 = vector.shape_cast %447 : vector<1x1x16x16xf32> to vector<16x16xf32>
    %449 = vector.shape_cast %446 : vector<16x16xf32> to vector<1x1x16x16xf32>
    tpu.vector_store %arg4[%c0_297, %c1_298, %c0_299, %c0_300], %449 {strides = array<i32>} : memref<1x8x16x16xf32, #tpu.memory_space<vmem>>, vector<1x1x16x16xf32>,
    %cst_301 = arith.constant 0.000000e+00 : f32
    %450 = vector.broadcast %cst_301 : f32 to vector<16x16xf32>
    %c72 = arith.constant 72 : index
    %451 = memref.load %arg1[%c72] : memref<288xf32, #tpu.memory_space<smem>>
    %c0_302 = arith.constant 0 : index
    %c0_303 = arith.constant 0 : index
    %c0_304 = arith.constant 0 : index
    %c0_305 = arith.constant 0 : index
    %452 = vector.load %arg3[%c0_302, %c0_303, %c0_304, %c0_305] : memref<1x4x18x18xf32, #tpu.memory_space<vmem>>, vector<1x1x16x16xf32>
    %453 = vector.shape_cast %452 : vector<1x1x16x16xf32> to vector<16x16xf32>
    %454 = vector.broadcast %451 : f32 to vector<16x16xf32>
    %455 = arith.mulf %453, %454 : vector<16x16xf32>
    %456 = arith.addf %450, %455 : vector<16x16xf32>
    %c73 = arith.constant 73 : index
    %457 = memref.load %arg1[%c73] : memref<288xf32, #tpu.memory_space<smem>>
    %c0_306 = arith.constant 0 : index
    %c0_307 = arith.constant 0 : index
    %c0_308 = arith.constant 0 : index
    %c1_309 = arith.constant 1 : index
    %458 = vector.load %arg3[%c0_306, %c0_307, %c0_308, %c1_309] : memref<1x4x18x18xf32, #tpu.memory_space<vmem>>, vector<1x1x16x16xf32>
    %459 = vector.shape_cast %458 : vector<1x1x16x16xf32> to vector<16x16xf32>
    %460 = vector.broadcast %457 : f32 to vector<16x16xf32>
    %461 = arith.mulf %459, %460 : vector<16x16xf32>
    %462 = arith.addf %456, %461 : vector<16x16xf32>
    %c74 = arith.constant 74 : index
    %463 = memref.load %arg1[%c74] : memref<288xf32, #tpu.memory_space<smem>>
    %c0_310 = arith.constant 0 : index
    %c0_311 = arith.constant 0 : index
    %c0_312 = arith.constant 0 : index
    %c2_313 = arith.constant 2 : index
    %464 = vector.load %arg3[%c0_310, %c0_311, %c0_312, %c2_313] : memref<1x4x18x18xf32, #tpu.memory_space<vmem>>, vector<1x1x16x16xf32>
    %465 = vector.shape_cast %464 : vector<1x1x16x16xf32> to vector<16x16xf32>
    %466 = vector.broadcast %463 : f32 to vector<16x16xf32>
    %467 = arith.mulf %465, %466 : vector<16x16xf32>
    %468 = arith.addf %462, %467 : vector<16x16xf32>
    %c75 = arith.constant 75 : index
    %469 = memref.load %arg1[%c75] : memref<288xf32, #tpu.memory_space<smem>>
    %c0_314 = arith.constant 0 : index
    %c0_315 = arith.constant 0 : index
    %c1_316 = arith.constant 1 : index
    %c0_317 = arith.constant 0 : index
    %470 = vector.load %arg3[%c0_314, %c0_315, %c1_316, %c0_317] : memref<1x4x18x18xf32, #tpu.memory_space<vmem>>, vector<1x1x16x16xf32>
    %471 = vector.shape_cast %470 : vector<1x1x16x16xf32> to vector<16x16xf32>
    %472 = vector.broadcast %469 : f32 to vector<16x16xf32>
    %473 = arith.mulf %471, %472 : vector<16x16xf32>
    %474 = arith.addf %468, %473 : vector<16x16xf32>
    %c76 = arith.constant 76 : index
    %475 = memref.load %arg1[%c76] : memref<288xf32, #tpu.memory_space<smem>>
    %c0_318 = arith.constant 0 : index
    %c0_319 = arith.constant 0 : index
    %c1_320 = arith.constant 1 : index
    %c1_321 = arith.constant 1 : index
    %476 = vector.load %arg3[%c0_318, %c0_319, %c1_320, %c1_321] : memref<1x4x18x18xf32, #tpu.memory_space<vmem>>, vector<1x1x16x16xf32>
    %477 = vector.shape_cast %476 : vector<1x1x16x16xf32> to vector<16x16xf32>
    %478 = vector.broadcast %475 : f32 to vector<16x16xf32>
    %479 = arith.mulf %477, %478 : vector<16x16xf32>
    %480 = arith.addf %474, %479 : vector<16x16xf32>
    %c77 = arith.constant 77 : index
    %481 = memref.load %arg1[%c77] : memref<288xf32, #tpu.memory_space<smem>>
    %c0_322 = arith.constant 0 : index
    %c0_323 = arith.constant 0 : index
    %c1_324 = arith.constant 1 : index
    %c2_325 = arith.constant 2 : index
    %482 = vector.load %arg3[%c0_322, %c0_323, %c1_324, %c2_325] : memref<1x4x18x18xf32, #tpu.memory_space<vmem>>, vector<1x1x16x16xf32>
    %483 = vector.shape_cast %482 : vector<1x1x16x16xf32> to vector<16x16xf32>
    %484 = vector.broadcast %481 : f32 to vector<16x16xf32>
    %485 = arith.mulf %483, %484 : vector<16x16xf32>
    %486 = arith.addf %480, %485 : vector<16x16xf32>
    %c78 = arith.constant 78 : index
    %487 = memref.load %arg1[%c78] : memref<288xf32, #tpu.memory_space<smem>>
    %c0_326 = arith.constant 0 : index
    %c0_327 = arith.constant 0 : index
    %c2_328 = arith.constant 2 : index
    %c0_329 = arith.constant 0 : index
    %488 = vector.load %arg3[%c0_326, %c0_327, %c2_328, %c0_329] : memref<1x4x18x18xf32, #tpu.memory_space<vmem>>, vector<1x1x16x16xf32>
    %489 = vector.shape_cast %488 : vector<1x1x16x16xf32> to vector<16x16xf32>
    %490 = vector.broadcast %487 : f32 to vector<16x16xf32>
    %491 = arith.mulf %489, %490 : vector<16x16xf32>
    %492 = arith.addf %486, %491 : vector<16x16xf32>
    %c79 = arith.constant 79 : index
    %493 = memref.load %arg1[%c79] : memref<288xf32, #tpu.memory_space<smem>>
    %c0_330 = arith.constant 0 : index
    %c0_331 = arith.constant 0 : index
    %c2_332 = arith.constant 2 : index
    %c1_333 = arith.constant 1 : index
    %494 = vector.load %arg3[%c0_330, %c0_331, %c2_332, %c1_333] : memref<1x4x18x18xf32, #tpu.memory_space<vmem>>, vector<1x1x16x16xf32>
    %495 = vector.shape_cast %494 : vector<1x1x16x16xf32> to vector<16x16xf32>
    %496 = vector.broadcast %493 : f32 to vector<16x16xf32>
    %497 = arith.mulf %495, %496 : vector<16x16xf32>
    %498 = arith.addf %492, %497 : vector<16x16xf32>
    %c80 = arith.constant 80 : index
    %499 = memref.load %arg1[%c80] : memref<288xf32, #tpu.memory_space<smem>>
    %c0_334 = arith.constant 0 : index
    %c0_335 = arith.constant 0 : index
    %c2_336 = arith.constant 2 : index
    %c2_337 = arith.constant 2 : index
    %500 = vector.load %arg3[%c0_334, %c0_335, %c2_336, %c2_337] : memref<1x4x18x18xf32, #tpu.memory_space<vmem>>, vector<1x1x16x16xf32>
    %501 = vector.shape_cast %500 : vector<1x1x16x16xf32> to vector<16x16xf32>
    %502 = vector.broadcast %499 : f32 to vector<16x16xf32>
    %503 = arith.mulf %501, %502 : vector<16x16xf32>
    %504 = arith.addf %498, %503 : vector<16x16xf32>
    %c81 = arith.constant 81 : index
    %505 = memref.load %arg1[%c81] : memref<288xf32, #tpu.memory_space<smem>>
    %c0_338 = arith.constant 0 : index
    %c1_339 = arith.constant 1 : index
    %c0_340 = arith.constant 0 : index
    %c0_341 = arith.constant 0 : index
    %506 = vector.load %arg3[%c0_338, %c1_339, %c0_340, %c0_341] : memref<1x4x18x18xf32, #tpu.memory_space<vmem>>, vector<1x1x16x16xf32>
    %507 = vector.shape_cast %506 : vector<1x1x16x16xf32> to vector<16x16xf32>
    %508 = vector.broadcast %505 : f32 to vector<16x16xf32>
    %509 = arith.mulf %507, %508 : vector<16x16xf32>
    %510 = arith.addf %504, %509 : vector<16x16xf32>
    %c82 = arith.constant 82 : index
    %511 = memref.load %arg1[%c82] : memref<288xf32, #tpu.memory_space<smem>>
    %c0_342 = arith.constant 0 : index
    %c1_343 = arith.constant 1 : index
    %c0_344 = arith.constant 0 : index
    %c1_345 = arith.constant 1 : index
    %512 = vector.load %arg3[%c0_342, %c1_343, %c0_344, %c1_345] : memref<1x4x18x18xf32, #tpu.memory_space<vmem>>, vector<1x1x16x16xf32>
    %513 = vector.shape_cast %512 : vector<1x1x16x16xf32> to vector<16x16xf32>
    %514 = vector.broadcast %511 : f32 to vector<16x16xf32>
    %515 = arith.mulf %513, %514 : vector<16x16xf32>
    %516 = arith.addf %510, %515 : vector<16x16xf32>
    %c83 = arith.constant 83 : index
    %517 = memref.load %arg1[%c83] : memref<288xf32, #tpu.memory_space<smem>>
    %c0_346 = arith.constant 0 : index
    %c1_347 = arith.constant 1 : index
    %c0_348 = arith.constant 0 : index
    %c2_349 = arith.constant 2 : index
    %518 = vector.load %arg3[%c0_346, %c1_347, %c0_348, %c2_349] : memref<1x4x18x18xf32, #tpu.memory_space<vmem>>, vector<1x1x16x16xf32>
    %519 = vector.shape_cast %518 : vector<1x1x16x16xf32> to vector<16x16xf32>
    %520 = vector.broadcast %517 : f32 to vector<16x16xf32>
    %521 = arith.mulf %519, %520 : vector<16x16xf32>
    %522 = arith.addf %516, %521 : vector<16x16xf32>
    %c84 = arith.constant 84 : index
    %523 = memref.load %arg1[%c84] : memref<288xf32, #tpu.memory_space<smem>>
    %c0_350 = arith.constant 0 : index
    %c1_351 = arith.constant 1 : index
    %c1_352 = arith.constant 1 : index
    %c0_353 = arith.constant 0 : index
    %524 = vector.load %arg3[%c0_350, %c1_351, %c1_352, %c0_353] : memref<1x4x18x18xf32, #tpu.memory_space<vmem>>, vector<1x1x16x16xf32>
    %525 = vector.shape_cast %524 : vector<1x1x16x16xf32> to vector<16x16xf32>
    %526 = vector.broadcast %523 : f32 to vector<16x16xf32>
    %527 = arith.mulf %525, %526 : vector<16x16xf32>
    %528 = arith.addf %522, %527 : vector<16x16xf32>
    %c85 = arith.constant 85 : index
    %529 = memref.load %arg1[%c85] : memref<288xf32, #tpu.memory_space<smem>>
    %c0_354 = arith.constant 0 : index
    %c1_355 = arith.constant 1 : index
    %c1_356 = arith.constant 1 : index
    %c1_357 = arith.constant 1 : index
    %530 = vector.load %arg3[%c0_354, %c1_355, %c1_356, %c1_357] : memref<1x4x18x18xf32, #tpu.memory_space<vmem>>, vector<1x1x16x16xf32>
    %531 = vector.shape_cast %530 : vector<1x1x16x16xf32> to vector<16x16xf32>
    %532 = vector.broadcast %529 : f32 to vector<16x16xf32>
    %533 = arith.mulf %531, %532 : vector<16x16xf32>
    %534 = arith.addf %528, %533 : vector<16x16xf32>
    %c86 = arith.constant 86 : index
    %535 = memref.load %arg1[%c86] : memref<288xf32, #tpu.memory_space<smem>>
    %c0_358 = arith.constant 0 : index
    %c1_359 = arith.constant 1 : index
    %c1_360 = arith.constant 1 : index
    %c2_361 = arith.constant 2 : index
    %536 = vector.load %arg3[%c0_358, %c1_359, %c1_360, %c2_361] : memref<1x4x18x18xf32, #tpu.memory_space<vmem>>, vector<1x1x16x16xf32>
    %537 = vector.shape_cast %536 : vector<1x1x16x16xf32> to vector<16x16xf32>
    %538 = vector.broadcast %535 : f32 to vector<16x16xf32>
    %539 = arith.mulf %537, %538 : vector<16x16xf32>
    %540 = arith.addf %534, %539 : vector<16x16xf32>
    %c87 = arith.constant 87 : index
    %541 = memref.load %arg1[%c87] : memref<288xf32, #tpu.memory_space<smem>>
    %c0_362 = arith.constant 0 : index
    %c1_363 = arith.constant 1 : index
    %c2_364 = arith.constant 2 : index
    %c0_365 = arith.constant 0 : index
    %542 = vector.load %arg3[%c0_362, %c1_363, %c2_364, %c0_365] : memref<1x4x18x18xf32, #tpu.memory_space<vmem>>, vector<1x1x16x16xf32>
    %543 = vector.shape_cast %542 : vector<1x1x16x16xf32> to vector<16x16xf32>
    %544 = vector.broadcast %541 : f32 to vector<16x16xf32>
    %545 = arith.mulf %543, %544 : vector<16x16xf32>
    %546 = arith.addf %540, %545 : vector<16x16xf32>
    %c88 = arith.constant 88 : index
    %547 = memref.load %arg1[%c88] : memref<288xf32, #tpu.memory_space<smem>>
    %c0_366 = arith.constant 0 : index
    %c1_367 = arith.constant 1 : index
    %c2_368 = arith.constant 2 : index
    %c1_369 = arith.constant 1 : index
    %548 = vector.load %arg3[%c0_366, %c1_367, %c2_368, %c1_369] : memref<1x4x18x18xf32, #tpu.memory_space<vmem>>, vector<1x1x16x16xf32>
    %549 = vector.shape_cast %548 : vector<1x1x16x16xf32> to vector<16x16xf32>
    %550 = vector.broadcast %547 : f32 to vector<16x16xf32>
    %551 = arith.mulf %549, %550 : vector<16x16xf32>
    %552 = arith.addf %546, %551 : vector<16x16xf32>
    %c89 = arith.constant 89 : index
    %553 = memref.load %arg1[%c89] : memref<288xf32, #tpu.memory_space<smem>>
    %c0_370 = arith.constant 0 : index
    %c1_371 = arith.constant 1 : index
    %c2_372 = arith.constant 2 : index
    %c2_373 = arith.constant 2 : index
    %554 = vector.load %arg3[%c0_370, %c1_371, %c2_372, %c2_373] : memref<1x4x18x18xf32, #tpu.memory_space<vmem>>, vector<1x1x16x16xf32>
    %555 = vector.shape_cast %554 : vector<1x1x16x16xf32> to vector<16x16xf32>
    %556 = vector.broadcast %553 : f32 to vector<16x16xf32>
    %557 = arith.mulf %555, %556 : vector<16x16xf32>
    %558 = arith.addf %552, %557 : vector<16x16xf32>
    %c90 = arith.constant 90 : index
    %559 = memref.load %arg1[%c90] : memref<288xf32, #tpu.memory_space<smem>>
    %c0_374 = arith.constant 0 : index
    %c2_375 = arith.constant 2 : index
    %c0_376 = arith.constant 0 : index
    %c0_377 = arith.constant 0 : index
    %560 = vector.load %arg3[%c0_374, %c2_375, %c0_376, %c0_377] : memref<1x4x18x18xf32, #tpu.memory_space<vmem>>, vector<1x1x16x16xf32>
    %561 = vector.shape_cast %560 : vector<1x1x16x16xf32> to vector<16x16xf32>
    %562 = vector.broadcast %559 : f32 to vector<16x16xf32>
    %563 = arith.mulf %561, %562 : vector<16x16xf32>
    %564 = arith.addf %558, %563 : vector<16x16xf32>
    %c91 = arith.constant 91 : index
    %565 = memref.load %arg1[%c91] : memref<288xf32, #tpu.memory_space<smem>>
    %c0_378 = arith.constant 0 : index
    %c2_379 = arith.constant 2 : index
    %c0_380 = arith.constant 0 : index
    %c1_381 = arith.constant 1 : index
    %566 = vector.load %arg3[%c0_378, %c2_379, %c0_380, %c1_381] : memref<1x4x18x18xf32, #tpu.memory_space<vmem>>, vector<1x1x16x16xf32>
    %567 = vector.shape_cast %566 : vector<1x1x16x16xf32> to vector<16x16xf32>
    %568 = vector.broadcast %565 : f32 to vector<16x16xf32>
    %569 = arith.mulf %567, %568 : vector<16x16xf32>
    %570 = arith.addf %564, %569 : vector<16x16xf32>
    %c92 = arith.constant 92 : index
    %571 = memref.load %arg1[%c92] : memref<288xf32, #tpu.memory_space<smem>>
    %c0_382 = arith.constant 0 : index
    %c2_383 = arith.constant 2 : index
    %c0_384 = arith.constant 0 : index
    %c2_385 = arith.constant 2 : index
    %572 = vector.load %arg3[%c0_382, %c2_383, %c0_384, %c2_385] : memref<1x4x18x18xf32, #tpu.memory_space<vmem>>, vector<1x1x16x16xf32>
    %573 = vector.shape_cast %572 : vector<1x1x16x16xf32> to vector<16x16xf32>
    %574 = vector.broadcast %571 : f32 to vector<16x16xf32>
    %575 = arith.mulf %573, %574 : vector<16x16xf32>
    %576 = arith.addf %570, %575 : vector<16x16xf32>
    %c93 = arith.constant 93 : index
    %577 = memref.load %arg1[%c93] : memref<288xf32, #tpu.memory_space<smem>>
    %c0_386 = arith.constant 0 : index
    %c2_387 = arith.constant 2 : index
    %c1_388 = arith.constant 1 : index
    %c0_389 = arith.constant 0 : index
    %578 = vector.load %arg3[%c0_386, %c2_387, %c1_388, %c0_389] : memref<1x4x18x18xf32, #tpu.memory_space<vmem>>, vector<1x1x16x16xf32>
    %579 = vector.shape_cast %578 : vector<1x1x16x16xf32> to vector<16x16xf32>
    %580 = vector.broadcast %577 : f32 to vector<16x16xf32>
    %581 = arith.mulf %579, %580 : vector<16x16xf32>
    %582 = arith.addf %576, %581 : vector<16x16xf32>
    %c94 = arith.constant 94 : index
    %583 = memref.load %arg1[%c94] : memref<288xf32, #tpu.memory_space<smem>>
    %c0_390 = arith.constant 0 : index
    %c2_391 = arith.constant 2 : index
    %c1_392 = arith.constant 1 : index
    %c1_393 = arith.constant 1 : index
    %584 = vector.load %arg3[%c0_390, %c2_391, %c1_392, %c1_393] : memref<1x4x18x18xf32, #tpu.memory_space<vmem>>, vector<1x1x16x16xf32>
    %585 = vector.shape_cast %584 : vector<1x1x16x16xf32> to vector<16x16xf32>
    %586 = vector.broadcast %583 : f32 to vector<16x16xf32>
    %587 = arith.mulf %585, %586 : vector<16x16xf32>
    %588 = arith.addf %582, %587 : vector<16x16xf32>
    %c95 = arith.constant 95 : index
    %589 = memref.load %arg1[%c95] : memref<288xf32, #tpu.memory_space<smem>>
    %c0_394 = arith.constant 0 : index
    %c2_395 = arith.constant 2 : index
    %c1_396 = arith.constant 1 : index
    %c2_397 = arith.constant 2 : index
    %590 = vector.load %arg3[%c0_394, %c2_395, %c1_396, %c2_397] : memref<1x4x18x18xf32, #tpu.memory_space<vmem>>, vector<1x1x16x16xf32>
    %591 = vector.shape_cast %590 : vector<1x1x16x16xf32> to vector<16x16xf32>
    %592 = vector.broadcast %589 : f32 to vector<16x16xf32>
    %593 = arith.mulf %591, %592 : vector<16x16xf32>
    %594 = arith.addf %588, %593 : vector<16x16xf32>
    %c96 = arith.constant 96 : index
    %595 = memref.load %arg1[%c96] : memref<288xf32, #tpu.memory_space<smem>>
    %c0_398 = arith.constant 0 : index
    %c2_399 = arith.constant 2 : index
    %c2_400 = arith.constant 2 : index
    %c0_401 = arith.constant 0 : index
    %596 = vector.load %arg3[%c0_398, %c2_399, %c2_400, %c0_401] : memref<1x4x18x18xf32, #tpu.memory_space<vmem>>, vector<1x1x16x16xf32>
    %597 = vector.shape_cast %596 : vector<1x1x16x16xf32> to vector<16x16xf32>
    %598 = vector.broadcast %595 : f32 to vector<16x16xf32>
    %599 = arith.mulf %597, %598 : vector<16x16xf32>
    %600 = arith.addf %594, %599 : vector<16x16xf32>
    %c97 = arith.constant 97 : index
    %601 = memref.load %arg1[%c97] : memref<288xf32, #tpu.memory_space<smem>>
    %c0_402 = arith.constant 0 : index
    %c2_403 = arith.constant 2 : index
    %c2_404 = arith.constant 2 : index
    %c1_405 = arith.constant 1 : index
    %602 = vector.load %arg3[%c0_402, %c2_403, %c2_404, %c1_405] : memref<1x4x18x18xf32, #tpu.memory_space<vmem>>, vector<1x1x16x16xf32>
    %603 = vector.shape_cast %602 : vector<1x1x16x16xf32> to vector<16x16xf32>
    %604 = vector.broadcast %601 : f32 to vector<16x16xf32>
    %605 = arith.mulf %603, %604 : vector<16x16xf32>
    %606 = arith.addf %600, %605 : vector<16x16xf32>
    %c98 = arith.constant 98 : index
    %607 = memref.load %arg1[%c98] : memref<288xf32, #tpu.memory_space<smem>>
    %c0_406 = arith.constant 0 : index
    %c2_407 = arith.constant 2 : index
    %c2_408 = arith.constant 2 : index
    %c2_409 = arith.constant 2 : index
    %608 = vector.load %arg3[%c0_406, %c2_407, %c2_408, %c2_409] : memref<1x4x18x18xf32, #tpu.memory_space<vmem>>, vector<1x1x16x16xf32>
    %609 = vector.shape_cast %608 : vector<1x1x16x16xf32> to vector<16x16xf32>
    %610 = vector.broadcast %607 : f32 to vector<16x16xf32>
    %611 = arith.mulf %609, %610 : vector<16x16xf32>
    %612 = arith.addf %606, %611 : vector<16x16xf32>
    %c99 = arith.constant 99 : index
    %613 = memref.load %arg1[%c99] : memref<288xf32, #tpu.memory_space<smem>>
    %c0_410 = arith.constant 0 : index
    %c3_411 = arith.constant 3 : index
    %c0_412 = arith.constant 0 : index
    %c0_413 = arith.constant 0 : index
    %614 = vector.load %arg3[%c0_410, %c3_411, %c0_412, %c0_413] : memref<1x4x18x18xf32, #tpu.memory_space<vmem>>, vector<1x1x16x16xf32>
    %615 = vector.shape_cast %614 : vector<1x1x16x16xf32> to vector<16x16xf32>
    %616 = vector.broadcast %613 : f32 to vector<16x16xf32>
    %617 = arith.mulf %615, %616 : vector<16x16xf32>
    %618 = arith.addf %612, %617 : vector<16x16xf32>
    %c100 = arith.constant 100 : index
    %619 = memref.load %arg1[%c100] : memref<288xf32, #tpu.memory_space<smem>>
    %c0_414 = arith.constant 0 : index
    %c3_415 = arith.constant 3 : index
    %c0_416 = arith.constant 0 : index
    %c1_417 = arith.constant 1 : index
    %620 = vector.load %arg3[%c0_414, %c3_415, %c0_416, %c1_417] : memref<1x4x18x18xf32, #tpu.memory_space<vmem>>, vector<1x1x16x16xf32>
    %621 = vector.shape_cast %620 : vector<1x1x16x16xf32> to vector<16x16xf32>
    %622 = vector.broadcast %619 : f32 to vector<16x16xf32>
    %623 = arith.mulf %621, %622 : vector<16x16xf32>
    %624 = arith.addf %618, %623 : vector<16x16xf32>
    %c101 = arith.constant 101 : index
    %625 = memref.load %arg1[%c101] : memref<288xf32, #tpu.memory_space<smem>>
    %c0_418 = arith.constant 0 : index
    %c3_419 = arith.constant 3 : index
    %c0_420 = arith.constant 0 : index
    %c2_421 = arith.constant 2 : index
    %626 = vector.load %arg3[%c0_418, %c3_419, %c0_420, %c2_421] : memref<1x4x18x18xf32, #tpu.memory_space<vmem>>, vector<1x1x16x16xf32>
    %627 = vector.shape_cast %626 : vector<1x1x16x16xf32> to vector<16x16xf32>
    %628 = vector.broadcast %625 : f32 to vector<16x16xf32>
    %629 = arith.mulf %627, %628 : vector<16x16xf32>
    %630 = arith.addf %624, %629 : vector<16x16xf32>
    %c102 = arith.constant 102 : index
    %631 = memref.load %arg1[%c102] : memref<288xf32, #tpu.memory_space<smem>>
    %c0_422 = arith.constant 0 : index
    %c3_423 = arith.constant 3 : index
    %c1_424 = arith.constant 1 : index
    %c0_425 = arith.constant 0 : index
    %632 = vector.load %arg3[%c0_422, %c3_423, %c1_424, %c0_425] : memref<1x4x18x18xf32, #tpu.memory_space<vmem>>, vector<1x1x16x16xf32>
    %633 = vector.shape_cast %632 : vector<1x1x16x16xf32> to vector<16x16xf32>
    %634 = vector.broadcast %631 : f32 to vector<16x16xf32>
    %635 = arith.mulf %633, %634 : vector<16x16xf32>
    %636 = arith.addf %630, %635 : vector<16x16xf32>
    %c103 = arith.constant 103 : index
    %637 = memref.load %arg1[%c103] : memref<288xf32, #tpu.memory_space<smem>>
    %c0_426 = arith.constant 0 : index
    %c3_427 = arith.constant 3 : index
    %c1_428 = arith.constant 1 : index
    %c1_429 = arith.constant 1 : index
    %638 = vector.load %arg3[%c0_426, %c3_427, %c1_428, %c1_429] : memref<1x4x18x18xf32, #tpu.memory_space<vmem>>, vector<1x1x16x16xf32>
    %639 = vector.shape_cast %638 : vector<1x1x16x16xf32> to vector<16x16xf32>
    %640 = vector.broadcast %637 : f32 to vector<16x16xf32>
    %641 = arith.mulf %639, %640 : vector<16x16xf32>
    %642 = arith.addf %636, %641 : vector<16x16xf32>
    %c104 = arith.constant 104 : index
    %643 = memref.load %arg1[%c104] : memref<288xf32, #tpu.memory_space<smem>>
    %c0_430 = arith.constant 0 : index
    %c3_431 = arith.constant 3 : index
    %c1_432 = arith.constant 1 : index
    %c2_433 = arith.constant 2 : index
    %644 = vector.load %arg3[%c0_430, %c3_431, %c1_432, %c2_433] : memref<1x4x18x18xf32, #tpu.memory_space<vmem>>, vector<1x1x16x16xf32>
    %645 = vector.shape_cast %644 : vector<1x1x16x16xf32> to vector<16x16xf32>
    %646 = vector.broadcast %643 : f32 to vector<16x16xf32>
    %647 = arith.mulf %645, %646 : vector<16x16xf32>
    %648 = arith.addf %642, %647 : vector<16x16xf32>
    %c105 = arith.constant 105 : index
    %649 = memref.load %arg1[%c105] : memref<288xf32, #tpu.memory_space<smem>>
    %c0_434 = arith.constant 0 : index
    %c3_435 = arith.constant 3 : index
    %c2_436 = arith.constant 2 : index
    %c0_437 = arith.constant 0 : index
    %650 = vector.load %arg3[%c0_434, %c3_435, %c2_436, %c0_437] : memref<1x4x18x18xf32, #tpu.memory_space<vmem>>, vector<1x1x16x16xf32>
    %651 = vector.shape_cast %650 : vector<1x1x16x16xf32> to vector<16x16xf32>
    %652 = vector.broadcast %649 : f32 to vector<16x16xf32>
    %653 = arith.mulf %651, %652 : vector<16x16xf32>
    %654 = arith.addf %648, %653 : vector<16x16xf32>
    %c106 = arith.constant 106 : index
    %655 = memref.load %arg1[%c106] : memref<288xf32, #tpu.memory_space<smem>>
    %c0_438 = arith.constant 0 : index
    %c3_439 = arith.constant 3 : index
    %c2_440 = arith.constant 2 : index
    %c1_441 = arith.constant 1 : index
    %656 = vector.load %arg3[%c0_438, %c3_439, %c2_440, %c1_441] : memref<1x4x18x18xf32, #tpu.memory_space<vmem>>, vector<1x1x16x16xf32>
    %657 = vector.shape_cast %656 : vector<1x1x16x16xf32> to vector<16x16xf32>
    %658 = vector.broadcast %655 : f32 to vector<16x16xf32>
    %659 = arith.mulf %657, %658 : vector<16x16xf32>
    %660 = arith.addf %654, %659 : vector<16x16xf32>
    %c107 = arith.constant 107 : index
    %661 = memref.load %arg1[%c107] : memref<288xf32, #tpu.memory_space<smem>>
    %c0_442 = arith.constant 0 : index
    %c3_443 = arith.constant 3 : index
    %c2_444 = arith.constant 2 : index
    %c2_445 = arith.constant 2 : index
    %662 = vector.load %arg3[%c0_442, %c3_443, %c2_444, %c2_445] : memref<1x4x18x18xf32, #tpu.memory_space<vmem>>, vector<1x1x16x16xf32>
    %663 = vector.shape_cast %662 : vector<1x1x16x16xf32> to vector<16x16xf32>
    %664 = vector.broadcast %661 : f32 to vector<16x16xf32>
    %665 = arith.mulf %663, %664 : vector<16x16xf32>
    %666 = arith.addf %660, %665 : vector<16x16xf32>
    %c2_446 = arith.constant 2 : index
    %667 = memref.load %arg2[%c2_446] : memref<8xf32, #tpu.memory_space<smem>>
    %668 = vector.broadcast %667 : f32 to vector<16x16xf32>
    %669 = arith.addf %666, %668 : vector<16x16xf32>
    %cst_447 = arith.constant 0.000000e+00 : f32
    %670 = vector.broadcast %cst_447 : f32 to vector<16x16xf32>
    %671 = arith.maximumf %669, %670 : vector<16x16xf32>
    %c0_448 = arith.constant 0 : index
    %c2_449 = arith.constant 2 : index
    %c0_450 = arith.constant 0 : index
    %c0_451 = arith.constant 0 : index
    %672 = vector.load %arg4[%c0_448, %c2_449, %c0_450, %c0_451] : memref<1x8x16x16xf32, #tpu.memory_space<vmem>>, vector<1x1x16x16xf32>
    %673 = vector.shape_cast %672 : vector<1x1x16x16xf32> to vector<16x16xf32>
    %674 = vector.shape_cast %671 : vector<16x16xf32> to vector<1x1x16x16xf32>
    tpu.vector_store %arg4[%c0_448, %c2_449, %c0_450, %c0_451], %674 {strides = array<i32>} : memref<1x8x16x16xf32, #tpu.memory_space<vmem>>, vector<1x1x16x16xf32>,
    %cst_452 = arith.constant 0.000000e+00 : f32
    %675 = vector.broadcast %cst_452 : f32 to vector<16x16xf32>
    %c108 = arith.constant 108 : index
    %676 = memref.load %arg1[%c108] : memref<288xf32, #tpu.memory_space<smem>>
    %c0_453 = arith.constant 0 : index
    %c0_454 = arith.constant 0 : index
    %c0_455 = arith.constant 0 : index
    %c0_456 = arith.constant 0 : index
    %677 = vector.load %arg3[%c0_453, %c0_454, %c0_455, %c0_456] : memref<1x4x18x18xf32, #tpu.memory_space<vmem>>, vector<1x1x16x16xf32>
    %678 = vector.shape_cast %677 : vector<1x1x16x16xf32> to vector<16x16xf32>
    %679 = vector.broadcast %676 : f32 to vector<16x16xf32>
    %680 = arith.mulf %678, %679 : vector<16x16xf32>
    %681 = arith.addf %675, %680 : vector<16x16xf32>
    %c109 = arith.constant 109 : index
    %682 = memref.load %arg1[%c109] : memref<288xf32, #tpu.memory_space<smem>>
    %c0_457 = arith.constant 0 : index
    %c0_458 = arith.constant 0 : index
    %c0_459 = arith.constant 0 : index
    %c1_460 = arith.constant 1 : index
    %683 = vector.load %arg3[%c0_457, %c0_458, %c0_459, %c1_460] : memref<1x4x18x18xf32, #tpu.memory_space<vmem>>, vector<1x1x16x16xf32>
    %684 = vector.shape_cast %683 : vector<1x1x16x16xf32> to vector<16x16xf32>
    %685 = vector.broadcast %682 : f32 to vector<16x16xf32>
    %686 = arith.mulf %684, %685 : vector<16x16xf32>
    %687 = arith.addf %681, %686 : vector<16x16xf32>
    %c110 = arith.constant 110 : index
    %688 = memref.load %arg1[%c110] : memref<288xf32, #tpu.memory_space<smem>>
    %c0_461 = arith.constant 0 : index
    %c0_462 = arith.constant 0 : index
    %c0_463 = arith.constant 0 : index
    %c2_464 = arith.constant 2 : index
    %689 = vector.load %arg3[%c0_461, %c0_462, %c0_463, %c2_464] : memref<1x4x18x18xf32, #tpu.memory_space<vmem>>, vector<1x1x16x16xf32>
    %690 = vector.shape_cast %689 : vector<1x1x16x16xf32> to vector<16x16xf32>
    %691 = vector.broadcast %688 : f32 to vector<16x16xf32>
    %692 = arith.mulf %690, %691 : vector<16x16xf32>
    %693 = arith.addf %687, %692 : vector<16x16xf32>
    %c111 = arith.constant 111 : index
    %694 = memref.load %arg1[%c111] : memref<288xf32, #tpu.memory_space<smem>>
    %c0_465 = arith.constant 0 : index
    %c0_466 = arith.constant 0 : index
    %c1_467 = arith.constant 1 : index
    %c0_468 = arith.constant 0 : index
    %695 = vector.load %arg3[%c0_465, %c0_466, %c1_467, %c0_468] : memref<1x4x18x18xf32, #tpu.memory_space<vmem>>, vector<1x1x16x16xf32>
    %696 = vector.shape_cast %695 : vector<1x1x16x16xf32> to vector<16x16xf32>
    %697 = vector.broadcast %694 : f32 to vector<16x16xf32>
    %698 = arith.mulf %696, %697 : vector<16x16xf32>
    %699 = arith.addf %693, %698 : vector<16x16xf32>
    %c112 = arith.constant 112 : index
    %700 = memref.load %arg1[%c112] : memref<288xf32, #tpu.memory_space<smem>>
    %c0_469 = arith.constant 0 : index
    %c0_470 = arith.constant 0 : index
    %c1_471 = arith.constant 1 : index
    %c1_472 = arith.constant 1 : index
    %701 = vector.load %arg3[%c0_469, %c0_470, %c1_471, %c1_472] : memref<1x4x18x18xf32, #tpu.memory_space<vmem>>, vector<1x1x16x16xf32>
    %702 = vector.shape_cast %701 : vector<1x1x16x16xf32> to vector<16x16xf32>
    %703 = vector.broadcast %700 : f32 to vector<16x16xf32>
    %704 = arith.mulf %702, %703 : vector<16x16xf32>
    %705 = arith.addf %699, %704 : vector<16x16xf32>
    %c113 = arith.constant 113 : index
    %706 = memref.load %arg1[%c113] : memref<288xf32, #tpu.memory_space<smem>>
    %c0_473 = arith.constant 0 : index
    %c0_474 = arith.constant 0 : index
    %c1_475 = arith.constant 1 : index
    %c2_476 = arith.constant 2 : index
    %707 = vector.load %arg3[%c0_473, %c0_474, %c1_475, %c2_476] : memref<1x4x18x18xf32, #tpu.memory_space<vmem>>, vector<1x1x16x16xf32>
    %708 = vector.shape_cast %707 : vector<1x1x16x16xf32> to vector<16x16xf32>
    %709 = vector.broadcast %706 : f32 to vector<16x16xf32>
    %710 = arith.mulf %708, %709 : vector<16x16xf32>
    %711 = arith.addf %705, %710 : vector<16x16xf32>
    %c114 = arith.constant 114 : index
    %712 = memref.load %arg1[%c114] : memref<288xf32, #tpu.memory_space<smem>>
    %c0_477 = arith.constant 0 : index
    %c0_478 = arith.constant 0 : index
    %c2_479 = arith.constant 2 : index
    %c0_480 = arith.constant 0 : index
    %713 = vector.load %arg3[%c0_477, %c0_478, %c2_479, %c0_480] : memref<1x4x18x18xf32, #tpu.memory_space<vmem>>, vector<1x1x16x16xf32>
    %714 = vector.shape_cast %713 : vector<1x1x16x16xf32> to vector<16x16xf32>
    %715 = vector.broadcast %712 : f32 to vector<16x16xf32>
    %716 = arith.mulf %714, %715 : vector<16x16xf32>
    %717 = arith.addf %711, %716 : vector<16x16xf32>
    %c115 = arith.constant 115 : index
    %718 = memref.load %arg1[%c115] : memref<288xf32, #tpu.memory_space<smem>>
    %c0_481 = arith.constant 0 : index
    %c0_482 = arith.constant 0 : index
    %c2_483 = arith.constant 2 : index
    %c1_484 = arith.constant 1 : index
    %719 = vector.load %arg3[%c0_481, %c0_482, %c2_483, %c1_484] : memref<1x4x18x18xf32, #tpu.memory_space<vmem>>, vector<1x1x16x16xf32>
    %720 = vector.shape_cast %719 : vector<1x1x16x16xf32> to vector<16x16xf32>
    %721 = vector.broadcast %718 : f32 to vector<16x16xf32>
    %722 = arith.mulf %720, %721 : vector<16x16xf32>
    %723 = arith.addf %717, %722 : vector<16x16xf32>
    %c116 = arith.constant 116 : index
    %724 = memref.load %arg1[%c116] : memref<288xf32, #tpu.memory_space<smem>>
    %c0_485 = arith.constant 0 : index
    %c0_486 = arith.constant 0 : index
    %c2_487 = arith.constant 2 : index
    %c2_488 = arith.constant 2 : index
    %725 = vector.load %arg3[%c0_485, %c0_486, %c2_487, %c2_488] : memref<1x4x18x18xf32, #tpu.memory_space<vmem>>, vector<1x1x16x16xf32>
    %726 = vector.shape_cast %725 : vector<1x1x16x16xf32> to vector<16x16xf32>
    %727 = vector.broadcast %724 : f32 to vector<16x16xf32>
    %728 = arith.mulf %726, %727 : vector<16x16xf32>
    %729 = arith.addf %723, %728 : vector<16x16xf32>
    %c117 = arith.constant 117 : index
    %730 = memref.load %arg1[%c117] : memref<288xf32, #tpu.memory_space<smem>>
    %c0_489 = arith.constant 0 : index
    %c1_490 = arith.constant 1 : index
    %c0_491 = arith.constant 0 : index
    %c0_492 = arith.constant 0 : index
    %731 = vector.load %arg3[%c0_489, %c1_490, %c0_491, %c0_492] : memref<1x4x18x18xf32, #tpu.memory_space<vmem>>, vector<1x1x16x16xf32>
    %732 = vector.shape_cast %731 : vector<1x1x16x16xf32> to vector<16x16xf32>
    %733 = vector.broadcast %730 : f32 to vector<16x16xf32>
    %734 = arith.mulf %732, %733 : vector<16x16xf32>
    %735 = arith.addf %729, %734 : vector<16x16xf32>
    %c118 = arith.constant 118 : index
    %736 = memref.load %arg1[%c118] : memref<288xf32, #tpu.memory_space<smem>>
    %c0_493 = arith.constant 0 : index
    %c1_494 = arith.constant 1 : index
    %c0_495 = arith.constant 0 : index
    %c1_496 = arith.constant 1 : index
    %737 = vector.load %arg3[%c0_493, %c1_494, %c0_495, %c1_496] : memref<1x4x18x18xf32, #tpu.memory_space<vmem>>, vector<1x1x16x16xf32>
    %738 = vector.shape_cast %737 : vector<1x1x16x16xf32> to vector<16x16xf32>
    %739 = vector.broadcast %736 : f32 to vector<16x16xf32>
    %740 = arith.mulf %738, %739 : vector<16x16xf32>
    %741 = arith.addf %735, %740 : vector<16x16xf32>
    %c119 = arith.constant 119 : index
    %742 = memref.load %arg1[%c119] : memref<288xf32, #tpu.memory_space<smem>>
    %c0_497 = arith.constant 0 : index
    %c1_498 = arith.constant 1 : index
    %c0_499 = arith.constant 0 : index
    %c2_500 = arith.constant 2 : index
    %743 = vector.load %arg3[%c0_497, %c1_498, %c0_499, %c2_500] : memref<1x4x18x18xf32, #tpu.memory_space<vmem>>, vector<1x1x16x16xf32>
    %744 = vector.shape_cast %743 : vector<1x1x16x16xf32> to vector<16x16xf32>
    %745 = vector.broadcast %742 : f32 to vector<16x16xf32>
    %746 = arith.mulf %744, %745 : vector<16x16xf32>
    %747 = arith.addf %741, %746 : vector<16x16xf32>
    %c120 = arith.constant 120 : index
    %748 = memref.load %arg1[%c120] : memref<288xf32, #tpu.memory_space<smem>>
    %c0_501 = arith.constant 0 : index
    %c1_502 = arith.constant 1 : index
    %c1_503 = arith.constant 1 : index
    %c0_504 = arith.constant 0 : index
    %749 = vector.load %arg3[%c0_501, %c1_502, %c1_503, %c0_504] : memref<1x4x18x18xf32, #tpu.memory_space<vmem>>, vector<1x1x16x16xf32>
    %750 = vector.shape_cast %749 : vector<1x1x16x16xf32> to vector<16x16xf32>
    %751 = vector.broadcast %748 : f32 to vector<16x16xf32>
    %752 = arith.mulf %750, %751 : vector<16x16xf32>
    %753 = arith.addf %747, %752 : vector<16x16xf32>
    %c121 = arith.constant 121 : index
    %754 = memref.load %arg1[%c121] : memref<288xf32, #tpu.memory_space<smem>>
    %c0_505 = arith.constant 0 : index
    %c1_506 = arith.constant 1 : index
    %c1_507 = arith.constant 1 : index
    %c1_508 = arith.constant 1 : index
    %755 = vector.load %arg3[%c0_505, %c1_506, %c1_507, %c1_508] : memref<1x4x18x18xf32, #tpu.memory_space<vmem>>, vector<1x1x16x16xf32>
    %756 = vector.shape_cast %755 : vector<1x1x16x16xf32> to vector<16x16xf32>
    %757 = vector.broadcast %754 : f32 to vector<16x16xf32>
    %758 = arith.mulf %756, %757 : vector<16x16xf32>
    %759 = arith.addf %753, %758 : vector<16x16xf32>
    %c122 = arith.constant 122 : index
    %760 = memref.load %arg1[%c122] : memref<288xf32, #tpu.memory_space<smem>>
    %c0_509 = arith.constant 0 : index
    %c1_510 = arith.constant 1 : index
    %c1_511 = arith.constant 1 : index
    %c2_512 = arith.constant 2 : index
    %761 = vector.load %arg3[%c0_509, %c1_510, %c1_511, %c2_512] : memref<1x4x18x18xf32, #tpu.memory_space<vmem>>, vector<1x1x16x16xf32>
    %762 = vector.shape_cast %761 : vector<1x1x16x16xf32> to vector<16x16xf32>
    %763 = vector.broadcast %760 : f32 to vector<16x16xf32>
    %764 = arith.mulf %762, %763 : vector<16x16xf32>
    %765 = arith.addf %759, %764 : vector<16x16xf32>
    %c123 = arith.constant 123 : index
    %766 = memref.load %arg1[%c123] : memref<288xf32, #tpu.memory_space<smem>>
    %c0_513 = arith.constant 0 : index
    %c1_514 = arith.constant 1 : index
    %c2_515 = arith.constant 2 : index
    %c0_516 = arith.constant 0 : index
    %767 = vector.load %arg3[%c0_513, %c1_514, %c2_515, %c0_516] : memref<1x4x18x18xf32, #tpu.memory_space<vmem>>, vector<1x1x16x16xf32>
    %768 = vector.shape_cast %767 : vector<1x1x16x16xf32> to vector<16x16xf32>
    %769 = vector.broadcast %766 : f32 to vector<16x16xf32>
    %770 = arith.mulf %768, %769 : vector<16x16xf32>
    %771 = arith.addf %765, %770 : vector<16x16xf32>
    %c124 = arith.constant 124 : index
    %772 = memref.load %arg1[%c124] : memref<288xf32, #tpu.memory_space<smem>>
    %c0_517 = arith.constant 0 : index
    %c1_518 = arith.constant 1 : index
    %c2_519 = arith.constant 2 : index
    %c1_520 = arith.constant 1 : index
    %773 = vector.load %arg3[%c0_517, %c1_518, %c2_519, %c1_520] : memref<1x4x18x18xf32, #tpu.memory_space<vmem>>, vector<1x1x16x16xf32>
    %774 = vector.shape_cast %773 : vector<1x1x16x16xf32> to vector<16x16xf32>
    %775 = vector.broadcast %772 : f32 to vector<16x16xf32>
    %776 = arith.mulf %774, %775 : vector<16x16xf32>
    %777 = arith.addf %771, %776 : vector<16x16xf32>
    %c125 = arith.constant 125 : index
    %778 = memref.load %arg1[%c125] : memref<288xf32, #tpu.memory_space<smem>>
    %c0_521 = arith.constant 0 : index
    %c1_522 = arith.constant 1 : index
    %c2_523 = arith.constant 2 : index
    %c2_524 = arith.constant 2 : index
    %779 = vector.load %arg3[%c0_521, %c1_522, %c2_523, %c2_524] : memref<1x4x18x18xf32, #tpu.memory_space<vmem>>, vector<1x1x16x16xf32>
    %780 = vector.shape_cast %779 : vector<1x1x16x16xf32> to vector<16x16xf32>
    %781 = vector.broadcast %778 : f32 to vector<16x16xf32>
    %782 = arith.mulf %780, %781 : vector<16x16xf32>
    %783 = arith.addf %777, %782 : vector<16x16xf32>
    %c126 = arith.constant 126 : index
    %784 = memref.load %arg1[%c126] : memref<288xf32, #tpu.memory_space<smem>>
    %c0_525 = arith.constant 0 : index
    %c2_526 = arith.constant 2 : index
    %c0_527 = arith.constant 0 : index
    %c0_528 = arith.constant 0 : index
    %785 = vector.load %arg3[%c0_525, %c2_526, %c0_527, %c0_528] : memref<1x4x18x18xf32, #tpu.memory_space<vmem>>, vector<1x1x16x16xf32>
    %786 = vector.shape_cast %785 : vector<1x1x16x16xf32> to vector<16x16xf32>
    %787 = vector.broadcast %784 : f32 to vector<16x16xf32>
    %788 = arith.mulf %786, %787 : vector<16x16xf32>
    %789 = arith.addf %783, %788 : vector<16x16xf32>
    %c127 = arith.constant 127 : index
    %790 = memref.load %arg1[%c127] : memref<288xf32, #tpu.memory_space<smem>>
    %c0_529 = arith.constant 0 : index
    %c2_530 = arith.constant 2 : index
    %c0_531 = arith.constant 0 : index
    %c1_532 = arith.constant 1 : index
    %791 = vector.load %arg3[%c0_529, %c2_530, %c0_531, %c1_532] : memref<1x4x18x18xf32, #tpu.memory_space<vmem>>, vector<1x1x16x16xf32>
    %792 = vector.shape_cast %791 : vector<1x1x16x16xf32> to vector<16x16xf32>
    %793 = vector.broadcast %790 : f32 to vector<16x16xf32>
    %794 = arith.mulf %792, %793 : vector<16x16xf32>
    %795 = arith.addf %789, %794 : vector<16x16xf32>
    %c128 = arith.constant 128 : index
    %796 = memref.load %arg1[%c128] : memref<288xf32, #tpu.memory_space<smem>>
    %c0_533 = arith.constant 0 : index
    %c2_534 = arith.constant 2 : index
    %c0_535 = arith.constant 0 : index
    %c2_536 = arith.constant 2 : index
    %797 = vector.load %arg3[%c0_533, %c2_534, %c0_535, %c2_536] : memref<1x4x18x18xf32, #tpu.memory_space<vmem>>, vector<1x1x16x16xf32>
    %798 = vector.shape_cast %797 : vector<1x1x16x16xf32> to vector<16x16xf32>
    %799 = vector.broadcast %796 : f32 to vector<16x16xf32>
    %800 = arith.mulf %798, %799 : vector<16x16xf32>
    %801 = arith.addf %795, %800 : vector<16x16xf32>
    %c129 = arith.constant 129 : index
    %802 = memref.load %arg1[%c129] : memref<288xf32, #tpu.memory_space<smem>>
    %c0_537 = arith.constant 0 : index
    %c2_538 = arith.constant 2 : index
    %c1_539 = arith.constant 1 : index
    %c0_540 = arith.constant 0 : index
    %803 = vector.load %arg3[%c0_537, %c2_538, %c1_539, %c0_540] : memref<1x4x18x18xf32, #tpu.memory_space<vmem>>, vector<1x1x16x16xf32>
    %804 = vector.shape_cast %803 : vector<1x1x16x16xf32> to vector<16x16xf32>
    %805 = vector.broadcast %802 : f32 to vector<16x16xf32>
    %806 = arith.mulf %804, %805 : vector<16x16xf32>
    %807 = arith.addf %801, %806 : vector<16x16xf32>
    %c130 = arith.constant 130 : index
    %808 = memref.load %arg1[%c130] : memref<288xf32, #tpu.memory_space<smem>>
    %c0_541 = arith.constant 0 : index
    %c2_542 = arith.constant 2 : index
    %c1_543 = arith.constant 1 : index
    %c1_544 = arith.constant 1 : index
    %809 = vector.load %arg3[%c0_541, %c2_542, %c1_543, %c1_544] : memref<1x4x18x18xf32, #tpu.memory_space<vmem>>, vector<1x1x16x16xf32>
    %810 = vector.shape_cast %809 : vector<1x1x16x16xf32> to vector<16x16xf32>
    %811 = vector.broadcast %808 : f32 to vector<16x16xf32>
    %812 = arith.mulf %810, %811 : vector<16x16xf32>
    %813 = arith.addf %807, %812 : vector<16x16xf32>
    %c131 = arith.constant 131 : index
    %814 = memref.load %arg1[%c131] : memref<288xf32, #tpu.memory_space<smem>>
    %c0_545 = arith.constant 0 : index
    %c2_546 = arith.constant 2 : index
    %c1_547 = arith.constant 1 : index
    %c2_548 = arith.constant 2 : index
    %815 = vector.load %arg3[%c0_545, %c2_546, %c1_547, %c2_548] : memref<1x4x18x18xf32, #tpu.memory_space<vmem>>, vector<1x1x16x16xf32>
    %816 = vector.shape_cast %815 : vector<1x1x16x16xf32> to vector<16x16xf32>
    %817 = vector.broadcast %814 : f32 to vector<16x16xf32>
    %818 = arith.mulf %816, %817 : vector<16x16xf32>
    %819 = arith.addf %813, %818 : vector<16x16xf32>
    %c132 = arith.constant 132 : index
    %820 = memref.load %arg1[%c132] : memref<288xf32, #tpu.memory_space<smem>>
    %c0_549 = arith.constant 0 : index
    %c2_550 = arith.constant 2 : index
    %c2_551 = arith.constant 2 : index
    %c0_552 = arith.constant 0 : index
    %821 = vector.load %arg3[%c0_549, %c2_550, %c2_551, %c0_552] : memref<1x4x18x18xf32, #tpu.memory_space<vmem>>, vector<1x1x16x16xf32>
    %822 = vector.shape_cast %821 : vector<1x1x16x16xf32> to vector<16x16xf32>
    %823 = vector.broadcast %820 : f32 to vector<16x16xf32>
    %824 = arith.mulf %822, %823 : vector<16x16xf32>
    %825 = arith.addf %819, %824 : vector<16x16xf32>
    %c133 = arith.constant 133 : index
    %826 = memref.load %arg1[%c133] : memref<288xf32, #tpu.memory_space<smem>>
    %c0_553 = arith.constant 0 : index
    %c2_554 = arith.constant 2 : index
    %c2_555 = arith.constant 2 : index
    %c1_556 = arith.constant 1 : index
    %827 = vector.load %arg3[%c0_553, %c2_554, %c2_555, %c1_556] : memref<1x4x18x18xf32, #tpu.memory_space<vmem>>, vector<1x1x16x16xf32>
    %828 = vector.shape_cast %827 : vector<1x1x16x16xf32> to vector<16x16xf32>
    %829 = vector.broadcast %826 : f32 to vector<16x16xf32>
    %830 = arith.mulf %828, %829 : vector<16x16xf32>
    %831 = arith.addf %825, %830 : vector<16x16xf32>
    %c134 = arith.constant 134 : index
    %832 = memref.load %arg1[%c134] : memref<288xf32, #tpu.memory_space<smem>>
    %c0_557 = arith.constant 0 : index
    %c2_558 = arith.constant 2 : index
    %c2_559 = arith.constant 2 : index
    %c2_560 = arith.constant 2 : index
    %833 = vector.load %arg3[%c0_557, %c2_558, %c2_559, %c2_560] : memref<1x4x18x18xf32, #tpu.memory_space<vmem>>, vector<1x1x16x16xf32>
    %834 = vector.shape_cast %833 : vector<1x1x16x16xf32> to vector<16x16xf32>
    %835 = vector.broadcast %832 : f32 to vector<16x16xf32>
    %836 = arith.mulf %834, %835 : vector<16x16xf32>
    %837 = arith.addf %831, %836 : vector<16x16xf32>
    %c135 = arith.constant 135 : index
    %838 = memref.load %arg1[%c135] : memref<288xf32, #tpu.memory_space<smem>>
    %c0_561 = arith.constant 0 : index
    %c3_562 = arith.constant 3 : index
    %c0_563 = arith.constant 0 : index
    %c0_564 = arith.constant 0 : index
    %839 = vector.load %arg3[%c0_561, %c3_562, %c0_563, %c0_564] : memref<1x4x18x18xf32, #tpu.memory_space<vmem>>, vector<1x1x16x16xf32>
    %840 = vector.shape_cast %839 : vector<1x1x16x16xf32> to vector<16x16xf32>
    %841 = vector.broadcast %838 : f32 to vector<16x16xf32>
    %842 = arith.mulf %840, %841 : vector<16x16xf32>
    %843 = arith.addf %837, %842 : vector<16x16xf32>
    %c136 = arith.constant 136 : index
    %844 = memref.load %arg1[%c136] : memref<288xf32, #tpu.memory_space<smem>>
    %c0_565 = arith.constant 0 : index
    %c3_566 = arith.constant 3 : index
    %c0_567 = arith.constant 0 : index
    %c1_568 = arith.constant 1 : index
    %845 = vector.load %arg3[%c0_565, %c3_566, %c0_567, %c1_568] : memref<1x4x18x18xf32, #tpu.memory_space<vmem>>, vector<1x1x16x16xf32>
    %846 = vector.shape_cast %845 : vector<1x1x16x16xf32> to vector<16x16xf32>
    %847 = vector.broadcast %844 : f32 to vector<16x16xf32>
    %848 = arith.mulf %846, %847 : vector<16x16xf32>
    %849 = arith.addf %843, %848 : vector<16x16xf32>
    %c137 = arith.constant 137 : index
    %850 = memref.load %arg1[%c137] : memref<288xf32, #tpu.memory_space<smem>>
    %c0_569 = arith.constant 0 : index
    %c3_570 = arith.constant 3 : index
    %c0_571 = arith.constant 0 : index
    %c2_572 = arith.constant 2 : index
    %851 = vector.load %arg3[%c0_569, %c3_570, %c0_571, %c2_572] : memref<1x4x18x18xf32, #tpu.memory_space<vmem>>, vector<1x1x16x16xf32>
    %852 = vector.shape_cast %851 : vector<1x1x16x16xf32> to vector<16x16xf32>
    %853 = vector.broadcast %850 : f32 to vector<16x16xf32>
    %854 = arith.mulf %852, %853 : vector<16x16xf32>
    %855 = arith.addf %849, %854 : vector<16x16xf32>
    %c138 = arith.constant 138 : index
    %856 = memref.load %arg1[%c138] : memref<288xf32, #tpu.memory_space<smem>>
    %c0_573 = arith.constant 0 : index
    %c3_574 = arith.constant 3 : index
    %c1_575 = arith.constant 1 : index
    %c0_576 = arith.constant 0 : index
    %857 = vector.load %arg3[%c0_573, %c3_574, %c1_575, %c0_576] : memref<1x4x18x18xf32, #tpu.memory_space<vmem>>, vector<1x1x16x16xf32>
    %858 = vector.shape_cast %857 : vector<1x1x16x16xf32> to vector<16x16xf32>
    %859 = vector.broadcast %856 : f32 to vector<16x16xf32>
    %860 = arith.mulf %858, %859 : vector<16x16xf32>
    %861 = arith.addf %855, %860 : vector<16x16xf32>
    %c139 = arith.constant 139 : index
    %862 = memref.load %arg1[%c139] : memref<288xf32, #tpu.memory_space<smem>>
    %c0_577 = arith.constant 0 : index
    %c3_578 = arith.constant 3 : index
    %c1_579 = arith.constant 1 : index
    %c1_580 = arith.constant 1 : index
    %863 = vector.load %arg3[%c0_577, %c3_578, %c1_579, %c1_580] : memref<1x4x18x18xf32, #tpu.memory_space<vmem>>, vector<1x1x16x16xf32>
    %864 = vector.shape_cast %863 : vector<1x1x16x16xf32> to vector<16x16xf32>
    %865 = vector.broadcast %862 : f32 to vector<16x16xf32>
    %866 = arith.mulf %864, %865 : vector<16x16xf32>
    %867 = arith.addf %861, %866 : vector<16x16xf32>
    %c140 = arith.constant 140 : index
    %868 = memref.load %arg1[%c140] : memref<288xf32, #tpu.memory_space<smem>>
    %c0_581 = arith.constant 0 : index
    %c3_582 = arith.constant 3 : index
    %c1_583 = arith.constant 1 : index
    %c2_584 = arith.constant 2 : index
    %869 = vector.load %arg3[%c0_581, %c3_582, %c1_583, %c2_584] : memref<1x4x18x18xf32, #tpu.memory_space<vmem>>, vector<1x1x16x16xf32>
    %870 = vector.shape_cast %869 : vector<1x1x16x16xf32> to vector<16x16xf32>
    %871 = vector.broadcast %868 : f32 to vector<16x16xf32>
    %872 = arith.mulf %870, %871 : vector<16x16xf32>
    %873 = arith.addf %867, %872 : vector<16x16xf32>
    %c141 = arith.constant 141 : index
    %874 = memref.load %arg1[%c141] : memref<288xf32, #tpu.memory_space<smem>>
    %c0_585 = arith.constant 0 : index
    %c3_586 = arith.constant 3 : index
    %c2_587 = arith.constant 2 : index
    %c0_588 = arith.constant 0 : index
    %875 = vector.load %arg3[%c0_585, %c3_586, %c2_587, %c0_588] : memref<1x4x18x18xf32, #tpu.memory_space<vmem>>, vector<1x1x16x16xf32>
    %876 = vector.shape_cast %875 : vector<1x1x16x16xf32> to vector<16x16xf32>
    %877 = vector.broadcast %874 : f32 to vector<16x16xf32>
    %878 = arith.mulf %876, %877 : vector<16x16xf32>
    %879 = arith.addf %873, %878 : vector<16x16xf32>
    %c142 = arith.constant 142 : index
    %880 = memref.load %arg1[%c142] : memref<288xf32, #tpu.memory_space<smem>>
    %c0_589 = arith.constant 0 : index
    %c3_590 = arith.constant 3 : index
    %c2_591 = arith.constant 2 : index
    %c1_592 = arith.constant 1 : index
    %881 = vector.load %arg3[%c0_589, %c3_590, %c2_591, %c1_592] : memref<1x4x18x18xf32, #tpu.memory_space<vmem>>, vector<1x1x16x16xf32>
    %882 = vector.shape_cast %881 : vector<1x1x16x16xf32> to vector<16x16xf32>
    %883 = vector.broadcast %880 : f32 to vector<16x16xf32>
    %884 = arith.mulf %882, %883 : vector<16x16xf32>
    %885 = arith.addf %879, %884 : vector<16x16xf32>
    %c143 = arith.constant 143 : index
    %886 = memref.load %arg1[%c143] : memref<288xf32, #tpu.memory_space<smem>>
    %c0_593 = arith.constant 0 : index
    %c3_594 = arith.constant 3 : index
    %c2_595 = arith.constant 2 : index
    %c2_596 = arith.constant 2 : index
    %887 = vector.load %arg3[%c0_593, %c3_594, %c2_595, %c2_596] : memref<1x4x18x18xf32, #tpu.memory_space<vmem>>, vector<1x1x16x16xf32>
    %888 = vector.shape_cast %887 : vector<1x1x16x16xf32> to vector<16x16xf32>
    %889 = vector.broadcast %886 : f32 to vector<16x16xf32>
    %890 = arith.mulf %888, %889 : vector<16x16xf32>
    %891 = arith.addf %885, %890 : vector<16x16xf32>
    %c3_597 = arith.constant 3 : index
    %892 = memref.load %arg2[%c3_597] : memref<8xf32, #tpu.memory_space<smem>>
    %893 = vector.broadcast %892 : f32 to vector<16x16xf32>
    %894 = arith.addf %891, %893 : vector<16x16xf32>
    %cst_598 = arith.constant 0.000000e+00 : f32
    %895 = vector.broadcast %cst_598 : f32 to vector<16x16xf32>
    %896 = arith.maximumf %894, %895 : vector<16x16xf32>
    %c0_599 = arith.constant 0 : index
    %c3_600 = arith.constant 3 : index
    %c0_601 = arith.constant 0 : index
    %c0_602 = arith.constant 0 : index
    %897 = vector.load %arg4[%c0_599, %c3_600, %c0_601, %c0_602] : memref<1x8x16x16xf32, #tpu.memory_space<vmem>>, vector<1x1x16x16xf32>
    %898 = vector.shape_cast %897 : vector<1x1x16x16xf32> to vector<16x16xf32>
    %899 = vector.shape_cast %896 : vector<16x16xf32> to vector<1x1x16x16xf32>
    tpu.vector_store %arg4[%c0_599, %c3_600, %c0_601, %c0_602], %899 {strides = array<i32>} : memref<1x8x16x16xf32, #tpu.memory_space<vmem>>, vector<1x1x16x16xf32>,
    %cst_603 = arith.constant 0.000000e+00 : f32
    %900 = vector.broadcast %cst_603 : f32 to vector<16x16xf32>
    %c144 = arith.constant 144 : index
    %901 = memref.load %arg1[%c144] : memref<288xf32, #tpu.memory_space<smem>>
    %c0_604 = arith.constant 0 : index
    %c0_605 = arith.constant 0 : index
    %c0_606 = arith.constant 0 : index
    %c0_607 = arith.constant 0 : index
    %902 = vector.load %arg3[%c0_604, %c0_605, %c0_606, %c0_607] : memref<1x4x18x18xf32, #tpu.memory_space<vmem>>, vector<1x1x16x16xf32>
    %903 = vector.shape_cast %902 : vector<1x1x16x16xf32> to vector<16x16xf32>
    %904 = vector.broadcast %901 : f32 to vector<16x16xf32>
    %905 = arith.mulf %903, %904 : vector<16x16xf32>
    %906 = arith.addf %900, %905 : vector<16x16xf32>
    %c145 = arith.constant 145 : index
    %907 = memref.load %arg1[%c145] : memref<288xf32, #tpu.memory_space<smem>>
    %c0_608 = arith.constant 0 : index
    %c0_609 = arith.constant 0 : index
    %c0_610 = arith.constant 0 : index
    %c1_611 = arith.constant 1 : index
    %908 = vector.load %arg3[%c0_608, %c0_609, %c0_610, %c1_611] : memref<1x4x18x18xf32, #tpu.memory_space<vmem>>, vector<1x1x16x16xf32>
    %909 = vector.shape_cast %908 : vector<1x1x16x16xf32> to vector<16x16xf32>
    %910 = vector.broadcast %907 : f32 to vector<16x16xf32>
    %911 = arith.mulf %909, %910 : vector<16x16xf32>
    %912 = arith.addf %906, %911 : vector<16x16xf32>
    %c146 = arith.constant 146 : index
    %913 = memref.load %arg1[%c146] : memref<288xf32, #tpu.memory_space<smem>>
    %c0_612 = arith.constant 0 : index
    %c0_613 = arith.constant 0 : index
    %c0_614 = arith.constant 0 : index
    %c2_615 = arith.constant 2 : index
    %914 = vector.load %arg3[%c0_612, %c0_613, %c0_614, %c2_615] : memref<1x4x18x18xf32, #tpu.memory_space<vmem>>, vector<1x1x16x16xf32>
    %915 = vector.shape_cast %914 : vector<1x1x16x16xf32> to vector<16x16xf32>
    %916 = vector.broadcast %913 : f32 to vector<16x16xf32>
    %917 = arith.mulf %915, %916 : vector<16x16xf32>
    %918 = arith.addf %912, %917 : vector<16x16xf32>
    %c147 = arith.constant 147 : index
    %919 = memref.load %arg1[%c147] : memref<288xf32, #tpu.memory_space<smem>>
    %c0_616 = arith.constant 0 : index
    %c0_617 = arith.constant 0 : index
    %c1_618 = arith.constant 1 : index
    %c0_619 = arith.constant 0 : index
    %920 = vector.load %arg3[%c0_616, %c0_617, %c1_618, %c0_619] : memref<1x4x18x18xf32, #tpu.memory_space<vmem>>, vector<1x1x16x16xf32>
    %921 = vector.shape_cast %920 : vector<1x1x16x16xf32> to vector<16x16xf32>
    %922 = vector.broadcast %919 : f32 to vector<16x16xf32>
    %923 = arith.mulf %921, %922 : vector<16x16xf32>
    %924 = arith.addf %918, %923 : vector<16x16xf32>
    %c148 = arith.constant 148 : index
    %925 = memref.load %arg1[%c148] : memref<288xf32, #tpu.memory_space<smem>>
    %c0_620 = arith.constant 0 : index
    %c0_621 = arith.constant 0 : index
    %c1_622 = arith.constant 1 : index
    %c1_623 = arith.constant 1 : index
    %926 = vector.load %arg3[%c0_620, %c0_621, %c1_622, %c1_623] : memref<1x4x18x18xf32, #tpu.memory_space<vmem>>, vector<1x1x16x16xf32>
    %927 = vector.shape_cast %926 : vector<1x1x16x16xf32> to vector<16x16xf32>
    %928 = vector.broadcast %925 : f32 to vector<16x16xf32>
    %929 = arith.mulf %927, %928 : vector<16x16xf32>
    %930 = arith.addf %924, %929 : vector<16x16xf32>
    %c149 = arith.constant 149 : index
    %931 = memref.load %arg1[%c149] : memref<288xf32, #tpu.memory_space<smem>>
    %c0_624 = arith.constant 0 : index
    %c0_625 = arith.constant 0 : index
    %c1_626 = arith.constant 1 : index
    %c2_627 = arith.constant 2 : index
    %932 = vector.load %arg3[%c0_624, %c0_625, %c1_626, %c2_627] : memref<1x4x18x18xf32, #tpu.memory_space<vmem>>, vector<1x1x16x16xf32>
    %933 = vector.shape_cast %932 : vector<1x1x16x16xf32> to vector<16x16xf32>
    %934 = vector.broadcast %931 : f32 to vector<16x16xf32>
    %935 = arith.mulf %933, %934 : vector<16x16xf32>
    %936 = arith.addf %930, %935 : vector<16x16xf32>
    %c150 = arith.constant 150 : index
    %937 = memref.load %arg1[%c150] : memref<288xf32, #tpu.memory_space<smem>>
    %c0_628 = arith.constant 0 : index
    %c0_629 = arith.constant 0 : index
    %c2_630 = arith.constant 2 : index
    %c0_631 = arith.constant 0 : index
    %938 = vector.load %arg3[%c0_628, %c0_629, %c2_630, %c0_631] : memref<1x4x18x18xf32, #tpu.memory_space<vmem>>, vector<1x1x16x16xf32>
    %939 = vector.shape_cast %938 : vector<1x1x16x16xf32> to vector<16x16xf32>
    %940 = vector.broadcast %937 : f32 to vector<16x16xf32>
    %941 = arith.mulf %939, %940 : vector<16x16xf32>
    %942 = arith.addf %936, %941 : vector<16x16xf32>
    %c151 = arith.constant 151 : index
    %943 = memref.load %arg1[%c151] : memref<288xf32, #tpu.memory_space<smem>>
    %c0_632 = arith.constant 0 : index
    %c0_633 = arith.constant 0 : index
    %c2_634 = arith.constant 2 : index
    %c1_635 = arith.constant 1 : index
    %944 = vector.load %arg3[%c0_632, %c0_633, %c2_634, %c1_635] : memref<1x4x18x18xf32, #tpu.memory_space<vmem>>, vector<1x1x16x16xf32>
    %945 = vector.shape_cast %944 : vector<1x1x16x16xf32> to vector<16x16xf32>
    %946 = vector.broadcast %943 : f32 to vector<16x16xf32>
    %947 = arith.mulf %945, %946 : vector<16x16xf32>
    %948 = arith.addf %942, %947 : vector<16x16xf32>
    %c152 = arith.constant 152 : index
    %949 = memref.load %arg1[%c152] : memref<288xf32, #tpu.memory_space<smem>>
    %c0_636 = arith.constant 0 : index
    %c0_637 = arith.constant 0 : index
    %c2_638 = arith.constant 2 : index
    %c2_639 = arith.constant 2 : index
    %950 = vector.load %arg3[%c0_636, %c0_637, %c2_638, %c2_639] : memref<1x4x18x18xf32, #tpu.memory_space<vmem>>, vector<1x1x16x16xf32>
    %951 = vector.shape_cast %950 : vector<1x1x16x16xf32> to vector<16x16xf32>
    %952 = vector.broadcast %949 : f32 to vector<16x16xf32>
    %953 = arith.mulf %951, %952 : vector<16x16xf32>
    %954 = arith.addf %948, %953 : vector<16x16xf32>
    %c153 = arith.constant 153 : index
    %955 = memref.load %arg1[%c153] : memref<288xf32, #tpu.memory_space<smem>>
    %c0_640 = arith.constant 0 : index
    %c1_641 = arith.constant 1 : index
    %c0_642 = arith.constant 0 : index
    %c0_643 = arith.constant 0 : index
    %956 = vector.load %arg3[%c0_640, %c1_641, %c0_642, %c0_643] : memref<1x4x18x18xf32, #tpu.memory_space<vmem>>, vector<1x1x16x16xf32>
    %957 = vector.shape_cast %956 : vector<1x1x16x16xf32> to vector<16x16xf32>
    %958 = vector.broadcast %955 : f32 to vector<16x16xf32>
    %959 = arith.mulf %957, %958 : vector<16x16xf32>
    %960 = arith.addf %954, %959 : vector<16x16xf32>
    %c154 = arith.constant 154 : index
    %961 = memref.load %arg1[%c154] : memref<288xf32, #tpu.memory_space<smem>>
    %c0_644 = arith.constant 0 : index
    %c1_645 = arith.constant 1 : index
    %c0_646 = arith.constant 0 : index
    %c1_647 = arith.constant 1 : index
    %962 = vector.load %arg3[%c0_644, %c1_645, %c0_646, %c1_647] : memref<1x4x18x18xf32, #tpu.memory_space<vmem>>, vector<1x1x16x16xf32>
    %963 = vector.shape_cast %962 : vector<1x1x16x16xf32> to vector<16x16xf32>
    %964 = vector.broadcast %961 : f32 to vector<16x16xf32>
    %965 = arith.mulf %963, %964 : vector<16x16xf32>
    %966 = arith.addf %960, %965 : vector<16x16xf32>
    %c155 = arith.constant 155 : index
    %967 = memref.load %arg1[%c155] : memref<288xf32, #tpu.memory_space<smem>>
    %c0_648 = arith.constant 0 : index
    %c1_649 = arith.constant 1 : index
    %c0_650 = arith.constant 0 : index
    %c2_651 = arith.constant 2 : index
    %968 = vector.load %arg3[%c0_648, %c1_649, %c0_650, %c2_651] : memref<1x4x18x18xf32, #tpu.memory_space<vmem>>, vector<1x1x16x16xf32>
    %969 = vector.shape_cast %968 : vector<1x1x16x16xf32> to vector<16x16xf32>
    %970 = vector.broadcast %967 : f32 to vector<16x16xf32>
    %971 = arith.mulf %969, %970 : vector<16x16xf32>
    %972 = arith.addf %966, %971 : vector<16x16xf32>
    %c156 = arith.constant 156 : index
    %973 = memref.load %arg1[%c156] : memref<288xf32, #tpu.memory_space<smem>>
    %c0_652 = arith.constant 0 : index
    %c1_653 = arith.constant 1 : index
    %c1_654 = arith.constant 1 : index
    %c0_655 = arith.constant 0 : index
    %974 = vector.load %arg3[%c0_652, %c1_653, %c1_654, %c0_655] : memref<1x4x18x18xf32, #tpu.memory_space<vmem>>, vector<1x1x16x16xf32>
    %975 = vector.shape_cast %974 : vector<1x1x16x16xf32> to vector<16x16xf32>
    %976 = vector.broadcast %973 : f32 to vector<16x16xf32>
    %977 = arith.mulf %975, %976 : vector<16x16xf32>
    %978 = arith.addf %972, %977 : vector<16x16xf32>
    %c157 = arith.constant 157 : index
    %979 = memref.load %arg1[%c157] : memref<288xf32, #tpu.memory_space<smem>>
    %c0_656 = arith.constant 0 : index
    %c1_657 = arith.constant 1 : index
    %c1_658 = arith.constant 1 : index
    %c1_659 = arith.constant 1 : index
    %980 = vector.load %arg3[%c0_656, %c1_657, %c1_658, %c1_659] : memref<1x4x18x18xf32, #tpu.memory_space<vmem>>, vector<1x1x16x16xf32>
    %981 = vector.shape_cast %980 : vector<1x1x16x16xf32> to vector<16x16xf32>
    %982 = vector.broadcast %979 : f32 to vector<16x16xf32>
    %983 = arith.mulf %981, %982 : vector<16x16xf32>
    %984 = arith.addf %978, %983 : vector<16x16xf32>
    %c158 = arith.constant 158 : index
    %985 = memref.load %arg1[%c158] : memref<288xf32, #tpu.memory_space<smem>>
    %c0_660 = arith.constant 0 : index
    %c1_661 = arith.constant 1 : index
    %c1_662 = arith.constant 1 : index
    %c2_663 = arith.constant 2 : index
    %986 = vector.load %arg3[%c0_660, %c1_661, %c1_662, %c2_663] : memref<1x4x18x18xf32, #tpu.memory_space<vmem>>, vector<1x1x16x16xf32>
    %987 = vector.shape_cast %986 : vector<1x1x16x16xf32> to vector<16x16xf32>
    %988 = vector.broadcast %985 : f32 to vector<16x16xf32>
    %989 = arith.mulf %987, %988 : vector<16x16xf32>
    %990 = arith.addf %984, %989 : vector<16x16xf32>
    %c159 = arith.constant 159 : index
    %991 = memref.load %arg1[%c159] : memref<288xf32, #tpu.memory_space<smem>>
    %c0_664 = arith.constant 0 : index
    %c1_665 = arith.constant 1 : index
    %c2_666 = arith.constant 2 : index
    %c0_667 = arith.constant 0 : index
    %992 = vector.load %arg3[%c0_664, %c1_665, %c2_666, %c0_667] : memref<1x4x18x18xf32, #tpu.memory_space<vmem>>, vector<1x1x16x16xf32>
    %993 = vector.shape_cast %992 : vector<1x1x16x16xf32> to vector<16x16xf32>
    %994 = vector.broadcast %991 : f32 to vector<16x16xf32>
    %995 = arith.mulf %993, %994 : vector<16x16xf32>
    %996 = arith.addf %990, %995 : vector<16x16xf32>
    %c160 = arith.constant 160 : index
    %997 = memref.load %arg1[%c160] : memref<288xf32, #tpu.memory_space<smem>>
    %c0_668 = arith.constant 0 : index
    %c1_669 = arith.constant 1 : index
    %c2_670 = arith.constant 2 : index
    %c1_671 = arith.constant 1 : index
    %998 = vector.load %arg3[%c0_668, %c1_669, %c2_670, %c1_671] : memref<1x4x18x18xf32, #tpu.memory_space<vmem>>, vector<1x1x16x16xf32>
    %999 = vector.shape_cast %998 : vector<1x1x16x16xf32> to vector<16x16xf32>
    %1000 = vector.broadcast %997 : f32 to vector<16x16xf32>
    %1001 = arith.mulf %999, %1000 : vector<16x16xf32>
    %1002 = arith.addf %996, %1001 : vector<16x16xf32>
    %c161 = arith.constant 161 : index
    %1003 = memref.load %arg1[%c161] : memref<288xf32, #tpu.memory_space<smem>>
    %c0_672 = arith.constant 0 : index
    %c1_673 = arith.constant 1 : index
    %c2_674 = arith.constant 2 : index
    %c2_675 = arith.constant 2 : index
    %1004 = vector.load %arg3[%c0_672, %c1_673, %c2_674, %c2_675] : memref<1x4x18x18xf32, #tpu.memory_space<vmem>>, vector<1x1x16x16xf32>
    %1005 = vector.shape_cast %1004 : vector<1x1x16x16xf32> to vector<16x16xf32>
    %1006 = vector.broadcast %1003 : f32 to vector<16x16xf32>
    %1007 = arith.mulf %1005, %1006 : vector<16x16xf32>
    %1008 = arith.addf %1002, %1007 : vector<16x16xf32>
    %c162 = arith.constant 162 : index
    %1009 = memref.load %arg1[%c162] : memref<288xf32, #tpu.memory_space<smem>>
    %c0_676 = arith.constant 0 : index
    %c2_677 = arith.constant 2 : index
    %c0_678 = arith.constant 0 : index
    %c0_679 = arith.constant 0 : index
    %1010 = vector.load %arg3[%c0_676, %c2_677, %c0_678, %c0_679] : memref<1x4x18x18xf32, #tpu.memory_space<vmem>>, vector<1x1x16x16xf32>
    %1011 = vector.shape_cast %1010 : vector<1x1x16x16xf32> to vector<16x16xf32>
    %1012 = vector.broadcast %1009 : f32 to vector<16x16xf32>
    %1013 = arith.mulf %1011, %1012 : vector<16x16xf32>
    %1014 = arith.addf %1008, %1013 : vector<16x16xf32>
    %c163 = arith.constant 163 : index
    %1015 = memref.load %arg1[%c163] : memref<288xf32, #tpu.memory_space<smem>>
    %c0_680 = arith.constant 0 : index
    %c2_681 = arith.constant 2 : index
    %c0_682 = arith.constant 0 : index
    %c1_683 = arith.constant 1 : index
    %1016 = vector.load %arg3[%c0_680, %c2_681, %c0_682, %c1_683] : memref<1x4x18x18xf32, #tpu.memory_space<vmem>>, vector<1x1x16x16xf32>
    %1017 = vector.shape_cast %1016 : vector<1x1x16x16xf32> to vector<16x16xf32>
    %1018 = vector.broadcast %1015 : f32 to vector<16x16xf32>
    %1019 = arith.mulf %1017, %1018 : vector<16x16xf32>
    %1020 = arith.addf %1014, %1019 : vector<16x16xf32>
    %c164 = arith.constant 164 : index
    %1021 = memref.load %arg1[%c164] : memref<288xf32, #tpu.memory_space<smem>>
    %c0_684 = arith.constant 0 : index
    %c2_685 = arith.constant 2 : index
    %c0_686 = arith.constant 0 : index
    %c2_687 = arith.constant 2 : index
    %1022 = vector.load %arg3[%c0_684, %c2_685, %c0_686, %c2_687] : memref<1x4x18x18xf32, #tpu.memory_space<vmem>>, vector<1x1x16x16xf32>
    %1023 = vector.shape_cast %1022 : vector<1x1x16x16xf32> to vector<16x16xf32>
    %1024 = vector.broadcast %1021 : f32 to vector<16x16xf32>
    %1025 = arith.mulf %1023, %1024 : vector<16x16xf32>
    %1026 = arith.addf %1020, %1025 : vector<16x16xf32>
    %c165 = arith.constant 165 : index
    %1027 = memref.load %arg1[%c165] : memref<288xf32, #tpu.memory_space<smem>>
    %c0_688 = arith.constant 0 : index
    %c2_689 = arith.constant 2 : index
    %c1_690 = arith.constant 1 : index
    %c0_691 = arith.constant 0 : index
    %1028 = vector.load %arg3[%c0_688, %c2_689, %c1_690, %c0_691] : memref<1x4x18x18xf32, #tpu.memory_space<vmem>>, vector<1x1x16x16xf32>
    %1029 = vector.shape_cast %1028 : vector<1x1x16x16xf32> to vector<16x16xf32>
    %1030 = vector.broadcast %1027 : f32 to vector<16x16xf32>
    %1031 = arith.mulf %1029, %1030 : vector<16x16xf32>
    %1032 = arith.addf %1026, %1031 : vector<16x16xf32>
    %c166 = arith.constant 166 : index
    %1033 = memref.load %arg1[%c166] : memref<288xf32, #tpu.memory_space<smem>>
    %c0_692 = arith.constant 0 : index
    %c2_693 = arith.constant 2 : index
    %c1_694 = arith.constant 1 : index
    %c1_695 = arith.constant 1 : index
    %1034 = vector.load %arg3[%c0_692, %c2_693, %c1_694, %c1_695] : memref<1x4x18x18xf32, #tpu.memory_space<vmem>>, vector<1x1x16x16xf32>
    %1035 = vector.shape_cast %1034 : vector<1x1x16x16xf32> to vector<16x16xf32>
    %1036 = vector.broadcast %1033 : f32 to vector<16x16xf32>
    %1037 = arith.mulf %1035, %1036 : vector<16x16xf32>
    %1038 = arith.addf %1032, %1037 : vector<16x16xf32>
    %c167 = arith.constant 167 : index
    %1039 = memref.load %arg1[%c167] : memref<288xf32, #tpu.memory_space<smem>>
    %c0_696 = arith.constant 0 : index
    %c2_697 = arith.constant 2 : index
    %c1_698 = arith.constant 1 : index
    %c2_699 = arith.constant 2 : index
    %1040 = vector.load %arg3[%c0_696, %c2_697, %c1_698, %c2_699] : memref<1x4x18x18xf32, #tpu.memory_space<vmem>>, vector<1x1x16x16xf32>
    %1041 = vector.shape_cast %1040 : vector<1x1x16x16xf32> to vector<16x16xf32>
    %1042 = vector.broadcast %1039 : f32 to vector<16x16xf32>
    %1043 = arith.mulf %1041, %1042 : vector<16x16xf32>
    %1044 = arith.addf %1038, %1043 : vector<16x16xf32>
    %c168 = arith.constant 168 : index
    %1045 = memref.load %arg1[%c168] : memref<288xf32, #tpu.memory_space<smem>>
    %c0_700 = arith.constant 0 : index
    %c2_701 = arith.constant 2 : index
    %c2_702 = arith.constant 2 : index
    %c0_703 = arith.constant 0 : index
    %1046 = vector.load %arg3[%c0_700, %c2_701, %c2_702, %c0_703] : memref<1x4x18x18xf32, #tpu.memory_space<vmem>>, vector<1x1x16x16xf32>
    %1047 = vector.shape_cast %1046 : vector<1x1x16x16xf32> to vector<16x16xf32>
    %1048 = vector.broadcast %1045 : f32 to vector<16x16xf32>
    %1049 = arith.mulf %1047, %1048 : vector<16x16xf32>
    %1050 = arith.addf %1044, %1049 : vector<16x16xf32>
    %c169 = arith.constant 169 : index
    %1051 = memref.load %arg1[%c169] : memref<288xf32, #tpu.memory_space<smem>>
    %c0_704 = arith.constant 0 : index
    %c2_705 = arith.constant 2 : index
    %c2_706 = arith.constant 2 : index
    %c1_707 = arith.constant 1 : index
    %1052 = vector.load %arg3[%c0_704, %c2_705, %c2_706, %c1_707] : memref<1x4x18x18xf32, #tpu.memory_space<vmem>>, vector<1x1x16x16xf32>
    %1053 = vector.shape_cast %1052 : vector<1x1x16x16xf32> to vector<16x16xf32>
    %1054 = vector.broadcast %1051 : f32 to vector<16x16xf32>
    %1055 = arith.mulf %1053, %1054 : vector<16x16xf32>
    %1056 = arith.addf %1050, %1055 : vector<16x16xf32>
    %c170 = arith.constant 170 : index
    %1057 = memref.load %arg1[%c170] : memref<288xf32, #tpu.memory_space<smem>>
    %c0_708 = arith.constant 0 : index
    %c2_709 = arith.constant 2 : index
    %c2_710 = arith.constant 2 : index
    %c2_711 = arith.constant 2 : index
    %1058 = vector.load %arg3[%c0_708, %c2_709, %c2_710, %c2_711] : memref<1x4x18x18xf32, #tpu.memory_space<vmem>>, vector<1x1x16x16xf32>
    %1059 = vector.shape_cast %1058 : vector<1x1x16x16xf32> to vector<16x16xf32>
    %1060 = vector.broadcast %1057 : f32 to vector<16x16xf32>
    %1061 = arith.mulf %1059, %1060 : vector<16x16xf32>
    %1062 = arith.addf %1056, %1061 : vector<16x16xf32>
    %c171 = arith.constant 171 : index
    %1063 = memref.load %arg1[%c171] : memref<288xf32, #tpu.memory_space<smem>>
    %c0_712 = arith.constant 0 : index
    %c3_713 = arith.constant 3 : index
    %c0_714 = arith.constant 0 : index
    %c0_715 = arith.constant 0 : index
    %1064 = vector.load %arg3[%c0_712, %c3_713, %c0_714, %c0_715] : memref<1x4x18x18xf32, #tpu.memory_space<vmem>>, vector<1x1x16x16xf32>
    %1065 = vector.shape_cast %1064 : vector<1x1x16x16xf32> to vector<16x16xf32>
    %1066 = vector.broadcast %1063 : f32 to vector<16x16xf32>
    %1067 = arith.mulf %1065, %1066 : vector<16x16xf32>
    %1068 = arith.addf %1062, %1067 : vector<16x16xf32>
    %c172 = arith.constant 172 : index
    %1069 = memref.load %arg1[%c172] : memref<288xf32, #tpu.memory_space<smem>>
    %c0_716 = arith.constant 0 : index
    %c3_717 = arith.constant 3 : index
    %c0_718 = arith.constant 0 : index
    %c1_719 = arith.constant 1 : index
    %1070 = vector.load %arg3[%c0_716, %c3_717, %c0_718, %c1_719] : memref<1x4x18x18xf32, #tpu.memory_space<vmem>>, vector<1x1x16x16xf32>
    %1071 = vector.shape_cast %1070 : vector<1x1x16x16xf32> to vector<16x16xf32>
    %1072 = vector.broadcast %1069 : f32 to vector<16x16xf32>
    %1073 = arith.mulf %1071, %1072 : vector<16x16xf32>
    %1074 = arith.addf %1068, %1073 : vector<16x16xf32>
    %c173 = arith.constant 173 : index
    %1075 = memref.load %arg1[%c173] : memref<288xf32, #tpu.memory_space<smem>>
    %c0_720 = arith.constant 0 : index
    %c3_721 = arith.constant 3 : index
    %c0_722 = arith.constant 0 : index
    %c2_723 = arith.constant 2 : index
    %1076 = vector.load %arg3[%c0_720, %c3_721, %c0_722, %c2_723] : memref<1x4x18x18xf32, #tpu.memory_space<vmem>>, vector<1x1x16x16xf32>
    %1077 = vector.shape_cast %1076 : vector<1x1x16x16xf32> to vector<16x16xf32>
    %1078 = vector.broadcast %1075 : f32 to vector<16x16xf32>
    %1079 = arith.mulf %1077, %1078 : vector<16x16xf32>
    %1080 = arith.addf %1074, %1079 : vector<16x16xf32>
    %c174 = arith.constant 174 : index
    %1081 = memref.load %arg1[%c174] : memref<288xf32, #tpu.memory_space<smem>>
    %c0_724 = arith.constant 0 : index
    %c3_725 = arith.constant 3 : index
    %c1_726 = arith.constant 1 : index
    %c0_727 = arith.constant 0 : index
    %1082 = vector.load %arg3[%c0_724, %c3_725, %c1_726, %c0_727] : memref<1x4x18x18xf32, #tpu.memory_space<vmem>>, vector<1x1x16x16xf32>
    %1083 = vector.shape_cast %1082 : vector<1x1x16x16xf32> to vector<16x16xf32>
    %1084 = vector.broadcast %1081 : f32 to vector<16x16xf32>
    %1085 = arith.mulf %1083, %1084 : vector<16x16xf32>
    %1086 = arith.addf %1080, %1085 : vector<16x16xf32>
    %c175 = arith.constant 175 : index
    %1087 = memref.load %arg1[%c175] : memref<288xf32, #tpu.memory_space<smem>>
    %c0_728 = arith.constant 0 : index
    %c3_729 = arith.constant 3 : index
    %c1_730 = arith.constant 1 : index
    %c1_731 = arith.constant 1 : index
    %1088 = vector.load %arg3[%c0_728, %c3_729, %c1_730, %c1_731] : memref<1x4x18x18xf32, #tpu.memory_space<vmem>>, vector<1x1x16x16xf32>
    %1089 = vector.shape_cast %1088 : vector<1x1x16x16xf32> to vector<16x16xf32>
    %1090 = vector.broadcast %1087 : f32 to vector<16x16xf32>
    %1091 = arith.mulf %1089, %1090 : vector<16x16xf32>
    %1092 = arith.addf %1086, %1091 : vector<16x16xf32>
    %c176 = arith.constant 176 : index
    %1093 = memref.load %arg1[%c176] : memref<288xf32, #tpu.memory_space<smem>>
    %c0_732 = arith.constant 0 : index
    %c3_733 = arith.constant 3 : index
    %c1_734 = arith.constant 1 : index
    %c2_735 = arith.constant 2 : index
    %1094 = vector.load %arg3[%c0_732, %c3_733, %c1_734, %c2_735] : memref<1x4x18x18xf32, #tpu.memory_space<vmem>>, vector<1x1x16x16xf32>
    %1095 = vector.shape_cast %1094 : vector<1x1x16x16xf32> to vector<16x16xf32>
    %1096 = vector.broadcast %1093 : f32 to vector<16x16xf32>
    %1097 = arith.mulf %1095, %1096 : vector<16x16xf32>
    %1098 = arith.addf %1092, %1097 : vector<16x16xf32>
    %c177 = arith.constant 177 : index
    %1099 = memref.load %arg1[%c177] : memref<288xf32, #tpu.memory_space<smem>>
    %c0_736 = arith.constant 0 : index
    %c3_737 = arith.constant 3 : index
    %c2_738 = arith.constant 2 : index
    %c0_739 = arith.constant 0 : index
    %1100 = vector.load %arg3[%c0_736, %c3_737, %c2_738, %c0_739] : memref<1x4x18x18xf32, #tpu.memory_space<vmem>>, vector<1x1x16x16xf32>
    %1101 = vector.shape_cast %1100 : vector<1x1x16x16xf32> to vector<16x16xf32>
    %1102 = vector.broadcast %1099 : f32 to vector<16x16xf32>
    %1103 = arith.mulf %1101, %1102 : vector<16x16xf32>
    %1104 = arith.addf %1098, %1103 : vector<16x16xf32>
    %c178 = arith.constant 178 : index
    %1105 = memref.load %arg1[%c178] : memref<288xf32, #tpu.memory_space<smem>>
    %c0_740 = arith.constant 0 : index
    %c3_741 = arith.constant 3 : index
    %c2_742 = arith.constant 2 : index
    %c1_743 = arith.constant 1 : index
    %1106 = vector.load %arg3[%c0_740, %c3_741, %c2_742, %c1_743] : memref<1x4x18x18xf32, #tpu.memory_space<vmem>>, vector<1x1x16x16xf32>
    %1107 = vector.shape_cast %1106 : vector<1x1x16x16xf32> to vector<16x16xf32>
    %1108 = vector.broadcast %1105 : f32 to vector<16x16xf32>
    %1109 = arith.mulf %1107, %1108 : vector<16x16xf32>
    %1110 = arith.addf %1104, %1109 : vector<16x16xf32>
    %c179 = arith.constant 179 : index
    %1111 = memref.load %arg1[%c179] : memref<288xf32, #tpu.memory_space<smem>>
    %c0_744 = arith.constant 0 : index
    %c3_745 = arith.constant 3 : index
    %c2_746 = arith.constant 2 : index
    %c2_747 = arith.constant 2 : index
    %1112 = vector.load %arg3[%c0_744, %c3_745, %c2_746, %c2_747] : memref<1x4x18x18xf32, #tpu.memory_space<vmem>>, vector<1x1x16x16xf32>
    %1113 = vector.shape_cast %1112 : vector<1x1x16x16xf32> to vector<16x16xf32>
    %1114 = vector.broadcast %1111 : f32 to vector<16x16xf32>
    %1115 = arith.mulf %1113, %1114 : vector<16x16xf32>
    %1116 = arith.addf %1110, %1115 : vector<16x16xf32>
    %c4_748 = arith.constant 4 : index
    %1117 = memref.load %arg2[%c4_748] : memref<8xf32, #tpu.memory_space<smem>>
    %1118 = vector.broadcast %1117 : f32 to vector<16x16xf32>
    %1119 = arith.addf %1116, %1118 : vector<16x16xf32>
    %cst_749 = arith.constant 0.000000e+00 : f32
    %1120 = vector.broadcast %cst_749 : f32 to vector<16x16xf32>
    %1121 = arith.maximumf %1119, %1120 : vector<16x16xf32>
    %c0_750 = arith.constant 0 : index
    %c4_751 = arith.constant 4 : index
    %c0_752 = arith.constant 0 : index
    %c0_753 = arith.constant 0 : index
    %1122 = vector.load %arg4[%c0_750, %c4_751, %c0_752, %c0_753] : memref<1x8x16x16xf32, #tpu.memory_space<vmem>>, vector<1x1x16x16xf32>
    %1123 = vector.shape_cast %1122 : vector<1x1x16x16xf32> to vector<16x16xf32>
    %1124 = vector.shape_cast %1121 : vector<16x16xf32> to vector<1x1x16x16xf32>
    tpu.vector_store %arg4[%c0_750, %c4_751, %c0_752, %c0_753], %1124 {strides = array<i32>} : memref<1x8x16x16xf32, #tpu.memory_space<vmem>>, vector<1x1x16x16xf32>,
    %cst_754 = arith.constant 0.000000e+00 : f32
    %1125 = vector.broadcast %cst_754 : f32 to vector<16x16xf32>
    %c180 = arith.constant 180 : index
    %1126 = memref.load %arg1[%c180] : memref<288xf32, #tpu.memory_space<smem>>
    %c0_755 = arith.constant 0 : index
    %c0_756 = arith.constant 0 : index
    %c0_757 = arith.constant 0 : index
    %c0_758 = arith.constant 0 : index
    %1127 = vector.load %arg3[%c0_755, %c0_756, %c0_757, %c0_758] : memref<1x4x18x18xf32, #tpu.memory_space<vmem>>, vector<1x1x16x16xf32>
    %1128 = vector.shape_cast %1127 : vector<1x1x16x16xf32> to vector<16x16xf32>
    %1129 = vector.broadcast %1126 : f32 to vector<16x16xf32>
    %1130 = arith.mulf %1128, %1129 : vector<16x16xf32>
    %1131 = arith.addf %1125, %1130 : vector<16x16xf32>
    %c181 = arith.constant 181 : index
    %1132 = memref.load %arg1[%c181] : memref<288xf32, #tpu.memory_space<smem>>
    %c0_759 = arith.constant 0 : index
    %c0_760 = arith.constant 0 : index
    %c0_761 = arith.constant 0 : index
    %c1_762 = arith.constant 1 : index
    %1133 = vector.load %arg3[%c0_759, %c0_760, %c0_761, %c1_762] : memref<1x4x18x18xf32, #tpu.memory_space<vmem>>, vector<1x1x16x16xf32>
    %1134 = vector.shape_cast %1133 : vector<1x1x16x16xf32> to vector<16x16xf32>
    %1135 = vector.broadcast %1132 : f32 to vector<16x16xf32>
    %1136 = arith.mulf %1134, %1135 : vector<16x16xf32>
    %1137 = arith.addf %1131, %1136 : vector<16x16xf32>
    %c182 = arith.constant 182 : index
    %1138 = memref.load %arg1[%c182] : memref<288xf32, #tpu.memory_space<smem>>
    %c0_763 = arith.constant 0 : index
    %c0_764 = arith.constant 0 : index
    %c0_765 = arith.constant 0 : index
    %c2_766 = arith.constant 2 : index
    %1139 = vector.load %arg3[%c0_763, %c0_764, %c0_765, %c2_766] : memref<1x4x18x18xf32, #tpu.memory_space<vmem>>, vector<1x1x16x16xf32>
    %1140 = vector.shape_cast %1139 : vector<1x1x16x16xf32> to vector<16x16xf32>
    %1141 = vector.broadcast %1138 : f32 to vector<16x16xf32>
    %1142 = arith.mulf %1140, %1141 : vector<16x16xf32>
    %1143 = arith.addf %1137, %1142 : vector<16x16xf32>
    %c183 = arith.constant 183 : index
    %1144 = memref.load %arg1[%c183] : memref<288xf32, #tpu.memory_space<smem>>
    %c0_767 = arith.constant 0 : index
    %c0_768 = arith.constant 0 : index
    %c1_769 = arith.constant 1 : index
    %c0_770 = arith.constant 0 : index
    %1145 = vector.load %arg3[%c0_767, %c0_768, %c1_769, %c0_770] : memref<1x4x18x18xf32, #tpu.memory_space<vmem>>, vector<1x1x16x16xf32>
    %1146 = vector.shape_cast %1145 : vector<1x1x16x16xf32> to vector<16x16xf32>
    %1147 = vector.broadcast %1144 : f32 to vector<16x16xf32>
    %1148 = arith.mulf %1146, %1147 : vector<16x16xf32>
    %1149 = arith.addf %1143, %1148 : vector<16x16xf32>
    %c184 = arith.constant 184 : index
    %1150 = memref.load %arg1[%c184] : memref<288xf32, #tpu.memory_space<smem>>
    %c0_771 = arith.constant 0 : index
    %c0_772 = arith.constant 0 : index
    %c1_773 = arith.constant 1 : index
    %c1_774 = arith.constant 1 : index
    %1151 = vector.load %arg3[%c0_771, %c0_772, %c1_773, %c1_774] : memref<1x4x18x18xf32, #tpu.memory_space<vmem>>, vector<1x1x16x16xf32>
    %1152 = vector.shape_cast %1151 : vector<1x1x16x16xf32> to vector<16x16xf32>
    %1153 = vector.broadcast %1150 : f32 to vector<16x16xf32>
    %1154 = arith.mulf %1152, %1153 : vector<16x16xf32>
    %1155 = arith.addf %1149, %1154 : vector<16x16xf32>
    %c185 = arith.constant 185 : index
    %1156 = memref.load %arg1[%c185] : memref<288xf32, #tpu.memory_space<smem>>
    %c0_775 = arith.constant 0 : index
    %c0_776 = arith.constant 0 : index
    %c1_777 = arith.constant 1 : index
    %c2_778 = arith.constant 2 : index
    %1157 = vector.load %arg3[%c0_775, %c0_776, %c1_777, %c2_778] : memref<1x4x18x18xf32, #tpu.memory_space<vmem>>, vector<1x1x16x16xf32>
    %1158 = vector.shape_cast %1157 : vector<1x1x16x16xf32> to vector<16x16xf32>
    %1159 = vector.broadcast %1156 : f32 to vector<16x16xf32>
    %1160 = arith.mulf %1158, %1159 : vector<16x16xf32>
    %1161 = arith.addf %1155, %1160 : vector<16x16xf32>
    %c186 = arith.constant 186 : index
    %1162 = memref.load %arg1[%c186] : memref<288xf32, #tpu.memory_space<smem>>
    %c0_779 = arith.constant 0 : index
    %c0_780 = arith.constant 0 : index
    %c2_781 = arith.constant 2 : index
    %c0_782 = arith.constant 0 : index
    %1163 = vector.load %arg3[%c0_779, %c0_780, %c2_781, %c0_782] : memref<1x4x18x18xf32, #tpu.memory_space<vmem>>, vector<1x1x16x16xf32>
    %1164 = vector.shape_cast %1163 : vector<1x1x16x16xf32> to vector<16x16xf32>
    %1165 = vector.broadcast %1162 : f32 to vector<16x16xf32>
    %1166 = arith.mulf %1164, %1165 : vector<16x16xf32>
    %1167 = arith.addf %1161, %1166 : vector<16x16xf32>
    %c187 = arith.constant 187 : index
    %1168 = memref.load %arg1[%c187] : memref<288xf32, #tpu.memory_space<smem>>
    %c0_783 = arith.constant 0 : index
    %c0_784 = arith.constant 0 : index
    %c2_785 = arith.constant 2 : index
    %c1_786 = arith.constant 1 : index
    %1169 = vector.load %arg3[%c0_783, %c0_784, %c2_785, %c1_786] : memref<1x4x18x18xf32, #tpu.memory_space<vmem>>, vector<1x1x16x16xf32>
    %1170 = vector.shape_cast %1169 : vector<1x1x16x16xf32> to vector<16x16xf32>
    %1171 = vector.broadcast %1168 : f32 to vector<16x16xf32>
    %1172 = arith.mulf %1170, %1171 : vector<16x16xf32>
    %1173 = arith.addf %1167, %1172 : vector<16x16xf32>
    %c188 = arith.constant 188 : index
    %1174 = memref.load %arg1[%c188] : memref<288xf32, #tpu.memory_space<smem>>
    %c0_787 = arith.constant 0 : index
    %c0_788 = arith.constant 0 : index
    %c2_789 = arith.constant 2 : index
    %c2_790 = arith.constant 2 : index
    %1175 = vector.load %arg3[%c0_787, %c0_788, %c2_789, %c2_790] : memref<1x4x18x18xf32, #tpu.memory_space<vmem>>, vector<1x1x16x16xf32>
    %1176 = vector.shape_cast %1175 : vector<1x1x16x16xf32> to vector<16x16xf32>
    %1177 = vector.broadcast %1174 : f32 to vector<16x16xf32>
    %1178 = arith.mulf %1176, %1177 : vector<16x16xf32>
    %1179 = arith.addf %1173, %1178 : vector<16x16xf32>
    %c189 = arith.constant 189 : index
    %1180 = memref.load %arg1[%c189] : memref<288xf32, #tpu.memory_space<smem>>
    %c0_791 = arith.constant 0 : index
    %c1_792 = arith.constant 1 : index
    %c0_793 = arith.constant 0 : index
    %c0_794 = arith.constant 0 : index
    %1181 = vector.load %arg3[%c0_791, %c1_792, %c0_793, %c0_794] : memref<1x4x18x18xf32, #tpu.memory_space<vmem>>, vector<1x1x16x16xf32>
    %1182 = vector.shape_cast %1181 : vector<1x1x16x16xf32> to vector<16x16xf32>
    %1183 = vector.broadcast %1180 : f32 to vector<16x16xf32>
    %1184 = arith.mulf %1182, %1183 : vector<16x16xf32>
    %1185 = arith.addf %1179, %1184 : vector<16x16xf32>
    %c190 = arith.constant 190 : index
    %1186 = memref.load %arg1[%c190] : memref<288xf32, #tpu.memory_space<smem>>
    %c0_795 = arith.constant 0 : index
    %c1_796 = arith.constant 1 : index
    %c0_797 = arith.constant 0 : index
    %c1_798 = arith.constant 1 : index
    %1187 = vector.load %arg3[%c0_795, %c1_796, %c0_797, %c1_798] : memref<1x4x18x18xf32, #tpu.memory_space<vmem>>, vector<1x1x16x16xf32>
    %1188 = vector.shape_cast %1187 : vector<1x1x16x16xf32> to vector<16x16xf32>
    %1189 = vector.broadcast %1186 : f32 to vector<16x16xf32>
    %1190 = arith.mulf %1188, %1189 : vector<16x16xf32>
    %1191 = arith.addf %1185, %1190 : vector<16x16xf32>
    %c191 = arith.constant 191 : index
    %1192 = memref.load %arg1[%c191] : memref<288xf32, #tpu.memory_space<smem>>
    %c0_799 = arith.constant 0 : index
    %c1_800 = arith.constant 1 : index
    %c0_801 = arith.constant 0 : index
    %c2_802 = arith.constant 2 : index
    %1193 = vector.load %arg3[%c0_799, %c1_800, %c0_801, %c2_802] : memref<1x4x18x18xf32, #tpu.memory_space<vmem>>, vector<1x1x16x16xf32>
    %1194 = vector.shape_cast %1193 : vector<1x1x16x16xf32> to vector<16x16xf32>
    %1195 = vector.broadcast %1192 : f32 to vector<16x16xf32>
    %1196 = arith.mulf %1194, %1195 : vector<16x16xf32>
    %1197 = arith.addf %1191, %1196 : vector<16x16xf32>
    %c192 = arith.constant 192 : index
    %1198 = memref.load %arg1[%c192] : memref<288xf32, #tpu.memory_space<smem>>
    %c0_803 = arith.constant 0 : index
    %c1_804 = arith.constant 1 : index
    %c1_805 = arith.constant 1 : index
    %c0_806 = arith.constant 0 : index
    %1199 = vector.load %arg3[%c0_803, %c1_804, %c1_805, %c0_806] : memref<1x4x18x18xf32, #tpu.memory_space<vmem>>, vector<1x1x16x16xf32>
    %1200 = vector.shape_cast %1199 : vector<1x1x16x16xf32> to vector<16x16xf32>
    %1201 = vector.broadcast %1198 : f32 to vector<16x16xf32>
    %1202 = arith.mulf %1200, %1201 : vector<16x16xf32>
    %1203 = arith.addf %1197, %1202 : vector<16x16xf32>
    %c193 = arith.constant 193 : index
    %1204 = memref.load %arg1[%c193] : memref<288xf32, #tpu.memory_space<smem>>
    %c0_807 = arith.constant 0 : index
    %c1_808 = arith.constant 1 : index
    %c1_809 = arith.constant 1 : index
    %c1_810 = arith.constant 1 : index
    %1205 = vector.load %arg3[%c0_807, %c1_808, %c1_809, %c1_810] : memref<1x4x18x18xf32, #tpu.memory_space<vmem>>, vector<1x1x16x16xf32>
    %1206 = vector.shape_cast %1205 : vector<1x1x16x16xf32> to vector<16x16xf32>
    %1207 = vector.broadcast %1204 : f32 to vector<16x16xf32>
    %1208 = arith.mulf %1206, %1207 : vector<16x16xf32>
    %1209 = arith.addf %1203, %1208 : vector<16x16xf32>
    %c194 = arith.constant 194 : index
    %1210 = memref.load %arg1[%c194] : memref<288xf32, #tpu.memory_space<smem>>
    %c0_811 = arith.constant 0 : index
    %c1_812 = arith.constant 1 : index
    %c1_813 = arith.constant 1 : index
    %c2_814 = arith.constant 2 : index
    %1211 = vector.load %arg3[%c0_811, %c1_812, %c1_813, %c2_814] : memref<1x4x18x18xf32, #tpu.memory_space<vmem>>, vector<1x1x16x16xf32>
    %1212 = vector.shape_cast %1211 : vector<1x1x16x16xf32> to vector<16x16xf32>
    %1213 = vector.broadcast %1210 : f32 to vector<16x16xf32>
    %1214 = arith.mulf %1212, %1213 : vector<16x16xf32>
    %1215 = arith.addf %1209, %1214 : vector<16x16xf32>
    %c195 = arith.constant 195 : index
    %1216 = memref.load %arg1[%c195] : memref<288xf32, #tpu.memory_space<smem>>
    %c0_815 = arith.constant 0 : index
    %c1_816 = arith.constant 1 : index
    %c2_817 = arith.constant 2 : index
    %c0_818 = arith.constant 0 : index
    %1217 = vector.load %arg3[%c0_815, %c1_816, %c2_817, %c0_818] : memref<1x4x18x18xf32, #tpu.memory_space<vmem>>, vector<1x1x16x16xf32>
    %1218 = vector.shape_cast %1217 : vector<1x1x16x16xf32> to vector<16x16xf32>
    %1219 = vector.broadcast %1216 : f32 to vector<16x16xf32>
    %1220 = arith.mulf %1218, %1219 : vector<16x16xf32>
    %1221 = arith.addf %1215, %1220 : vector<16x16xf32>
    %c196 = arith.constant 196 : index
    %1222 = memref.load %arg1[%c196] : memref<288xf32, #tpu.memory_space<smem>>
    %c0_819 = arith.constant 0 : index
    %c1_820 = arith.constant 1 : index
    %c2_821 = arith.constant 2 : index
    %c1_822 = arith.constant 1 : index
    %1223 = vector.load %arg3[%c0_819, %c1_820, %c2_821, %c1_822] : memref<1x4x18x18xf32, #tpu.memory_space<vmem>>, vector<1x1x16x16xf32>
    %1224 = vector.shape_cast %1223 : vector<1x1x16x16xf32> to vector<16x16xf32>
    %1225 = vector.broadcast %1222 : f32 to vector<16x16xf32>
    %1226 = arith.mulf %1224, %1225 : vector<16x16xf32>
    %1227 = arith.addf %1221, %1226 : vector<16x16xf32>
    %c197 = arith.constant 197 : index
    %1228 = memref.load %arg1[%c197] : memref<288xf32, #tpu.memory_space<smem>>
    %c0_823 = arith.constant 0 : index
    %c1_824 = arith.constant 1 : index
    %c2_825 = arith.constant 2 : index
    %c2_826 = arith.constant 2 : index
    %1229 = vector.load %arg3[%c0_823, %c1_824, %c2_825, %c2_826] : memref<1x4x18x18xf32, #tpu.memory_space<vmem>>, vector<1x1x16x16xf32>
    %1230 = vector.shape_cast %1229 : vector<1x1x16x16xf32> to vector<16x16xf32>
    %1231 = vector.broadcast %1228 : f32 to vector<16x16xf32>
    %1232 = arith.mulf %1230, %1231 : vector<16x16xf32>
    %1233 = arith.addf %1227, %1232 : vector<16x16xf32>
    %c198 = arith.constant 198 : index
    %1234 = memref.load %arg1[%c198] : memref<288xf32, #tpu.memory_space<smem>>
    %c0_827 = arith.constant 0 : index
    %c2_828 = arith.constant 2 : index
    %c0_829 = arith.constant 0 : index
    %c0_830 = arith.constant 0 : index
    %1235 = vector.load %arg3[%c0_827, %c2_828, %c0_829, %c0_830] : memref<1x4x18x18xf32, #tpu.memory_space<vmem>>, vector<1x1x16x16xf32>
    %1236 = vector.shape_cast %1235 : vector<1x1x16x16xf32> to vector<16x16xf32>
    %1237 = vector.broadcast %1234 : f32 to vector<16x16xf32>
    %1238 = arith.mulf %1236, %1237 : vector<16x16xf32>
    %1239 = arith.addf %1233, %1238 : vector<16x16xf32>
    %c199 = arith.constant 199 : index
    %1240 = memref.load %arg1[%c199] : memref<288xf32, #tpu.memory_space<smem>>
    %c0_831 = arith.constant 0 : index
    %c2_832 = arith.constant 2 : index
    %c0_833 = arith.constant 0 : index
    %c1_834 = arith.constant 1 : index
    %1241 = vector.load %arg3[%c0_831, %c2_832, %c0_833, %c1_834] : memref<1x4x18x18xf32, #tpu.memory_space<vmem>>, vector<1x1x16x16xf32>
    %1242 = vector.shape_cast %1241 : vector<1x1x16x16xf32> to vector<16x16xf32>
    %1243 = vector.broadcast %1240 : f32 to vector<16x16xf32>
    %1244 = arith.mulf %1242, %1243 : vector<16x16xf32>
    %1245 = arith.addf %1239, %1244 : vector<16x16xf32>
    %c200 = arith.constant 200 : index
    %1246 = memref.load %arg1[%c200] : memref<288xf32, #tpu.memory_space<smem>>
    %c0_835 = arith.constant 0 : index
    %c2_836 = arith.constant 2 : index
    %c0_837 = arith.constant 0 : index
    %c2_838 = arith.constant 2 : index
    %1247 = vector.load %arg3[%c0_835, %c2_836, %c0_837, %c2_838] : memref<1x4x18x18xf32, #tpu.memory_space<vmem>>, vector<1x1x16x16xf32>
    %1248 = vector.shape_cast %1247 : vector<1x1x16x16xf32> to vector<16x16xf32>
    %1249 = vector.broadcast %1246 : f32 to vector<16x16xf32>
    %1250 = arith.mulf %1248, %1249 : vector<16x16xf32>
    %1251 = arith.addf %1245, %1250 : vector<16x16xf32>
    %c201 = arith.constant 201 : index
    %1252 = memref.load %arg1[%c201] : memref<288xf32, #tpu.memory_space<smem>>
    %c0_839 = arith.constant 0 : index
    %c2_840 = arith.constant 2 : index
    %c1_841 = arith.constant 1 : index
    %c0_842 = arith.constant 0 : index
    %1253 = vector.load %arg3[%c0_839, %c2_840, %c1_841, %c0_842] : memref<1x4x18x18xf32, #tpu.memory_space<vmem>>, vector<1x1x16x16xf32>
    %1254 = vector.shape_cast %1253 : vector<1x1x16x16xf32> to vector<16x16xf32>
    %1255 = vector.broadcast %1252 : f32 to vector<16x16xf32>
    %1256 = arith.mulf %1254, %1255 : vector<16x16xf32>
    %1257 = arith.addf %1251, %1256 : vector<16x16xf32>
    %c202 = arith.constant 202 : index
    %1258 = memref.load %arg1[%c202] : memref<288xf32, #tpu.memory_space<smem>>
    %c0_843 = arith.constant 0 : index
    %c2_844 = arith.constant 2 : index
    %c1_845 = arith.constant 1 : index
    %c1_846 = arith.constant 1 : index
    %1259 = vector.load %arg3[%c0_843, %c2_844, %c1_845, %c1_846] : memref<1x4x18x18xf32, #tpu.memory_space<vmem>>, vector<1x1x16x16xf32>
    %1260 = vector.shape_cast %1259 : vector<1x1x16x16xf32> to vector<16x16xf32>
    %1261 = vector.broadcast %1258 : f32 to vector<16x16xf32>
    %1262 = arith.mulf %1260, %1261 : vector<16x16xf32>
    %1263 = arith.addf %1257, %1262 : vector<16x16xf32>
    %c203 = arith.constant 203 : index
    %1264 = memref.load %arg1[%c203] : memref<288xf32, #tpu.memory_space<smem>>
    %c0_847 = arith.constant 0 : index
    %c2_848 = arith.constant 2 : index
    %c1_849 = arith.constant 1 : index
    %c2_850 = arith.constant 2 : index
    %1265 = vector.load %arg3[%c0_847, %c2_848, %c1_849, %c2_850] : memref<1x4x18x18xf32, #tpu.memory_space<vmem>>, vector<1x1x16x16xf32>
    %1266 = vector.shape_cast %1265 : vector<1x1x16x16xf32> to vector<16x16xf32>
    %1267 = vector.broadcast %1264 : f32 to vector<16x16xf32>
    %1268 = arith.mulf %1266, %1267 : vector<16x16xf32>
    %1269 = arith.addf %1263, %1268 : vector<16x16xf32>
    %c204 = arith.constant 204 : index
    %1270 = memref.load %arg1[%c204] : memref<288xf32, #tpu.memory_space<smem>>
    %c0_851 = arith.constant 0 : index
    %c2_852 = arith.constant 2 : index
    %c2_853 = arith.constant 2 : index
    %c0_854 = arith.constant 0 : index
    %1271 = vector.load %arg3[%c0_851, %c2_852, %c2_853, %c0_854] : memref<1x4x18x18xf32, #tpu.memory_space<vmem>>, vector<1x1x16x16xf32>
    %1272 = vector.shape_cast %1271 : vector<1x1x16x16xf32> to vector<16x16xf32>
    %1273 = vector.broadcast %1270 : f32 to vector<16x16xf32>
    %1274 = arith.mulf %1272, %1273 : vector<16x16xf32>
    %1275 = arith.addf %1269, %1274 : vector<16x16xf32>
    %c205 = arith.constant 205 : index
    %1276 = memref.load %arg1[%c205] : memref<288xf32, #tpu.memory_space<smem>>
    %c0_855 = arith.constant 0 : index
    %c2_856 = arith.constant 2 : index
    %c2_857 = arith.constant 2 : index
    %c1_858 = arith.constant 1 : index
    %1277 = vector.load %arg3[%c0_855, %c2_856, %c2_857, %c1_858] : memref<1x4x18x18xf32, #tpu.memory_space<vmem>>, vector<1x1x16x16xf32>
    %1278 = vector.shape_cast %1277 : vector<1x1x16x16xf32> to vector<16x16xf32>
    %1279 = vector.broadcast %1276 : f32 to vector<16x16xf32>
    %1280 = arith.mulf %1278, %1279 : vector<16x16xf32>
    %1281 = arith.addf %1275, %1280 : vector<16x16xf32>
    %c206 = arith.constant 206 : index
    %1282 = memref.load %arg1[%c206] : memref<288xf32, #tpu.memory_space<smem>>
    %c0_859 = arith.constant 0 : index
    %c2_860 = arith.constant 2 : index
    %c2_861 = arith.constant 2 : index
    %c2_862 = arith.constant 2 : index
    %1283 = vector.load %arg3[%c0_859, %c2_860, %c2_861, %c2_862] : memref<1x4x18x18xf32, #tpu.memory_space<vmem>>, vector<1x1x16x16xf32>
    %1284 = vector.shape_cast %1283 : vector<1x1x16x16xf32> to vector<16x16xf32>
    %1285 = vector.broadcast %1282 : f32 to vector<16x16xf32>
    %1286 = arith.mulf %1284, %1285 : vector<16x16xf32>
    %1287 = arith.addf %1281, %1286 : vector<16x16xf32>
    %c207 = arith.constant 207 : index
    %1288 = memref.load %arg1[%c207] : memref<288xf32, #tpu.memory_space<smem>>
    %c0_863 = arith.constant 0 : index
    %c3_864 = arith.constant 3 : index
    %c0_865 = arith.constant 0 : index
    %c0_866 = arith.constant 0 : index
    %1289 = vector.load %arg3[%c0_863, %c3_864, %c0_865, %c0_866] : memref<1x4x18x18xf32, #tpu.memory_space<vmem>>, vector<1x1x16x16xf32>
    %1290 = vector.shape_cast %1289 : vector<1x1x16x16xf32> to vector<16x16xf32>
    %1291 = vector.broadcast %1288 : f32 to vector<16x16xf32>
    %1292 = arith.mulf %1290, %1291 : vector<16x16xf32>
    %1293 = arith.addf %1287, %1292 : vector<16x16xf32>
    %c208 = arith.constant 208 : index
    %1294 = memref.load %arg1[%c208] : memref<288xf32, #tpu.memory_space<smem>>
    %c0_867 = arith.constant 0 : index
    %c3_868 = arith.constant 3 : index
    %c0_869 = arith.constant 0 : index
    %c1_870 = arith.constant 1 : index
    %1295 = vector.load %arg3[%c0_867, %c3_868, %c0_869, %c1_870] : memref<1x4x18x18xf32, #tpu.memory_space<vmem>>, vector<1x1x16x16xf32>
    %1296 = vector.shape_cast %1295 : vector<1x1x16x16xf32> to vector<16x16xf32>
    %1297 = vector.broadcast %1294 : f32 to vector<16x16xf32>
    %1298 = arith.mulf %1296, %1297 : vector<16x16xf32>
    %1299 = arith.addf %1293, %1298 : vector<16x16xf32>
    %c209 = arith.constant 209 : index
    %1300 = memref.load %arg1[%c209] : memref<288xf32, #tpu.memory_space<smem>>
    %c0_871 = arith.constant 0 : index
    %c3_872 = arith.constant 3 : index
    %c0_873 = arith.constant 0 : index
    %c2_874 = arith.constant 2 : index
    %1301 = vector.load %arg3[%c0_871, %c3_872, %c0_873, %c2_874] : memref<1x4x18x18xf32, #tpu.memory_space<vmem>>, vector<1x1x16x16xf32>
    %1302 = vector.shape_cast %1301 : vector<1x1x16x16xf32> to vector<16x16xf32>
    %1303 = vector.broadcast %1300 : f32 to vector<16x16xf32>
    %1304 = arith.mulf %1302, %1303 : vector<16x16xf32>
    %1305 = arith.addf %1299, %1304 : vector<16x16xf32>
    %c210 = arith.constant 210 : index
    %1306 = memref.load %arg1[%c210] : memref<288xf32, #tpu.memory_space<smem>>
    %c0_875 = arith.constant 0 : index
    %c3_876 = arith.constant 3 : index
    %c1_877 = arith.constant 1 : index
    %c0_878 = arith.constant 0 : index
    %1307 = vector.load %arg3[%c0_875, %c3_876, %c1_877, %c0_878] : memref<1x4x18x18xf32, #tpu.memory_space<vmem>>, vector<1x1x16x16xf32>
    %1308 = vector.shape_cast %1307 : vector<1x1x16x16xf32> to vector<16x16xf32>
    %1309 = vector.broadcast %1306 : f32 to vector<16x16xf32>
    %1310 = arith.mulf %1308, %1309 : vector<16x16xf32>
    %1311 = arith.addf %1305, %1310 : vector<16x16xf32>
    %c211 = arith.constant 211 : index
    %1312 = memref.load %arg1[%c211] : memref<288xf32, #tpu.memory_space<smem>>
    %c0_879 = arith.constant 0 : index
    %c3_880 = arith.constant 3 : index
    %c1_881 = arith.constant 1 : index
    %c1_882 = arith.constant 1 : index
    %1313 = vector.load %arg3[%c0_879, %c3_880, %c1_881, %c1_882] : memref<1x4x18x18xf32, #tpu.memory_space<vmem>>, vector<1x1x16x16xf32>
    %1314 = vector.shape_cast %1313 : vector<1x1x16x16xf32> to vector<16x16xf32>
    %1315 = vector.broadcast %1312 : f32 to vector<16x16xf32>
    %1316 = arith.mulf %1314, %1315 : vector<16x16xf32>
    %1317 = arith.addf %1311, %1316 : vector<16x16xf32>
    %c212 = arith.constant 212 : index
    %1318 = memref.load %arg1[%c212] : memref<288xf32, #tpu.memory_space<smem>>
    %c0_883 = arith.constant 0 : index
    %c3_884 = arith.constant 3 : index
    %c1_885 = arith.constant 1 : index
    %c2_886 = arith.constant 2 : index
    %1319 = vector.load %arg3[%c0_883, %c3_884, %c1_885, %c2_886] : memref<1x4x18x18xf32, #tpu.memory_space<vmem>>, vector<1x1x16x16xf32>
    %1320 = vector.shape_cast %1319 : vector<1x1x16x16xf32> to vector<16x16xf32>
    %1321 = vector.broadcast %1318 : f32 to vector<16x16xf32>
    %1322 = arith.mulf %1320, %1321 : vector<16x16xf32>
    %1323 = arith.addf %1317, %1322 : vector<16x16xf32>
    %c213 = arith.constant 213 : index
    %1324 = memref.load %arg1[%c213] : memref<288xf32, #tpu.memory_space<smem>>
    %c0_887 = arith.constant 0 : index
    %c3_888 = arith.constant 3 : index
    %c2_889 = arith.constant 2 : index
    %c0_890 = arith.constant 0 : index
    %1325 = vector.load %arg3[%c0_887, %c3_888, %c2_889, %c0_890] : memref<1x4x18x18xf32, #tpu.memory_space<vmem>>, vector<1x1x16x16xf32>
    %1326 = vector.shape_cast %1325 : vector<1x1x16x16xf32> to vector<16x16xf32>
    %1327 = vector.broadcast %1324 : f32 to vector<16x16xf32>
    %1328 = arith.mulf %1326, %1327 : vector<16x16xf32>
    %1329 = arith.addf %1323, %1328 : vector<16x16xf32>
    %c214 = arith.constant 214 : index
    %1330 = memref.load %arg1[%c214] : memref<288xf32, #tpu.memory_space<smem>>
    %c0_891 = arith.constant 0 : index
    %c3_892 = arith.constant 3 : index
    %c2_893 = arith.constant 2 : index
    %c1_894 = arith.constant 1 : index
    %1331 = vector.load %arg3[%c0_891, %c3_892, %c2_893, %c1_894] : memref<1x4x18x18xf32, #tpu.memory_space<vmem>>, vector<1x1x16x16xf32>
    %1332 = vector.shape_cast %1331 : vector<1x1x16x16xf32> to vector<16x16xf32>
    %1333 = vector.broadcast %1330 : f32 to vector<16x16xf32>
    %1334 = arith.mulf %1332, %1333 : vector<16x16xf32>
    %1335 = arith.addf %1329, %1334 : vector<16x16xf32>
    %c215 = arith.constant 215 : index
    %1336 = memref.load %arg1[%c215] : memref<288xf32, #tpu.memory_space<smem>>
    %c0_895 = arith.constant 0 : index
    %c3_896 = arith.constant 3 : index
    %c2_897 = arith.constant 2 : index
    %c2_898 = arith.constant 2 : index
    %1337 = vector.load %arg3[%c0_895, %c3_896, %c2_897, %c2_898] : memref<1x4x18x18xf32, #tpu.memory_space<vmem>>, vector<1x1x16x16xf32>
    %1338 = vector.shape_cast %1337 : vector<1x1x16x16xf32> to vector<16x16xf32>
    %1339 = vector.broadcast %1336 : f32 to vector<16x16xf32>
    %1340 = arith.mulf %1338, %1339 : vector<16x16xf32>
    %1341 = arith.addf %1335, %1340 : vector<16x16xf32>
    %c5_899 = arith.constant 5 : index
    %1342 = memref.load %arg2[%c5_899] : memref<8xf32, #tpu.memory_space<smem>>
    %1343 = vector.broadcast %1342 : f32 to vector<16x16xf32>
    %1344 = arith.addf %1341, %1343 : vector<16x16xf32>
    %cst_900 = arith.constant 0.000000e+00 : f32
    %1345 = vector.broadcast %cst_900 : f32 to vector<16x16xf32>
    %1346 = arith.maximumf %1344, %1345 : vector<16x16xf32>
    %c0_901 = arith.constant 0 : index
    %c5_902 = arith.constant 5 : index
    %c0_903 = arith.constant 0 : index
    %c0_904 = arith.constant 0 : index
    %1347 = vector.load %arg4[%c0_901, %c5_902, %c0_903, %c0_904] : memref<1x8x16x16xf32, #tpu.memory_space<vmem>>, vector<1x1x16x16xf32>
    %1348 = vector.shape_cast %1347 : vector<1x1x16x16xf32> to vector<16x16xf32>
    %1349 = vector.shape_cast %1346 : vector<16x16xf32> to vector<1x1x16x16xf32>
    tpu.vector_store %arg4[%c0_901, %c5_902, %c0_903, %c0_904], %1349 {strides = array<i32>} : memref<1x8x16x16xf32, #tpu.memory_space<vmem>>, vector<1x1x16x16xf32>,
    %cst_905 = arith.constant 0.000000e+00 : f32
    %1350 = vector.broadcast %cst_905 : f32 to vector<16x16xf32>
    %c216 = arith.constant 216 : index
    %1351 = memref.load %arg1[%c216] : memref<288xf32, #tpu.memory_space<smem>>
    %c0_906 = arith.constant 0 : index
    %c0_907 = arith.constant 0 : index
    %c0_908 = arith.constant 0 : index
    %c0_909 = arith.constant 0 : index
    %1352 = vector.load %arg3[%c0_906, %c0_907, %c0_908, %c0_909] : memref<1x4x18x18xf32, #tpu.memory_space<vmem>>, vector<1x1x16x16xf32>
    %1353 = vector.shape_cast %1352 : vector<1x1x16x16xf32> to vector<16x16xf32>
    %1354 = vector.broadcast %1351 : f32 to vector<16x16xf32>
    %1355 = arith.mulf %1353, %1354 : vector<16x16xf32>
    %1356 = arith.addf %1350, %1355 : vector<16x16xf32>
    %c217 = arith.constant 217 : index
    %1357 = memref.load %arg1[%c217] : memref<288xf32, #tpu.memory_space<smem>>
    %c0_910 = arith.constant 0 : index
    %c0_911 = arith.constant 0 : index
    %c0_912 = arith.constant 0 : index
    %c1_913 = arith.constant 1 : index
    %1358 = vector.load %arg3[%c0_910, %c0_911, %c0_912, %c1_913] : memref<1x4x18x18xf32, #tpu.memory_space<vmem>>, vector<1x1x16x16xf32>
    %1359 = vector.shape_cast %1358 : vector<1x1x16x16xf32> to vector<16x16xf32>
    %1360 = vector.broadcast %1357 : f32 to vector<16x16xf32>
    %1361 = arith.mulf %1359, %1360 : vector<16x16xf32>
    %1362 = arith.addf %1356, %1361 : vector<16x16xf32>
    %c218 = arith.constant 218 : index
    %1363 = memref.load %arg1[%c218] : memref<288xf32, #tpu.memory_space<smem>>
    %c0_914 = arith.constant 0 : index
    %c0_915 = arith.constant 0 : index
    %c0_916 = arith.constant 0 : index
    %c2_917 = arith.constant 2 : index
    %1364 = vector.load %arg3[%c0_914, %c0_915, %c0_916, %c2_917] : memref<1x4x18x18xf32, #tpu.memory_space<vmem>>, vector<1x1x16x16xf32>
    %1365 = vector.shape_cast %1364 : vector<1x1x16x16xf32> to vector<16x16xf32>
    %1366 = vector.broadcast %1363 : f32 to vector<16x16xf32>
    %1367 = arith.mulf %1365, %1366 : vector<16x16xf32>
    %1368 = arith.addf %1362, %1367 : vector<16x16xf32>
    %c219 = arith.constant 219 : index
    %1369 = memref.load %arg1[%c219] : memref<288xf32, #tpu.memory_space<smem>>
    %c0_918 = arith.constant 0 : index
    %c0_919 = arith.constant 0 : index
    %c1_920 = arith.constant 1 : index
    %c0_921 = arith.constant 0 : index
    %1370 = vector.load %arg3[%c0_918, %c0_919, %c1_920, %c0_921] : memref<1x4x18x18xf32, #tpu.memory_space<vmem>>, vector<1x1x16x16xf32>
    %1371 = vector.shape_cast %1370 : vector<1x1x16x16xf32> to vector<16x16xf32>
    %1372 = vector.broadcast %1369 : f32 to vector<16x16xf32>
    %1373 = arith.mulf %1371, %1372 : vector<16x16xf32>
    %1374 = arith.addf %1368, %1373 : vector<16x16xf32>
    %c220 = arith.constant 220 : index
    %1375 = memref.load %arg1[%c220] : memref<288xf32, #tpu.memory_space<smem>>
    %c0_922 = arith.constant 0 : index
    %c0_923 = arith.constant 0 : index
    %c1_924 = arith.constant 1 : index
    %c1_925 = arith.constant 1 : index
    %1376 = vector.load %arg3[%c0_922, %c0_923, %c1_924, %c1_925] : memref<1x4x18x18xf32, #tpu.memory_space<vmem>>, vector<1x1x16x16xf32>
    %1377 = vector.shape_cast %1376 : vector<1x1x16x16xf32> to vector<16x16xf32>
    %1378 = vector.broadcast %1375 : f32 to vector<16x16xf32>
    %1379 = arith.mulf %1377, %1378 : vector<16x16xf32>
    %1380 = arith.addf %1374, %1379 : vector<16x16xf32>
    %c221 = arith.constant 221 : index
    %1381 = memref.load %arg1[%c221] : memref<288xf32, #tpu.memory_space<smem>>
    %c0_926 = arith.constant 0 : index
    %c0_927 = arith.constant 0 : index
    %c1_928 = arith.constant 1 : index
    %c2_929 = arith.constant 2 : index
    %1382 = vector.load %arg3[%c0_926, %c0_927, %c1_928, %c2_929] : memref<1x4x18x18xf32, #tpu.memory_space<vmem>>, vector<1x1x16x16xf32>
    %1383 = vector.shape_cast %1382 : vector<1x1x16x16xf32> to vector<16x16xf32>
    %1384 = vector.broadcast %1381 : f32 to vector<16x16xf32>
    %1385 = arith.mulf %1383, %1384 : vector<16x16xf32>
    %1386 = arith.addf %1380, %1385 : vector<16x16xf32>
    %c222 = arith.constant 222 : index
    %1387 = memref.load %arg1[%c222] : memref<288xf32, #tpu.memory_space<smem>>
    %c0_930 = arith.constant 0 : index
    %c0_931 = arith.constant 0 : index
    %c2_932 = arith.constant 2 : index
    %c0_933 = arith.constant 0 : index
    %1388 = vector.load %arg3[%c0_930, %c0_931, %c2_932, %c0_933] : memref<1x4x18x18xf32, #tpu.memory_space<vmem>>, vector<1x1x16x16xf32>
    %1389 = vector.shape_cast %1388 : vector<1x1x16x16xf32> to vector<16x16xf32>
    %1390 = vector.broadcast %1387 : f32 to vector<16x16xf32>
    %1391 = arith.mulf %1389, %1390 : vector<16x16xf32>
    %1392 = arith.addf %1386, %1391 : vector<16x16xf32>
    %c223 = arith.constant 223 : index
    %1393 = memref.load %arg1[%c223] : memref<288xf32, #tpu.memory_space<smem>>
    %c0_934 = arith.constant 0 : index
    %c0_935 = arith.constant 0 : index
    %c2_936 = arith.constant 2 : index
    %c1_937 = arith.constant 1 : index
    %1394 = vector.load %arg3[%c0_934, %c0_935, %c2_936, %c1_937] : memref<1x4x18x18xf32, #tpu.memory_space<vmem>>, vector<1x1x16x16xf32>
    %1395 = vector.shape_cast %1394 : vector<1x1x16x16xf32> to vector<16x16xf32>
    %1396 = vector.broadcast %1393 : f32 to vector<16x16xf32>
    %1397 = arith.mulf %1395, %1396 : vector<16x16xf32>
    %1398 = arith.addf %1392, %1397 : vector<16x16xf32>
    %c224 = arith.constant 224 : index
    %1399 = memref.load %arg1[%c224] : memref<288xf32, #tpu.memory_space<smem>>
    %c0_938 = arith.constant 0 : index
    %c0_939 = arith.constant 0 : index
    %c2_940 = arith.constant 2 : index
    %c2_941 = arith.constant 2 : index
    %1400 = vector.load %arg3[%c0_938, %c0_939, %c2_940, %c2_941] : memref<1x4x18x18xf32, #tpu.memory_space<vmem>>, vector<1x1x16x16xf32>
    %1401 = vector.shape_cast %1400 : vector<1x1x16x16xf32> to vector<16x16xf32>
    %1402 = vector.broadcast %1399 : f32 to vector<16x16xf32>
    %1403 = arith.mulf %1401, %1402 : vector<16x16xf32>
    %1404 = arith.addf %1398, %1403 : vector<16x16xf32>
    %c225 = arith.constant 225 : index
    %1405 = memref.load %arg1[%c225] : memref<288xf32, #tpu.memory_space<smem>>
    %c0_942 = arith.constant 0 : index
    %c1_943 = arith.constant 1 : index
    %c0_944 = arith.constant 0 : index
    %c0_945 = arith.constant 0 : index
    %1406 = vector.load %arg3[%c0_942, %c1_943, %c0_944, %c0_945] : memref<1x4x18x18xf32, #tpu.memory_space<vmem>>, vector<1x1x16x16xf32>
    %1407 = vector.shape_cast %1406 : vector<1x1x16x16xf32> to vector<16x16xf32>
    %1408 = vector.broadcast %1405 : f32 to vector<16x16xf32>
    %1409 = arith.mulf %1407, %1408 : vector<16x16xf32>
    %1410 = arith.addf %1404, %1409 : vector<16x16xf32>
    %c226 = arith.constant 226 : index
    %1411 = memref.load %arg1[%c226] : memref<288xf32, #tpu.memory_space<smem>>
    %c0_946 = arith.constant 0 : index
    %c1_947 = arith.constant 1 : index
    %c0_948 = arith.constant 0 : index
    %c1_949 = arith.constant 1 : index
    %1412 = vector.load %arg3[%c0_946, %c1_947, %c0_948, %c1_949] : memref<1x4x18x18xf32, #tpu.memory_space<vmem>>, vector<1x1x16x16xf32>
    %1413 = vector.shape_cast %1412 : vector<1x1x16x16xf32> to vector<16x16xf32>
    %1414 = vector.broadcast %1411 : f32 to vector<16x16xf32>
    %1415 = arith.mulf %1413, %1414 : vector<16x16xf32>
    %1416 = arith.addf %1410, %1415 : vector<16x16xf32>
    %c227 = arith.constant 227 : index
    %1417 = memref.load %arg1[%c227] : memref<288xf32, #tpu.memory_space<smem>>
    %c0_950 = arith.constant 0 : index
    %c1_951 = arith.constant 1 : index
    %c0_952 = arith.constant 0 : index
    %c2_953 = arith.constant 2 : index
    %1418 = vector.load %arg3[%c0_950, %c1_951, %c0_952, %c2_953] : memref<1x4x18x18xf32, #tpu.memory_space<vmem>>, vector<1x1x16x16xf32>
    %1419 = vector.shape_cast %1418 : vector<1x1x16x16xf32> to vector<16x16xf32>
    %1420 = vector.broadcast %1417 : f32 to vector<16x16xf32>
    %1421 = arith.mulf %1419, %1420 : vector<16x16xf32>
    %1422 = arith.addf %1416, %1421 : vector<16x16xf32>
    %c228 = arith.constant 228 : index
    %1423 = memref.load %arg1[%c228] : memref<288xf32, #tpu.memory_space<smem>>
    %c0_954 = arith.constant 0 : index
    %c1_955 = arith.constant 1 : index
    %c1_956 = arith.constant 1 : index
    %c0_957 = arith.constant 0 : index
    %1424 = vector.load %arg3[%c0_954, %c1_955, %c1_956, %c0_957] : memref<1x4x18x18xf32, #tpu.memory_space<vmem>>, vector<1x1x16x16xf32>
    %1425 = vector.shape_cast %1424 : vector<1x1x16x16xf32> to vector<16x16xf32>
    %1426 = vector.broadcast %1423 : f32 to vector<16x16xf32>
    %1427 = arith.mulf %1425, %1426 : vector<16x16xf32>
    %1428 = arith.addf %1422, %1427 : vector<16x16xf32>
    %c229 = arith.constant 229 : index
    %1429 = memref.load %arg1[%c229] : memref<288xf32, #tpu.memory_space<smem>>
    %c0_958 = arith.constant 0 : index
    %c1_959 = arith.constant 1 : index
    %c1_960 = arith.constant 1 : index
    %c1_961 = arith.constant 1 : index
    %1430 = vector.load %arg3[%c0_958, %c1_959, %c1_960, %c1_961] : memref<1x4x18x18xf32, #tpu.memory_space<vmem>>, vector<1x1x16x16xf32>
    %1431 = vector.shape_cast %1430 : vector<1x1x16x16xf32> to vector<16x16xf32>
    %1432 = vector.broadcast %1429 : f32 to vector<16x16xf32>
    %1433 = arith.mulf %1431, %1432 : vector<16x16xf32>
    %1434 = arith.addf %1428, %1433 : vector<16x16xf32>
    %c230 = arith.constant 230 : index
    %1435 = memref.load %arg1[%c230] : memref<288xf32, #tpu.memory_space<smem>>
    %c0_962 = arith.constant 0 : index
    %c1_963 = arith.constant 1 : index
    %c1_964 = arith.constant 1 : index
    %c2_965 = arith.constant 2 : index
    %1436 = vector.load %arg3[%c0_962, %c1_963, %c1_964, %c2_965] : memref<1x4x18x18xf32, #tpu.memory_space<vmem>>, vector<1x1x16x16xf32>
    %1437 = vector.shape_cast %1436 : vector<1x1x16x16xf32> to vector<16x16xf32>
    %1438 = vector.broadcast %1435 : f32 to vector<16x16xf32>
    %1439 = arith.mulf %1437, %1438 : vector<16x16xf32>
    %1440 = arith.addf %1434, %1439 : vector<16x16xf32>
    %c231 = arith.constant 231 : index
    %1441 = memref.load %arg1[%c231] : memref<288xf32, #tpu.memory_space<smem>>
    %c0_966 = arith.constant 0 : index
    %c1_967 = arith.constant 1 : index
    %c2_968 = arith.constant 2 : index
    %c0_969 = arith.constant 0 : index
    %1442 = vector.load %arg3[%c0_966, %c1_967, %c2_968, %c0_969] : memref<1x4x18x18xf32, #tpu.memory_space<vmem>>, vector<1x1x16x16xf32>
    %1443 = vector.shape_cast %1442 : vector<1x1x16x16xf32> to vector<16x16xf32>
    %1444 = vector.broadcast %1441 : f32 to vector<16x16xf32>
    %1445 = arith.mulf %1443, %1444 : vector<16x16xf32>
    %1446 = arith.addf %1440, %1445 : vector<16x16xf32>
    %c232 = arith.constant 232 : index
    %1447 = memref.load %arg1[%c232] : memref<288xf32, #tpu.memory_space<smem>>
    %c0_970 = arith.constant 0 : index
    %c1_971 = arith.constant 1 : index
    %c2_972 = arith.constant 2 : index
    %c1_973 = arith.constant 1 : index
    %1448 = vector.load %arg3[%c0_970, %c1_971, %c2_972, %c1_973] : memref<1x4x18x18xf32, #tpu.memory_space<vmem>>, vector<1x1x16x16xf32>
    %1449 = vector.shape_cast %1448 : vector<1x1x16x16xf32> to vector<16x16xf32>
    %1450 = vector.broadcast %1447 : f32 to vector<16x16xf32>
    %1451 = arith.mulf %1449, %1450 : vector<16x16xf32>
    %1452 = arith.addf %1446, %1451 : vector<16x16xf32>
    %c233 = arith.constant 233 : index
    %1453 = memref.load %arg1[%c233] : memref<288xf32, #tpu.memory_space<smem>>
    %c0_974 = arith.constant 0 : index
    %c1_975 = arith.constant 1 : index
    %c2_976 = arith.constant 2 : index
    %c2_977 = arith.constant 2 : index
    %1454 = vector.load %arg3[%c0_974, %c1_975, %c2_976, %c2_977] : memref<1x4x18x18xf32, #tpu.memory_space<vmem>>, vector<1x1x16x16xf32>
    %1455 = vector.shape_cast %1454 : vector<1x1x16x16xf32> to vector<16x16xf32>
    %1456 = vector.broadcast %1453 : f32 to vector<16x16xf32>
    %1457 = arith.mulf %1455, %1456 : vector<16x16xf32>
    %1458 = arith.addf %1452, %1457 : vector<16x16xf32>
    %c234 = arith.constant 234 : index
    %1459 = memref.load %arg1[%c234] : memref<288xf32, #tpu.memory_space<smem>>
    %c0_978 = arith.constant 0 : index
    %c2_979 = arith.constant 2 : index
    %c0_980 = arith.constant 0 : index
    %c0_981 = arith.constant 0 : index
    %1460 = vector.load %arg3[%c0_978, %c2_979, %c0_980, %c0_981] : memref<1x4x18x18xf32, #tpu.memory_space<vmem>>, vector<1x1x16x16xf32>
    %1461 = vector.shape_cast %1460 : vector<1x1x16x16xf32> to vector<16x16xf32>
    %1462 = vector.broadcast %1459 : f32 to vector<16x16xf32>
    %1463 = arith.mulf %1461, %1462 : vector<16x16xf32>
    %1464 = arith.addf %1458, %1463 : vector<16x16xf32>
    %c235 = arith.constant 235 : index
    %1465 = memref.load %arg1[%c235] : memref<288xf32, #tpu.memory_space<smem>>
    %c0_982 = arith.constant 0 : index
    %c2_983 = arith.constant 2 : index
    %c0_984 = arith.constant 0 : index
    %c1_985 = arith.constant 1 : index
    %1466 = vector.load %arg3[%c0_982, %c2_983, %c0_984, %c1_985] : memref<1x4x18x18xf32, #tpu.memory_space<vmem>>, vector<1x1x16x16xf32>
    %1467 = vector.shape_cast %1466 : vector<1x1x16x16xf32> to vector<16x16xf32>
    %1468 = vector.broadcast %1465 : f32 to vector<16x16xf32>
    %1469 = arith.mulf %1467, %1468 : vector<16x16xf32>
    %1470 = arith.addf %1464, %1469 : vector<16x16xf32>
    %c236 = arith.constant 236 : index
    %1471 = memref.load %arg1[%c236] : memref<288xf32, #tpu.memory_space<smem>>
    %c0_986 = arith.constant 0 : index
    %c2_987 = arith.constant 2 : index
    %c0_988 = arith.constant 0 : index
    %c2_989 = arith.constant 2 : index
    %1472 = vector.load %arg3[%c0_986, %c2_987, %c0_988, %c2_989] : memref<1x4x18x18xf32, #tpu.memory_space<vmem>>, vector<1x1x16x16xf32>
    %1473 = vector.shape_cast %1472 : vector<1x1x16x16xf32> to vector<16x16xf32>
    %1474 = vector.broadcast %1471 : f32 to vector<16x16xf32>
    %1475 = arith.mulf %1473, %1474 : vector<16x16xf32>
    %1476 = arith.addf %1470, %1475 : vector<16x16xf32>
    %c237 = arith.constant 237 : index
    %1477 = memref.load %arg1[%c237] : memref<288xf32, #tpu.memory_space<smem>>
    %c0_990 = arith.constant 0 : index
    %c2_991 = arith.constant 2 : index
    %c1_992 = arith.constant 1 : index
    %c0_993 = arith.constant 0 : index
    %1478 = vector.load %arg3[%c0_990, %c2_991, %c1_992, %c0_993] : memref<1x4x18x18xf32, #tpu.memory_space<vmem>>, vector<1x1x16x16xf32>
    %1479 = vector.shape_cast %1478 : vector<1x1x16x16xf32> to vector<16x16xf32>
    %1480 = vector.broadcast %1477 : f32 to vector<16x16xf32>
    %1481 = arith.mulf %1479, %1480 : vector<16x16xf32>
    %1482 = arith.addf %1476, %1481 : vector<16x16xf32>
    %c238 = arith.constant 238 : index
    %1483 = memref.load %arg1[%c238] : memref<288xf32, #tpu.memory_space<smem>>
    %c0_994 = arith.constant 0 : index
    %c2_995 = arith.constant 2 : index
    %c1_996 = arith.constant 1 : index
    %c1_997 = arith.constant 1 : index
    %1484 = vector.load %arg3[%c0_994, %c2_995, %c1_996, %c1_997] : memref<1x4x18x18xf32, #tpu.memory_space<vmem>>, vector<1x1x16x16xf32>
    %1485 = vector.shape_cast %1484 : vector<1x1x16x16xf32> to vector<16x16xf32>
    %1486 = vector.broadcast %1483 : f32 to vector<16x16xf32>
    %1487 = arith.mulf %1485, %1486 : vector<16x16xf32>
    %1488 = arith.addf %1482, %1487 : vector<16x16xf32>
    %c239 = arith.constant 239 : index
    %1489 = memref.load %arg1[%c239] : memref<288xf32, #tpu.memory_space<smem>>
    %c0_998 = arith.constant 0 : index
    %c2_999 = arith.constant 2 : index
    %c1_1000 = arith.constant 1 : index
    %c2_1001 = arith.constant 2 : index
    %1490 = vector.load %arg3[%c0_998, %c2_999, %c1_1000, %c2_1001] : memref<1x4x18x18xf32, #tpu.memory_space<vmem>>, vector<1x1x16x16xf32>
    %1491 = vector.shape_cast %1490 : vector<1x1x16x16xf32> to vector<16x16xf32>
    %1492 = vector.broadcast %1489 : f32 to vector<16x16xf32>
    %1493 = arith.mulf %1491, %1492 : vector<16x16xf32>
    %1494 = arith.addf %1488, %1493 : vector<16x16xf32>
    %c240 = arith.constant 240 : index
    %1495 = memref.load %arg1[%c240] : memref<288xf32, #tpu.memory_space<smem>>
    %c0_1002 = arith.constant 0 : index
    %c2_1003 = arith.constant 2 : index
    %c2_1004 = arith.constant 2 : index
    %c0_1005 = arith.constant 0 : index
    %1496 = vector.load %arg3[%c0_1002, %c2_1003, %c2_1004, %c0_1005] : memref<1x4x18x18xf32, #tpu.memory_space<vmem>>, vector<1x1x16x16xf32>
    %1497 = vector.shape_cast %1496 : vector<1x1x16x16xf32> to vector<16x16xf32>
    %1498 = vector.broadcast %1495 : f32 to vector<16x16xf32>
    %1499 = arith.mulf %1497, %1498 : vector<16x16xf32>
    %1500 = arith.addf %1494, %1499 : vector<16x16xf32>
    %c241 = arith.constant 241 : index
    %1501 = memref.load %arg1[%c241] : memref<288xf32, #tpu.memory_space<smem>>
    %c0_1006 = arith.constant 0 : index
    %c2_1007 = arith.constant 2 : index
    %c2_1008 = arith.constant 2 : index
    %c1_1009 = arith.constant 1 : index
    %1502 = vector.load %arg3[%c0_1006, %c2_1007, %c2_1008, %c1_1009] : memref<1x4x18x18xf32, #tpu.memory_space<vmem>>, vector<1x1x16x16xf32>
    %1503 = vector.shape_cast %1502 : vector<1x1x16x16xf32> to vector<16x16xf32>
    %1504 = vector.broadcast %1501 : f32 to vector<16x16xf32>
    %1505 = arith.mulf %1503, %1504 : vector<16x16xf32>
    %1506 = arith.addf %1500, %1505 : vector<16x16xf32>
    %c242 = arith.constant 242 : index
    %1507 = memref.load %arg1[%c242] : memref<288xf32, #tpu.memory_space<smem>>
    %c0_1010 = arith.constant 0 : index
    %c2_1011 = arith.constant 2 : index
    %c2_1012 = arith.constant 2 : index
    %c2_1013 = arith.constant 2 : index
    %1508 = vector.load %arg3[%c0_1010, %c2_1011, %c2_1012, %c2_1013] : memref<1x4x18x18xf32, #tpu.memory_space<vmem>>, vector<1x1x16x16xf32>
    %1509 = vector.shape_cast %1508 : vector<1x1x16x16xf32> to vector<16x16xf32>
    %1510 = vector.broadcast %1507 : f32 to vector<16x16xf32>
    %1511 = arith.mulf %1509, %1510 : vector<16x16xf32>
    %1512 = arith.addf %1506, %1511 : vector<16x16xf32>
    %c243 = arith.constant 243 : index
    %1513 = memref.load %arg1[%c243] : memref<288xf32, #tpu.memory_space<smem>>
    %c0_1014 = arith.constant 0 : index
    %c3_1015 = arith.constant 3 : index
    %c0_1016 = arith.constant 0 : index
    %c0_1017 = arith.constant 0 : index
    %1514 = vector.load %arg3[%c0_1014, %c3_1015, %c0_1016, %c0_1017] : memref<1x4x18x18xf32, #tpu.memory_space<vmem>>, vector<1x1x16x16xf32>
    %1515 = vector.shape_cast %1514 : vector<1x1x16x16xf32> to vector<16x16xf32>
    %1516 = vector.broadcast %1513 : f32 to vector<16x16xf32>
    %1517 = arith.mulf %1515, %1516 : vector<16x16xf32>
    %1518 = arith.addf %1512, %1517 : vector<16x16xf32>
    %c244 = arith.constant 244 : index
    %1519 = memref.load %arg1[%c244] : memref<288xf32, #tpu.memory_space<smem>>
    %c0_1018 = arith.constant 0 : index
    %c3_1019 = arith.constant 3 : index
    %c0_1020 = arith.constant 0 : index
    %c1_1021 = arith.constant 1 : index
    %1520 = vector.load %arg3[%c0_1018, %c3_1019, %c0_1020, %c1_1021] : memref<1x4x18x18xf32, #tpu.memory_space<vmem>>, vector<1x1x16x16xf32>
    %1521 = vector.shape_cast %1520 : vector<1x1x16x16xf32> to vector<16x16xf32>
    %1522 = vector.broadcast %1519 : f32 to vector<16x16xf32>
    %1523 = arith.mulf %1521, %1522 : vector<16x16xf32>
    %1524 = arith.addf %1518, %1523 : vector<16x16xf32>
    %c245 = arith.constant 245 : index
    %1525 = memref.load %arg1[%c245] : memref<288xf32, #tpu.memory_space<smem>>
    %c0_1022 = arith.constant 0 : index
    %c3_1023 = arith.constant 3 : index
    %c0_1024 = arith.constant 0 : index
    %c2_1025 = arith.constant 2 : index
    %1526 = vector.load %arg3[%c0_1022, %c3_1023, %c0_1024, %c2_1025] : memref<1x4x18x18xf32, #tpu.memory_space<vmem>>, vector<1x1x16x16xf32>
    %1527 = vector.shape_cast %1526 : vector<1x1x16x16xf32> to vector<16x16xf32>
    %1528 = vector.broadcast %1525 : f32 to vector<16x16xf32>
    %1529 = arith.mulf %1527, %1528 : vector<16x16xf32>
    %1530 = arith.addf %1524, %1529 : vector<16x16xf32>
    %c246 = arith.constant 246 : index
    %1531 = memref.load %arg1[%c246] : memref<288xf32, #tpu.memory_space<smem>>
    %c0_1026 = arith.constant 0 : index
    %c3_1027 = arith.constant 3 : index
    %c1_1028 = arith.constant 1 : index
    %c0_1029 = arith.constant 0 : index
    %1532 = vector.load %arg3[%c0_1026, %c3_1027, %c1_1028, %c0_1029] : memref<1x4x18x18xf32, #tpu.memory_space<vmem>>, vector<1x1x16x16xf32>
    %1533 = vector.shape_cast %1532 : vector<1x1x16x16xf32> to vector<16x16xf32>
    %1534 = vector.broadcast %1531 : f32 to vector<16x16xf32>
    %1535 = arith.mulf %1533, %1534 : vector<16x16xf32>
    %1536 = arith.addf %1530, %1535 : vector<16x16xf32>
    %c247 = arith.constant 247 : index
    %1537 = memref.load %arg1[%c247] : memref<288xf32, #tpu.memory_space<smem>>
    %c0_1030 = arith.constant 0 : index
    %c3_1031 = arith.constant 3 : index
    %c1_1032 = arith.constant 1 : index
    %c1_1033 = arith.constant 1 : index
    %1538 = vector.load %arg3[%c0_1030, %c3_1031, %c1_1032, %c1_1033] : memref<1x4x18x18xf32, #tpu.memory_space<vmem>>, vector<1x1x16x16xf32>
    %1539 = vector.shape_cast %1538 : vector<1x1x16x16xf32> to vector<16x16xf32>
    %1540 = vector.broadcast %1537 : f32 to vector<16x16xf32>
    %1541 = arith.mulf %1539, %1540 : vector<16x16xf32>
    %1542 = arith.addf %1536, %1541 : vector<16x16xf32>
    %c248 = arith.constant 248 : index
    %1543 = memref.load %arg1[%c248] : memref<288xf32, #tpu.memory_space<smem>>
    %c0_1034 = arith.constant 0 : index
    %c3_1035 = arith.constant 3 : index
    %c1_1036 = arith.constant 1 : index
    %c2_1037 = arith.constant 2 : index
    %1544 = vector.load %arg3[%c0_1034, %c3_1035, %c1_1036, %c2_1037] : memref<1x4x18x18xf32, #tpu.memory_space<vmem>>, vector<1x1x16x16xf32>
    %1545 = vector.shape_cast %1544 : vector<1x1x16x16xf32> to vector<16x16xf32>
    %1546 = vector.broadcast %1543 : f32 to vector<16x16xf32>
    %1547 = arith.mulf %1545, %1546 : vector<16x16xf32>
    %1548 = arith.addf %1542, %1547 : vector<16x16xf32>
    %c249 = arith.constant 249 : index
    %1549 = memref.load %arg1[%c249] : memref<288xf32, #tpu.memory_space<smem>>
    %c0_1038 = arith.constant 0 : index
    %c3_1039 = arith.constant 3 : index
    %c2_1040 = arith.constant 2 : index
    %c0_1041 = arith.constant 0 : index
    %1550 = vector.load %arg3[%c0_1038, %c3_1039, %c2_1040, %c0_1041] : memref<1x4x18x18xf32, #tpu.memory_space<vmem>>, vector<1x1x16x16xf32>
    %1551 = vector.shape_cast %1550 : vector<1x1x16x16xf32> to vector<16x16xf32>
    %1552 = vector.broadcast %1549 : f32 to vector<16x16xf32>
    %1553 = arith.mulf %1551, %1552 : vector<16x16xf32>
    %1554 = arith.addf %1548, %1553 : vector<16x16xf32>
    %c250 = arith.constant 250 : index
    %1555 = memref.load %arg1[%c250] : memref<288xf32, #tpu.memory_space<smem>>
    %c0_1042 = arith.constant 0 : index
    %c3_1043 = arith.constant 3 : index
    %c2_1044 = arith.constant 2 : index
    %c1_1045 = arith.constant 1 : index
    %1556 = vector.load %arg3[%c0_1042, %c3_1043, %c2_1044, %c1_1045] : memref<1x4x18x18xf32, #tpu.memory_space<vmem>>, vector<1x1x16x16xf32>
    %1557 = vector.shape_cast %1556 : vector<1x1x16x16xf32> to vector<16x16xf32>
    %1558 = vector.broadcast %1555 : f32 to vector<16x16xf32>
    %1559 = arith.mulf %1557, %1558 : vector<16x16xf32>
    %1560 = arith.addf %1554, %1559 : vector<16x16xf32>
    %c251 = arith.constant 251 : index
    %1561 = memref.load %arg1[%c251] : memref<288xf32, #tpu.memory_space<smem>>
    %c0_1046 = arith.constant 0 : index
    %c3_1047 = arith.constant 3 : index
    %c2_1048 = arith.constant 2 : index
    %c2_1049 = arith.constant 2 : index
    %1562 = vector.load %arg3[%c0_1046, %c3_1047, %c2_1048, %c2_1049] : memref<1x4x18x18xf32, #tpu.memory_space<vmem>>, vector<1x1x16x16xf32>
    %1563 = vector.shape_cast %1562 : vector<1x1x16x16xf32> to vector<16x16xf32>
    %1564 = vector.broadcast %1561 : f32 to vector<16x16xf32>
    %1565 = arith.mulf %1563, %1564 : vector<16x16xf32>
    %1566 = arith.addf %1560, %1565 : vector<16x16xf32>
    %c6_1050 = arith.constant 6 : index
    %1567 = memref.load %arg2[%c6_1050] : memref<8xf32, #tpu.memory_space<smem>>
    %1568 = vector.broadcast %1567 : f32 to vector<16x16xf32>
    %1569 = arith.addf %1566, %1568 : vector<16x16xf32>
    %cst_1051 = arith.constant 0.000000e+00 : f32
    %1570 = vector.broadcast %cst_1051 : f32 to vector<16x16xf32>
    %1571 = arith.maximumf %1569, %1570 : vector<16x16xf32>
    %c0_1052 = arith.constant 0 : index
    %c6_1053 = arith.constant 6 : index
    %c0_1054 = arith.constant 0 : index
    %c0_1055 = arith.constant 0 : index
    %1572 = vector.load %arg4[%c0_1052, %c6_1053, %c0_1054, %c0_1055] : memref<1x8x16x16xf32, #tpu.memory_space<vmem>>, vector<1x1x16x16xf32>
    %1573 = vector.shape_cast %1572 : vector<1x1x16x16xf32> to vector<16x16xf32>
    %1574 = vector.shape_cast %1571 : vector<16x16xf32> to vector<1x1x16x16xf32>
    tpu.vector_store %arg4[%c0_1052, %c6_1053, %c0_1054, %c0_1055], %1574 {strides = array<i32>} : memref<1x8x16x16xf32, #tpu.memory_space<vmem>>, vector<1x1x16x16xf32>,
    %cst_1056 = arith.constant 0.000000e+00 : f32
    %1575 = vector.broadcast %cst_1056 : f32 to vector<16x16xf32>
    %c252 = arith.constant 252 : index
    %1576 = memref.load %arg1[%c252] : memref<288xf32, #tpu.memory_space<smem>>
    %c0_1057 = arith.constant 0 : index
    %c0_1058 = arith.constant 0 : index
    %c0_1059 = arith.constant 0 : index
    %c0_1060 = arith.constant 0 : index
    %1577 = vector.load %arg3[%c0_1057, %c0_1058, %c0_1059, %c0_1060] : memref<1x4x18x18xf32, #tpu.memory_space<vmem>>, vector<1x1x16x16xf32>
    %1578 = vector.shape_cast %1577 : vector<1x1x16x16xf32> to vector<16x16xf32>
    %1579 = vector.broadcast %1576 : f32 to vector<16x16xf32>
    %1580 = arith.mulf %1578, %1579 : vector<16x16xf32>
    %1581 = arith.addf %1575, %1580 : vector<16x16xf32>
    %c253 = arith.constant 253 : index
    %1582 = memref.load %arg1[%c253] : memref<288xf32, #tpu.memory_space<smem>>
    %c0_1061 = arith.constant 0 : index
    %c0_1062 = arith.constant 0 : index
    %c0_1063 = arith.constant 0 : index
    %c1_1064 = arith.constant 1 : index
    %1583 = vector.load %arg3[%c0_1061, %c0_1062, %c0_1063, %c1_1064] : memref<1x4x18x18xf32, #tpu.memory_space<vmem>>, vector<1x1x16x16xf32>
    %1584 = vector.shape_cast %1583 : vector<1x1x16x16xf32> to vector<16x16xf32>
    %1585 = vector.broadcast %1582 : f32 to vector<16x16xf32>
    %1586 = arith.mulf %1584, %1585 : vector<16x16xf32>
    %1587 = arith.addf %1581, %1586 : vector<16x16xf32>
    %c254 = arith.constant 254 : index
    %1588 = memref.load %arg1[%c254] : memref<288xf32, #tpu.memory_space<smem>>
    %c0_1065 = arith.constant 0 : index
    %c0_1066 = arith.constant 0 : index
    %c0_1067 = arith.constant 0 : index
    %c2_1068 = arith.constant 2 : index
    %1589 = vector.load %arg3[%c0_1065, %c0_1066, %c0_1067, %c2_1068] : memref<1x4x18x18xf32, #tpu.memory_space<vmem>>, vector<1x1x16x16xf32>
    %1590 = vector.shape_cast %1589 : vector<1x1x16x16xf32> to vector<16x16xf32>
    %1591 = vector.broadcast %1588 : f32 to vector<16x16xf32>
    %1592 = arith.mulf %1590, %1591 : vector<16x16xf32>
    %1593 = arith.addf %1587, %1592 : vector<16x16xf32>
    %c255 = arith.constant 255 : index
    %1594 = memref.load %arg1[%c255] : memref<288xf32, #tpu.memory_space<smem>>
    %c0_1069 = arith.constant 0 : index
    %c0_1070 = arith.constant 0 : index
    %c1_1071 = arith.constant 1 : index
    %c0_1072 = arith.constant 0 : index
    %1595 = vector.load %arg3[%c0_1069, %c0_1070, %c1_1071, %c0_1072] : memref<1x4x18x18xf32, #tpu.memory_space<vmem>>, vector<1x1x16x16xf32>
    %1596 = vector.shape_cast %1595 : vector<1x1x16x16xf32> to vector<16x16xf32>
    %1597 = vector.broadcast %1594 : f32 to vector<16x16xf32>
    %1598 = arith.mulf %1596, %1597 : vector<16x16xf32>
    %1599 = arith.addf %1593, %1598 : vector<16x16xf32>
    %c256 = arith.constant 256 : index
    %1600 = memref.load %arg1[%c256] : memref<288xf32, #tpu.memory_space<smem>>
    %c0_1073 = arith.constant 0 : index
    %c0_1074 = arith.constant 0 : index
    %c1_1075 = arith.constant 1 : index
    %c1_1076 = arith.constant 1 : index
    %1601 = vector.load %arg3[%c0_1073, %c0_1074, %c1_1075, %c1_1076] : memref<1x4x18x18xf32, #tpu.memory_space<vmem>>, vector<1x1x16x16xf32>
    %1602 = vector.shape_cast %1601 : vector<1x1x16x16xf32> to vector<16x16xf32>
    %1603 = vector.broadcast %1600 : f32 to vector<16x16xf32>
    %1604 = arith.mulf %1602, %1603 : vector<16x16xf32>
    %1605 = arith.addf %1599, %1604 : vector<16x16xf32>
    %c257 = arith.constant 257 : index
    %1606 = memref.load %arg1[%c257] : memref<288xf32, #tpu.memory_space<smem>>
    %c0_1077 = arith.constant 0 : index
    %c0_1078 = arith.constant 0 : index
    %c1_1079 = arith.constant 1 : index
    %c2_1080 = arith.constant 2 : index
    %1607 = vector.load %arg3[%c0_1077, %c0_1078, %c1_1079, %c2_1080] : memref<1x4x18x18xf32, #tpu.memory_space<vmem>>, vector<1x1x16x16xf32>
    %1608 = vector.shape_cast %1607 : vector<1x1x16x16xf32> to vector<16x16xf32>
    %1609 = vector.broadcast %1606 : f32 to vector<16x16xf32>
    %1610 = arith.mulf %1608, %1609 : vector<16x16xf32>
    %1611 = arith.addf %1605, %1610 : vector<16x16xf32>
    %c258 = arith.constant 258 : index
    %1612 = memref.load %arg1[%c258] : memref<288xf32, #tpu.memory_space<smem>>
    %c0_1081 = arith.constant 0 : index
    %c0_1082 = arith.constant 0 : index
    %c2_1083 = arith.constant 2 : index
    %c0_1084 = arith.constant 0 : index
    %1613 = vector.load %arg3[%c0_1081, %c0_1082, %c2_1083, %c0_1084] : memref<1x4x18x18xf32, #tpu.memory_space<vmem>>, vector<1x1x16x16xf32>
    %1614 = vector.shape_cast %1613 : vector<1x1x16x16xf32> to vector<16x16xf32>
    %1615 = vector.broadcast %1612 : f32 to vector<16x16xf32>
    %1616 = arith.mulf %1614, %1615 : vector<16x16xf32>
    %1617 = arith.addf %1611, %1616 : vector<16x16xf32>
    %c259 = arith.constant 259 : index
    %1618 = memref.load %arg1[%c259] : memref<288xf32, #tpu.memory_space<smem>>
    %c0_1085 = arith.constant 0 : index
    %c0_1086 = arith.constant 0 : index
    %c2_1087 = arith.constant 2 : index
    %c1_1088 = arith.constant 1 : index
    %1619 = vector.load %arg3[%c0_1085, %c0_1086, %c2_1087, %c1_1088] : memref<1x4x18x18xf32, #tpu.memory_space<vmem>>, vector<1x1x16x16xf32>
    %1620 = vector.shape_cast %1619 : vector<1x1x16x16xf32> to vector<16x16xf32>
    %1621 = vector.broadcast %1618 : f32 to vector<16x16xf32>
    %1622 = arith.mulf %1620, %1621 : vector<16x16xf32>
    %1623 = arith.addf %1617, %1622 : vector<16x16xf32>
    %c260 = arith.constant 260 : index
    %1624 = memref.load %arg1[%c260] : memref<288xf32, #tpu.memory_space<smem>>
    %c0_1089 = arith.constant 0 : index
    %c0_1090 = arith.constant 0 : index
    %c2_1091 = arith.constant 2 : index
    %c2_1092 = arith.constant 2 : index
    %1625 = vector.load %arg3[%c0_1089, %c0_1090, %c2_1091, %c2_1092] : memref<1x4x18x18xf32, #tpu.memory_space<vmem>>, vector<1x1x16x16xf32>
    %1626 = vector.shape_cast %1625 : vector<1x1x16x16xf32> to vector<16x16xf32>
    %1627 = vector.broadcast %1624 : f32 to vector<16x16xf32>
    %1628 = arith.mulf %1626, %1627 : vector<16x16xf32>
    %1629 = arith.addf %1623, %1628 : vector<16x16xf32>
    %c261 = arith.constant 261 : index
    %1630 = memref.load %arg1[%c261] : memref<288xf32, #tpu.memory_space<smem>>
    %c0_1093 = arith.constant 0 : index
    %c1_1094 = arith.constant 1 : index
    %c0_1095 = arith.constant 0 : index
    %c0_1096 = arith.constant 0 : index
    %1631 = vector.load %arg3[%c0_1093, %c1_1094, %c0_1095, %c0_1096] : memref<1x4x18x18xf32, #tpu.memory_space<vmem>>, vector<1x1x16x16xf32>
    %1632 = vector.shape_cast %1631 : vector<1x1x16x16xf32> to vector<16x16xf32>
    %1633 = vector.broadcast %1630 : f32 to vector<16x16xf32>
    %1634 = arith.mulf %1632, %1633 : vector<16x16xf32>
    %1635 = arith.addf %1629, %1634 : vector<16x16xf32>
    %c262 = arith.constant 262 : index
    %1636 = memref.load %arg1[%c262] : memref<288xf32, #tpu.memory_space<smem>>
    %c0_1097 = arith.constant 0 : index
    %c1_1098 = arith.constant 1 : index
    %c0_1099 = arith.constant 0 : index
    %c1_1100 = arith.constant 1 : index
    %1637 = vector.load %arg3[%c0_1097, %c1_1098, %c0_1099, %c1_1100] : memref<1x4x18x18xf32, #tpu.memory_space<vmem>>, vector<1x1x16x16xf32>
    %1638 = vector.shape_cast %1637 : vector<1x1x16x16xf32> to vector<16x16xf32>
    %1639 = vector.broadcast %1636 : f32 to vector<16x16xf32>
    %1640 = arith.mulf %1638, %1639 : vector<16x16xf32>
    %1641 = arith.addf %1635, %1640 : vector<16x16xf32>
    %c263 = arith.constant 263 : index
    %1642 = memref.load %arg1[%c263] : memref<288xf32, #tpu.memory_space<smem>>
    %c0_1101 = arith.constant 0 : index
    %c1_1102 = arith.constant 1 : index
    %c0_1103 = arith.constant 0 : index
    %c2_1104 = arith.constant 2 : index
    %1643 = vector.load %arg3[%c0_1101, %c1_1102, %c0_1103, %c2_1104] : memref<1x4x18x18xf32, #tpu.memory_space<vmem>>, vector<1x1x16x16xf32>
    %1644 = vector.shape_cast %1643 : vector<1x1x16x16xf32> to vector<16x16xf32>
    %1645 = vector.broadcast %1642 : f32 to vector<16x16xf32>
    %1646 = arith.mulf %1644, %1645 : vector<16x16xf32>
    %1647 = arith.addf %1641, %1646 : vector<16x16xf32>
    %c264 = arith.constant 264 : index
    %1648 = memref.load %arg1[%c264] : memref<288xf32, #tpu.memory_space<smem>>
    %c0_1105 = arith.constant 0 : index
    %c1_1106 = arith.constant 1 : index
    %c1_1107 = arith.constant 1 : index
    %c0_1108 = arith.constant 0 : index
    %1649 = vector.load %arg3[%c0_1105, %c1_1106, %c1_1107, %c0_1108] : memref<1x4x18x18xf32, #tpu.memory_space<vmem>>, vector<1x1x16x16xf32>
    %1650 = vector.shape_cast %1649 : vector<1x1x16x16xf32> to vector<16x16xf32>
    %1651 = vector.broadcast %1648 : f32 to vector<16x16xf32>
    %1652 = arith.mulf %1650, %1651 : vector<16x16xf32>
    %1653 = arith.addf %1647, %1652 : vector<16x16xf32>
    %c265 = arith.constant 265 : index
    %1654 = memref.load %arg1[%c265] : memref<288xf32, #tpu.memory_space<smem>>
    %c0_1109 = arith.constant 0 : index
    %c1_1110 = arith.constant 1 : index
    %c1_1111 = arith.constant 1 : index
    %c1_1112 = arith.constant 1 : index
    %1655 = vector.load %arg3[%c0_1109, %c1_1110, %c1_1111, %c1_1112] : memref<1x4x18x18xf32, #tpu.memory_space<vmem>>, vector<1x1x16x16xf32>
    %1656 = vector.shape_cast %1655 : vector<1x1x16x16xf32> to vector<16x16xf32>
    %1657 = vector.broadcast %1654 : f32 to vector<16x16xf32>
    %1658 = arith.mulf %1656, %1657 : vector<16x16xf32>
    %1659 = arith.addf %1653, %1658 : vector<16x16xf32>
    %c266 = arith.constant 266 : index
    %1660 = memref.load %arg1[%c266] : memref<288xf32, #tpu.memory_space<smem>>
    %c0_1113 = arith.constant 0 : index
    %c1_1114 = arith.constant 1 : index
    %c1_1115 = arith.constant 1 : index
    %c2_1116 = arith.constant 2 : index
    %1661 = vector.load %arg3[%c0_1113, %c1_1114, %c1_1115, %c2_1116] : memref<1x4x18x18xf32, #tpu.memory_space<vmem>>, vector<1x1x16x16xf32>
    %1662 = vector.shape_cast %1661 : vector<1x1x16x16xf32> to vector<16x16xf32>
    %1663 = vector.broadcast %1660 : f32 to vector<16x16xf32>
    %1664 = arith.mulf %1662, %1663 : vector<16x16xf32>
    %1665 = arith.addf %1659, %1664 : vector<16x16xf32>
    %c267 = arith.constant 267 : index
    %1666 = memref.load %arg1[%c267] : memref<288xf32, #tpu.memory_space<smem>>
    %c0_1117 = arith.constant 0 : index
    %c1_1118 = arith.constant 1 : index
    %c2_1119 = arith.constant 2 : index
    %c0_1120 = arith.constant 0 : index
    %1667 = vector.load %arg3[%c0_1117, %c1_1118, %c2_1119, %c0_1120] : memref<1x4x18x18xf32, #tpu.memory_space<vmem>>, vector<1x1x16x16xf32>
    %1668 = vector.shape_cast %1667 : vector<1x1x16x16xf32> to vector<16x16xf32>
    %1669 = vector.broadcast %1666 : f32 to vector<16x16xf32>
    %1670 = arith.mulf %1668, %1669 : vector<16x16xf32>
    %1671 = arith.addf %1665, %1670 : vector<16x16xf32>
    %c268 = arith.constant 268 : index
    %1672 = memref.load %arg1[%c268] : memref<288xf32, #tpu.memory_space<smem>>
    %c0_1121 = arith.constant 0 : index
    %c1_1122 = arith.constant 1 : index
    %c2_1123 = arith.constant 2 : index
    %c1_1124 = arith.constant 1 : index
    %1673 = vector.load %arg3[%c0_1121, %c1_1122, %c2_1123, %c1_1124] : memref<1x4x18x18xf32, #tpu.memory_space<vmem>>, vector<1x1x16x16xf32>
    %1674 = vector.shape_cast %1673 : vector<1x1x16x16xf32> to vector<16x16xf32>
    %1675 = vector.broadcast %1672 : f32 to vector<16x16xf32>
    %1676 = arith.mulf %1674, %1675 : vector<16x16xf32>
    %1677 = arith.addf %1671, %1676 : vector<16x16xf32>
    %c269 = arith.constant 269 : index
    %1678 = memref.load %arg1[%c269] : memref<288xf32, #tpu.memory_space<smem>>
    %c0_1125 = arith.constant 0 : index
    %c1_1126 = arith.constant 1 : index
    %c2_1127 = arith.constant 2 : index
    %c2_1128 = arith.constant 2 : index
    %1679 = vector.load %arg3[%c0_1125, %c1_1126, %c2_1127, %c2_1128] : memref<1x4x18x18xf32, #tpu.memory_space<vmem>>, vector<1x1x16x16xf32>
    %1680 = vector.shape_cast %1679 : vector<1x1x16x16xf32> to vector<16x16xf32>
    %1681 = vector.broadcast %1678 : f32 to vector<16x16xf32>
    %1682 = arith.mulf %1680, %1681 : vector<16x16xf32>
    %1683 = arith.addf %1677, %1682 : vector<16x16xf32>
    %c270 = arith.constant 270 : index
    %1684 = memref.load %arg1[%c270] : memref<288xf32, #tpu.memory_space<smem>>
    %c0_1129 = arith.constant 0 : index
    %c2_1130 = arith.constant 2 : index
    %c0_1131 = arith.constant 0 : index
    %c0_1132 = arith.constant 0 : index
    %1685 = vector.load %arg3[%c0_1129, %c2_1130, %c0_1131, %c0_1132] : memref<1x4x18x18xf32, #tpu.memory_space<vmem>>, vector<1x1x16x16xf32>
    %1686 = vector.shape_cast %1685 : vector<1x1x16x16xf32> to vector<16x16xf32>
    %1687 = vector.broadcast %1684 : f32 to vector<16x16xf32>
    %1688 = arith.mulf %1686, %1687 : vector<16x16xf32>
    %1689 = arith.addf %1683, %1688 : vector<16x16xf32>
    %c271 = arith.constant 271 : index
    %1690 = memref.load %arg1[%c271] : memref<288xf32, #tpu.memory_space<smem>>
    %c0_1133 = arith.constant 0 : index
    %c2_1134 = arith.constant 2 : index
    %c0_1135 = arith.constant 0 : index
    %c1_1136 = arith.constant 1 : index
    %1691 = vector.load %arg3[%c0_1133, %c2_1134, %c0_1135, %c1_1136] : memref<1x4x18x18xf32, #tpu.memory_space<vmem>>, vector<1x1x16x16xf32>
    %1692 = vector.shape_cast %1691 : vector<1x1x16x16xf32> to vector<16x16xf32>
    %1693 = vector.broadcast %1690 : f32 to vector<16x16xf32>
    %1694 = arith.mulf %1692, %1693 : vector<16x16xf32>
    %1695 = arith.addf %1689, %1694 : vector<16x16xf32>
    %c272 = arith.constant 272 : index
    %1696 = memref.load %arg1[%c272] : memref<288xf32, #tpu.memory_space<smem>>
    %c0_1137 = arith.constant 0 : index
    %c2_1138 = arith.constant 2 : index
    %c0_1139 = arith.constant 0 : index
    %c2_1140 = arith.constant 2 : index
    %1697 = vector.load %arg3[%c0_1137, %c2_1138, %c0_1139, %c2_1140] : memref<1x4x18x18xf32, #tpu.memory_space<vmem>>, vector<1x1x16x16xf32>
    %1698 = vector.shape_cast %1697 : vector<1x1x16x16xf32> to vector<16x16xf32>
    %1699 = vector.broadcast %1696 : f32 to vector<16x16xf32>
    %1700 = arith.mulf %1698, %1699 : vector<16x16xf32>
    %1701 = arith.addf %1695, %1700 : vector<16x16xf32>
    %c273 = arith.constant 273 : index
    %1702 = memref.load %arg1[%c273] : memref<288xf32, #tpu.memory_space<smem>>
    %c0_1141 = arith.constant 0 : index
    %c2_1142 = arith.constant 2 : index
    %c1_1143 = arith.constant 1 : index
    %c0_1144 = arith.constant 0 : index
    %1703 = vector.load %arg3[%c0_1141, %c2_1142, %c1_1143, %c0_1144] : memref<1x4x18x18xf32, #tpu.memory_space<vmem>>, vector<1x1x16x16xf32>
    %1704 = vector.shape_cast %1703 : vector<1x1x16x16xf32> to vector<16x16xf32>
    %1705 = vector.broadcast %1702 : f32 to vector<16x16xf32>
    %1706 = arith.mulf %1704, %1705 : vector<16x16xf32>
    %1707 = arith.addf %1701, %1706 : vector<16x16xf32>
    %c274 = arith.constant 274 : index
    %1708 = memref.load %arg1[%c274] : memref<288xf32, #tpu.memory_space<smem>>
    %c0_1145 = arith.constant 0 : index
    %c2_1146 = arith.constant 2 : index
    %c1_1147 = arith.constant 1 : index
    %c1_1148 = arith.constant 1 : index
    %1709 = vector.load %arg3[%c0_1145, %c2_1146, %c1_1147, %c1_1148] : memref<1x4x18x18xf32, #tpu.memory_space<vmem>>, vector<1x1x16x16xf32>
    %1710 = vector.shape_cast %1709 : vector<1x1x16x16xf32> to vector<16x16xf32>
    %1711 = vector.broadcast %1708 : f32 to vector<16x16xf32>
    %1712 = arith.mulf %1710, %1711 : vector<16x16xf32>
    %1713 = arith.addf %1707, %1712 : vector<16x16xf32>
    %c275 = arith.constant 275 : index
    %1714 = memref.load %arg1[%c275] : memref<288xf32, #tpu.memory_space<smem>>
    %c0_1149 = arith.constant 0 : index
    %c2_1150 = arith.constant 2 : index
    %c1_1151 = arith.constant 1 : index
    %c2_1152 = arith.constant 2 : index
    %1715 = vector.load %arg3[%c0_1149, %c2_1150, %c1_1151, %c2_1152] : memref<1x4x18x18xf32, #tpu.memory_space<vmem>>, vector<1x1x16x16xf32>
    %1716 = vector.shape_cast %1715 : vector<1x1x16x16xf32> to vector<16x16xf32>
    %1717 = vector.broadcast %1714 : f32 to vector<16x16xf32>
    %1718 = arith.mulf %1716, %1717 : vector<16x16xf32>
    %1719 = arith.addf %1713, %1718 : vector<16x16xf32>
    %c276 = arith.constant 276 : index
    %1720 = memref.load %arg1[%c276] : memref<288xf32, #tpu.memory_space<smem>>
    %c0_1153 = arith.constant 0 : index
    %c2_1154 = arith.constant 2 : index
    %c2_1155 = arith.constant 2 : index
    %c0_1156 = arith.constant 0 : index
    %1721 = vector.load %arg3[%c0_1153, %c2_1154, %c2_1155, %c0_1156] : memref<1x4x18x18xf32, #tpu.memory_space<vmem>>, vector<1x1x16x16xf32>
    %1722 = vector.shape_cast %1721 : vector<1x1x16x16xf32> to vector<16x16xf32>
    %1723 = vector.broadcast %1720 : f32 to vector<16x16xf32>
    %1724 = arith.mulf %1722, %1723 : vector<16x16xf32>
    %1725 = arith.addf %1719, %1724 : vector<16x16xf32>
    %c277 = arith.constant 277 : index
    %1726 = memref.load %arg1[%c277] : memref<288xf32, #tpu.memory_space<smem>>
    %c0_1157 = arith.constant 0 : index
    %c2_1158 = arith.constant 2 : index
    %c2_1159 = arith.constant 2 : index
    %c1_1160 = arith.constant 1 : index
    %1727 = vector.load %arg3[%c0_1157, %c2_1158, %c2_1159, %c1_1160] : memref<1x4x18x18xf32, #tpu.memory_space<vmem>>, vector<1x1x16x16xf32>
    %1728 = vector.shape_cast %1727 : vector<1x1x16x16xf32> to vector<16x16xf32>
    %1729 = vector.broadcast %1726 : f32 to vector<16x16xf32>
    %1730 = arith.mulf %1728, %1729 : vector<16x16xf32>
    %1731 = arith.addf %1725, %1730 : vector<16x16xf32>
    %c278 = arith.constant 278 : index
    %1732 = memref.load %arg1[%c278] : memref<288xf32, #tpu.memory_space<smem>>
    %c0_1161 = arith.constant 0 : index
    %c2_1162 = arith.constant 2 : index
    %c2_1163 = arith.constant 2 : index
    %c2_1164 = arith.constant 2 : index
    %1733 = vector.load %arg3[%c0_1161, %c2_1162, %c2_1163, %c2_1164] : memref<1x4x18x18xf32, #tpu.memory_space<vmem>>, vector<1x1x16x16xf32>
    %1734 = vector.shape_cast %1733 : vector<1x1x16x16xf32> to vector<16x16xf32>
    %1735 = vector.broadcast %1732 : f32 to vector<16x16xf32>
    %1736 = arith.mulf %1734, %1735 : vector<16x16xf32>
    %1737 = arith.addf %1731, %1736 : vector<16x16xf32>
    %c279 = arith.constant 279 : index
    %1738 = memref.load %arg1[%c279] : memref<288xf32, #tpu.memory_space<smem>>
    %c0_1165 = arith.constant 0 : index
    %c3_1166 = arith.constant 3 : index
    %c0_1167 = arith.constant 0 : index
    %c0_1168 = arith.constant 0 : index
    %1739 = vector.load %arg3[%c0_1165, %c3_1166, %c0_1167, %c0_1168] : memref<1x4x18x18xf32, #tpu.memory_space<vmem>>, vector<1x1x16x16xf32>
    %1740 = vector.shape_cast %1739 : vector<1x1x16x16xf32> to vector<16x16xf32>
    %1741 = vector.broadcast %1738 : f32 to vector<16x16xf32>
    %1742 = arith.mulf %1740, %1741 : vector<16x16xf32>
    %1743 = arith.addf %1737, %1742 : vector<16x16xf32>
    %c280 = arith.constant 280 : index
    %1744 = memref.load %arg1[%c280] : memref<288xf32, #tpu.memory_space<smem>>
    %c0_1169 = arith.constant 0 : index
    %c3_1170 = arith.constant 3 : index
    %c0_1171 = arith.constant 0 : index
    %c1_1172 = arith.constant 1 : index
    %1745 = vector.load %arg3[%c0_1169, %c3_1170, %c0_1171, %c1_1172] : memref<1x4x18x18xf32, #tpu.memory_space<vmem>>, vector<1x1x16x16xf32>
    %1746 = vector.shape_cast %1745 : vector<1x1x16x16xf32> to vector<16x16xf32>
    %1747 = vector.broadcast %1744 : f32 to vector<16x16xf32>
    %1748 = arith.mulf %1746, %1747 : vector<16x16xf32>
    %1749 = arith.addf %1743, %1748 : vector<16x16xf32>
    %c281 = arith.constant 281 : index
    %1750 = memref.load %arg1[%c281] : memref<288xf32, #tpu.memory_space<smem>>
    %c0_1173 = arith.constant 0 : index
    %c3_1174 = arith.constant 3 : index
    %c0_1175 = arith.constant 0 : index
    %c2_1176 = arith.constant 2 : index
    %1751 = vector.load %arg3[%c0_1173, %c3_1174, %c0_1175, %c2_1176] : memref<1x4x18x18xf32, #tpu.memory_space<vmem>>, vector<1x1x16x16xf32>
    %1752 = vector.shape_cast %1751 : vector<1x1x16x16xf32> to vector<16x16xf32>
    %1753 = vector.broadcast %1750 : f32 to vector<16x16xf32>
    %1754 = arith.mulf %1752, %1753 : vector<16x16xf32>
    %1755 = arith.addf %1749, %1754 : vector<16x16xf32>
    %c282 = arith.constant 282 : index
    %1756 = memref.load %arg1[%c282] : memref<288xf32, #tpu.memory_space<smem>>
    %c0_1177 = arith.constant 0 : index
    %c3_1178 = arith.constant 3 : index
    %c1_1179 = arith.constant 1 : index
    %c0_1180 = arith.constant 0 : index
    %1757 = vector.load %arg3[%c0_1177, %c3_1178, %c1_1179, %c0_1180] : memref<1x4x18x18xf32, #tpu.memory_space<vmem>>, vector<1x1x16x16xf32>
    %1758 = vector.shape_cast %1757 : vector<1x1x16x16xf32> to vector<16x16xf32>
    %1759 = vector.broadcast %1756 : f32 to vector<16x16xf32>
    %1760 = arith.mulf %1758, %1759 : vector<16x16xf32>
    %1761 = arith.addf %1755, %1760 : vector<16x16xf32>
    %c283 = arith.constant 283 : index
    %1762 = memref.load %arg1[%c283] : memref<288xf32, #tpu.memory_space<smem>>
    %c0_1181 = arith.constant 0 : index
    %c3_1182 = arith.constant 3 : index
    %c1_1183 = arith.constant 1 : index
    %c1_1184 = arith.constant 1 : index
    %1763 = vector.load %arg3[%c0_1181, %c3_1182, %c1_1183, %c1_1184] : memref<1x4x18x18xf32, #tpu.memory_space<vmem>>, vector<1x1x16x16xf32>
    %1764 = vector.shape_cast %1763 : vector<1x1x16x16xf32> to vector<16x16xf32>
    %1765 = vector.broadcast %1762 : f32 to vector<16x16xf32>
    %1766 = arith.mulf %1764, %1765 : vector<16x16xf32>
    %1767 = arith.addf %1761, %1766 : vector<16x16xf32>
    %c284 = arith.constant 284 : index
    %1768 = memref.load %arg1[%c284] : memref<288xf32, #tpu.memory_space<smem>>
    %c0_1185 = arith.constant 0 : index
    %c3_1186 = arith.constant 3 : index
    %c1_1187 = arith.constant 1 : index
    %c2_1188 = arith.constant 2 : index
    %1769 = vector.load %arg3[%c0_1185, %c3_1186, %c1_1187, %c2_1188] : memref<1x4x18x18xf32, #tpu.memory_space<vmem>>, vector<1x1x16x16xf32>
    %1770 = vector.shape_cast %1769 : vector<1x1x16x16xf32> to vector<16x16xf32>
    %1771 = vector.broadcast %1768 : f32 to vector<16x16xf32>
    %1772 = arith.mulf %1770, %1771 : vector<16x16xf32>
    %1773 = arith.addf %1767, %1772 : vector<16x16xf32>
    %c285 = arith.constant 285 : index
    %1774 = memref.load %arg1[%c285] : memref<288xf32, #tpu.memory_space<smem>>
    %c0_1189 = arith.constant 0 : index
    %c3_1190 = arith.constant 3 : index
    %c2_1191 = arith.constant 2 : index
    %c0_1192 = arith.constant 0 : index
    %1775 = vector.load %arg3[%c0_1189, %c3_1190, %c2_1191, %c0_1192] : memref<1x4x18x18xf32, #tpu.memory_space<vmem>>, vector<1x1x16x16xf32>
    %1776 = vector.shape_cast %1775 : vector<1x1x16x16xf32> to vector<16x16xf32>
    %1777 = vector.broadcast %1774 : f32 to vector<16x16xf32>
    %1778 = arith.mulf %1776, %1777 : vector<16x16xf32>
    %1779 = arith.addf %1773, %1778 : vector<16x16xf32>
    %c286 = arith.constant 286 : index
    %1780 = memref.load %arg1[%c286] : memref<288xf32, #tpu.memory_space<smem>>
    %c0_1193 = arith.constant 0 : index
    %c3_1194 = arith.constant 3 : index
    %c2_1195 = arith.constant 2 : index
    %c1_1196 = arith.constant 1 : index
    %1781 = vector.load %arg3[%c0_1193, %c3_1194, %c2_1195, %c1_1196] : memref<1x4x18x18xf32, #tpu.memory_space<vmem>>, vector<1x1x16x16xf32>
    %1782 = vector.shape_cast %1781 : vector<1x1x16x16xf32> to vector<16x16xf32>
    %1783 = vector.broadcast %1780 : f32 to vector<16x16xf32>
    %1784 = arith.mulf %1782, %1783 : vector<16x16xf32>
    %1785 = arith.addf %1779, %1784 : vector<16x16xf32>
    %c287 = arith.constant 287 : index
    %1786 = memref.load %arg1[%c287] : memref<288xf32, #tpu.memory_space<smem>>
    %c0_1197 = arith.constant 0 : index
    %c3_1198 = arith.constant 3 : index
    %c2_1199 = arith.constant 2 : index
    %c2_1200 = arith.constant 2 : index
    %1787 = vector.load %arg3[%c0_1197, %c3_1198, %c2_1199, %c2_1200] : memref<1x4x18x18xf32, #tpu.memory_space<vmem>>, vector<1x1x16x16xf32>
    %1788 = vector.shape_cast %1787 : vector<1x1x16x16xf32> to vector<16x16xf32>
    %1789 = vector.broadcast %1786 : f32 to vector<16x16xf32>
    %1790 = arith.mulf %1788, %1789 : vector<16x16xf32>
    %1791 = arith.addf %1785, %1790 : vector<16x16xf32>
    %c7_1201 = arith.constant 7 : index
    %1792 = memref.load %arg2[%c7_1201] : memref<8xf32, #tpu.memory_space<smem>>
    %1793 = vector.broadcast %1792 : f32 to vector<16x16xf32>
    %1794 = arith.addf %1791, %1793 : vector<16x16xf32>
    %cst_1202 = arith.constant 0.000000e+00 : f32
    %1795 = vector.broadcast %cst_1202 : f32 to vector<16x16xf32>
    %1796 = arith.maximumf %1794, %1795 : vector<16x16xf32>
    %c0_1203 = arith.constant 0 : index
    %c7_1204 = arith.constant 7 : index
    %c0_1205 = arith.constant 0 : index
    %c0_1206 = arith.constant 0 : index
    %1797 = vector.load %arg4[%c0_1203, %c7_1204, %c0_1205, %c0_1206] : memref<1x8x16x16xf32, #tpu.memory_space<vmem>>, vector<1x1x16x16xf32>
    %1798 = vector.shape_cast %1797 : vector<1x1x16x16xf32> to vector<16x16xf32>
    %1799 = vector.shape_cast %1796 : vector<16x16xf32> to vector<1x1x16x16xf32>
    tpu.vector_store %arg4[%c0_1203, %c7_1204, %c0_1205, %c0_1206], %1799 {strides = array<i32>} : memref<1x8x16x16xf32, #tpu.memory_space<vmem>>, vector<1x1x16x16xf32>,
    return
  }
  func.func @transform_0(%arg0: i32) -> i32 {
    %c0_i32 = arith.constant 0 : i32
    %c0_i32_0 = arith.constant 0 : i32
    return %c0_i32 : i32
  }
  func.func @transform_1(%arg0: i32) -> i32 {
    %c0_i32 = arith.constant 0 : i32
    %c0_i32_0 = arith.constant 0 : i32
    return %c0_i32 : i32
  }
  func.func @transform_2(%arg0: i32) -> (i32, i32, i32, i32) {
    %c0_i32 = arith.constant 0 : i32
    %c0_i32_0 = arith.constant 0 : i32
    %c0_i32_1 = arith.constant 0 : i32
    %c0_i32_2 = arith.constant 0 : i32
    return %arg0, %c0_i32, %c0_i32_0, %c0_i32_1 : i32, i32, i32, i32
  }
  func.func @transform_3(%arg0: i32) -> (i32, i32, i32, i32) {
    %c0_i32 = arith.constant 0 : i32
    %c0_i32_0 = arith.constant 0 : i32
    %c0_i32_1 = arith.constant 0 : i32
    %c0_i32_2 = arith.constant 0 : i32
    return %arg0, %c0_i32, %c0_i32_0, %c0_i32_1 : i32, i32, i32, i32
  }
}

</mosaic_0001>

<llo_original>
// kernel: _conv2d_relu_forward.1
$region0: #{_conv2d_relu_forward.1}
  #allocation0 [shape = 'u32[]', space=smem, size = 0x4, offset = 0x4, fixed_abs, tag = 'smem constant byte address 0x4 - core index']
  #allocation1 [shape = 'u32[144,128]{1,0:T(1,128)}', space=vmem, size = 0x12000, scoped, tag = 'internal scratch']
  %s0 = inlined_call_operand.vmem [shape: f32[288], index: 0, kind: input, shape index: {}]
  %s1 = inlined_call_operand.vmem [shape: f32[8], index: 1, kind: input, shape index: {}]
  %s2 = inlined_call_operand.vmem [shape: f32[2,4,18,18], index: 2, kind: input, shape index: {}]
  %s3 = inlined_call_operand.hbm [shape: f32[2,8,16,16], index: 3, kind: output, shape index: {}]
  %s4 = sld [smem:[#allocation0]]
  $region53: #{_conv2d_relu_forward.1} parent=0
    _
  %s6 = ssub.s32 1, %s4
  %s7 = scalar_select 0, %s6, %s4
  $region1: #{_conv2d_relu_forward.1} parent=0
    #allocation2 [shape = 'u8[1536]{0}', space=smem, size = 0x600, scoped, tag = 'input window, operand 0, single buffered']
    #allocation3 [shape = 's32[2]{0}', space=sflag, size = 0x8, scoped, tag = 'scoped memory for _conv2d_relu_forward.1']
    #allocation4 [shape = 's32[2]{0}', space=sflag, size = 0x8, scoped, tag = 'scoped memory for _conv2d_relu_forward.1']
    #allocation5 [shape = 'u8[512]{0}', space=smem, size = 0x200, scoped, tag = 'input window, operand 1, single buffered']
    #allocation6 [shape = 's32[1]{0}', space=sflag, size = 0x4, scoped, tag = 'scoped memory for _conv2d_relu_forward.1']
    #allocation7 [shape = 'u8[131072]{0}', space=vmem, size = 0x20000, scoped, tag = 'output window, operand 0']
    %8 = vsyncpa [#allocation4], 0
    %9 = vsyncpa [#allocation6], 0
    %10 = vsyncpa [#allocation3], 0
    %s11 = scalar_lea.sflag [#allocation3], 1
    %12 = vsyncpa %s11, 0
    loop: start=0, step=1, limit=4
    $region2: #{_conv2d_relu_forward.1} parent=1 // loop_pre_header
      _
    $region3: #{_conv2d_relu_forward.1} parent=1 // loop_header
      %s14 = sphi 0, %s18
      %p15 = scmp.ge.s32.totalorder %s14, 4
      %s22 = sphi 0, %s22
      %s24 = sphi 0, %s22
      %s25 = sphi 0, %s24
      %s39 = sphi 0, %s25
      %s43 = sphi 0, %s43
      %s45 = sphi 0, %s43
      %s46 = sphi 0, %s45
      %s60 = sphi 0, %s46
      %s66 = sphi 0, %s68
      %s69 = sphi 0, %s66
      %s70 = sphi 0, %s69
      %s86 = sphi 0, %s70
      %s92 = sphi 0, %s94
      %s95 = sphi 0, %s92
      %s96 = sphi 0, %s95
      %s112 = sphi 0, %s96
    $region4: #{_conv2d_relu_forward.1} parent=1 // loop_header_branch
      %17 = sbr.rel (%p15) target = $region8
    $region5: #{_conv2d_relu_forward.1} parent=1 // loop_body
      %s19 = ssub.s32 %s14, 1
      %s20 = ssub.s32 %s14, 2
      %s21 = sadd.s32 %s14, 1
      %s23 = sadd.s32 %s22, 1
      %p26 = scmp.eq.s32.totalorder %s14, 1
      %p27 = scmp.ne.s32.totalorder %s22, %s24
      %p28 = scmp.eq.s32.totalorder %s14, 0
      %p29 = por %p27, %p28
      %p30 = scmp.ne.s32.totalorder %s22, %s24
      %p31 = scmp.eq.s32.totalorder %s19, 1
      %p32 = por %p30, %p31
      %p33 = scmp.ne.s32.totalorder %s24, %s25
      %p34 = scmp.eq.s32.totalorder %s19, 0
      %p35 = por %p33, %p34
      %p36 = scmp.ne.s32.totalorder %s24, %s25
      %p37 = scmp.eq.s32.totalorder %s20, 1
      %p38 = por %p36, %p37
      %p40 = scmp.ne.s32.totalorder %s25, %s39
      %p41 = scmp.eq.s32.totalorder %s20, 0
      %p42 = por %p40, %p41
      %s44 = sadd.s32 %s43, 1
      %p47 = scmp.eq.s32.totalorder %s14, 1
      %p48 = scmp.ne.s32.totalorder %s43, %s45
      %p49 = scmp.eq.s32.totalorder %s14, 0
      %p50 = por %p48, %p49
      %p51 = scmp.ne.s32.totalorder %s43, %s45
      %p52 = scmp.eq.s32.totalorder %s19, 1
      %p53 = por %p51, %p52
      %p54 = scmp.ne.s32.totalorder %s45, %s46
      %p55 = scmp.eq.s32.totalorder %s19, 0
      %p56 = por %p54, %p55
      %p57 = scmp.ne.s32.totalorder %s45, %s46
      %p58 = scmp.eq.s32.totalorder %s20, 1
      %p59 = por %p57, %p58
      %p61 = scmp.ne.s32.totalorder %s46, %s60
      %p62 = scmp.eq.s32.totalorder %s20, 0
      %p63 = por %p61, %p62
      %s64 = ssub.s32 %s14, %s21
      %p65 = scmp.eq.s32.totalorder %s64, 0
      %s67 = sadd.s32 %s66, 1
      %s68 = scalar_select %p65, %s66, %s67
      %p71 = pneg %p65
      %p72 = scmp.eq.s32.totalorder %s14, 1
      %p73 = por %p71, %p72
      %p74 = scmp.ne.s32.totalorder %s66, %s69
      %p75 = scmp.eq.s32.totalorder %s14, 0
      %p76 = por %p74, %p75
      %p77 = scmp.ne.s32.totalorder %s66, %s69
      %p78 = scmp.eq.s32.totalorder %s19, 1
      %p79 = por %p77, %p78
      %p80 = scmp.ne.s32.totalorder %s69, %s70
      %p81 = scmp.eq.s32.totalorder %s19, 0
      %p82 = por %p80, %p81
      %p83 = scmp.ne.s32.totalorder %s69, %s70
      %p84 = scmp.eq.s32.totalorder %s20, 1
      %p85 = por %p83, %p84
      %p87 = scmp.ne.s32.totalorder %s70, %s86
      %p88 = scmp.eq.s32.totalorder %s20, 0
      %p89 = por %p87, %p88
      %s90 = ssub.s32 %s14, %s21
      %p91 = scmp.eq.s32.totalorder %s90, 0
      %s93 = sadd.s32 %s92, 1
      %s94 = scalar_select %p91, %s92, %s93
      %p97 = pneg %p91
      %p98 = scmp.eq.s32.totalorder %s14, 1
      %p99 = por %p97, %p98
      %p100 = scmp.ne.s32.totalorder %s92, %s95
      %p101 = scmp.eq.s32.totalorder %s14, 0
      %p102 = por %p100, %p101
      %p103 = scmp.ne.s32.totalorder %s92, %s95
      %p104 = scmp.eq.s32.totalorder %s19, 1
      %p105 = por %p103, %p104
      %p106 = scmp.ne.s32.totalorder %s95, %s96
      %p107 = scmp.eq.s32.totalorder %s19, 0
      %p108 = por %p106, %p107
      %p109 = scmp.ne.s32.totalorder %s95, %s96
      %p110 = scmp.eq.s32.totalorder %s20, 1
      %p111 = por %p109, %p110
      %p113 = scmp.ne.s32.totalorder %s96, %s112
      %p114 = scmp.eq.s32.totalorder %s20, 0
      %p115 = por %p113, %p114
      %p116 = scmp.le.s32.totalorder 1, %s14
      %p117 = scmp.lt.s32.totalorder %s14, 3
      %p118 = pnand %p116, %p117
      %p119 = pneg %p118
      // Predicated region
      $region9: #{_conv2d_relu_forward.1} parent=5 // pred_check
        _
      $region10: #{_conv2d_relu_forward.1} parent=5 // pred_check_branch
        %121 = sbr.rel (%p118) target = $region12
      $region11: #{_conv2d_relu_forward.1} parent=5 // pred_region
        %s122 = ssub.s32 %s14, 1
        // Predicated region
        $region13: #{_conv2d_relu_forward.1} parent=11 // pred_check
          %p123 = pneg %p35
        $region14: #{_conv2d_relu_forward.1} parent=11 // pred_check_branch
          %125 = sbr.rel (%p123) target = $region16
        $region15: #{_conv2d_relu_forward.1} parent=11 // pred_region
          %s127 = ssub.s32 48, 48
          %128 = vsyncadd [#allocation4], %s127
          %s130 = sshll.u32 %s0, 4
          %s131 = int_to_ptr.vmem [resolvable:$true] %s130
          %133 = dma.vmem_to_smem %s131, 48, [#allocation2], [#allocation4]
        $region16: #{_conv2d_relu_forward.1} parent=11 // pred_fallthru
          _
        // Predicated region
        $region17: #{_conv2d_relu_forward.1} parent=11 // pred_check
          %p134 = pneg %p56
        $region18: #{_conv2d_relu_forward.1} parent=11 // pred_check_branch
          %136 = sbr.rel (%p134) target = $region20
        $region19: #{_conv2d_relu_forward.1} parent=11 // pred_region
          %s138 = ssub.s32 16, 16
          %139 = vsyncadd [#allocation6], %s138
          %s141 = sshll.u32 %s1, 4
          %s142 = int_to_ptr.vmem [resolvable:$true] %s141
          %144 = dma.vmem_to_smem %s142, 16, [#allocation5], [#allocation6]
        $region20: #{_conv2d_relu_forward.1} parent=11 // pred_fallthru
          _
      $region12: #{_conv2d_relu_forward.1} parent=5 // pred_fallthru
        _
      %p145 = scmp.lt.s32.totalorder %s14, 2
      // Predicated region
      $region21: #{_conv2d_relu_forward.1} parent=5 // pred_check
        %p146 = pneg %p145
      $region22: #{_conv2d_relu_forward.1} parent=5 // pred_check_branch
        %148 = sbr.rel (%p146) target = $region24
      $region23: #{_conv2d_relu_forward.1} parent=5 // pred_region
        // Predicated region
        $region25: #{_conv2d_relu_forward.1} parent=23 // pred_check
          %p149 = pneg %p76
        $region26: #{_conv2d_relu_forward.1} parent=23 // pred_check_branch
          %151 = sbr.rel (%p149) target = $region28
        $region27: #{_conv2d_relu_forward.1} parent=23 // pred_region
          %p152 = scmp.lt.s32.totalorder %s14, 1
          %s153 = scalar_select %p152, %s14, 1
          %s154 = smul.addr %s153, 12
          %s155 = smul.addr %s154, 8
          %s156 = scalar_lea.vmem %s2, %s155
        $region28: #{_conv2d_relu_forward.1} parent=23 // pred_fallthru
          _
      $region24: #{_conv2d_relu_forward.1} parent=5 // pred_fallthru
        _
      %p157 = scmp.le.s32.totalorder 1, %s14
      %p158 = scmp.lt.s32.totalorder %s14, 3
      %p159 = pnand %p157, %p158
      %p160 = pneg %p159
      // Predicated region
      $region29: #{_conv2d_relu_forward.1} parent=5 // pred_check
        _
      $region30: #{_conv2d_relu_forward.1} parent=5 // pred_check_branch
        %162 = sbr.rel (%p159) target = $region32
      $region31: #{_conv2d_relu_forward.1} parent=5 // pred_region
        %s163 = ssub.s32 %s14, 1
        // Predicated region
        $region33: #{_conv2d_relu_forward.1} parent=31 // pred_check
          %p164 = pneg %p35
        $region34: #{_conv2d_relu_forward.1} parent=31 // pred_check_branch
          %166 = sbr.rel (%p164) target = $region36
        $region35: #{_conv2d_relu_forward.1} parent=31 // pred_region
          %167 = dma.done [#allocation4], 48
        $region36: #{_conv2d_relu_forward.1} parent=31 // pred_fallthru
          _
        // Predicated region
        $region37: #{_conv2d_relu_forward.1} parent=31 // pred_check
          %p168 = pneg %p56
        $region38: #{_conv2d_relu_forward.1} parent=31 // pred_check_branch
          %170 = sbr.rel (%p168) target = $region40
        $region39: #{_conv2d_relu_forward.1} parent=31 // pred_region
          %171 = dma.done [#allocation6], 16
        $region40: #{_conv2d_relu_forward.1} parent=31 // pred_fallthru
          _
        %172 = sfence
        %p173 = pneg %p35
        %p174 = pneg %p32
        %p175 = pneg %p56
        %p176 = pneg %p53
        %p177 = scmp.lt.s32.totalorder %s19, 1
        %s178 = scalar_select %p177, %s19, 1
        %s179 = smul.addr %s178, 12
        %s180 = smul.addr %s179, 8
        %s181 = scalar_lea.vmem %s2, %s180
        %p182 = pneg %p82
        %p183 = pneg %p79
        %p184 = pneg %p108
        %p185 = pneg %p105
        %s186 = sand.u32 %s95, 1
        %s187 = scalar_lea.sflag [#allocation3], %s186
        %s188 = sand.u32 %s95, 1
        %s189 = smul.addr %s188, 128
        %s190 = scalar_lea.vmem [#allocation7], %s189
        %p191 = scmp.lt.s32.totalorder %s19, 1
        %s192 = scalar_select %p191, %s19, 1
        %s193 = smul.addr %s192, 12
        %s194 = smul.addr %s193, 8
        %s195 = scalar_lea.vmem %s2, %s194
        %s196 = sld [smem:[#allocation2]]
        %v197 = vld [vmem:[%s195] sm:$0xff]
        %v198 = vld [vmem:[%s195 + $0x8] sm:$0xff]
        %v199 = vstv %s196
        %v200 = vmul.f32 %v197, %v199
        %v201 = vmul.f32 %v198, %v199
        %v202 = vadd.f32 %v200, 0.0
        %v203 = vadd.f32 %v201, 0.0
        %s204 = sld [smem:[#allocation2 + $0x1]]
        %v205 = vstv %s204
        %v206 = vmul.f32 %v197, %v205
        %v207 = vmul.f32 %v198, %v205
        %210 = vrot.lane.b32.xlu0 %v206, 127
        %v211 = vpop.permute.xlu0 %210
        %212 = vrot.lane.b32.xlu0 %v207, 127
        %v213 = vpop.permute.xlu0 %212
        %v216 = vadd.f32 %v202, %v211
        %v217 = vadd.f32 %v203, %v213
        %s218 = sld [smem:[#allocation2 + $0x2]]
        %v219 = vstv %s218
        %v220 = vmul.f32 %v197, %v219
        %v221 = vmul.f32 %v198, %v219
        %224 = vrot.lane.b32.xlu0 %v220, 126
        %v225 = vpop.permute.xlu0 %224
        %226 = vrot.lane.b32.xlu0 %v221, 126
        %v227 = vpop.permute.xlu0 %226
        %v230 = vadd.f32 %v216, %v225
        %v231 = vadd.f32 %v217, %v227
        %s232 = sld [smem:[#allocation2 + $0x3]]
        %v233 = vld [vmem:[%s195 + $0x1] sm:$0xff]
        %v234 = vld [vmem:[%s195 + $0x9] sm:$0xff]
        %v235 = vstv %s232
        %v236 = vmul.f32 %v233, %v235
        %v237 = vmul.f32 %v234, %v235
        %v238 = vadd.f32 %v230, %v236
        %v239 = vadd.f32 %v231, %v237
        %s240 = sld [smem:[#allocation2 + $0x4]]
        %v241 = vstv %s240
        %v242 = vmul.f32 %v233, %v241
        %v243 = vmul.f32 %v234, %v241
        %246 = vrot.lane.b32.xlu0 %v242, 127
        %v247 = vpop.permute.xlu0 %246
        %248 = vrot.lane.b32.xlu0 %v243, 127
        %v249 = vpop.permute.xlu0 %248
        %v252 = vadd.f32 %v238, %v247
        %v253 = vadd.f32 %v239, %v249
        %s254 = sld [smem:[#allocation2 + $0x5]]
        %v255 = vstv %s254
        %v256 = vmul.f32 %v233, %v255
        %v257 = vmul.f32 %v234, %v255
        %260 = vrot.lane.b32.xlu0 %v256, 126
        %v261 = vpop.permute.xlu0 %260
        %262 = vrot.lane.b32.xlu0 %v257, 126
        %v263 = vpop.permute.xlu0 %262
        %v266 = vadd.f32 %v252, %v261
        %v267 = vadd.f32 %v253, %v263
        %s268 = sld [smem:[#allocation2 + $0x6]]
        %v269 = vld [vmem:[%s195 + $0x2] sm:$0xff]
        %v270 = vld [vmem:[%s195 + $0xa] sm:$0xff]
        %v271 = vstv %s268
        %v272 = vmul.f32 %v269, %v271
        %v273 = vmul.f32 %v270, %v271
        %v274 = vadd.f32 %v266, %v272
        %v275 = vadd.f32 %v267, %v273
        %s276 = sld [smem:[#allocation2 + $0x7]]
        %v277 = vstv %s276
        %v278 = vmul.f32 %v269, %v277
        %v279 = vmul.f32 %v270, %v277
        %282 = vrot.lane.b32.xlu0 %v278, 127
        %v283 = vpop.permute.xlu0 %282
        %284 = vrot.lane.b32.xlu0 %v279, 127
        %v285 = vpop.permute.xlu0 %284
        %v288 = vadd.f32 %v274, %v283
        %v289 = vadd.f32 %v275, %v285
        %s290 = sld [smem:[#allocation2 + $0x8]]
        %v291 = vstv %s290
        %v292 = vmul.f32 %v269, %v291
        %v293 = vmul.f32 %v270, %v291
        %296 = vrot.lane.b32.xlu0 %v292, 126
        %v297 = vpop.permute.xlu0 %296
        %298 = vrot.lane.b32.xlu0 %v293, 126
        %v299 = vpop.permute.xlu0 %298
        %v302 = vadd.f32 %v288, %v297
        %v303 = vadd.f32 %v289, %v299
        %s304 = sld [smem:[#allocation2 + $0x9]]
        %s305 = scalar_lea.vmem %s195, 24
        %v306 = vld [vmem:[%s305] sm:$0xff]
        %v307 = vld [vmem:[%s305 + $0x8] sm:$0xff]
        %v308 = vstv %s304
        %v309 = vmul.f32 %v306, %v308
        %v310 = vmul.f32 %v307, %v308
        %v311 = vadd.f32 %v302, %v309
        %v312 = vadd.f32 %v303, %v310
        %s313 = sld [smem:[#allocation2 + $0xa]]
        %v314 = vstv %s313
        %v315 = vmul.f32 %v306, %v314
        %v316 = vmul.f32 %v307, %v314
        %319 = vrot.lane.b32.xlu0 %v315, 127
        %v320 = vpop.permute.xlu0 %319
        %321 = vrot.lane.b32.xlu0 %v316, 127
        %v322 = vpop.permute.xlu0 %321
        %v325 = vadd.f32 %v311, %v320
        %v326 = vadd.f32 %v312, %v322
        %s327 = sld [smem:[#allocation2 + $0xb]]
        %v328 = vstv %s327
        %v329 = vmul.f32 %v306, %v328
        %v330 = vmul.f32 %v307, %v328
        %333 = vrot.lane.b32.xlu0 %v329, 126
        %v334 = vpop.permute.xlu0 %333
        %335 = vrot.lane.b32.xlu0 %v330, 126
        %v336 = vpop.permute.xlu0 %335
        %v339 = vadd.f32 %v325, %v334
        %v340 = vadd.f32 %v326, %v336
        %s341 = sld [smem:[#allocation2 + $0xc]]
        %v342 = vld [vmem:[%s305 + $0x1] sm:$0xff]
        %v343 = vld [vmem:[%s305 + $0x9] sm:$0xff]
        %v344 = vstv %s341
        %v345 = vmul.f32 %v342, %v344
        %v346 = vmul.f32 %v343, %v344
        %v347 = vadd.f32 %v339, %v345
        %v348 = vadd.f32 %v340, %v346
        %s349 = sld [smem:[#allocation2 + $0xd]]
        %v350 = vstv %s349
        %v351 = vmul.f32 %v342, %v350
        %v352 = vmul.f32 %v343, %v350
        %355 = vrot.lane.b32.xlu0 %v351, 127
        %v356 = vpop.permute.xlu0 %355
        %357 = vrot.lane.b32.xlu0 %v352, 127
        %v358 = vpop.permute.xlu0 %357
        %v361 = vadd.f32 %v347, %v356
        %v362 = vadd.f32 %v348, %v358
        %s363 = sld [smem:[#allocation2 + $0xe]]
        %v364 = vstv %s363
        %v365 = vmul.f32 %v342, %v364
        %v366 = vmul.f32 %v343, %v364
        %369 = vrot.lane.b32.xlu0 %v365, 126
        %v370 = vpop.permute.xlu0 %369
        %371 = vrot.lane.b32.xlu0 %v366, 126
        %v372 = vpop.permute.xlu0 %371
        %v375 = vadd.f32 %v361, %v370
        %v376 = vadd.f32 %v362, %v372
        %s377 = sld [smem:[#allocation2 + $0xf]]
        %v378 = vld [vmem:[%s305 + $0x2] sm:$0xff]
        %v379 = vld [vmem:[%s305 + $0xa] sm:$0xff]
        %v380 = vstv %s377
        %v381 = vmul.f32 %v378, %v380
        %v382 = vmul.f32 %v379, %v380
        %v383 = vadd.f32 %v375, %v381
        %v384 = vadd.f32 %v376, %v382
        %s385 = sld [smem:[#allocation2 + $0x10]]
        %v386 = vstv %s385
        %v387 = vmul.f32 %v378, %v386
        %v388 = vmul.f32 %v379, %v386
        %391 = vrot.lane.b32.xlu0 %v387, 127
        %v392 = vpop.permute.xlu0 %391
        %393 = vrot.lane.b32.xlu0 %v388, 127
        %v394 = vpop.permute.xlu0 %393
        %v397 = vadd.f32 %v383, %v392
        %v398 = vadd.f32 %v384, %v394
        %s399 = sld [smem:[#allocation2 + $0x11]]
        %v400 = vstv %s399
        %v401 = vmul.f32 %v378, %v400
        %v402 = vmul.f32 %v379, %v400
        %405 = vrot.lane.b32.xlu0 %v401, 126
        %v406 = vpop.permute.xlu0 %405
        %407 = vrot.lane.b32.xlu0 %v402, 126
        %v408 = vpop.permute.xlu0 %407
        %v411 = vadd.f32 %v397, %v406
        %v412 = vadd.f32 %v398, %v408
        %s413 = sld [smem:[#allocation2 + $0x12]]
        %s414 = scalar_lea.vmem %s195, 48
        %v415 = vld [vmem:[%s414] sm:$0xff]
        %v416 = vld [vmem:[%s414 + $0x8] sm:$0xff]
        %v417 = vstv %s413
        %v418 = vmul.f32 %v415, %v417
        %v419 = vmul.f32 %v416, %v417
        %v420 = vadd.f32 %v411, %v418
        %v421 = vadd.f32 %v412, %v419
        %s422 = sld [smem:[#allocation2 + $0x13]]
        %v423 = vstv %s422
        %v424 = vmul.f32 %v415, %v423
        %v425 = vmul.f32 %v416, %v423
        %428 = vrot.lane.b32.xlu0 %v424, 127
        %v429 = vpop.permute.xlu0 %428
        %430 = vrot.lane.b32.xlu0 %v425, 127
        %v431 = vpop.permute.xlu0 %430
        %v434 = vadd.f32 %v420, %v429
        %v435 = vadd.f32 %v421, %v431
        %s436 = sld [smem:[#allocation2 + $0x14]]
        %v437 = vstv %s436
        %v438 = vmul.f32 %v415, %v437
        %v439 = vmul.f32 %v416, %v437
        %442 = vrot.lane.b32.xlu0 %v438, 126
        %v443 = vpop.permute.xlu0 %442
        %444 = vrot.lane.b32.xlu0 %v439, 126
        %v445 = vpop.permute.xlu0 %444
        %v448 = vadd.f32 %v434, %v443
        %v449 = vadd.f32 %v435, %v445
        %s450 = sld [smem:[#allocation2 + $0x15]]
        %v451 = vld [vmem:[%s414 + $0x1] sm:$0xff]
        %v452 = vld [vmem:[%s414 + $0x9] sm:$0xff]
        %v453 = vstv %s450
        %v454 = vmul.f32 %v451, %v453
        %v455 = vmul.f32 %v452, %v453
        %v456 = vadd.f32 %v448, %v454
        %v457 = vadd.f32 %v449, %v455
        %s458 = sld [smem:[#allocation2 + $0x16]]
        %v459 = vstv %s458
        %v460 = vmul.f32 %v451, %v459
        %v461 = vmul.f32 %v452, %v459
        %464 = vrot.lane.b32.xlu0 %v460, 127
        %v465 = vpop.permute.xlu0 %464
        %466 = vrot.lane.b32.xlu0 %v461, 127
        %v467 = vpop.permute.xlu0 %466
        %v470 = vadd.f32 %v456, %v465
        %v471 = vadd.f32 %v457, %v467
        %s472 = sld [smem:[#allocation2 + $0x17]]
        %v473 = vstv %s472
        %v474 = vmul.f32 %v451, %v473
        %v475 = vmul.f32 %v452, %v473
        %478 = vrot.lane.b32.xlu0 %v474, 126
        %v479 = vpop.permute.xlu0 %478
        %480 = vrot.lane.b32.xlu0 %v475, 126
        %v481 = vpop.permute.xlu0 %480
        %v484 = vadd.f32 %v470, %v479
        %v485 = vadd.f32 %v471, %v481
        %s486 = sld [smem:[#allocation2 + $0x18]]
        %v487 = vld [vmem:[%s414 + $0x2] sm:$0xff]
        %v488 = vld [vmem:[%s414 + $0xa] sm:$0xff]
        %v489 = vstv %s486
        %v490 = vmul.f32 %v487, %v489
        %v491 = vmul.f32 %v488, %v489
        %v492 = vadd.f32 %v484, %v490
        %v493 = vadd.f32 %v485, %v491
        %s494 = sld [smem:[#allocation2 + $0x19]]
        %v495 = vstv %s494
        %v496 = vmul.f32 %v487, %v495
        %v497 = vmul.f32 %v488, %v495
        %500 = vrot.lane.b32.xlu0 %v496, 127
        %v501 = vpop.permute.xlu0 %500
        %502 = vrot.lane.b32.xlu0 %v497, 127
        %v503 = vpop.permute.xlu0 %502
        %v506 = vadd.f32 %v492, %v501
        %v507 = vadd.f32 %v493, %v503
        %s508 = sld [smem:[#allocation2 + $0x1a]]
        %v509 = vstv %s508
        %v510 = vmul.f32 %v487, %v509
        %v511 = vmul.f32 %v488, %v509
        %514 = vrot.lane.b32.xlu0 %v510, 126
        %v515 = vpop.permute.xlu0 %514
        %516 = vrot.lane.b32.xlu0 %v511, 126
        %v517 = vpop.permute.xlu0 %516
        %v520 = vadd.f32 %v506, %v515
        %v521 = vadd.f32 %v507, %v517
        %s522 = sld [smem:[#allocation2 + $0x1b]]
        %s523 = scalar_lea.vmem %s195, 72
        %v524 = vld [vmem:[%s523] sm:$0xff]
        %v525 = vld [vmem:[%s523 + $0x8] sm:$0xff]
        %v526 = vstv %s522
        %v527 = vmul.f32 %v524, %v526
        %v528 = vmul.f32 %v525, %v526
        %v529 = vadd.f32 %v520, %v527
        %v530 = vadd.f32 %v521, %v528
        %s531 = sld [smem:[#allocation2 + $0x1c]]
        %v532 = vstv %s531
        %v533 = vmul.f32 %v524, %v532
        %v534 = vmul.f32 %v525, %v532
        %537 = vrot.lane.b32.xlu0 %v533, 127
        %v538 = vpop.permute.xlu0 %537
        %539 = vrot.lane.b32.xlu0 %v534, 127
        %v540 = vpop.permute.xlu0 %539
        %v543 = vadd.f32 %v529, %v538
        %v544 = vadd.f32 %v530, %v540
        %s545 = sld [smem:[#allocation2 + $0x1d]]
        %v546 = vstv %s545
        %v547 = vmul.f32 %v524, %v546
        %v548 = vmul.f32 %v525, %v546
        %551 = vrot.lane.b32.xlu0 %v547, 126
        %v552 = vpop.permute.xlu0 %551
        %553 = vrot.lane.b32.xlu0 %v548, 126
        %v554 = vpop.permute.xlu0 %553
        %v557 = vadd.f32 %v543, %v552
        %v558 = vadd.f32 %v544, %v554
        %s559 = sld [smem:[#allocation2 + $0x1e]]
        %v560 = vld [vmem:[%s523 + $0x1] sm:$0xff]
        %v561 = vld [vmem:[%s523 + $0x9] sm:$0xff]
        %v562 = vstv %s559
        %v563 = vmul.f32 %v560, %v562
        %v564 = vmul.f32 %v561, %v562
        %v565 = vadd.f32 %v557, %v563
        %v566 = vadd.f32 %v558, %v564
        %s567 = sld [smem:[#allocation2 + $0x1f]]
        %v568 = vstv %s567
        %v569 = vmul.f32 %v560, %v568
        %v570 = vmul.f32 %v561, %v568
        %573 = vrot.lane.b32.xlu0 %v569, 127
        %v574 = vpop.permute.xlu0 %573
        %575 = vrot.lane.b32.xlu0 %v570, 127
        %v576 = vpop.permute.xlu0 %575
        %v579 = vadd.f32 %v565, %v574
        %v580 = vadd.f32 %v566, %v576
        %s581 = sld [smem:[#allocation2 + $0x20]]
        %v582 = vstv %s581
        %v583 = vmul.f32 %v560, %v582
        %v584 = vmul.f32 %v561, %v582
        %587 = vrot.lane.b32.xlu0 %v583, 126
        %v588 = vpop.permute.xlu0 %587
        %589 = vrot.lane.b32.xlu0 %v584, 126
        %v590 = vpop.permute.xlu0 %589
        %v593 = vadd.f32 %v579, %v588
        %v594 = vadd.f32 %v580, %v590
        %s595 = sld [smem:[#allocation2 + $0x21]]
        %v596 = vld [vmem:[%s523 + $0x2] sm:$0xff]
        %v597 = vld [vmem:[%s523 + $0xa] sm:$0xff]
        %v598 = vstv %s595
        %v599 = vmul.f32 %v596, %v598
        %v600 = vmul.f32 %v597, %v598
        %v601 = vadd.f32 %v593, %v599
        %v602 = vadd.f32 %v594, %v600
        %s603 = sld [smem:[#allocation2 + $0x22]]
        %v604 = vstv %s603
        %v605 = vmul.f32 %v596, %v604
        %v606 = vmul.f32 %v597, %v604
        %609 = vrot.lane.b32.xlu0 %v605, 127
        %v610 = vpop.permute.xlu0 %609
        %611 = vrot.lane.b32.xlu0 %v606, 127
        %v612 = vpop.permute.xlu0 %611
        %v615 = vadd.f32 %v601, %v610
        %v616 = vadd.f32 %v602, %v612
        %s617 = sld [smem:[#allocation2 + $0x23]]
        %v618 = vstv %s617
        %v619 = vmul.f32 %v596, %v618
        %v620 = vmul.f32 %v597, %v618
        %623 = vrot.lane.b32.xlu0 %v619, 126
        %v624 = vpop.permute.xlu0 %623
        %625 = vrot.lane.b32.xlu0 %v620, 126
        %v626 = vpop.permute.xlu0 %625
        %v629 = vadd.f32 %v615, %v624
        %v630 = vadd.f32 %v616, %v626
        %s631 = sld [smem:[#allocation5]]
        %v632 = vstv %s631
        %v633 = vadd.f32 %v629, %v632
        %v634 = vadd.f32 %v630, %v632
        %v635 = vmax.f32 %v633, 0.0
        %v636 = vmax.f32 %v634, 0.0
        %vm637 = vcmask 130048
        %638 = vst.msk [vmem:[%s190] sm:$0xff] %vm637, %v635
        %639 = vst.msk [vmem:[%s190 + $0x8] sm:$0xff] %vm637, %v636
        %s640 = sld [smem:[#allocation2 + $0x24]]
        %v641 = vld [vmem:[%s195] sm:$0xff]
        %v642 = vld [vmem:[%s195 + $0x8] sm:$0xff]
        %v643 = vstv %s640
        %v644 = vmul.f32 %v641, %v643
        %v645 = vmul.f32 %v642, %v643
        %v646 = vadd.f32 %v644, 0.0
        %v647 = vadd.f32 %v645, 0.0
        %s648 = sld [smem:[#allocation2 + $0x25]]
        %v649 = vstv %s648
        %v650 = vmul.f32 %v641, %v649
        %v651 = vmul.f32 %v642, %v649
        %654 = vrot.lane.b32.xlu0 %v650, 127
        %v655 = vpop.permute.xlu0 %654
        %656 = vrot.lane.b32.xlu0 %v651, 127
        %v657 = vpop.permute.xlu0 %656
        %v660 = vadd.f32 %v646, %v655
        %v661 = vadd.f32 %v647, %v657
        %s662 = sld [smem:[#allocation2 + $0x26]]
        %v663 = vstv %s662
        %v664 = vmul.f32 %v641, %v663
        %v665 = vmul.f32 %v642, %v663
        %668 = vrot.lane.b32.xlu0 %v664, 126
        %v669 = vpop.permute.xlu0 %668
        %670 = vrot.lane.b32.xlu0 %v665, 126
        %v671 = vpop.permute.xlu0 %670
        %v674 = vadd.f32 %v660, %v669
        %v675 = vadd.f32 %v661, %v671
        %s676 = sld [smem:[#allocation2 + $0x27]]
        %v677 = vld [vmem:[%s195 + $0x1] sm:$0xff]
        %v678 = vld [vmem:[%s195 + $0x9] sm:$0xff]
        %v679 = vstv %s676
        %v680 = vmul.f32 %v677, %v679
        %v681 = vmul.f32 %v678, %v679
        %v682 = vadd.f32 %v674, %v680
        %v683 = vadd.f32 %v675, %v681
        %s684 = sld [smem:[#allocation2 + $0x28]]
        %v685 = vstv %s684
        %v686 = vmul.f32 %v677, %v685
        %v687 = vmul.f32 %v678, %v685
        %690 = vrot.lane.b32.xlu0 %v686, 127
        %v691 = vpop.permute.xlu0 %690
        %692 = vrot.lane.b32.xlu0 %v687, 127
        %v693 = vpop.permute.xlu0 %692
        %v696 = vadd.f32 %v682, %v691
        %v697 = vadd.f32 %v683, %v693
        %s698 = sld [smem:[#allocation2 + $0x29]]
        %v699 = vstv %s698
        %v700 = vmul.f32 %v677, %v699
        %v701 = vmul.f32 %v678, %v699
        %704 = vrot.lane.b32.xlu0 %v700, 126
        %v705 = vpop.permute.xlu0 %704
        %706 = vrot.lane.b32.xlu0 %v701, 126
        %v707 = vpop.permute.xlu0 %706
        %v710 = vadd.f32 %v696, %v705
        %v711 = vadd.f32 %v697, %v707
        %s712 = sld [smem:[#allocation2 + $0x2a]]
        %v713 = vld [vmem:[%s195 + $0x2] sm:$0xff]
        %v714 = vld [vmem:[%s195 + $0xa] sm:$0xff]
        %v715 = vstv %s712
        %v716 = vmul.f32 %v713, %v715
        %v717 = vmul.f32 %v714, %v715
        %v718 = vadd.f32 %v710, %v716
        %v719 = vadd.f32 %v711, %v717
        %s720 = sld [smem:[#allocation2 + $0x2b]]
        %v721 = vstv %s720
        %v722 = vmul.f32 %v713, %v721
        %v723 = vmul.f32 %v714, %v721
        %726 = vrot.lane.b32.xlu0 %v722, 127
        %v727 = vpop.permute.xlu0 %726
        %728 = vrot.lane.b32.xlu0 %v723, 127
        %v729 = vpop.permute.xlu0 %728
        %v732 = vadd.f32 %v718, %v727
        %v733 = vadd.f32 %v719, %v729
        %s734 = sld [smem:[#allocation2 + $0x2c]]
        %v735 = vstv %s734
        %v736 = vmul.f32 %v713, %v735
        %v737 = vmul.f32 %v714, %v735
        %740 = vrot.lane.b32.xlu0 %v736, 126
        %v741 = vpop.permute.xlu0 %740
        %742 = vrot.lane.b32.xlu0 %v737, 126
        %v743 = vpop.permute.xlu0 %742
        %v746 = vadd.f32 %v732, %v741
        %v747 = vadd.f32 %v733, %v743
        %s748 = sld [smem:[#allocation2 + $0x2d]]
        %v749 = vld [vmem:[%s305] sm:$0xff]
        %v750 = vld [vmem:[%s305 + $0x8] sm:$0xff]
        %v751 = vstv %s748
        %v752 = vmul.f32 %v749, %v751
        %v753 = vmul.f32 %v750, %v751
        %v754 = vadd.f32 %v746, %v752
        %v755 = vadd.f32 %v747, %v753
        %s756 = sld [smem:[#allocation2 + $0x2e]]
        %v757 = vstv %s756
        %v758 = vmul.f32 %v749, %v757
        %v759 = vmul.f32 %v750, %v757
        %762 = vrot.lane.b32.xlu0 %v758, 127
        %v763 = vpop.permute.xlu0 %762
        %764 = vrot.lane.b32.xlu0 %v759, 127
        %v765 = vpop.permute.xlu0 %764
        %v768 = vadd.f32 %v754, %v763
        %v769 = vadd.f32 %v755, %v765
        %s770 = sld [smem:[#allocation2 + $0x2f]]
        %v771 = vstv %s770
        %v772 = vmul.f32 %v749, %v771
        %v773 = vmul.f32 %v750, %v771
        %776 = vrot.lane.b32.xlu0 %v772, 126
        %v777 = vpop.permute.xlu0 %776
        %778 = vrot.lane.b32.xlu0 %v773, 126
        %v779 = vpop.permute.xlu0 %778
        %v782 = vadd.f32 %v768, %v777
        %v783 = vadd.f32 %v769, %v779
        %s784 = sld [smem:[#allocation2 + $0x30]]
        %v785 = vld [vmem:[%s305 + $0x1] sm:$0xff]
        %v786 = vld [vmem:[%s305 + $0x9] sm:$0xff]
        %v787 = vstv %s784
        %v788 = vmul.f32 %v785, %v787
        %v789 = vmul.f32 %v786, %v787
        %v790 = vadd.f32 %v782, %v788
        %v791 = vadd.f32 %v783, %v789
        %s792 = sld [smem:[#allocation2 + $0x31]]
        %v793 = vstv %s792
        %v794 = vmul.f32 %v785, %v793
        %v795 = vmul.f32 %v786, %v793
        %798 = vrot.lane.b32.xlu0 %v794, 127
        %v799 = vpop.permute.xlu0 %798
        %800 = vrot.lane.b32.xlu0 %v795, 127
        %v801 = vpop.permute.xlu0 %800
        %v804 = vadd.f32 %v790, %v799
        %v805 = vadd.f32 %v791, %v801
        %s806 = sld [smem:[#allocation2 + $0x32]]
        %v807 = vstv %s806
        %v808 = vmul.f32 %v785, %v807
        %v809 = vmul.f32 %v786, %v807
        %812 = vrot.lane.b32.xlu0 %v808, 126
        %v813 = vpop.permute.xlu0 %812
        %814 = vrot.lane.b32.xlu0 %v809, 126
        %v815 = vpop.permute.xlu0 %814
        %v818 = vadd.f32 %v804, %v813
        %v819 = vadd.f32 %v805, %v815
        %s820 = sld [smem:[#allocation2 + $0x33]]
        %v821 = vld [vmem:[%s305 + $0x2] sm:$0xff]
        %v822 = vld [vmem:[%s305 + $0xa] sm:$0xff]
        %v823 = vstv %s820
        %v824 = vmul.f32 %v821, %v823
        %v825 = vmul.f32 %v822, %v823
        %v826 = vadd.f32 %v818, %v824
        %v827 = vadd.f32 %v819, %v825
        %s828 = sld [smem:[#allocation2 + $0x34]]
        %v829 = vstv %s828
        %v830 = vmul.f32 %v821, %v829
        %v831 = vmul.f32 %v822, %v829
        %834 = vrot.lane.b32.xlu0 %v830, 127
        %v835 = vpop.permute.xlu0 %834
        %836 = vrot.lane.b32.xlu0 %v831, 127
        %v837 = vpop.permute.xlu0 %836
        %v840 = vadd.f32 %v826, %v835
        %v841 = vadd.f32 %v827, %v837
        %s842 = sld [smem:[#allocation2 + $0x35]]
        %v843 = vstv %s842
        %v844 = vmul.f32 %v821, %v843
        %v845 = vmul.f32 %v822, %v843
        %848 = vrot.lane.b32.xlu0 %v844, 126
        %v849 = vpop.permute.xlu0 %848
        %850 = vrot.lane.b32.xlu0 %v845, 126
        %v851 = vpop.permute.xlu0 %850
        %v854 = vadd.f32 %v840, %v849
        %v855 = vadd.f32 %v841, %v851
        %s856 = sld [smem:[#allocation2 + $0x36]]
        %v857 = vld [vmem:[%s414] sm:$0xff]
        %v858 = vld [vmem:[%s414 + $0x8] sm:$0xff]
        %v859 = vstv %s856
        %v860 = vmul.f32 %v857, %v859
        %v861 = vmul.f32 %v858, %v859
        %v862 = vadd.f32 %v854, %v860
        %v863 = vadd.f32 %v855, %v861
        %s864 = sld [smem:[#allocation2 + $0x37]]
        %v865 = vstv %s864
        %v866 = vmul.f32 %v857, %v865
        %v867 = vmul.f32 %v858, %v865
        %870 = vrot.lane.b32.xlu0 %v866, 127
        %v871 = vpop.permute.xlu0 %870
        %872 = vrot.lane.b32.xlu0 %v867, 127
        %v873 = vpop.permute.xlu0 %872
        %v876 = vadd.f32 %v862, %v871
        %v877 = vadd.f32 %v863, %v873
        %s878 = sld [smem:[#allocation2 + $0x38]]
        %v879 = vstv %s878
        %v880 = vmul.f32 %v857, %v879
        %v881 = vmul.f32 %v858, %v879
        %884 = vrot.lane.b32.xlu0 %v880, 126
        %v885 = vpop.permute.xlu0 %884
        %886 = vrot.lane.b32.xlu0 %v881, 126
        %v887 = vpop.permute.xlu0 %886
        %v890 = vadd.f32 %v876, %v885
        %v891 = vadd.f32 %v877, %v887
        %s892 = sld [smem:[#allocation2 + $0x39]]
        %v893 = vld [vmem:[%s414 + $0x1] sm:$0xff]
        %v894 = vld [vmem:[%s414 + $0x9] sm:$0xff]
        %v895 = vstv %s892
        %v896 = vmul.f32 %v893, %v895
        %v897 = vmul.f32 %v894, %v895
        %v898 = vadd.f32 %v890, %v896
        %v899 = vadd.f32 %v891, %v897
        %s900 = sld [smem:[#allocation2 + $0x3a]]
        %v901 = vstv %s900
        %v902 = vmul.f32 %v893, %v901
        %v903 = vmul.f32 %v894, %v901
        %906 = vrot.lane.b32.xlu0 %v902, 127
        %v907 = vpop.permute.xlu0 %906
        %908 = vrot.lane.b32.xlu0 %v903, 127
        %v909 = vpop.permute.xlu0 %908
        %v912 = vadd.f32 %v898, %v907
        %v913 = vadd.f32 %v899, %v909
        %s914 = sld [smem:[#allocation2 + $0x3b]]
        %v915 = vstv %s914
        %v916 = vmul.f32 %v893, %v915
        %v917 = vmul.f32 %v894, %v915
        %920 = vrot.lane.b32.xlu0 %v916, 126
        %v921 = vpop.permute.xlu0 %920
        %922 = vrot.lane.b32.xlu0 %v917, 126
        %v923 = vpop.permute.xlu0 %922
        %v926 = vadd.f32 %v912, %v921
        %v927 = vadd.f32 %v913, %v923
        %s928 = sld [smem:[#allocation2 + $0x3c]]
        %v929 = vld [vmem:[%s414 + $0x2] sm:$0xff]
        %v930 = vld [vmem:[%s414 + $0xa] sm:$0xff]
        %v931 = vstv %s928
        %v932 = vmul.f32 %v929, %v931
        %v933 = vmul.f32 %v930, %v931
        %v934 = vadd.f32 %v926, %v932
        %v935 = vadd.f32 %v927, %v933
        %s936 = sld [smem:[#allocation2 + $0x3d]]
        %v937 = vstv %s936
        %v938 = vmul.f32 %v929, %v937
        %v939 = vmul.f32 %v930, %v937
        %942 = vrot.lane.b32.xlu0 %v938, 127
        %v943 = vpop.permute.xlu0 %942
        %944 = vrot.lane.b32.xlu0 %v939, 127
        %v945 = vpop.permute.xlu0 %944
        %v948 = vadd.f32 %v934, %v943
        %v949 = vadd.f32 %v935, %v945
        %s950 = sld [smem:[#allocation2 + $0x3e]]
        %v951 = vstv %s950
        %v952 = vmul.f32 %v929, %v951
        %v953 = vmul.f32 %v930, %v951
        %956 = vrot.lane.b32.xlu0 %v952, 126
        %v957 = vpop.permute.xlu0 %956
        %958 = vrot.lane.b32.xlu0 %v953, 126
        %v959 = vpop.permute.xlu0 %958
        %v962 = vadd.f32 %v948, %v957
        %v963 = vadd.f32 %v949, %v959
        %s964 = sld [smem:[#allocation2 + $0x3f]]
        %v965 = vld [vmem:[%s523] sm:$0xff]
        %v966 = vld [vmem:[%s523 + $0x8] sm:$0xff]
        %v967 = vstv %s964
        %v968 = vmul.f32 %v965, %v967
        %v969 = vmul.f32 %v966, %v967
        %v970 = vadd.f32 %v962, %v968
        %v971 = vadd.f32 %v963, %v969
        %s972 = sld [smem:[#allocation2 + $0x40]]
        %v973 = vstv %s972
        %v974 = vmul.f32 %v965, %v973
        %v975 = vmul.f32 %v966, %v973
        %978 = vrot.lane.b32.xlu0 %v974, 127
        %v979 = vpop.permute.xlu0 %978
        %980 = vrot.lane.b32.xlu0 %v975, 127
        %v981 = vpop.permute.xlu0 %980
        %v984 = vadd.f32 %v970, %v979
        %v985 = vadd.f32 %v971, %v981
        %s986 = sld [smem:[#allocation2 + $0x41]]
        %v987 = vstv %s986
        %v988 = vmul.f32 %v965, %v987
        %v989 = vmul.f32 %v966, %v987
        %992 = vrot.lane.b32.xlu0 %v988, 126
        %v993 = vpop.permute.xlu0 %992
        %994 = vrot.lane.b32.xlu0 %v989, 126
        %v995 = vpop.permute.xlu0 %994
        %v998 = vadd.f32 %v984, %v993
        %v999 = vadd.f32 %v985, %v995
        %s1000 = sld [smem:[#allocation2 + $0x42]]
        %v1001 = vld [vmem:[%s523 + $0x1] sm:$0xff]
        %v1002 = vld [vmem:[%s523 + $0x9] sm:$0xff]
        %v1003 = vstv %s1000
        %v1004 = vmul.f32 %v1001, %v1003
        %v1005 = vmul.f32 %v1002, %v1003
        %v1006 = vadd.f32 %v998, %v1004
        %v1007 = vadd.f32 %v999, %v1005
        %s1008 = sld [smem:[#allocation2 + $0x43]]
        %v1009 = vstv %s1008
        %v1010 = vmul.f32 %v1001, %v1009
        %v1011 = vmul.f32 %v1002, %v1009
        %1014 = vrot.lane.b32.xlu0 %v1010, 127
        %v1015 = vpop.permute.xlu0 %1014
        %1016 = vrot.lane.b32.xlu0 %v1011, 127
        %v1017 = vpop.permute.xlu0 %1016
        %v1020 = vadd.f32 %v1006, %v1015
        %v1021 = vadd.f32 %v1007, %v1017
        %s1022 = sld [smem:[#allocation2 + $0x44]]
        %v1023 = vstv %s1022
        %v1024 = vmul.f32 %v1001, %v1023
        %v1025 = vmul.f32 %v1002, %v1023
        %1028 = vrot.lane.b32.xlu0 %v1024, 126
        %v1029 = vpop.permute.xlu0 %1028
        %1030 = vrot.lane.b32.xlu0 %v1025, 126
        %v1031 = vpop.permute.xlu0 %1030
        %v1034 = vadd.f32 %v1020, %v1029
        %v1035 = vadd.f32 %v1021, %v1031
        %s1036 = sld [smem:[#allocation2 + $0x45]]
        %v1037 = vld [vmem:[%s523 + $0x2] sm:$0xff]
        %v1038 = vld [vmem:[%s523 + $0xa] sm:$0xff]
        %v1039 = vstv %s1036
        %v1040 = vmul.f32 %v1037, %v1039
        %v1041 = vmul.f32 %v1038, %v1039
        %v1042 = vadd.f32 %v1034, %v1040
        %v1043 = vadd.f32 %v1035, %v1041
        %s1044 = sld [smem:[#allocation2 + $0x46]]
        %v1045 = vstv %s1044
        %v1046 = vmul.f32 %v1037, %v1045
        %v1047 = vmul.f32 %v1038, %v1045
        %1050 = vrot.lane.b32.xlu0 %v1046, 127
        %v1051 = vpop.permute.xlu0 %1050
        %1052 = vrot.lane.b32.xlu0 %v1047, 127
        %v1053 = vpop.permute.xlu0 %1052
        %v1056 = vadd.f32 %v1042, %v1051
        %v1057 = vadd.f32 %v1043, %v1053
        %s1058 = sld [smem:[#allocation2 + $0x47]]
        %v1059 = vstv %s1058
        %v1060 = vmul.f32 %v1037, %v1059
        %v1061 = vmul.f32 %v1038, %v1059
        %1064 = vrot.lane.b32.xlu0 %v1060, 126
        %v1065 = vpop.permute.xlu0 %1064
        %1066 = vrot.lane.b32.xlu0 %v1061, 126
        %v1067 = vpop.permute.xlu0 %1066
        %v1070 = vadd.f32 %v1056, %v1065
        %v1071 = vadd.f32 %v1057, %v1067
        %s1072 = sld [smem:[#allocation5 + $0x1]]
        %v1073 = vstv %s1072
        %v1074 = vadd.f32 %v1070, %v1073
        %v1075 = vadd.f32 %v1071, %v1073
        %v1076 = vmax.f32 %v1074, 0.0
        %v1077 = vmax.f32 %v1075, 0.0
        %s1078 = scalar_lea.vmem %s190, 16 [#allocation7]
        %1079 = vst.msk [vmem:[%s1078] sm:$0xff] %vm637, %v1076
        %1080 = vst.msk [vmem:[%s1078 + $0x8] sm:$0xff] %vm637, %v1077
        %s1081 = sld [smem:[#allocation2 + $0x48]]
        %v1082 = vld [vmem:[%s195] sm:$0xff]
        %v1083 = vld [vmem:[%s195 + $0x8] sm:$0xff]
        %v1084 = vstv %s1081
        %v1085 = vmul.f32 %v1082, %v1084
        %v1086 = vmul.f32 %v1083, %v1084
        %v1087 = vadd.f32 %v1085, 0.0
        %v1088 = vadd.f32 %v1086, 0.0
        %s1089 = sld [smem:[#allocation2 + $0x49]]
        %v1090 = vstv %s1089
        %v1091 = vmul.f32 %v1082, %v1090
        %v1092 = vmul.f32 %v1083, %v1090
        %1095 = vrot.lane.b32.xlu0 %v1091, 127
        %v1096 = vpop.permute.xlu0 %1095
        %1097 = vrot.lane.b32.xlu0 %v1092, 127
        %v1098 = vpop.permute.xlu0 %1097
        %v1101 = vadd.f32 %v1087, %v1096
        %v1102 = vadd.f32 %v1088, %v1098
        %s1103 = sld [smem:[#allocation2 + $0x4a]]
        %v1104 = vstv %s1103
        %v1105 = vmul.f32 %v1082, %v1104
        %v1106 = vmul.f32 %v1083, %v1104
        %1109 = vrot.lane.b32.xlu0 %v1105, 126
        %v1110 = vpop.permute.xlu0 %1109
        %1111 = vrot.lane.b32.xlu0 %v1106, 126
        %v1112 = vpop.permute.xlu0 %1111
        %v1115 = vadd.f32 %v1101, %v1110
        %v1116 = vadd.f32 %v1102, %v1112
        %s1117 = sld [smem:[#allocation2 + $0x4b]]
        %v1118 = vld [vmem:[%s195 + $0x1] sm:$0xff]
        %v1119 = vld [vmem:[%s195 + $0x9] sm:$0xff]
        %v1120 = vstv %s1117
        %v1121 = vmul.f32 %v1118, %v1120
        %v1122 = vmul.f32 %v1119, %v1120
        %v1123 = vadd.f32 %v1115, %v1121
        %v1124 = vadd.f32 %v1116, %v1122
        %s1125 = sld [smem:[#allocation2 + $0x4c]]
        %v1126 = vstv %s1125
        %v1127 = vmul.f32 %v1118, %v1126
        %v1128 = vmul.f32 %v1119, %v1126
        %1131 = vrot.lane.b32.xlu0 %v1127, 127
        %v1132 = vpop.permute.xlu0 %1131
        %1133 = vrot.lane.b32.xlu0 %v1128, 127
        %v1134 = vpop.permute.xlu0 %1133
        %v1137 = vadd.f32 %v1123, %v1132
        %v1138 = vadd.f32 %v1124, %v1134
        %s1139 = sld [smem:[#allocation2 + $0x4d]]
        %v1140 = vstv %s1139
        %v1141 = vmul.f32 %v1118, %v1140
        %v1142 = vmul.f32 %v1119, %v1140
        %1145 = vrot.lane.b32.xlu0 %v1141, 126
        %v1146 = vpop.permute.xlu0 %1145
        %1147 = vrot.lane.b32.xlu0 %v1142, 126
        %v1148 = vpop.permute.xlu0 %1147
        %v1151 = vadd.f32 %v1137, %v1146
        %v1152 = vadd.f32 %v1138, %v1148
        %s1153 = sld [smem:[#allocation2 + $0x4e]]
        %v1154 = vld [vmem:[%s195 + $0x2] sm:$0xff]
        %v1155 = vld [vmem:[%s195 + $0xa] sm:$0xff]
        %v1156 = vstv %s1153
        %v1157 = vmul.f32 %v1154, %v1156
        %v1158 = vmul.f32 %v1155, %v1156
        %v1159 = vadd.f32 %v1151, %v1157
        %v1160 = vadd.f32 %v1152, %v1158
        %s1161 = sld [smem:[#allocation2 + $0x4f]]
        %v1162 = vstv %s1161
        %v1163 = vmul.f32 %v1154, %v1162
        %v1164 = vmul.f32 %v1155, %v1162
        %1167 = vrot.lane.b32.xlu0 %v1163, 127
        %v1168 = vpop.permute.xlu0 %1167
        %1169 = vrot.lane.b32.xlu0 %v1164, 127
        %v1170 = vpop.permute.xlu0 %1169
        %v1173 = vadd.f32 %v1159, %v1168
        %v1174 = vadd.f32 %v1160, %v1170
        %s1175 = sld [smem:[#allocation2 + $0x50]]
        %v1176 = vstv %s1175
        %v1177 = vmul.f32 %v1154, %v1176
        %v1178 = vmul.f32 %v1155, %v1176
        %1181 = vrot.lane.b32.xlu0 %v1177, 126
        %v1182 = vpop.permute.xlu0 %1181
        %1183 = vrot.lane.b32.xlu0 %v1178, 126
        %v1184 = vpop.permute.xlu0 %1183
        %v1187 = vadd.f32 %v1173, %v1182
        %v1188 = vadd.f32 %v1174, %v1184
        %s1189 = sld [smem:[#allocation2 + $0x51]]
        %v1190 = vld [vmem:[%s305] sm:$0xff]
        %v1191 = vld [vmem:[%s305 + $0x8] sm:$0xff]
        %v1192 = vstv %s1189
        %v1193 = vmul.f32 %v1190, %v1192
        %v1194 = vmul.f32 %v1191, %v1192
        %v1195 = vadd.f32 %v1187, %v1193
        %v1196 = vadd.f32 %v1188, %v1194
        %s1197 = sld [smem:[#allocation2 + $0x52]]
        %v1198 = vstv %s1197
        %v1199 = vmul.f32 %v1190, %v1198
        %v1200 = vmul.f32 %v1191, %v1198
        %1203 = vrot.lane.b32.xlu0 %v1199, 127
        %v1204 = vpop.permute.xlu0 %1203
        %1205 = vrot.lane.b32.xlu0 %v1200, 127
        %v1206 = vpop.permute.xlu0 %1205
        %v1209 = vadd.f32 %v1195, %v1204
        %v1210 = vadd.f32 %v1196, %v1206
        %s1211 = sld [smem:[#allocation2 + $0x53]]
        %v1212 = vstv %s1211
        %v1213 = vmul.f32 %v1190, %v1212
        %v1214 = vmul.f32 %v1191, %v1212
        %1217 = vrot.lane.b32.xlu0 %v1213, 126
        %v1218 = vpop.permute.xlu0 %1217
        %1219 = vrot.lane.b32.xlu0 %v1214, 126
        %v1220 = vpop.permute.xlu0 %1219
        %v1223 = vadd.f32 %v1209, %v1218
        %v1224 = vadd.f32 %v1210, %v1220
        %s1225 = sld [smem:[#allocation2 + $0x54]]
        %v1226 = vld [vmem:[%s305 + $0x1] sm:$0xff]
        %v1227 = vld [vmem:[%s305 + $0x9] sm:$0xff]
        %v1228 = vstv %s1225
        %v1229 = vmul.f32 %v1226, %v1228
        %v1230 = vmul.f32 %v1227, %v1228
        %v1231 = vadd.f32 %v1223, %v1229
        %v1232 = vadd.f32 %v1224, %v1230
        %s1233 = sld [smem:[#allocation2 + $0x55]]
        %v1234 = vstv %s1233
        %v1235 = vmul.f32 %v1226, %v1234
        %v1236 = vmul.f32 %v1227, %v1234
        %1239 = vrot.lane.b32.xlu0 %v1235, 127
        %v1240 = vpop.permute.xlu0 %1239
        %1241 = vrot.lane.b32.xlu0 %v1236, 127
        %v1242 = vpop.permute.xlu0 %1241
        %v1245 = vadd.f32 %v1231, %v1240
        %v1246 = vadd.f32 %v1232, %v1242
        %s1247 = sld [smem:[#allocation2 + $0x56]]
        %v1248 = vstv %s1247
        %v1249 = vmul.f32 %v1226, %v1248
        %v1250 = vmul.f32 %v1227, %v1248
        %1253 = vrot.lane.b32.xlu0 %v1249, 126
        %v1254 = vpop.permute.xlu0 %1253
        %1255 = vrot.lane.b32.xlu0 %v1250, 126
        %v1256 = vpop.permute.xlu0 %1255
        %v1259 = vadd.f32 %v1245, %v1254
        %v1260 = vadd.f32 %v1246, %v1256
        %s1261 = sld [smem:[#allocation2 + $0x57]]
        %v1262 = vld [vmem:[%s305 + $0x2] sm:$0xff]
        %v1263 = vld [vmem:[%s305 + $0xa] sm:$0xff]
        %v1264 = vstv %s1261
        %v1265 = vmul.f32 %v1262, %v1264
        %v1266 = vmul.f32 %v1263, %v1264
        %v1267 = vadd.f32 %v1259, %v1265
        %v1268 = vadd.f32 %v1260, %v1266
        %s1269 = sld [smem:[#allocation2 + $0x58]]
        %v1270 = vstv %s1269
        %v1271 = vmul.f32 %v1262, %v1270
        %v1272 = vmul.f32 %v1263, %v1270
        %1275 = vrot.lane.b32.xlu0 %v1271, 127
        %v1276 = vpop.permute.xlu0 %1275
        %1277 = vrot.lane.b32.xlu0 %v1272, 127
        %v1278 = vpop.permute.xlu0 %1277
        %v1281 = vadd.f32 %v1267, %v1276
        %v1282 = vadd.f32 %v1268, %v1278
        %s1283 = sld [smem:[#allocation2 + $0x59]]
        %v1284 = vstv %s1283
        %v1285 = vmul.f32 %v1262, %v1284
        %v1286 = vmul.f32 %v1263, %v1284
        %1289 = vrot.lane.b32.xlu0 %v1285, 126
        %v1290 = vpop.permute.xlu0 %1289
        %1291 = vrot.lane.b32.xlu0 %v1286, 126
        %v1292 = vpop.permute.xlu0 %1291
        %v1295 = vadd.f32 %v1281, %v1290
        %v1296 = vadd.f32 %v1282, %v1292
        %s1297 = sld [smem:[#allocation2 + $0x5a]]
        %v1298 = vld [vmem:[%s414] sm:$0xff]
        %v1299 = vld [vmem:[%s414 + $0x8] sm:$0xff]
        %v1300 = vstv %s1297
        %v1301 = vmul.f32 %v1298, %v1300
        %v1302 = vmul.f32 %v1299, %v1300
        %v1303 = vadd.f32 %v1295, %v1301
        %v1304 = vadd.f32 %v1296, %v1302
        %s1305 = sld [smem:[#allocation2 + $0x5b]]
        %v1306 = vstv %s1305
        %v1307 = vmul.f32 %v1298, %v1306
        %v1308 = vmul.f32 %v1299, %v1306
        %1311 = vrot.lane.b32.xlu0 %v1307, 127
        %v1312 = vpop.permute.xlu0 %1311
        %1313 = vrot.lane.b32.xlu0 %v1308, 127
        %v1314 = vpop.permute.xlu0 %1313
        %v1317 = vadd.f32 %v1303, %v1312
        %v1318 = vadd.f32 %v1304, %v1314
        %s1319 = sld [smem:[#allocation2 + $0x5c]]
        %v1320 = vstv %s1319
        %v1321 = vmul.f32 %v1298, %v1320
        %v1322 = vmul.f32 %v1299, %v1320
        %1325 = vrot.lane.b32.xlu0 %v1321, 126
        %v1326 = vpop.permute.xlu0 %1325
        %1327 = vrot.lane.b32.xlu0 %v1322, 126
        %v1328 = vpop.permute.xlu0 %1327
        %v1331 = vadd.f32 %v1317, %v1326
        %v1332 = vadd.f32 %v1318, %v1328
        %s1333 = sld [smem:[#allocation2 + $0x5d]]
        %v1334 = vld [vmem:[%s414 + $0x1] sm:$0xff]
        %v1335 = vld [vmem:[%s414 + $0x9] sm:$0xff]
        %v1336 = vstv %s1333
        %v1337 = vmul.f32 %v1334, %v1336
        %v1338 = vmul.f32 %v1335, %v1336
        %v1339 = vadd.f32 %v1331, %v1337
        %v1340 = vadd.f32 %v1332, %v1338
        %s1341 = sld [smem:[#allocation2 + $0x5e]]
        %v1342 = vstv %s1341
        %v1343 = vmul.f32 %v1334, %v1342
        %v1344 = vmul.f32 %v1335, %v1342
        %1347 = vrot.lane.b32.xlu0 %v1343, 127
        %v1348 = vpop.permute.xlu0 %1347
        %1349 = vrot.lane.b32.xlu0 %v1344, 127
        %v1350 = vpop.permute.xlu0 %1349
        %v1353 = vadd.f32 %v1339, %v1348
        %v1354 = vadd.f32 %v1340, %v1350
        %s1355 = sld [smem:[#allocation2 + $0x5f]]
        %v1356 = vstv %s1355
        %v1357 = vmul.f32 %v1334, %v1356
        %v1358 = vmul.f32 %v1335, %v1356
        %1361 = vrot.lane.b32.xlu0 %v1357, 126
        %v1362 = vpop.permute.xlu0 %1361
        %1363 = vrot.lane.b32.xlu0 %v1358, 126
        %v1364 = vpop.permute.xlu0 %1363
        %v1367 = vadd.f32 %v1353, %v1362
        %v1368 = vadd.f32 %v1354, %v1364
        %s1369 = sld [smem:[#allocation2 + $0x60]]
        %v1370 = vld [vmem:[%s414 + $0x2] sm:$0xff]
        %v1371 = vld [vmem:[%s414 + $0xa] sm:$0xff]
        %v1372 = vstv %s1369
        %v1373 = vmul.f32 %v1370, %v1372
        %v1374 = vmul.f32 %v1371, %v1372
        %v1375 = vadd.f32 %v1367, %v1373
        %v1376 = vadd.f32 %v1368, %v1374
        %s1377 = sld [smem:[#allocation2 + $0x61]]
        %v1378 = vstv %s1377
        %v1379 = vmul.f32 %v1370, %v1378
        %v1380 = vmul.f32 %v1371, %v1378
        %1383 = vrot.lane.b32.xlu0 %v1379, 127
        %v1384 = vpop.permute.xlu0 %1383
        %1385 = vrot.lane.b32.xlu0 %v1380, 127
        %v1386 = vpop.permute.xlu0 %1385
        %v1389 = vadd.f32 %v1375, %v1384
        %v1390 = vadd.f32 %v1376, %v1386
        %s1391 = sld [smem:[#allocation2 + $0x62]]
        %v1392 = vstv %s1391
        %v1393 = vmul.f32 %v1370, %v1392
        %v1394 = vmul.f32 %v1371, %v1392
        %1397 = vrot.lane.b32.xlu0 %v1393, 126
        %v1398 = vpop.permute.xlu0 %1397
        %1399 = vrot.lane.b32.xlu0 %v1394, 126
        %v1400 = vpop.permute.xlu0 %1399
        %v1403 = vadd.f32 %v1389, %v1398
        %v1404 = vadd.f32 %v1390, %v1400
        %s1405 = sld [smem:[#allocation2 + $0x63]]
        %v1406 = vld [vmem:[%s523] sm:$0xff]
        %v1407 = vld [vmem:[%s523 + $0x8] sm:$0xff]
        %v1408 = vstv %s1405
        %v1409 = vmul.f32 %v1406, %v1408
        %v1410 = vmul.f32 %v1407, %v1408
        %v1411 = vadd.f32 %v1403, %v1409
        %v1412 = vadd.f32 %v1404, %v1410
        %s1413 = sld [smem:[#allocation2 + $0x64]]
        %v1414 = vstv %s1413
        %v1415 = vmul.f32 %v1406, %v1414
        %v1416 = vmul.f32 %v1407, %v1414
        %1419 = vrot.lane.b32.xlu0 %v1415, 127
        %v1420 = vpop.permute.xlu0 %1419
        %1421 = vrot.lane.b32.xlu0 %v1416, 127
        %v1422 = vpop.permute.xlu0 %1421
        %v1425 = vadd.f32 %v1411, %v1420
        %v1426 = vadd.f32 %v1412, %v1422
        %s1427 = sld [smem:[#allocation2 + $0x65]]
        %v1428 = vstv %s1427
        %v1429 = vmul.f32 %v1406, %v1428
        %v1430 = vmul.f32 %v1407, %v1428
        %1433 = vrot.lane.b32.xlu0 %v1429, 126
        %v1434 = vpop.permute.xlu0 %1433
        %1435 = vrot.lane.b32.xlu0 %v1430, 126
        %v1436 = vpop.permute.xlu0 %1435
        %v1439 = vadd.f32 %v1425, %v1434
        %v1440 = vadd.f32 %v1426, %v1436
        %s1441 = sld [smem:[#allocation2 + $0x66]]
        %v1442 = vld [vmem:[%s523 + $0x1] sm:$0xff]
        %v1443 = vld [vmem:[%s523 + $0x9] sm:$0xff]
        %v1444 = vstv %s1441
        %v1445 = vmul.f32 %v1442, %v1444
        %v1446 = vmul.f32 %v1443, %v1444
        %v1447 = vadd.f32 %v1439, %v1445
        %v1448 = vadd.f32 %v1440, %v1446
        %s1449 = sld [smem:[#allocation2 + $0x67]]
        %v1450 = vstv %s1449
        %v1451 = vmul.f32 %v1442, %v1450
        %v1452 = vmul.f32 %v1443, %v1450
        %1455 = vrot.lane.b32.xlu0 %v1451, 127
        %v1456 = vpop.permute.xlu0 %1455
        %1457 = vrot.lane.b32.xlu0 %v1452, 127
        %v1458 = vpop.permute.xlu0 %1457
        %v1461 = vadd.f32 %v1447, %v1456
        %v1462 = vadd.f32 %v1448, %v1458
        %s1463 = sld [smem:[#allocation2 + $0x68]]
        %v1464 = vstv %s1463
        %v1465 = vmul.f32 %v1442, %v1464
        %v1466 = vmul.f32 %v1443, %v1464
        %1469 = vrot.lane.b32.xlu0 %v1465, 126
        %v1470 = vpop.permute.xlu0 %1469
        %1471 = vrot.lane.b32.xlu0 %v1466, 126
        %v1472 = vpop.permute.xlu0 %1471
        %v1475 = vadd.f32 %v1461, %v1470
        %v1476 = vadd.f32 %v1462, %v1472
        %s1477 = sld [smem:[#allocation2 + $0x69]]
        %v1478 = vld [vmem:[%s523 + $0x2] sm:$0xff]
        %v1479 = vld [vmem:[%s523 + $0xa] sm:$0xff]
        %v1480 = vstv %s1477
        %v1481 = vmul.f32 %v1478, %v1480
        %v1482 = vmul.f32 %v1479, %v1480
        %v1483 = vadd.f32 %v1475, %v1481
        %v1484 = vadd.f32 %v1476, %v1482
        %s1485 = sld [smem:[#allocation2 + $0x6a]]
        %v1486 = vstv %s1485
        %v1487 = vmul.f32 %v1478, %v1486
        %v1488 = vmul.f32 %v1479, %v1486
        %1491 = vrot.lane.b32.xlu0 %v1487, 127
        %v1492 = vpop.permute.xlu0 %1491
        %1493 = vrot.lane.b32.xlu0 %v1488, 127
        %v1494 = vpop.permute.xlu0 %1493
        %v1497 = vadd.f32 %v1483, %v1492
        %v1498 = vadd.f32 %v1484, %v1494
        %s1499 = sld [smem:[#allocation2 + $0x6b]]
        %v1500 = vstv %s1499
        %v1501 = vmul.f32 %v1478, %v1500
        %v1502 = vmul.f32 %v1479, %v1500
        %1505 = vrot.lane.b32.xlu0 %v1501, 126
        %v1506 = vpop.permute.xlu0 %1505
        %1507 = vrot.lane.b32.xlu0 %v1502, 126
        %v1508 = vpop.permute.xlu0 %1507
        %v1511 = vadd.f32 %v1497, %v1506
        %v1512 = vadd.f32 %v1498, %v1508
        %s1513 = sld [smem:[#allocation5 + $0x2]]
        %v1514 = vstv %s1513
        %v1515 = vadd.f32 %v1511, %v1514
        %v1516 = vadd.f32 %v1512, %v1514
        %v1517 = vmax.f32 %v1515, 0.0
        %v1518 = vmax.f32 %v1516, 0.0
        %s1519 = scalar_lea.vmem %s190, 32 [#allocation7]
        %1520 = vst.msk [vmem:[%s1519] sm:$0xff] %vm637, %v1517
        %1521 = vst.msk [vmem:[%s1519 + $0x8] sm:$0xff] %vm637, %v1518
        %s1522 = sld [smem:[#allocation2 + $0x6c]]
        %v1523 = vld [vmem:[%s195] sm:$0xff]
        %v1524 = vld [vmem:[%s195 + $0x8] sm:$0xff]
        %v1525 = vstv %s1522
        %v1526 = vmul.f32 %v1523, %v1525
        %v1527 = vmul.f32 %v1524, %v1525
        %v1528 = vadd.f32 %v1526, 0.0
        %v1529 = vadd.f32 %v1527, 0.0
        %s1530 = sld [smem:[#allocation2 + $0x6d]]
        %v1531 = vstv %s1530
        %v1532 = vmul.f32 %v1523, %v1531
        %v1533 = vmul.f32 %v1524, %v1531
        %1536 = vrot.lane.b32.xlu0 %v1532, 127
        %v1537 = vpop.permute.xlu0 %1536
        %1538 = vrot.lane.b32.xlu0 %v1533, 127
        %v1539 = vpop.permute.xlu0 %1538
        %v1542 = vadd.f32 %v1528, %v1537
        %v1543 = vadd.f32 %v1529, %v1539
        %s1544 = sld [smem:[#allocation2 + $0x6e]]
        %v1545 = vstv %s1544
        %v1546 = vmul.f32 %v1523, %v1545
        %v1547 = vmul.f32 %v1524, %v1545
        %1550 = vrot.lane.b32.xlu0 %v1546, 126
        %v1551 = vpop.permute.xlu0 %1550
        %1552 = vrot.lane.b32.xlu0 %v1547, 126
        %v1553 = vpop.permute.xlu0 %1552
        %v1556 = vadd.f32 %v1542, %v1551
        %v1557 = vadd.f32 %v1543, %v1553
        %s1558 = sld [smem:[#allocation2 + $0x6f]]
        %v1559 = vld [vmem:[%s195 + $0x1] sm:$0xff]
        %v1560 = vld [vmem:[%s195 + $0x9] sm:$0xff]
        %v1561 = vstv %s1558
        %v1562 = vmul.f32 %v1559, %v1561
        %v1563 = vmul.f32 %v1560, %v1561
        %v1564 = vadd.f32 %v1556, %v1562
        %v1565 = vadd.f32 %v1557, %v1563
        %s1566 = sld [smem:[#allocation2 + $0x70]]
        %v1567 = vstv %s1566
        %v1568 = vmul.f32 %v1559, %v1567
        %v1569 = vmul.f32 %v1560, %v1567
        %1572 = vrot.lane.b32.xlu0 %v1568, 127
        %v1573 = vpop.permute.xlu0 %1572
        %1574 = vrot.lane.b32.xlu0 %v1569, 127
        %v1575 = vpop.permute.xlu0 %1574
        %v1578 = vadd.f32 %v1564, %v1573
        %v1579 = vadd.f32 %v1565, %v1575
        %s1580 = sld [smem:[#allocation2 + $0x71]]
        %v1581 = vstv %s1580
        %v1582 = vmul.f32 %v1559, %v1581
        %v1583 = vmul.f32 %v1560, %v1581
        %1586 = vrot.lane.b32.xlu0 %v1582, 126
        %v1587 = vpop.permute.xlu0 %1586
        %1588 = vrot.lane.b32.xlu0 %v1583, 126
        %v1589 = vpop.permute.xlu0 %1588
        %v1592 = vadd.f32 %v1578, %v1587
        %v1593 = vadd.f32 %v1579, %v1589
        %s1594 = sld [smem:[#allocation2 + $0x72]]
        %v1595 = vld [vmem:[%s195 + $0x2] sm:$0xff]
        %v1596 = vld [vmem:[%s195 + $0xa] sm:$0xff]
        %v1597 = vstv %s1594
        %v1598 = vmul.f32 %v1595, %v1597
        %v1599 = vmul.f32 %v1596, %v1597
        %v1600 = vadd.f32 %v1592, %v1598
        %v1601 = vadd.f32 %v1593, %v1599
        %s1602 = sld [smem:[#allocation2 + $0x73]]
        %v1603 = vstv %s1602
        %v1604 = vmul.f32 %v1595, %v1603
        %v1605 = vmul.f32 %v1596, %v1603
        %1608 = vrot.lane.b32.xlu0 %v1604, 127
        %v1609 = vpop.permute.xlu0 %1608
        %1610 = vrot.lane.b32.xlu0 %v1605, 127
        %v1611 = vpop.permute.xlu0 %1610
        %v1614 = vadd.f32 %v1600, %v1609
        %v1615 = vadd.f32 %v1601, %v1611
        %s1616 = sld [smem:[#allocation2 + $0x74]]
        %v1617 = vstv %s1616
        %v1618 = vmul.f32 %v1595, %v1617
        %v1619 = vmul.f32 %v1596, %v1617
        %1622 = vrot.lane.b32.xlu0 %v1618, 126
        %v1623 = vpop.permute.xlu0 %1622
        %1624 = vrot.lane.b32.xlu0 %v1619, 126
        %v1625 = vpop.permute.xlu0 %1624
        %v1628 = vadd.f32 %v1614, %v1623
        %v1629 = vadd.f32 %v1615, %v1625
        %s1630 = sld [smem:[#allocation2 + $0x75]]
        %v1631 = vld [vmem:[%s305] sm:$0xff]
        %v1632 = vld [vmem:[%s305 + $0x8] sm:$0xff]
        %v1633 = vstv %s1630
        %v1634 = vmul.f32 %v1631, %v1633
        %v1635 = vmul.f32 %v1632, %v1633
        %v1636 = vadd.f32 %v1628, %v1634
        %v1637 = vadd.f32 %v1629, %v1635
        %s1638 = sld [smem:[#allocation2 + $0x76]]
        %v1639 = vstv %s1638
        %v1640 = vmul.f32 %v1631, %v1639
        %v1641 = vmul.f32 %v1632, %v1639
        %1644 = vrot.lane.b32.xlu0 %v1640, 127
        %v1645 = vpop.permute.xlu0 %1644
        %1646 = vrot.lane.b32.xlu0 %v1641, 127
        %v1647 = vpop.permute.xlu0 %1646
        %v1650 = vadd.f32 %v1636, %v1645
        %v1651 = vadd.f32 %v1637, %v1647
        %s1652 = sld [smem:[#allocation2 + $0x77]]
        %v1653 = vstv %s1652
        %v1654 = vmul.f32 %v1631, %v1653
        %v1655 = vmul.f32 %v1632, %v1653
        %1658 = vrot.lane.b32.xlu0 %v1654, 126
        %v1659 = vpop.permute.xlu0 %1658
        %1660 = vrot.lane.b32.xlu0 %v1655, 126
        %v1661 = vpop.permute.xlu0 %1660
        %v1664 = vadd.f32 %v1650, %v1659
        %v1665 = vadd.f32 %v1651, %v1661
        %s1666 = sld [smem:[#allocation2 + $0x78]]
        %v1667 = vld [vmem:[%s305 + $0x1] sm:$0xff]
        %v1668 = vld [vmem:[%s305 + $0x9] sm:$0xff]
        %v1669 = vstv %s1666
        %v1670 = vmul.f32 %v1667, %v1669
        %v1671 = vmul.f32 %v1668, %v1669
        %v1672 = vadd.f32 %v1664, %v1670
        %v1673 = vadd.f32 %v1665, %v1671
        %s1674 = sld [smem:[#allocation2 + $0x79]]
        %v1675 = vstv %s1674
        %v1676 = vmul.f32 %v1667, %v1675
        %v1677 = vmul.f32 %v1668, %v1675
        %1680 = vrot.lane.b32.xlu0 %v1676, 127
        %v1681 = vpop.permute.xlu0 %1680
        %1682 = vrot.lane.b32.xlu0 %v1677, 127
        %v1683 = vpop.permute.xlu0 %1682
        %v1686 = vadd.f32 %v1672, %v1681
        %v1687 = vadd.f32 %v1673, %v1683
        %s1688 = sld [smem:[#allocation2 + $0x7a]]
        %v1689 = vstv %s1688
        %v1690 = vmul.f32 %v1667, %v1689
        %v1691 = vmul.f32 %v1668, %v1689
        %1694 = vrot.lane.b32.xlu0 %v1690, 126
        %v1695 = vpop.permute.xlu0 %1694
        %1696 = vrot.lane.b32.xlu0 %v1691, 126
        %v1697 = vpop.permute.xlu0 %1696
        %v1700 = vadd.f32 %v1686, %v1695
        %v1701 = vadd.f32 %v1687, %v1697
        %s1702 = sld [smem:[#allocation2 + $0x7b]]
        %v1703 = vld [vmem:[%s305 + $0x2] sm:$0xff]
        %v1704 = vld [vmem:[%s305 + $0xa] sm:$0xff]
        %v1705 = vstv %s1702
        %v1706 = vmul.f32 %v1703, %v1705
        %v1707 = vmul.f32 %v1704, %v1705
        %v1708 = vadd.f32 %v1700, %v1706
        %v1709 = vadd.f32 %v1701, %v1707
        %s1710 = sld [smem:[#allocation2 + $0x7c]]
        %v1711 = vstv %s1710
        %v1712 = vmul.f32 %v1703, %v1711
        %v1713 = vmul.f32 %v1704, %v1711
        %1716 = vrot.lane.b32.xlu0 %v1712, 127
        %v1717 = vpop.permute.xlu0 %1716
        %1718 = vrot.lane.b32.xlu0 %v1713, 127
        %v1719 = vpop.permute.xlu0 %1718
        %v1722 = vadd.f32 %v1708, %v1717
        %v1723 = vadd.f32 %v1709, %v1719
        %s1724 = sld [smem:[#allocation2 + $0x7d]]
        %v1725 = vstv %s1724
        %v1726 = vmul.f32 %v1703, %v1725
        %v1727 = vmul.f32 %v1704, %v1725
        %1730 = vrot.lane.b32.xlu0 %v1726, 126
        %v1731 = vpop.permute.xlu0 %1730
        %1732 = vrot.lane.b32.xlu0 %v1727, 126
        %v1733 = vpop.permute.xlu0 %1732
        %v1736 = vadd.f32 %v1722, %v1731
        %v1737 = vadd.f32 %v1723, %v1733
        %s1738 = sld [smem:[#allocation2 + $0x7e]]
        %v1739 = vld [vmem:[%s414] sm:$0xff]
        %v1740 = vld [vmem:[%s414 + $0x8] sm:$0xff]
        %v1741 = vstv %s1738
        %v1742 = vmul.f32 %v1739, %v1741
        %v1743 = vmul.f32 %v1740, %v1741
        %v1744 = vadd.f32 %v1736, %v1742
        %v1745 = vadd.f32 %v1737, %v1743
        %s1746 = sld [smem:[#allocation2 + $0x7f]]
        %v1747 = vstv %s1746
        %v1748 = vmul.f32 %v1739, %v1747
        %v1749 = vmul.f32 %v1740, %v1747
        %1752 = vrot.lane.b32.xlu0 %v1748, 127
        %v1753 = vpop.permute.xlu0 %1752
        %1754 = vrot.lane.b32.xlu0 %v1749, 127
        %v1755 = vpop.permute.xlu0 %1754
        %v1758 = vadd.f32 %v1744, %v1753
        %v1759 = vadd.f32 %v1745, %v1755
        %s1760 = sld [smem:[#allocation2 + $0x80]]
        %v1761 = vstv %s1760
        %v1762 = vmul.f32 %v1739, %v1761
        %v1763 = vmul.f32 %v1740, %v1761
        %1766 = vrot.lane.b32.xlu0 %v1762, 126
        %v1767 = vpop.permute.xlu0 %1766
        %1768 = vrot.lane.b32.xlu0 %v1763, 126
        %v1769 = vpop.permute.xlu0 %1768
        %v1772 = vadd.f32 %v1758, %v1767
        %v1773 = vadd.f32 %v1759, %v1769
        %s1774 = sld [smem:[#allocation2 + $0x81]]
        %v1775 = vld [vmem:[%s414 + $0x1] sm:$0xff]
        %v1776 = vld [vmem:[%s414 + $0x9] sm:$0xff]
        %v1777 = vstv %s1774
        %v1778 = vmul.f32 %v1775, %v1777
        %v1779 = vmul.f32 %v1776, %v1777
        %v1780 = vadd.f32 %v1772, %v1778
        %v1781 = vadd.f32 %v1773, %v1779
        %s1782 = sld [smem:[#allocation2 + $0x82]]
        %v1783 = vstv %s1782
        %v1784 = vmul.f32 %v1775, %v1783
        %v1785 = vmul.f32 %v1776, %v1783
        %1788 = vrot.lane.b32.xlu0 %v1784, 127
        %v1789 = vpop.permute.xlu0 %1788
        %1790 = vrot.lane.b32.xlu0 %v1785, 127
        %v1791 = vpop.permute.xlu0 %1790
        %v1794 = vadd.f32 %v1780, %v1789
        %v1795 = vadd.f32 %v1781, %v1791
        %s1796 = sld [smem:[#allocation2 + $0x83]]
        %v1797 = vstv %s1796
        %v1798 = vmul.f32 %v1775, %v1797
        %v1799 = vmul.f32 %v1776, %v1797
        %1802 = vrot.lane.b32.xlu0 %v1798, 126
        %v1803 = vpop.permute.xlu0 %1802
        %1804 = vrot.lane.b32.xlu0 %v1799, 126
        %v1805 = vpop.permute.xlu0 %1804
        %v1808 = vadd.f32 %v1794, %v1803
        %v1809 = vadd.f32 %v1795, %v1805
        %s1810 = sld [smem:[#allocation2 + $0x84]]
        %v1811 = vld [vmem:[%s414 + $0x2] sm:$0xff]
        %v1812 = vld [vmem:[%s414 + $0xa] sm:$0xff]
        %v1813 = vstv %s1810
        %v1814 = vmul.f32 %v1811, %v1813
        %v1815 = vmul.f32 %v1812, %v1813
        %v1816 = vadd.f32 %v1808, %v1814
        %v1817 = vadd.f32 %v1809, %v1815
        %s1818 = sld [smem:[#allocation2 + $0x85]]
        %v1819 = vstv %s1818
        %v1820 = vmul.f32 %v1811, %v1819
        %v1821 = vmul.f32 %v1812, %v1819
        %1824 = vrot.lane.b32.xlu0 %v1820, 127
        %v1825 = vpop.permute.xlu0 %1824
        %1826 = vrot.lane.b32.xlu0 %v1821, 127
        %v1827 = vpop.permute.xlu0 %1826
        %v1830 = vadd.f32 %v1816, %v1825
        %v1831 = vadd.f32 %v1817, %v1827
        %s1832 = sld [smem:[#allocation2 + $0x86]]
        %v1833 = vstv %s1832
        %v1834 = vmul.f32 %v1811, %v1833
        %v1835 = vmul.f32 %v1812, %v1833
        %1838 = vrot.lane.b32.xlu0 %v1834, 126
        %v1839 = vpop.permute.xlu0 %1838
        %1840 = vrot.lane.b32.xlu0 %v1835, 126
        %v1841 = vpop.permute.xlu0 %1840
        %v1844 = vadd.f32 %v1830, %v1839
        %v1845 = vadd.f32 %v1831, %v1841
        %s1846 = sld [smem:[#allocation2 + $0x87]]
        %v1847 = vld [vmem:[%s523] sm:$0xff]
        %v1848 = vld [vmem:[%s523 + $0x8] sm:$0xff]
        %v1849 = vstv %s1846
        %v1850 = vmul.f32 %v1847, %v1849
        %v1851 = vmul.f32 %v1848, %v1849
        %v1852 = vadd.f32 %v1844, %v1850
        %v1853 = vadd.f32 %v1845, %v1851
        %s1854 = sld [smem:[#allocation2 + $0x88]]
        %v1855 = vstv %s1854
        %v1856 = vmul.f32 %v1847, %v1855
        %v1857 = vmul.f32 %v1848, %v1855
        %1860 = vrot.lane.b32.xlu0 %v1856, 127
        %v1861 = vpop.permute.xlu0 %1860
        %1862 = vrot.lane.b32.xlu0 %v1857, 127
        %v1863 = vpop.permute.xlu0 %1862
        %v1866 = vadd.f32 %v1852, %v1861
        %v1867 = vadd.f32 %v1853, %v1863
        %s1868 = sld [smem:[#allocation2 + $0x89]]
        %v1869 = vstv %s1868
        %v1870 = vmul.f32 %v1847, %v1869
        %v1871 = vmul.f32 %v1848, %v1869
        %1874 = vrot.lane.b32.xlu0 %v1870, 126
        %v1875 = vpop.permute.xlu0 %1874
        %1876 = vrot.lane.b32.xlu0 %v1871, 126
        %v1877 = vpop.permute.xlu0 %1876
        %v1880 = vadd.f32 %v1866, %v1875
        %v1881 = vadd.f32 %v1867, %v1877
        %s1882 = sld [smem:[#allocation2 + $0x8a]]
        %v1883 = vld [vmem:[%s523 + $0x1] sm:$0xff]
        %v1884 = vld [vmem:[%s523 + $0x9] sm:$0xff]
        %v1885 = vstv %s1882
        %v1886 = vmul.f32 %v1883, %v1885
        %v1887 = vmul.f32 %v1884, %v1885
        %v1888 = vadd.f32 %v1880, %v1886
        %v1889 = vadd.f32 %v1881, %v1887
        %s1890 = sld [smem:[#allocation2 + $0x8b]]
        %v1891 = vstv %s1890
        %v1892 = vmul.f32 %v1883, %v1891
        %v1893 = vmul.f32 %v1884, %v1891
        %1896 = vrot.lane.b32.xlu0 %v1892, 127
        %v1897 = vpop.permute.xlu0 %1896
        %1898 = vrot.lane.b32.xlu0 %v1893, 127
        %v1899 = vpop.permute.xlu0 %1898
        %v1902 = vadd.f32 %v1888, %v1897
        %v1903 = vadd.f32 %v1889, %v1899
        %s1904 = sld [smem:[#allocation2 + $0x8c]]
        %v1905 = vstv %s1904
        %v1906 = vmul.f32 %v1883, %v1905
        %v1907 = vmul.f32 %v1884, %v1905
        %1910 = vrot.lane.b32.xlu0 %v1906, 126
        %v1911 = vpop.permute.xlu0 %1910
        %1912 = vrot.lane.b32.xlu0 %v1907, 126
        %v1913 = vpop.permute.xlu0 %1912
        %v1916 = vadd.f32 %v1902, %v1911
        %v1917 = vadd.f32 %v1903, %v1913
        %s1918 = sld [smem:[#allocation2 + $0x8d]]
        %v1919 = vld [vmem:[%s523 + $0x2] sm:$0xff]
        %v1920 = vld [vmem:[%s523 + $0xa] sm:$0xff]
        %v1921 = vstv %s1918
        %v1922 = vmul.f32 %v1919, %v1921
        %v1923 = vmul.f32 %v1920, %v1921
        %v1924 = vadd.f32 %v1916, %v1922
        %v1925 = vadd.f32 %v1917, %v1923
        %s1926 = sld [smem:[#allocation2 + $0x8e]]
        %v1927 = vstv %s1926
        %v1928 = vmul.f32 %v1919, %v1927
        %v1929 = vmul.f32 %v1920, %v1927
        %1932 = vrot.lane.b32.xlu0 %v1928, 127
        %v1933 = vpop.permute.xlu0 %1932
        %1934 = vrot.lane.b32.xlu0 %v1929, 127
        %v1935 = vpop.permute.xlu0 %1934
        %v1938 = vadd.f32 %v1924, %v1933
        %v1939 = vadd.f32 %v1925, %v1935
        %s1940 = sld [smem:[#allocation2 + $0x8f]]
        %v1941 = vstv %s1940
        %v1942 = vmul.f32 %v1919, %v1941
        %v1943 = vmul.f32 %v1920, %v1941
        %1946 = vrot.lane.b32.xlu0 %v1942, 126
        %v1947 = vpop.permute.xlu0 %1946
        %1948 = vrot.lane.b32.xlu0 %v1943, 126
        %v1949 = vpop.permute.xlu0 %1948
        %v1952 = vadd.f32 %v1938, %v1947
        %v1953 = vadd.f32 %v1939, %v1949
        %s1954 = sld [smem:[#allocation5 + $0x3]]
        %v1955 = vstv %s1954
        %v1956 = vadd.f32 %v1952, %v1955
        %v1957 = vadd.f32 %v1953, %v1955
        %v1958 = vmax.f32 %v1956, 0.0
        %v1959 = vmax.f32 %v1957, 0.0
        %s1960 = scalar_lea.vmem %s190, 48 [#allocation7]
        %1961 = vst.msk [vmem:[%s1960] sm:$0xff] %vm637, %v1958
        %1962 = vst.msk [vmem:[%s1960 + $0x8] sm:$0xff] %vm637, %v1959
        %s1963 = sld [smem:[#allocation2 + $0x90]]
        %v1964 = vld [vmem:[%s195] sm:$0xff]
        %v1965 = vld [vmem:[%s195 + $0x8] sm:$0xff]
        %v1966 = vstv %s1963
        %v1967 = vmul.f32 %v1964, %v1966
        %v1968 = vmul.f32 %v1965, %v1966
        %v1969 = vadd.f32 %v1967, 0.0
        %v1970 = vadd.f32 %v1968, 0.0
        %s1971 = sld [smem:[#allocation2 + $0x91]]
        %v1972 = vstv %s1971
        %v1973 = vmul.f32 %v1964, %v1972
        %v1974 = vmul.f32 %v1965, %v1972
        %1977 = vrot.lane.b32.xlu0 %v1973, 127
        %v1978 = vpop.permute.xlu0 %1977
        %1979 = vrot.lane.b32.xlu0 %v1974, 127
        %v1980 = vpop.permute.xlu0 %1979
        %v1983 = vadd.f32 %v1969, %v1978
        %v1984 = vadd.f32 %v1970, %v1980
        %s1985 = sld [smem:[#allocation2 + $0x92]]
        %v1986 = vstv %s1985
        %v1987 = vmul.f32 %v1964, %v1986
        %v1988 = vmul.f32 %v1965, %v1986
        %1991 = vrot.lane.b32.xlu0 %v1987, 126
        %v1992 = vpop.permute.xlu0 %1991
        %1993 = vrot.lane.b32.xlu0 %v1988, 126
        %v1994 = vpop.permute.xlu0 %1993
        %v1997 = vadd.f32 %v1983, %v1992
        %v1998 = vadd.f32 %v1984, %v1994
        %s1999 = sld [smem:[#allocation2 + $0x93]]
        %v2000 = vld [vmem:[%s195 + $0x1] sm:$0xff]
        %v2001 = vld [vmem:[%s195 + $0x9] sm:$0xff]
        %v2002 = vstv %s1999
        %v2003 = vmul.f32 %v2000, %v2002
        %v2004 = vmul.f32 %v2001, %v2002
        %v2005 = vadd.f32 %v1997, %v2003
        %v2006 = vadd.f32 %v1998, %v2004
        %s2007 = sld [smem:[#allocation2 + $0x94]]
        %v2008 = vstv %s2007
        %v2009 = vmul.f32 %v2000, %v2008
        %v2010 = vmul.f32 %v2001, %v2008
        %2013 = vrot.lane.b32.xlu0 %v2009, 127
        %v2014 = vpop.permute.xlu0 %2013
        %2015 = vrot.lane.b32.xlu0 %v2010, 127
        %v2016 = vpop.permute.xlu0 %2015
        %v2019 = vadd.f32 %v2005, %v2014
        %v2020 = vadd.f32 %v2006, %v2016
        %s2021 = sld [smem:[#allocation2 + $0x95]]
        %v2022 = vstv %s2021
        %v2023 = vmul.f32 %v2000, %v2022
        %v2024 = vmul.f32 %v2001, %v2022
        %2027 = vrot.lane.b32.xlu0 %v2023, 126
        %v2028 = vpop.permute.xlu0 %2027
        %2029 = vrot.lane.b32.xlu0 %v2024, 126
        %v2030 = vpop.permute.xlu0 %2029
        %v2033 = vadd.f32 %v2019, %v2028
        %v2034 = vadd.f32 %v2020, %v2030
        %s2035 = sld [smem:[#allocation2 + $0x96]]
        %v2036 = vld [vmem:[%s195 + $0x2] sm:$0xff]
        %v2037 = vld [vmem:[%s195 + $0xa] sm:$0xff]
        %v2038 = vstv %s2035
        %v2039 = vmul.f32 %v2036, %v2038
        %v2040 = vmul.f32 %v2037, %v2038
        %v2041 = vadd.f32 %v2033, %v2039
        %v2042 = vadd.f32 %v2034, %v2040
        %s2043 = sld [smem:[#allocation2 + $0x97]]
        %v2044 = vstv %s2043
        %v2045 = vmul.f32 %v2036, %v2044
        %v2046 = vmul.f32 %v2037, %v2044
        %2049 = vrot.lane.b32.xlu0 %v2045, 127
        %v2050 = vpop.permute.xlu0 %2049
        %2051 = vrot.lane.b32.xlu0 %v2046, 127
        %v2052 = vpop.permute.xlu0 %2051
        %v2055 = vadd.f32 %v2041, %v2050
        %v2056 = vadd.f32 %v2042, %v2052
        %s2057 = sld [smem:[#allocation2 + $0x98]]
        %v2058 = vstv %s2057
        %v2059 = vmul.f32 %v2036, %v2058
        %v2060 = vmul.f32 %v2037, %v2058
        %2063 = vrot.lane.b32.xlu0 %v2059, 126
        %v2064 = vpop.permute.xlu0 %2063
        %2065 = vrot.lane.b32.xlu0 %v2060, 126
        %v2066 = vpop.permute.xlu0 %2065
        %v2069 = vadd.f32 %v2055, %v2064
        %v2070 = vadd.f32 %v2056, %v2066
        %s2071 = sld [smem:[#allocation2 + $0x99]]
        %v2072 = vld [vmem:[%s305] sm:$0xff]
        %v2073 = vld [vmem:[%s305 + $0x8] sm:$0xff]
        %v2074 = vstv %s2071
        %v2075 = vmul.f32 %v2072, %v2074
        %v2076 = vmul.f32 %v2073, %v2074
        %v2077 = vadd.f32 %v2069, %v2075
        %v2078 = vadd.f32 %v2070, %v2076
        %s2079 = sld [smem:[#allocation2 + $0x9a]]
        %v2080 = vstv %s2079
        %v2081 = vmul.f32 %v2072, %v2080
        %v2082 = vmul.f32 %v2073, %v2080
        %2085 = vrot.lane.b32.xlu0 %v2081, 127
        %v2086 = vpop.permute.xlu0 %2085
        %2087 = vrot.lane.b32.xlu0 %v2082, 127
        %v2088 = vpop.permute.xlu0 %2087
        %v2091 = vadd.f32 %v2077, %v2086
        %v2092 = vadd.f32 %v2078, %v2088
        %s2093 = sld [smem:[#allocation2 + $0x9b]]
        %v2094 = vstv %s2093
        %v2095 = vmul.f32 %v2072, %v2094
        %v2096 = vmul.f32 %v2073, %v2094
        %2099 = vrot.lane.b32.xlu0 %v2095, 126
        %v2100 = vpop.permute.xlu0 %2099
        %2101 = vrot.lane.b32.xlu0 %v2096, 126
        %v2102 = vpop.permute.xlu0 %2101
        %v2105 = vadd.f32 %v2091, %v2100
        %v2106 = vadd.f32 %v2092, %v2102
        %s2107 = sld [smem:[#allocation2 + $0x9c]]
        %v2108 = vld [vmem:[%s305 + $0x1] sm:$0xff]
        %v2109 = vld [vmem:[%s305 + $0x9] sm:$0xff]
        %v2110 = vstv %s2107
        %v2111 = vmul.f32 %v2108, %v2110
        %v2112 = vmul.f32 %v2109, %v2110
        %v2113 = vadd.f32 %v2105, %v2111
        %v2114 = vadd.f32 %v2106, %v2112
        %s2115 = sld [smem:[#allocation2 + $0x9d]]
        %v2116 = vstv %s2115
        %v2117 = vmul.f32 %v2108, %v2116
        %v2118 = vmul.f32 %v2109, %v2116
        %2121 = vrot.lane.b32.xlu0 %v2117, 127
        %v2122 = vpop.permute.xlu0 %2121
        %2123 = vrot.lane.b32.xlu0 %v2118, 127
        %v2124 = vpop.permute.xlu0 %2123
        %v2127 = vadd.f32 %v2113, %v2122
        %v2128 = vadd.f32 %v2114, %v2124
        %s2129 = sld [smem:[#allocation2 + $0x9e]]
        %v2130 = vstv %s2129
        %v2131 = vmul.f32 %v2108, %v2130
        %v2132 = vmul.f32 %v2109, %v2130
        %2135 = vrot.lane.b32.xlu0 %v2131, 126
        %v2136 = vpop.permute.xlu0 %2135
        %2137 = vrot.lane.b32.xlu0 %v2132, 126
        %v2138 = vpop.permute.xlu0 %2137
        %v2141 = vadd.f32 %v2127, %v2136
        %v2142 = vadd.f32 %v2128, %v2138
        %s2143 = sld [smem:[#allocation2 + $0x9f]]
        %v2144 = vld [vmem:[%s305 + $0x2] sm:$0xff]
        %v2145 = vld [vmem:[%s305 + $0xa] sm:$0xff]
        %v2146 = vstv %s2143
        %v2147 = vmul.f32 %v2144, %v2146
        %v2148 = vmul.f32 %v2145, %v2146
        %v2149 = vadd.f32 %v2141, %v2147
        %v2150 = vadd.f32 %v2142, %v2148
        %s2151 = sld [smem:[#allocation2 + $0xa0]]
        %v2152 = vstv %s2151
        %v2153 = vmul.f32 %v2144, %v2152
        %v2154 = vmul.f32 %v2145, %v2152
        %2157 = vrot.lane.b32.xlu0 %v2153, 127
        %v2158 = vpop.permute.xlu0 %2157
        %2159 = vrot.lane.b32.xlu0 %v2154, 127
        %v2160 = vpop.permute.xlu0 %2159
        %v2163 = vadd.f32 %v2149, %v2158
        %v2164 = vadd.f32 %v2150, %v2160
        %s2165 = sld [smem:[#allocation2 + $0xa1]]
        %v2166 = vstv %s2165
        %v2167 = vmul.f32 %v2144, %v2166
        %v2168 = vmul.f32 %v2145, %v2166
        %2171 = vrot.lane.b32.xlu0 %v2167, 126
        %v2172 = vpop.permute.xlu0 %2171
        %2173 = vrot.lane.b32.xlu0 %v2168, 126
        %v2174 = vpop.permute.xlu0 %2173
        %v2177 = vadd.f32 %v2163, %v2172
        %v2178 = vadd.f32 %v2164, %v2174
        %s2179 = sld [smem:[#allocation2 + $0xa2]]
        %v2180 = vld [vmem:[%s414] sm:$0xff]
        %v2181 = vld [vmem:[%s414 + $0x8] sm:$0xff]
        %v2182 = vstv %s2179
        %v2183 = vmul.f32 %v2180, %v2182
        %v2184 = vmul.f32 %v2181, %v2182
        %v2185 = vadd.f32 %v2177, %v2183
        %v2186 = vadd.f32 %v2178, %v2184
        %s2187 = sld [smem:[#allocation2 + $0xa3]]
        %v2188 = vstv %s2187
        %v2189 = vmul.f32 %v2180, %v2188
        %v2190 = vmul.f32 %v2181, %v2188
        %2193 = vrot.lane.b32.xlu0 %v2189, 127
        %v2194 = vpop.permute.xlu0 %2193
        %2195 = vrot.lane.b32.xlu0 %v2190, 127
        %v2196 = vpop.permute.xlu0 %2195
        %v2199 = vadd.f32 %v2185, %v2194
        %v2200 = vadd.f32 %v2186, %v2196
        %s2201 = sld [smem:[#allocation2 + $0xa4]]
        %v2202 = vstv %s2201
        %v2203 = vmul.f32 %v2180, %v2202
        %v2204 = vmul.f32 %v2181, %v2202
        %2207 = vrot.lane.b32.xlu0 %v2203, 126
        %v2208 = vpop.permute.xlu0 %2207
        %2209 = vrot.lane.b32.xlu0 %v2204, 126
        %v2210 = vpop.permute.xlu0 %2209
        %v2213 = vadd.f32 %v2199, %v2208
        %v2214 = vadd.f32 %v2200, %v2210
        %s2215 = sld [smem:[#allocation2 + $0xa5]]
        %v2216 = vld [vmem:[%s414 + $0x1] sm:$0xff]
        %v2217 = vld [vmem:[%s414 + $0x9] sm:$0xff]
        %v2218 = vstv %s2215
        %v2219 = vmul.f32 %v2216, %v2218
        %v2220 = vmul.f32 %v2217, %v2218
        %v2221 = vadd.f32 %v2213, %v2219
        %v2222 = vadd.f32 %v2214, %v2220
        %s2223 = sld [smem:[#allocation2 + $0xa6]]
        %v2224 = vstv %s2223
        %v2225 = vmul.f32 %v2216, %v2224
        %v2226 = vmul.f32 %v2217, %v2224
        %2229 = vrot.lane.b32.xlu0 %v2225, 127
        %v2230 = vpop.permute.xlu0 %2229
        %2231 = vrot.lane.b32.xlu0 %v2226, 127
        %v2232 = vpop.permute.xlu0 %2231
        %v2235 = vadd.f32 %v2221, %v2230
        %v2236 = vadd.f32 %v2222, %v2232
        %s2237 = sld [smem:[#allocation2 + $0xa7]]
        %v2238 = vstv %s2237
        %v2239 = vmul.f32 %v2216, %v2238
        %v2240 = vmul.f32 %v2217, %v2238
        %2243 = vrot.lane.b32.xlu0 %v2239, 126
        %v2244 = vpop.permute.xlu0 %2243
        %2245 = vrot.lane.b32.xlu0 %v2240, 126
        %v2246 = vpop.permute.xlu0 %2245
        %v2249 = vadd.f32 %v2235, %v2244
        %v2250 = vadd.f32 %v2236, %v2246
        %s2251 = sld [smem:[#allocation2 + $0xa8]]
        %v2252 = vld [vmem:[%s414 + $0x2] sm:$0xff]
        %v2253 = vld [vmem:[%s414 + $0xa] sm:$0xff]
        %v2254 = vstv %s2251
        %v2255 = vmul.f32 %v2252, %v2254
        %v2256 = vmul.f32 %v2253, %v2254
        %v2257 = vadd.f32 %v2249, %v2255
        %v2258 = vadd.f32 %v2250, %v2256
        %s2259 = sld [smem:[#allocation2 + $0xa9]]
        %v2260 = vstv %s2259
        %v2261 = vmul.f32 %v2252, %v2260
        %v2262 = vmul.f32 %v2253, %v2260
        %2265 = vrot.lane.b32.xlu0 %v2261, 127
        %v2266 = vpop.permute.xlu0 %2265
        %2267 = vrot.lane.b32.xlu0 %v2262, 127
        %v2268 = vpop.permute.xlu0 %2267
        %v2271 = vadd.f32 %v2257, %v2266
        %v2272 = vadd.f32 %v2258, %v2268
        %s2273 = sld [smem:[#allocation2 + $0xaa]]
        %v2274 = vstv %s2273
        %v2275 = vmul.f32 %v2252, %v2274
        %v2276 = vmul.f32 %v2253, %v2274
        %2279 = vrot.lane.b32.xlu0 %v2275, 126
        %v2280 = vpop.permute.xlu0 %2279
        %2281 = vrot.lane.b32.xlu0 %v2276, 126
        %v2282 = vpop.permute.xlu0 %2281
        %v2285 = vadd.f32 %v2271, %v2280
        %v2286 = vadd.f32 %v2272, %v2282
        %s2287 = sld [smem:[#allocation2 + $0xab]]
        %v2288 = vld [vmem:[%s523] sm:$0xff]
        %v2289 = vld [vmem:[%s523 + $0x8] sm:$0xff]
        %v2290 = vstv %s2287
        %v2291 = vmul.f32 %v2288, %v2290
        %v2292 = vmul.f32 %v2289, %v2290
        %v2293 = vadd.f32 %v2285, %v2291
        %v2294 = vadd.f32 %v2286, %v2292
        %s2295 = sld [smem:[#allocation2 + $0xac]]
        %v2296 = vstv %s2295
        %v2297 = vmul.f32 %v2288, %v2296
        %v2298 = vmul.f32 %v2289, %v2296
        %2301 = vrot.lane.b32.xlu0 %v2297, 127
        %v2302 = vpop.permute.xlu0 %2301
        %2303 = vrot.lane.b32.xlu0 %v2298, 127
        %v2304 = vpop.permute.xlu0 %2303
        %v2307 = vadd.f32 %v2293, %v2302
        %v2308 = vadd.f32 %v2294, %v2304
        %s2309 = sld [smem:[#allocation2 + $0xad]]
        %v2310 = vstv %s2309
        %v2311 = vmul.f32 %v2288, %v2310
        %v2312 = vmul.f32 %v2289, %v2310
        %2315 = vrot.lane.b32.xlu0 %v2311, 126
        %v2316 = vpop.permute.xlu0 %2315
        %2317 = vrot.lane.b32.xlu0 %v2312, 126
        %v2318 = vpop.permute.xlu0 %2317
        %v2321 = vadd.f32 %v2307, %v2316
        %v2322 = vadd.f32 %v2308, %v2318
        %s2323 = sld [smem:[#allocation2 + $0xae]]
        %v2324 = vld [vmem:[%s523 + $0x1] sm:$0xff]
        %v2325 = vld [vmem:[%s523 + $0x9] sm:$0xff]
        %v2326 = vstv %s2323
        %v2327 = vmul.f32 %v2324, %v2326
        %v2328 = vmul.f32 %v2325, %v2326
        %v2329 = vadd.f32 %v2321, %v2327
        %v2330 = vadd.f32 %v2322, %v2328
        %s2331 = sld [smem:[#allocation2 + $0xaf]]
        %v2332 = vstv %s2331
        %v2333 = vmul.f32 %v2324, %v2332
        %v2334 = vmul.f32 %v2325, %v2332
        %2337 = vrot.lane.b32.xlu0 %v2333, 127
        %v2338 = vpop.permute.xlu0 %2337
        %2339 = vrot.lane.b32.xlu0 %v2334, 127
        %v2340 = vpop.permute.xlu0 %2339
        %v2343 = vadd.f32 %v2329, %v2338
        %v2344 = vadd.f32 %v2330, %v2340
        %s2345 = sld [smem:[#allocation2 + $0xb0]]
        %v2346 = vstv %s2345
        %v2347 = vmul.f32 %v2324, %v2346
        %v2348 = vmul.f32 %v2325, %v2346
        %2351 = vrot.lane.b32.xlu0 %v2347, 126
        %v2352 = vpop.permute.xlu0 %2351
        %2353 = vrot.lane.b32.xlu0 %v2348, 126
        %v2354 = vpop.permute.xlu0 %2353
        %v2357 = vadd.f32 %v2343, %v2352
        %v2358 = vadd.f32 %v2344, %v2354
        %s2359 = sld [smem:[#allocation2 + $0xb1]]
        %v2360 = vld [vmem:[%s523 + $0x2] sm:$0xff]
        %v2361 = vld [vmem:[%s523 + $0xa] sm:$0xff]
        %v2362 = vstv %s2359
        %v2363 = vmul.f32 %v2360, %v2362
        %v2364 = vmul.f32 %v2361, %v2362
        %v2365 = vadd.f32 %v2357, %v2363
        %v2366 = vadd.f32 %v2358, %v2364
        %s2367 = sld [smem:[#allocation2 + $0xb2]]
        %v2368 = vstv %s2367
        %v2369 = vmul.f32 %v2360, %v2368
        %v2370 = vmul.f32 %v2361, %v2368
        %2373 = vrot.lane.b32.xlu0 %v2369, 127
        %v2374 = vpop.permute.xlu0 %2373
        %2375 = vrot.lane.b32.xlu0 %v2370, 127
        %v2376 = vpop.permute.xlu0 %2375
        %v2379 = vadd.f32 %v2365, %v2374
        %v2380 = vadd.f32 %v2366, %v2376
        %s2381 = sld [smem:[#allocation2 + $0xb3]]
        %v2382 = vstv %s2381
        %v2383 = vmul.f32 %v2360, %v2382
        %v2384 = vmul.f32 %v2361, %v2382
        %2387 = vrot.lane.b32.xlu0 %v2383, 126
        %v2388 = vpop.permute.xlu0 %2387
        %2389 = vrot.lane.b32.xlu0 %v2384, 126
        %v2390 = vpop.permute.xlu0 %2389
        %v2393 = vadd.f32 %v2379, %v2388
        %v2394 = vadd.f32 %v2380, %v2390
        %s2395 = sld [smem:[#allocation5 + $0x4]]
        %v2396 = vstv %s2395
        %v2397 = vadd.f32 %v2393, %v2396
        %v2398 = vadd.f32 %v2394, %v2396
        %v2399 = vmax.f32 %v2397, 0.0
        %v2400 = vmax.f32 %v2398, 0.0
        %s2401 = scalar_lea.vmem %s190, 64 [#allocation7]
        %2402 = vst.msk [vmem:[%s2401] sm:$0xff] %vm637, %v2399
        %2403 = vst.msk [vmem:[%s2401 + $0x8] sm:$0xff] %vm637, %v2400
        %s2404 = sld [smem:[#allocation2 + $0xb4]]
        %v2405 = vld [vmem:[%s195] sm:$0xff]
        %v2406 = vld [vmem:[%s195 + $0x8] sm:$0xff]
        %v2407 = vstv %s2404
        %v2408 = vmul.f32 %v2405, %v2407
        %v2409 = vmul.f32 %v2406, %v2407
        %v2410 = vadd.f32 %v2408, 0.0
        %v2411 = vadd.f32 %v2409, 0.0
        %s2412 = sld [smem:[#allocation2 + $0xb5]]
        %v2413 = vstv %s2412
        %v2414 = vmul.f32 %v2405, %v2413
        %v2415 = vmul.f32 %v2406, %v2413
        %2418 = vrot.lane.b32.xlu0 %v2414, 127
        %v2419 = vpop.permute.xlu0 %2418
        %2420 = vrot.lane.b32.xlu0 %v2415, 127
        %v2421 = vpop.permute.xlu0 %2420
        %v2424 = vadd.f32 %v2410, %v2419
        %v2425 = vadd.f32 %v2411, %v2421
        %s2426 = sld [smem:[#allocation2 + $0xb6]]
        %v2427 = vstv %s2426
        %v2428 = vmul.f32 %v2405, %v2427
        %v2429 = vmul.f32 %v2406, %v2427
        %2432 = vrot.lane.b32.xlu0 %v2428, 126
        %v2433 = vpop.permute.xlu0 %2432
        %2434 = vrot.lane.b32.xlu0 %v2429, 126
        %v2435 = vpop.permute.xlu0 %2434
        %v2438 = vadd.f32 %v2424, %v2433
        %v2439 = vadd.f32 %v2425, %v2435
        %s2440 = sld [smem:[#allocation2 + $0xb7]]
        %v2441 = vld [vmem:[%s195 + $0x1] sm:$0xff]
        %v2442 = vld [vmem:[%s195 + $0x9] sm:$0xff]
        %v2443 = vstv %s2440
        %v2444 = vmul.f32 %v2441, %v2443
        %v2445 = vmul.f32 %v2442, %v2443
        %v2446 = vadd.f32 %v2438, %v2444
        %v2447 = vadd.f32 %v2439, %v2445
        %s2448 = sld [smem:[#allocation2 + $0xb8]]
        %v2449 = vstv %s2448
        %v2450 = vmul.f32 %v2441, %v2449
        %v2451 = vmul.f32 %v2442, %v2449
        %2454 = vrot.lane.b32.xlu0 %v2450, 127
        %v2455 = vpop.permute.xlu0 %2454
        %2456 = vrot.lane.b32.xlu0 %v2451, 127
        %v2457 = vpop.permute.xlu0 %2456
        %v2460 = vadd.f32 %v2446, %v2455
        %v2461 = vadd.f32 %v2447, %v2457
        %s2462 = sld [smem:[#allocation2 + $0xb9]]
        %v2463 = vstv %s2462
        %v2464 = vmul.f32 %v2441, %v2463
        %v2465 = vmul.f32 %v2442, %v2463
        %2468 = vrot.lane.b32.xlu0 %v2464, 126
        %v2469 = vpop.permute.xlu0 %2468
        %2470 = vrot.lane.b32.xlu0 %v2465, 126
        %v2471 = vpop.permute.xlu0 %2470
        %v2474 = vadd.f32 %v2460, %v2469
        %v2475 = vadd.f32 %v2461, %v2471
        %s2476 = sld [smem:[#allocation2 + $0xba]]
        %v2477 = vld [vmem:[%s195 + $0x2] sm:$0xff]
        %v2478 = vld [vmem:[%s195 + $0xa] sm:$0xff]
        %v2479 = vstv %s2476
        %v2480 = vmul.f32 %v2477, %v2479
        %v2481 = vmul.f32 %v2478, %v2479
        %v2482 = vadd.f32 %v2474, %v2480
        %v2483 = vadd.f32 %v2475, %v2481
        %s2484 = sld [smem:[#allocation2 + $0xbb]]
        %v2485 = vstv %s2484
        %v2486 = vmul.f32 %v2477, %v2485
        %v2487 = vmul.f32 %v2478, %v2485
        %2490 = vrot.lane.b32.xlu0 %v2486, 127
        %v2491 = vpop.permute.xlu0 %2490
        %2492 = vrot.lane.b32.xlu0 %v2487, 127
        %v2493 = vpop.permute.xlu0 %2492
        %v2496 = vadd.f32 %v2482, %v2491
        %v2497 = vadd.f32 %v2483, %v2493
        %s2498 = sld [smem:[#allocation2 + $0xbc]]
        %v2499 = vstv %s2498
        %v2500 = vmul.f32 %v2477, %v2499
        %v2501 = vmul.f32 %v2478, %v2499
        %2504 = vrot.lane.b32.xlu0 %v2500, 126
        %v2505 = vpop.permute.xlu0 %2504
        %2506 = vrot.lane.b32.xlu0 %v2501, 126
        %v2507 = vpop.permute.xlu0 %2506
        %v2510 = vadd.f32 %v2496, %v2505
        %v2511 = vadd.f32 %v2497, %v2507
        %s2512 = sld [smem:[#allocation2 + $0xbd]]
        %v2513 = vld [vmem:[%s305] sm:$0xff]
        %v2514 = vld [vmem:[%s305 + $0x8] sm:$0xff]
        %v2515 = vstv %s2512
        %v2516 = vmul.f32 %v2513, %v2515
        %v2517 = vmul.f32 %v2514, %v2515
        %v2518 = vadd.f32 %v2510, %v2516
        %v2519 = vadd.f32 %v2511, %v2517
        %s2520 = sld [smem:[#allocation2 + $0xbe]]
        %v2521 = vstv %s2520
        %v2522 = vmul.f32 %v2513, %v2521
        %v2523 = vmul.f32 %v2514, %v2521
        %2526 = vrot.lane.b32.xlu0 %v2522, 127
        %v2527 = vpop.permute.xlu0 %2526
        %2528 = vrot.lane.b32.xlu0 %v2523, 127
        %v2529 = vpop.permute.xlu0 %2528
        %v2532 = vadd.f32 %v2518, %v2527
        %v2533 = vadd.f32 %v2519, %v2529
        %s2534 = sld [smem:[#allocation2 + $0xbf]]
        %v2535 = vstv %s2534
        %v2536 = vmul.f32 %v2513, %v2535
        %v2537 = vmul.f32 %v2514, %v2535
        %2540 = vrot.lane.b32.xlu0 %v2536, 126
        %v2541 = vpop.permute.xlu0 %2540
        %2542 = vrot.lane.b32.xlu0 %v2537, 126
        %v2543 = vpop.permute.xlu0 %2542
        %v2546 = vadd.f32 %v2532, %v2541
        %v2547 = vadd.f32 %v2533, %v2543
        %s2548 = sld [smem:[#allocation2 + $0xc0]]
        %v2549 = vld [vmem:[%s305 + $0x1] sm:$0xff]
        %v2550 = vld [vmem:[%s305 + $0x9] sm:$0xff]
        %v2551 = vstv %s2548
        %v2552 = vmul.f32 %v2549, %v2551
        %v2553 = vmul.f32 %v2550, %v2551
        %v2554 = vadd.f32 %v2546, %v2552
        %v2555 = vadd.f32 %v2547, %v2553
        %s2556 = sld [smem:[#allocation2 + $0xc1]]
        %v2557 = vstv %s2556
        %v2558 = vmul.f32 %v2549, %v2557
        %v2559 = vmul.f32 %v2550, %v2557
        %2562 = vrot.lane.b32.xlu0 %v2558, 127
        %v2563 = vpop.permute.xlu0 %2562
        %2564 = vrot.lane.b32.xlu0 %v2559, 127
        %v2565 = vpop.permute.xlu0 %2564
        %v2568 = vadd.f32 %v2554, %v2563
        %v2569 = vadd.f32 %v2555, %v2565
        %s2570 = sld [smem:[#allocation2 + $0xc2]]
        %v2571 = vstv %s2570
        %v2572 = vmul.f32 %v2549, %v2571
        %v2573 = vmul.f32 %v2550, %v2571
        %2576 = vrot.lane.b32.xlu0 %v2572, 126
        %v2577 = vpop.permute.xlu0 %2576
        %2578 = vrot.lane.b32.xlu0 %v2573, 126
        %v2579 = vpop.permute.xlu0 %2578
        %v2582 = vadd.f32 %v2568, %v2577
        %v2583 = vadd.f32 %v2569, %v2579
        %s2584 = sld [smem:[#allocation2 + $0xc3]]
        %v2585 = vld [vmem:[%s305 + $0x2] sm:$0xff]
        %v2586 = vld [vmem:[%s305 + $0xa] sm:$0xff]
        %v2587 = vstv %s2584
        %v2588 = vmul.f32 %v2585, %v2587
        %v2589 = vmul.f32 %v2586, %v2587
        %v2590 = vadd.f32 %v2582, %v2588
        %v2591 = vadd.f32 %v2583, %v2589
        %s2592 = sld [smem:[#allocation2 + $0xc4]]
        %v2593 = vstv %s2592
        %v2594 = vmul.f32 %v2585, %v2593
        %v2595 = vmul.f32 %v2586, %v2593
        %2598 = vrot.lane.b32.xlu0 %v2594, 127
        %v2599 = vpop.permute.xlu0 %2598
        %2600 = vrot.lane.b32.xlu0 %v2595, 127
        %v2601 = vpop.permute.xlu0 %2600
        %v2604 = vadd.f32 %v2590, %v2599
        %v2605 = vadd.f32 %v2591, %v2601
        %s2606 = sld [smem:[#allocation2 + $0xc5]]
        %v2607 = vstv %s2606
        %v2608 = vmul.f32 %v2585, %v2607
        %v2609 = vmul.f32 %v2586, %v2607
        %2612 = vrot.lane.b32.xlu0 %v2608, 126
        %v2613 = vpop.permute.xlu0 %2612
        %2614 = vrot.lane.b32.xlu0 %v2609, 126
        %v2615 = vpop.permute.xlu0 %2614
        %v2618 = vadd.f32 %v2604, %v2613
        %v2619 = vadd.f32 %v2605, %v2615
        %s2620 = sld [smem:[#allocation2 + $0xc6]]
        %v2621 = vld [vmem:[%s414] sm:$0xff]
        %v2622 = vld [vmem:[%s414 + $0x8] sm:$0xff]
        %v2623 = vstv %s2620
        %v2624 = vmul.f32 %v2621, %v2623
        %v2625 = vmul.f32 %v2622, %v2623
        %v2626 = vadd.f32 %v2618, %v2624
        %v2627 = vadd.f32 %v2619, %v2625
        %s2628 = sld [smem:[#allocation2 + $0xc7]]
        %v2629 = vstv %s2628
        %v2630 = vmul.f32 %v2621, %v2629
        %v2631 = vmul.f32 %v2622, %v2629
        %2634 = vrot.lane.b32.xlu0 %v2630, 127
        %v2635 = vpop.permute.xlu0 %2634
        %2636 = vrot.lane.b32.xlu0 %v2631, 127
        %v2637 = vpop.permute.xlu0 %2636
        %v2640 = vadd.f32 %v2626, %v2635
        %v2641 = vadd.f32 %v2627, %v2637
        %s2642 = sld [smem:[#allocation2 + $0xc8]]
        %v2643 = vstv %s2642
        %v2644 = vmul.f32 %v2621, %v2643
        %v2645 = vmul.f32 %v2622, %v2643
        %2648 = vrot.lane.b32.xlu0 %v2644, 126
        %v2649 = vpop.permute.xlu0 %2648
        %2650 = vrot.lane.b32.xlu0 %v2645, 126
        %v2651 = vpop.permute.xlu0 %2650
        %v2654 = vadd.f32 %v2640, %v2649
        %v2655 = vadd.f32 %v2641, %v2651
        %s2656 = sld [smem:[#allocation2 + $0xc9]]
        %v2657 = vld [vmem:[%s414 + $0x1] sm:$0xff]
        %v2658 = vld [vmem:[%s414 + $0x9] sm:$0xff]
        %v2659 = vstv %s2656
        %v2660 = vmul.f32 %v2657, %v2659
        %v2661 = vmul.f32 %v2658, %v2659
        %v2662 = vadd.f32 %v2654, %v2660
        %v2663 = vadd.f32 %v2655, %v2661
        %s2664 = sld [smem:[#allocation2 + $0xca]]
        %v2665 = vstv %s2664
        %v2666 = vmul.f32 %v2657, %v2665
        %v2667 = vmul.f32 %v2658, %v2665
        %2670 = vrot.lane.b32.xlu0 %v2666, 127
        %v2671 = vpop.permute.xlu0 %2670
        %2672 = vrot.lane.b32.xlu0 %v2667, 127
        %v2673 = vpop.permute.xlu0 %2672
        %v2676 = vadd.f32 %v2662, %v2671
        %v2677 = vadd.f32 %v2663, %v2673
        %s2678 = sld [smem:[#allocation2 + $0xcb]]
        %v2679 = vstv %s2678
        %v2680 = vmul.f32 %v2657, %v2679
        %v2681 = vmul.f32 %v2658, %v2679
        %2684 = vrot.lane.b32.xlu0 %v2680, 126
        %v2685 = vpop.permute.xlu0 %2684
        %2686 = vrot.lane.b32.xlu0 %v2681, 126
        %v2687 = vpop.permute.xlu0 %2686
        %v2690 = vadd.f32 %v2676, %v2685
        %v2691 = vadd.f32 %v2677, %v2687
        %s2692 = sld [smem:[#allocation2 + $0xcc]]
        %v2693 = vld [vmem:[%s414 + $0x2] sm:$0xff]
        %v2694 = vld [vmem:[%s414 + $0xa] sm:$0xff]
        %v2695 = vstv %s2692
        %v2696 = vmul.f32 %v2693, %v2695
        %v2697 = vmul.f32 %v2694, %v2695
        %v2698 = vadd.f32 %v2690, %v2696
        %v2699 = vadd.f32 %v2691, %v2697
        %s2700 = sld [smem:[#allocation2 + $0xcd]]
        %v2701 = vstv %s2700
        %v2702 = vmul.f32 %v2693, %v2701
        %v2703 = vmul.f32 %v2694, %v2701
        %2706 = vrot.lane.b32.xlu0 %v2702, 127
        %v2707 = vpop.permute.xlu0 %2706
        %2708 = vrot.lane.b32.xlu0 %v2703, 127
        %v2709 = vpop.permute.xlu0 %2708
        %v2712 = vadd.f32 %v2698, %v2707
        %v2713 = vadd.f32 %v2699, %v2709
        %s2714 = sld [smem:[#allocation2 + $0xce]]
        %v2715 = vstv %s2714
        %v2716 = vmul.f32 %v2693, %v2715
        %v2717 = vmul.f32 %v2694, %v2715
        %2720 = vrot.lane.b32.xlu0 %v2716, 126
        %v2721 = vpop.permute.xlu0 %2720
        %2722 = vrot.lane.b32.xlu0 %v2717, 126
        %v2723 = vpop.permute.xlu0 %2722
        %v2726 = vadd.f32 %v2712, %v2721
        %v2727 = vadd.f32 %v2713, %v2723
        %s2728 = sld [smem:[#allocation2 + $0xcf]]
        %v2729 = vld [vmem:[%s523] sm:$0xff]
        %v2730 = vld [vmem:[%s523 + $0x8] sm:$0xff]
        %v2731 = vstv %s2728
        %v2732 = vmul.f32 %v2729, %v2731
        %v2733 = vmul.f32 %v2730, %v2731
        %v2734 = vadd.f32 %v2726, %v2732
        %v2735 = vadd.f32 %v2727, %v2733
        %s2736 = sld [smem:[#allocation2 + $0xd0]]
        %v2737 = vstv %s2736
        %v2738 = vmul.f32 %v2729, %v2737
        %v2739 = vmul.f32 %v2730, %v2737
        %2742 = vrot.lane.b32.xlu0 %v2738, 127
        %v2743 = vpop.permute.xlu0 %2742
        %2744 = vrot.lane.b32.xlu0 %v2739, 127
        %v2745 = vpop.permute.xlu0 %2744
        %v2748 = vadd.f32 %v2734, %v2743
        %v2749 = vadd.f32 %v2735, %v2745
        %s2750 = sld [smem:[#allocation2 + $0xd1]]
        %v2751 = vstv %s2750
        %v2752 = vmul.f32 %v2729, %v2751
        %v2753 = vmul.f32 %v2730, %v2751
        %2756 = vrot.lane.b32.xlu0 %v2752, 126
        %v2757 = vpop.permute.xlu0 %2756
        %2758 = vrot.lane.b32.xlu0 %v2753, 126
        %v2759 = vpop.permute.xlu0 %2758
        %v2762 = vadd.f32 %v2748, %v2757
        %v2763 = vadd.f32 %v2749, %v2759
        %s2764 = sld [smem:[#allocation2 + $0xd2]]
        %v2765 = vld [vmem:[%s523 + $0x1] sm:$0xff]
        %v2766 = vld [vmem:[%s523 + $0x9] sm:$0xff]
        %v2767 = vstv %s2764
        %v2768 = vmul.f32 %v2765, %v2767
        %v2769 = vmul.f32 %v2766, %v2767
        %v2770 = vadd.f32 %v2762, %v2768
        %v2771 = vadd.f32 %v2763, %v2769
        %s2772 = sld [smem:[#allocation2 + $0xd3]]
        %v2773 = vstv %s2772
        %v2774 = vmul.f32 %v2765, %v2773
        %v2775 = vmul.f32 %v2766, %v2773
        %2778 = vrot.lane.b32.xlu0 %v2774, 127
        %v2779 = vpop.permute.xlu0 %2778
        %2780 = vrot.lane.b32.xlu0 %v2775, 127
        %v2781 = vpop.permute.xlu0 %2780
        %v2784 = vadd.f32 %v2770, %v2779
        %v2785 = vadd.f32 %v2771, %v2781
        %s2786 = sld [smem:[#allocation2 + $0xd4]]
        %v2787 = vstv %s2786
        %v2788 = vmul.f32 %v2765, %v2787
        %v2789 = vmul.f32 %v2766, %v2787
        %2792 = vrot.lane.b32.xlu0 %v2788, 126
        %v2793 = vpop.permute.xlu0 %2792
        %2794 = vrot.lane.b32.xlu0 %v2789, 126
        %v2795 = vpop.permute.xlu0 %2794
        %v2798 = vadd.f32 %v2784, %v2793
        %v2799 = vadd.f32 %v2785, %v2795
        %s2800 = sld [smem:[#allocation2 + $0xd5]]
        %v2801 = vld [vmem:[%s523 + $0x2] sm:$0xff]
        %v2802 = vld [vmem:[%s523 + $0xa] sm:$0xff]
        %v2803 = vstv %s2800
        %v2804 = vmul.f32 %v2801, %v2803
        %v2805 = vmul.f32 %v2802, %v2803
        %v2806 = vadd.f32 %v2798, %v2804
        %v2807 = vadd.f32 %v2799, %v2805
        %s2808 = sld [smem:[#allocation2 + $0xd6]]
        %v2809 = vstv %s2808
        %v2810 = vmul.f32 %v2801, %v2809
        %v2811 = vmul.f32 %v2802, %v2809
        %2814 = vrot.lane.b32.xlu0 %v2810, 127
        %v2815 = vpop.permute.xlu0 %2814
        %2816 = vrot.lane.b32.xlu0 %v2811, 127
        %v2817 = vpop.permute.xlu0 %2816
        %v2820 = vadd.f32 %v2806, %v2815
        %v2821 = vadd.f32 %v2807, %v2817
        %s2822 = sld [smem:[#allocation2 + $0xd7]]
        %v2823 = vstv %s2822
        %v2824 = vmul.f32 %v2801, %v2823
        %v2825 = vmul.f32 %v2802, %v2823
        %2828 = vrot.lane.b32.xlu0 %v2824, 126
        %v2829 = vpop.permute.xlu0 %2828
        %2830 = vrot.lane.b32.xlu0 %v2825, 126
        %v2831 = vpop.permute.xlu0 %2830
        %v2834 = vadd.f32 %v2820, %v2829
        %v2835 = vadd.f32 %v2821, %v2831
        %s2836 = sld [smem:[#allocation5 + $0x5]]
        %v2837 = vstv %s2836
        %v2838 = vadd.f32 %v2834, %v2837
        %v2839 = vadd.f32 %v2835, %v2837
        %v2840 = vmax.f32 %v2838, 0.0
        %v2841 = vmax.f32 %v2839, 0.0
        %s2842 = scalar_lea.vmem %s190, 80 [#allocation7]
        %2843 = vst.msk [vmem:[%s2842] sm:$0xff] %vm637, %v2840
        %2844 = vst.msk [vmem:[%s2842 + $0x8] sm:$0xff] %vm637, %v2841
        %s2845 = sld [smem:[#allocation2 + $0xd8]]
        %v2846 = vld [vmem:[%s195] sm:$0xff]
        %v2847 = vld [vmem:[%s195 + $0x8] sm:$0xff]
        %v2848 = vstv %s2845
        %v2849 = vmul.f32 %v2846, %v2848
        %v2850 = vmul.f32 %v2847, %v2848
        %v2851 = vadd.f32 %v2849, 0.0
        %v2852 = vadd.f32 %v2850, 0.0
        %s2853 = sld [smem:[#allocation2 + $0xd9]]
        %v2854 = vstv %s2853
        %v2855 = vmul.f32 %v2846, %v2854
        %v2856 = vmul.f32 %v2847, %v2854
        %2859 = vrot.lane.b32.xlu0 %v2855, 127
        %v2860 = vpop.permute.xlu0 %2859
        %2861 = vrot.lane.b32.xlu0 %v2856, 127
        %v2862 = vpop.permute.xlu0 %2861
        %v2865 = vadd.f32 %v2851, %v2860
        %v2866 = vadd.f32 %v2852, %v2862
        %s2867 = sld [smem:[#allocation2 + $0xda]]
        %v2868 = vstv %s2867
        %v2869 = vmul.f32 %v2846, %v2868
        %v2870 = vmul.f32 %v2847, %v2868
        %2873 = vrot.lane.b32.xlu0 %v2869, 126
        %v2874 = vpop.permute.xlu0 %2873
        %2875 = vrot.lane.b32.xlu0 %v2870, 126
        %v2876 = vpop.permute.xlu0 %2875
        %v2879 = vadd.f32 %v2865, %v2874
        %v2880 = vadd.f32 %v2866, %v2876
        %s2881 = sld [smem:[#allocation2 + $0xdb]]
        %v2882 = vld [vmem:[%s195 + $0x1] sm:$0xff]
        %v2883 = vld [vmem:[%s195 + $0x9] sm:$0xff]
        %v2884 = vstv %s2881
        %v2885 = vmul.f32 %v2882, %v2884
        %v2886 = vmul.f32 %v2883, %v2884
        %v2887 = vadd.f32 %v2879, %v2885
        %v2888 = vadd.f32 %v2880, %v2886
        %s2889 = sld [smem:[#allocation2 + $0xdc]]
        %v2890 = vstv %s2889
        %v2891 = vmul.f32 %v2882, %v2890
        %v2892 = vmul.f32 %v2883, %v2890
        %2895 = vrot.lane.b32.xlu0 %v2891, 127
        %v2896 = vpop.permute.xlu0 %2895
        %2897 = vrot.lane.b32.xlu0 %v2892, 127
        %v2898 = vpop.permute.xlu0 %2897
        %v2901 = vadd.f32 %v2887, %v2896
        %v2902 = vadd.f32 %v2888, %v2898
        %s2903 = sld [smem:[#allocation2 + $0xdd]]
        %v2904 = vstv %s2903
        %v2905 = vmul.f32 %v2882, %v2904
        %v2906 = vmul.f32 %v2883, %v2904
        %2909 = vrot.lane.b32.xlu0 %v2905, 126
        %v2910 = vpop.permute.xlu0 %2909
        %2911 = vrot.lane.b32.xlu0 %v2906, 126
        %v2912 = vpop.permute.xlu0 %2911
        %v2915 = vadd.f32 %v2901, %v2910
        %v2916 = vadd.f32 %v2902, %v2912
        %s2917 = sld [smem:[#allocation2 + $0xde]]
        %v2918 = vld [vmem:[%s195 + $0x2] sm:$0xff]
        %v2919 = vld [vmem:[%s195 + $0xa] sm:$0xff]
        %v2920 = vstv %s2917
        %v2921 = vmul.f32 %v2918, %v2920
        %v2922 = vmul.f32 %v2919, %v2920
        %v2923 = vadd.f32 %v2915, %v2921
        %v2924 = vadd.f32 %v2916, %v2922
        %s2925 = sld [smem:[#allocation2 + $0xdf]]
        %v2926 = vstv %s2925
        %v2927 = vmul.f32 %v2918, %v2926
        %v2928 = vmul.f32 %v2919, %v2926
        %2931 = vrot.lane.b32.xlu0 %v2927, 127
        %v2932 = vpop.permute.xlu0 %2931
        %2933 = vrot.lane.b32.xlu0 %v2928, 127
        %v2934 = vpop.permute.xlu0 %2933
        %v2937 = vadd.f32 %v2923, %v2932
        %v2938 = vadd.f32 %v2924, %v2934
        %s2939 = sld [smem:[#allocation2 + $0xe0]]
        %v2940 = vstv %s2939
        %v2941 = vmul.f32 %v2918, %v2940
        %v2942 = vmul.f32 %v2919, %v2940
        %2945 = vrot.lane.b32.xlu0 %v2941, 126
        %v2946 = vpop.permute.xlu0 %2945
        %2947 = vrot.lane.b32.xlu0 %v2942, 126
        %v2948 = vpop.permute.xlu0 %2947
        %v2951 = vadd.f32 %v2937, %v2946
        %v2952 = vadd.f32 %v2938, %v2948
        %s2953 = sld [smem:[#allocation2 + $0xe1]]
        %v2954 = vld [vmem:[%s305] sm:$0xff]
        %v2955 = vld [vmem:[%s305 + $0x8] sm:$0xff]
        %v2956 = vstv %s2953
        %v2957 = vmul.f32 %v2954, %v2956
        %v2958 = vmul.f32 %v2955, %v2956
        %v2959 = vadd.f32 %v2951, %v2957
        %v2960 = vadd.f32 %v2952, %v2958
        %s2961 = sld [smem:[#allocation2 + $0xe2]]
        %v2962 = vstv %s2961
        %v2963 = vmul.f32 %v2954, %v2962
        %v2964 = vmul.f32 %v2955, %v2962
        %2967 = vrot.lane.b32.xlu0 %v2963, 127
        %v2968 = vpop.permute.xlu0 %2967
        %2969 = vrot.lane.b32.xlu0 %v2964, 127
        %v2970 = vpop.permute.xlu0 %2969
        %v2973 = vadd.f32 %v2959, %v2968
        %v2974 = vadd.f32 %v2960, %v2970
        %s2975 = sld [smem:[#allocation2 + $0xe3]]
        %v2976 = vstv %s2975
        %v2977 = vmul.f32 %v2954, %v2976
        %v2978 = vmul.f32 %v2955, %v2976
        %2981 = vrot.lane.b32.xlu0 %v2977, 126
        %v2982 = vpop.permute.xlu0 %2981
        %2983 = vrot.lane.b32.xlu0 %v2978, 126
        %v2984 = vpop.permute.xlu0 %2983
        %v2987 = vadd.f32 %v2973, %v2982
        %v2988 = vadd.f32 %v2974, %v2984
        %s2989 = sld [smem:[#allocation2 + $0xe4]]
        %v2990 = vld [vmem:[%s305 + $0x1] sm:$0xff]
        %v2991 = vld [vmem:[%s305 + $0x9] sm:$0xff]
        %v2992 = vstv %s2989
        %v2993 = vmul.f32 %v2990, %v2992
        %v2994 = vmul.f32 %v2991, %v2992
        %v2995 = vadd.f32 %v2987, %v2993
        %v2996 = vadd.f32 %v2988, %v2994
        %s2997 = sld [smem:[#allocation2 + $0xe5]]
        %v2998 = vstv %s2997
        %v2999 = vmul.f32 %v2990, %v2998
        %v3000 = vmul.f32 %v2991, %v2998
        %3003 = vrot.lane.b32.xlu0 %v2999, 127
        %v3004 = vpop.permute.xlu0 %3003
        %3005 = vrot.lane.b32.xlu0 %v3000, 127
        %v3006 = vpop.permute.xlu0 %3005
        %v3009 = vadd.f32 %v2995, %v3004
        %v3010 = vadd.f32 %v2996, %v3006
        %s3011 = sld [smem:[#allocation2 + $0xe6]]
        %v3012 = vstv %s3011
        %v3013 = vmul.f32 %v2990, %v3012
        %v3014 = vmul.f32 %v2991, %v3012
        %3017 = vrot.lane.b32.xlu0 %v3013, 126
        %v3018 = vpop.permute.xlu0 %3017
        %3019 = vrot.lane.b32.xlu0 %v3014, 126
        %v3020 = vpop.permute.xlu0 %3019
        %v3023 = vadd.f32 %v3009, %v3018
        %v3024 = vadd.f32 %v3010, %v3020
        %s3025 = sld [smem:[#allocation2 + $0xe7]]
        %v3026 = vld [vmem:[%s305 + $0x2] sm:$0xff]
        %v3027 = vld [vmem:[%s305 + $0xa] sm:$0xff]
        %v3028 = vstv %s3025
        %v3029 = vmul.f32 %v3026, %v3028
        %v3030 = vmul.f32 %v3027, %v3028
        %v3031 = vadd.f32 %v3023, %v3029
        %v3032 = vadd.f32 %v3024, %v3030
        %s3033 = sld [smem:[#allocation2 + $0xe8]]
        %v3034 = vstv %s3033
        %v3035 = vmul.f32 %v3026, %v3034
        %v3036 = vmul.f32 %v3027, %v3034
        %3039 = vrot.lane.b32.xlu0 %v3035, 127
        %v3040 = vpop.permute.xlu0 %3039
        %3041 = vrot.lane.b32.xlu0 %v3036, 127
        %v3042 = vpop.permute.xlu0 %3041
        %v3045 = vadd.f32 %v3031, %v3040
        %v3046 = vadd.f32 %v3032, %v3042
        %s3047 = sld [smem:[#allocation2 + $0xe9]]
        %v3048 = vstv %s3047
        %v3049 = vmul.f32 %v3026, %v3048
        %v3050 = vmul.f32 %v3027, %v3048
        %3053 = vrot.lane.b32.xlu0 %v3049, 126
        %v3054 = vpop.permute.xlu0 %3053
        %3055 = vrot.lane.b32.xlu0 %v3050, 126
        %v3056 = vpop.permute.xlu0 %3055
        %v3059 = vadd.f32 %v3045, %v3054
        %v3060 = vadd.f32 %v3046, %v3056
        %s3061 = sld [smem:[#allocation2 + $0xea]]
        %v3062 = vld [vmem:[%s414] sm:$0xff]
        %v3063 = vld [vmem:[%s414 + $0x8] sm:$0xff]
        %v3064 = vstv %s3061
        %v3065 = vmul.f32 %v3062, %v3064
        %v3066 = vmul.f32 %v3063, %v3064
        %v3067 = vadd.f32 %v3059, %v3065
        %v3068 = vadd.f32 %v3060, %v3066
        %s3069 = sld [smem:[#allocation2 + $0xeb]]
        %v3070 = vstv %s3069
        %v3071 = vmul.f32 %v3062, %v3070
        %v3072 = vmul.f32 %v3063, %v3070
        %3075 = vrot.lane.b32.xlu0 %v3071, 127
        %v3076 = vpop.permute.xlu0 %3075
        %3077 = vrot.lane.b32.xlu0 %v3072, 127
        %v3078 = vpop.permute.xlu0 %3077
        %v3081 = vadd.f32 %v3067, %v3076
        %v3082 = vadd.f32 %v3068, %v3078
        %s3083 = sld [smem:[#allocation2 + $0xec]]
        %v3084 = vstv %s3083
        %v3085 = vmul.f32 %v3062, %v3084
        %v3086 = vmul.f32 %v3063, %v3084
        %3089 = vrot.lane.b32.xlu0 %v3085, 126
        %v3090 = vpop.permute.xlu0 %3089
        %3091 = vrot.lane.b32.xlu0 %v3086, 126
        %v3092 = vpop.permute.xlu0 %3091
        %v3095 = vadd.f32 %v3081, %v3090
        %v3096 = vadd.f32 %v3082, %v3092
        %s3097 = sld [smem:[#allocation2 + $0xed]]
        %v3098 = vld [vmem:[%s414 + $0x1] sm:$0xff]
        %v3099 = vld [vmem:[%s414 + $0x9] sm:$0xff]
        %v3100 = vstv %s3097
        %v3101 = vmul.f32 %v3098, %v3100
        %v3102 = vmul.f32 %v3099, %v3100
        %v3103 = vadd.f32 %v3095, %v3101
        %v3104 = vadd.f32 %v3096, %v3102
        %s3105 = sld [smem:[#allocation2 + $0xee]]
        %v3106 = vstv %s3105
        %v3107 = vmul.f32 %v3098, %v3106
        %v3108 = vmul.f32 %v3099, %v3106
        %3111 = vrot.lane.b32.xlu0 %v3107, 127
        %v3112 = vpop.permute.xlu0 %3111
        %3113 = vrot.lane.b32.xlu0 %v3108, 127
        %v3114 = vpop.permute.xlu0 %3113
        %v3117 = vadd.f32 %v3103, %v3112
        %v3118 = vadd.f32 %v3104, %v3114
        %s3119 = sld [smem:[#allocation2 + $0xef]]
        %v3120 = vstv %s3119
        %v3121 = vmul.f32 %v3098, %v3120
        %v3122 = vmul.f32 %v3099, %v3120
        %3125 = vrot.lane.b32.xlu0 %v3121, 126
        %v3126 = vpop.permute.xlu0 %3125
        %3127 = vrot.lane.b32.xlu0 %v3122, 126
        %v3128 = vpop.permute.xlu0 %3127
        %v3131 = vadd.f32 %v3117, %v3126
        %v3132 = vadd.f32 %v3118, %v3128
        %s3133 = sld [smem:[#allocation2 + $0xf0]]
        %v3134 = vld [vmem:[%s414 + $0x2] sm:$0xff]
        %v3135 = vld [vmem:[%s414 + $0xa] sm:$0xff]
        %v3136 = vstv %s3133
        %v3137 = vmul.f32 %v3134, %v3136
        %v3138 = vmul.f32 %v3135, %v3136
        %v3139 = vadd.f32 %v3131, %v3137
        %v3140 = vadd.f32 %v3132, %v3138
        %s3141 = sld [smem:[#allocation2 + $0xf1]]
        %v3142 = vstv %s3141
        %v3143 = vmul.f32 %v3134, %v3142
        %v3144 = vmul.f32 %v3135, %v3142
        %3147 = vrot.lane.b32.xlu0 %v3143, 127
        %v3148 = vpop.permute.xlu0 %3147
        %3149 = vrot.lane.b32.xlu0 %v3144, 127
        %v3150 = vpop.permute.xlu0 %3149
        %v3153 = vadd.f32 %v3139, %v3148
        %v3154 = vadd.f32 %v3140, %v3150
        %s3155 = sld [smem:[#allocation2 + $0xf2]]
        %v3156 = vstv %s3155
        %v3157 = vmul.f32 %v3134, %v3156
        %v3158 = vmul.f32 %v3135, %v3156
        %3161 = vrot.lane.b32.xlu0 %v3157, 126
        %v3162 = vpop.permute.xlu0 %3161
        %3163 = vrot.lane.b32.xlu0 %v3158, 126
        %v3164 = vpop.permute.xlu0 %3163
        %v3167 = vadd.f32 %v3153, %v3162
        %v3168 = vadd.f32 %v3154, %v3164
        %s3169 = sld [smem:[#allocation2 + $0xf3]]
        %v3170 = vld [vmem:[%s523] sm:$0xff]
        %v3171 = vld [vmem:[%s523 + $0x8] sm:$0xff]
        %v3172 = vstv %s3169
        %v3173 = vmul.f32 %v3170, %v3172
        %v3174 = vmul.f32 %v3171, %v3172
        %v3175 = vadd.f32 %v3167, %v3173
        %v3176 = vadd.f32 %v3168, %v3174
        %s3177 = sld [smem:[#allocation2 + $0xf4]]
        %v3178 = vstv %s3177
        %v3179 = vmul.f32 %v3170, %v3178
        %v3180 = vmul.f32 %v3171, %v3178
        %3183 = vrot.lane.b32.xlu0 %v3179, 127
        %v3184 = vpop.permute.xlu0 %3183
        %3185 = vrot.lane.b32.xlu0 %v3180, 127
        %v3186 = vpop.permute.xlu0 %3185
        %v3189 = vadd.f32 %v3175, %v3184
        %v3190 = vadd.f32 %v3176, %v3186
        %s3191 = sld [smem:[#allocation2 + $0xf5]]
        %v3192 = vstv %s3191
        %v3193 = vmul.f32 %v3170, %v3192
        %v3194 = vmul.f32 %v3171, %v3192
        %3197 = vrot.lane.b32.xlu0 %v3193, 126
        %v3198 = vpop.permute.xlu0 %3197
        %3199 = vrot.lane.b32.xlu0 %v3194, 126
        %v3200 = vpop.permute.xlu0 %3199
        %v3203 = vadd.f32 %v3189, %v3198
        %v3204 = vadd.f32 %v3190, %v3200
        %s3205 = sld [smem:[#allocation2 + $0xf6]]
        %v3206 = vld [vmem:[%s523 + $0x1] sm:$0xff]
        %v3207 = vld [vmem:[%s523 + $0x9] sm:$0xff]
        %v3208 = vstv %s3205
        %v3209 = vmul.f32 %v3206, %v3208
        %v3210 = vmul.f32 %v3207, %v3208
        %v3211 = vadd.f32 %v3203, %v3209
        %v3212 = vadd.f32 %v3204, %v3210
        %s3213 = sld [smem:[#allocation2 + $0xf7]]
        %v3214 = vstv %s3213
        %v3215 = vmul.f32 %v3206, %v3214
        %v3216 = vmul.f32 %v3207, %v3214
        %3219 = vrot.lane.b32.xlu0 %v3215, 127
        %v3220 = vpop.permute.xlu0 %3219
        %3221 = vrot.lane.b32.xlu0 %v3216, 127
        %v3222 = vpop.permute.xlu0 %3221
        %v3225 = vadd.f32 %v3211, %v3220
        %v3226 = vadd.f32 %v3212, %v3222
        %s3227 = sld [smem:[#allocation2 + $0xf8]]
        %v3228 = vstv %s3227
        %v3229 = vmul.f32 %v3206, %v3228
        %v3230 = vmul.f32 %v3207, %v3228
        %3233 = vrot.lane.b32.xlu0 %v3229, 126
        %v3234 = vpop.permute.xlu0 %3233
        %3235 = vrot.lane.b32.xlu0 %v3230, 126
        %v3236 = vpop.permute.xlu0 %3235
        %v3239 = vadd.f32 %v3225, %v3234
        %v3240 = vadd.f32 %v3226, %v3236
        %s3241 = sld [smem:[#allocation2 + $0xf9]]
        %v3242 = vld [vmem:[%s523 + $0x2] sm:$0xff]
        %v3243 = vld [vmem:[%s523 + $0xa] sm:$0xff]
        %v3244 = vstv %s3241
        %v3245 = vmul.f32 %v3242, %v3244
        %v3246 = vmul.f32 %v3243, %v3244
        %v3247 = vadd.f32 %v3239, %v3245
        %v3248 = vadd.f32 %v3240, %v3246
        %s3249 = sld [smem:[#allocation2 + $0xfa]]
        %v3250 = vstv %s3249
        %v3251 = vmul.f32 %v3242, %v3250
        %v3252 = vmul.f32 %v3243, %v3250
        %3255 = vrot.lane.b32.xlu0 %v3251, 127
        %v3256 = vpop.permute.xlu0 %3255
        %3257 = vrot.lane.b32.xlu0 %v3252, 127
        %v3258 = vpop.permute.xlu0 %3257
        %v3261 = vadd.f32 %v3247, %v3256
        %v3262 = vadd.f32 %v3248, %v3258
        %s3263 = sld [smem:[#allocation2 + $0xfb]]
        %v3264 = vstv %s3263
        %v3265 = vmul.f32 %v3242, %v3264
        %v3266 = vmul.f32 %v3243, %v3264
        %3269 = vrot.lane.b32.xlu0 %v3265, 126
        %v3270 = vpop.permute.xlu0 %3269
        %3271 = vrot.lane.b32.xlu0 %v3266, 126
        %v3272 = vpop.permute.xlu0 %3271
        %v3275 = vadd.f32 %v3261, %v3270
        %v3276 = vadd.f32 %v3262, %v3272
        %s3277 = sld [smem:[#allocation5 + $0x6]]
        %v3278 = vstv %s3277
        %v3279 = vadd.f32 %v3275, %v3278
        %v3280 = vadd.f32 %v3276, %v3278
        %v3281 = vmax.f32 %v3279, 0.0
        %v3282 = vmax.f32 %v3280, 0.0
        %s3283 = scalar_lea.vmem %s190, 96 [#allocation7]
        %3284 = vst.msk [vmem:[%s3283] sm:$0xff] %vm637, %v3281
        %3285 = vst.msk [vmem:[%s3283 + $0x8] sm:$0xff] %vm637, %v3282
        %s3286 = sld [smem:[#allocation2 + $0xfc]]
        %v3287 = vld [vmem:[%s195] sm:$0xff]
        %v3288 = vld [vmem:[%s195 + $0x8] sm:$0xff]
        %v3289 = vstv %s3286
        %v3290 = vmul.f32 %v3287, %v3289
        %v3291 = vmul.f32 %v3288, %v3289
        %v3292 = vadd.f32 %v3290, 0.0
        %v3293 = vadd.f32 %v3291, 0.0
        %s3294 = sld [smem:[#allocation2 + $0xfd]]
        %v3295 = vstv %s3294
        %v3296 = vmul.f32 %v3287, %v3295
        %v3297 = vmul.f32 %v3288, %v3295
        %3300 = vrot.lane.b32.xlu0 %v3296, 127
        %v3301 = vpop.permute.xlu0 %3300
        %3302 = vrot.lane.b32.xlu0 %v3297, 127
        %v3303 = vpop.permute.xlu0 %3302
        %v3306 = vadd.f32 %v3292, %v3301
        %v3307 = vadd.f32 %v3293, %v3303
        %s3308 = sld [smem:[#allocation2 + $0xfe]]
        %v3309 = vstv %s3308
        %v3310 = vmul.f32 %v3287, %v3309
        %v3311 = vmul.f32 %v3288, %v3309
        %3314 = vrot.lane.b32.xlu0 %v3310, 126
        %v3315 = vpop.permute.xlu0 %3314
        %3316 = vrot.lane.b32.xlu0 %v3311, 126
        %v3317 = vpop.permute.xlu0 %3316
        %v3320 = vadd.f32 %v3306, %v3315
        %v3321 = vadd.f32 %v3307, %v3317
        %s3322 = sld [smem:[#allocation2 + $0xff]]
        %v3323 = vld [vmem:[%s195 + $0x1] sm:$0xff]
        %v3324 = vld [vmem:[%s195 + $0x9] sm:$0xff]
        %v3325 = vstv %s3322
        %v3326 = vmul.f32 %v3323, %v3325
        %v3327 = vmul.f32 %v3324, %v3325
        %v3328 = vadd.f32 %v3320, %v3326
        %v3329 = vadd.f32 %v3321, %v3327
        %s3330 = sld [smem:[#allocation2 + $0x100]]
        %v3331 = vstv %s3330
        %v3332 = vmul.f32 %v3323, %v3331
        %v3333 = vmul.f32 %v3324, %v3331
        %3336 = vrot.lane.b32.xlu0 %v3332, 127
        %v3337 = vpop.permute.xlu0 %3336
        %3338 = vrot.lane.b32.xlu0 %v3333, 127
        %v3339 = vpop.permute.xlu0 %3338
        %v3342 = vadd.f32 %v3328, %v3337
        %v3343 = vadd.f32 %v3329, %v3339
        %s3344 = sld [smem:[#allocation2 + $0x101]]
        %v3345 = vstv %s3344
        %v3346 = vmul.f32 %v3323, %v3345
        %v3347 = vmul.f32 %v3324, %v3345
        %3350 = vrot.lane.b32.xlu0 %v3346, 126
        %v3351 = vpop.permute.xlu0 %3350
        %3352 = vrot.lane.b32.xlu0 %v3347, 126
        %v3353 = vpop.permute.xlu0 %3352
        %v3356 = vadd.f32 %v3342, %v3351
        %v3357 = vadd.f32 %v3343, %v3353
        %s3358 = sld [smem:[#allocation2 + $0x102]]
        %v3359 = vld [vmem:[%s195 + $0x2] sm:$0xff]
        %v3360 = vld [vmem:[%s195 + $0xa] sm:$0xff]
        %v3361 = vstv %s3358
        %v3362 = vmul.f32 %v3359, %v3361
        %v3363 = vmul.f32 %v3360, %v3361
        %v3364 = vadd.f32 %v3356, %v3362
        %v3365 = vadd.f32 %v3357, %v3363
        %s3366 = sld [smem:[#allocation2 + $0x103]]
        %v3367 = vstv %s3366
        %v3368 = vmul.f32 %v3359, %v3367
        %v3369 = vmul.f32 %v3360, %v3367
        %3372 = vrot.lane.b32.xlu0 %v3368, 127
        %v3373 = vpop.permute.xlu0 %3372
        %3374 = vrot.lane.b32.xlu0 %v3369, 127
        %v3375 = vpop.permute.xlu0 %3374
        %v3378 = vadd.f32 %v3364, %v3373
        %v3379 = vadd.f32 %v3365, %v3375
        %s3380 = sld [smem:[#allocation2 + $0x104]]
        %v3381 = vstv %s3380
        %v3382 = vmul.f32 %v3359, %v3381
        %v3383 = vmul.f32 %v3360, %v3381
        %3386 = vrot.lane.b32.xlu0 %v3382, 126
        %v3387 = vpop.permute.xlu0 %3386
        %3388 = vrot.lane.b32.xlu0 %v3383, 126
        %v3389 = vpop.permute.xlu0 %3388
        %v3392 = vadd.f32 %v3378, %v3387
        %v3393 = vadd.f32 %v3379, %v3389
        %s3394 = sld [smem:[#allocation2 + $0x105]]
        %v3395 = vld [vmem:[%s305] sm:$0xff]
        %v3396 = vld [vmem:[%s305 + $0x8] sm:$0xff]
        %v3397 = vstv %s3394
        %v3398 = vmul.f32 %v3395, %v3397
        %v3399 = vmul.f32 %v3396, %v3397
        %v3400 = vadd.f32 %v3392, %v3398
        %v3401 = vadd.f32 %v3393, %v3399
        %s3402 = sld [smem:[#allocation2 + $0x106]]
        %v3403 = vstv %s3402
        %v3404 = vmul.f32 %v3395, %v3403
        %v3405 = vmul.f32 %v3396, %v3403
        %3408 = vrot.lane.b32.xlu0 %v3404, 127
        %v3409 = vpop.permute.xlu0 %3408
        %3410 = vrot.lane.b32.xlu0 %v3405, 127
        %v3411 = vpop.permute.xlu0 %3410
        %v3414 = vadd.f32 %v3400, %v3409
        %v3415 = vadd.f32 %v3401, %v3411
        %s3416 = sld [smem:[#allocation2 + $0x107]]
        %v3417 = vstv %s3416
        %v3418 = vmul.f32 %v3395, %v3417
        %v3419 = vmul.f32 %v3396, %v3417
        %3422 = vrot.lane.b32.xlu0 %v3418, 126
        %v3423 = vpop.permute.xlu0 %3422
        %3424 = vrot.lane.b32.xlu0 %v3419, 126
        %v3425 = vpop.permute.xlu0 %3424
        %v3428 = vadd.f32 %v3414, %v3423
        %v3429 = vadd.f32 %v3415, %v3425
        %s3430 = sld [smem:[#allocation2 + $0x108]]
        %v3431 = vld [vmem:[%s305 + $0x1] sm:$0xff]
        %v3432 = vld [vmem:[%s305 + $0x9] sm:$0xff]
        %v3433 = vstv %s3430
        %v3434 = vmul.f32 %v3431, %v3433
        %v3435 = vmul.f32 %v3432, %v3433
        %v3436 = vadd.f32 %v3428, %v3434
        %v3437 = vadd.f32 %v3429, %v3435
        %s3438 = sld [smem:[#allocation2 + $0x109]]
        %v3439 = vstv %s3438
        %v3440 = vmul.f32 %v3431, %v3439
        %v3441 = vmul.f32 %v3432, %v3439
        %3444 = vrot.lane.b32.xlu0 %v3440, 127
        %v3445 = vpop.permute.xlu0 %3444
        %3446 = vrot.lane.b32.xlu0 %v3441, 127
        %v3447 = vpop.permute.xlu0 %3446
        %v3450 = vadd.f32 %v3436, %v3445
        %v3451 = vadd.f32 %v3437, %v3447
        %s3452 = sld [smem:[#allocation2 + $0x10a]]
        %v3453 = vstv %s3452
        %v3454 = vmul.f32 %v3431, %v3453
        %v3455 = vmul.f32 %v3432, %v3453
        %3458 = vrot.lane.b32.xlu0 %v3454, 126
        %v3459 = vpop.permute.xlu0 %3458
        %3460 = vrot.lane.b32.xlu0 %v3455, 126
        %v3461 = vpop.permute.xlu0 %3460
        %v3464 = vadd.f32 %v3450, %v3459
        %v3465 = vadd.f32 %v3451, %v3461
        %s3466 = sld [smem:[#allocation2 + $0x10b]]
        %v3467 = vld [vmem:[%s305 + $0x2] sm:$0xff]
        %v3468 = vld [vmem:[%s305 + $0xa] sm:$0xff]
        %v3469 = vstv %s3466
        %v3470 = vmul.f32 %v3467, %v3469
        %v3471 = vmul.f32 %v3468, %v3469
        %v3472 = vadd.f32 %v3464, %v3470
        %v3473 = vadd.f32 %v3465, %v3471
        %s3474 = sld [smem:[#allocation2 + $0x10c]]
        %v3475 = vstv %s3474
        %v3476 = vmul.f32 %v3467, %v3475
        %v3477 = vmul.f32 %v3468, %v3475
        %3480 = vrot.lane.b32.xlu0 %v3476, 127
        %v3481 = vpop.permute.xlu0 %3480
        %3482 = vrot.lane.b32.xlu0 %v3477, 127
        %v3483 = vpop.permute.xlu0 %3482
        %v3486 = vadd.f32 %v3472, %v3481
        %v3487 = vadd.f32 %v3473, %v3483
        %s3488 = sld [smem:[#allocation2 + $0x10d]]
        %v3489 = vstv %s3488
        %v3490 = vmul.f32 %v3467, %v3489
        %v3491 = vmul.f32 %v3468, %v3489
        %3494 = vrot.lane.b32.xlu0 %v3490, 126
        %v3495 = vpop.permute.xlu0 %3494
        %3496 = vrot.lane.b32.xlu0 %v3491, 126
        %v3497 = vpop.permute.xlu0 %3496
        %v3500 = vadd.f32 %v3486, %v3495
        %v3501 = vadd.f32 %v3487, %v3497
        %s3502 = sld [smem:[#allocation2 + $0x10e]]
        %v3503 = vld [vmem:[%s414] sm:$0xff]
        %v3504 = vld [vmem:[%s414 + $0x8] sm:$0xff]
        %v3505 = vstv %s3502
        %v3506 = vmul.f32 %v3503, %v3505
        %v3507 = vmul.f32 %v3504, %v3505
        %v3508 = vadd.f32 %v3500, %v3506
        %v3509 = vadd.f32 %v3501, %v3507
        %s3510 = sld [smem:[#allocation2 + $0x10f]]
        %v3511 = vstv %s3510
        %v3512 = vmul.f32 %v3503, %v3511
        %v3513 = vmul.f32 %v3504, %v3511
        %3516 = vrot.lane.b32.xlu0 %v3512, 127
        %v3517 = vpop.permute.xlu0 %3516
        %3518 = vrot.lane.b32.xlu0 %v3513, 127
        %v3519 = vpop.permute.xlu0 %3518
        %v3522 = vadd.f32 %v3508, %v3517
        %v3523 = vadd.f32 %v3509, %v3519
        %s3524 = sld [smem:[#allocation2 + $0x110]]
        %v3525 = vstv %s3524
        %v3526 = vmul.f32 %v3503, %v3525
        %v3527 = vmul.f32 %v3504, %v3525
        %3530 = vrot.lane.b32.xlu0 %v3526, 126
        %v3531 = vpop.permute.xlu0 %3530
        %3532 = vrot.lane.b32.xlu0 %v3527, 126
        %v3533 = vpop.permute.xlu0 %3532
        %v3536 = vadd.f32 %v3522, %v3531
        %v3537 = vadd.f32 %v3523, %v3533
        %s3538 = sld [smem:[#allocation2 + $0x111]]
        %v3539 = vld [vmem:[%s414 + $0x1] sm:$0xff]
        %v3540 = vld [vmem:[%s414 + $0x9] sm:$0xff]
        %v3541 = vstv %s3538
        %v3542 = vmul.f32 %v3539, %v3541
        %v3543 = vmul.f32 %v3540, %v3541
        %v3544 = vadd.f32 %v3536, %v3542
        %v3545 = vadd.f32 %v3537, %v3543
        %s3546 = sld [smem:[#allocation2 + $0x112]]
        %v3547 = vstv %s3546
        %v3548 = vmul.f32 %v3539, %v3547
        %v3549 = vmul.f32 %v3540, %v3547
        %3552 = vrot.lane.b32.xlu0 %v3548, 127
        %v3553 = vpop.permute.xlu0 %3552
        %3554 = vrot.lane.b32.xlu0 %v3549, 127
        %v3555 = vpop.permute.xlu0 %3554
        %v3558 = vadd.f32 %v3544, %v3553
        %v3559 = vadd.f32 %v3545, %v3555
        %s3560 = sld [smem:[#allocation2 + $0x113]]
        %v3561 = vstv %s3560
        %v3562 = vmul.f32 %v3539, %v3561
        %v3563 = vmul.f32 %v3540, %v3561
        %3566 = vrot.lane.b32.xlu0 %v3562, 126
        %v3567 = vpop.permute.xlu0 %3566
        %3568 = vrot.lane.b32.xlu0 %v3563, 126
        %v3569 = vpop.permute.xlu0 %3568
        %v3572 = vadd.f32 %v3558, %v3567
        %v3573 = vadd.f32 %v3559, %v3569
        %s3574 = sld [smem:[#allocation2 + $0x114]]
        %v3575 = vld [vmem:[%s414 + $0x2] sm:$0xff]
        %v3576 = vld [vmem:[%s414 + $0xa] sm:$0xff]
        %v3577 = vstv %s3574
        %v3578 = vmul.f32 %v3575, %v3577
        %v3579 = vmul.f32 %v3576, %v3577
        %v3580 = vadd.f32 %v3572, %v3578
        %v3581 = vadd.f32 %v3573, %v3579
        %s3582 = sld [smem:[#allocation2 + $0x115]]
        %v3583 = vstv %s3582
        %v3584 = vmul.f32 %v3575, %v3583
        %v3585 = vmul.f32 %v3576, %v3583
        %3588 = vrot.lane.b32.xlu0 %v3584, 127
        %v3589 = vpop.permute.xlu0 %3588
        %3590 = vrot.lane.b32.xlu0 %v3585, 127
        %v3591 = vpop.permute.xlu0 %3590
        %v3594 = vadd.f32 %v3580, %v3589
        %v3595 = vadd.f32 %v3581, %v3591
        %s3596 = sld [smem:[#allocation2 + $0x116]]
        %v3597 = vstv %s3596
        %v3598 = vmul.f32 %v3575, %v3597
        %v3599 = vmul.f32 %v3576, %v3597
        %3602 = vrot.lane.b32.xlu0 %v3598, 126
        %v3603 = vpop.permute.xlu0 %3602
        %3604 = vrot.lane.b32.xlu0 %v3599, 126
        %v3605 = vpop.permute.xlu0 %3604
        %v3608 = vadd.f32 %v3594, %v3603
        %v3609 = vadd.f32 %v3595, %v3605
        %s3610 = sld [smem:[#allocation2 + $0x117]]
        %v3611 = vld [vmem:[%s523] sm:$0xff]
        %v3612 = vld [vmem:[%s523 + $0x8] sm:$0xff]
        %v3613 = vstv %s3610
        %v3614 = vmul.f32 %v3611, %v3613
        %v3615 = vmul.f32 %v3612, %v3613
        %v3616 = vadd.f32 %v3608, %v3614
        %v3617 = vadd.f32 %v3609, %v3615
        %s3618 = sld [smem:[#allocation2 + $0x118]]
        %v3619 = vstv %s3618
        %v3620 = vmul.f32 %v3611, %v3619
        %v3621 = vmul.f32 %v3612, %v3619
        %3624 = vrot.lane.b32.xlu0 %v3620, 127
        %v3625 = vpop.permute.xlu0 %3624
        %3626 = vrot.lane.b32.xlu0 %v3621, 127
        %v3627 = vpop.permute.xlu0 %3626
        %v3630 = vadd.f32 %v3616, %v3625
        %v3631 = vadd.f32 %v3617, %v3627
        %s3632 = sld [smem:[#allocation2 + $0x119]]
        %v3633 = vstv %s3632
        %v3634 = vmul.f32 %v3611, %v3633
        %v3635 = vmul.f32 %v3612, %v3633
        %3638 = vrot.lane.b32.xlu0 %v3634, 126
        %v3639 = vpop.permute.xlu0 %3638
        %3640 = vrot.lane.b32.xlu0 %v3635, 126
        %v3641 = vpop.permute.xlu0 %3640
        %v3644 = vadd.f32 %v3630, %v3639
        %v3645 = vadd.f32 %v3631, %v3641
        %s3646 = sld [smem:[#allocation2 + $0x11a]]
        %v3647 = vld [vmem:[%s523 + $0x1] sm:$0xff]
        %v3648 = vld [vmem:[%s523 + $0x9] sm:$0xff]
        %v3649 = vstv %s3646
        %v3650 = vmul.f32 %v3647, %v3649
        %v3651 = vmul.f32 %v3648, %v3649
        %v3652 = vadd.f32 %v3644, %v3650
        %v3653 = vadd.f32 %v3645, %v3651
        %s3654 = sld [smem:[#allocation2 + $0x11b]]
        %v3655 = vstv %s3654
        %v3656 = vmul.f32 %v3647, %v3655
        %v3657 = vmul.f32 %v3648, %v3655
        %3660 = vrot.lane.b32.xlu0 %v3656, 127
        %v3661 = vpop.permute.xlu0 %3660
        %3662 = vrot.lane.b32.xlu0 %v3657, 127
        %v3663 = vpop.permute.xlu0 %3662
        %v3666 = vadd.f32 %v3652, %v3661
        %v3667 = vadd.f32 %v3653, %v3663
        %s3668 = sld [smem:[#allocation2 + $0x11c]]
        %v3669 = vstv %s3668
        %v3670 = vmul.f32 %v3647, %v3669
        %v3671 = vmul.f32 %v3648, %v3669
        %3674 = vrot.lane.b32.xlu0 %v3670, 126
        %v3675 = vpop.permute.xlu0 %3674
        %3676 = vrot.lane.b32.xlu0 %v3671, 126
        %v3677 = vpop.permute.xlu0 %3676
        %v3680 = vadd.f32 %v3666, %v3675
        %v3681 = vadd.f32 %v3667, %v3677
        %s3682 = sld [smem:[#allocation2 + $0x11d]]
        %v3683 = vld [vmem:[%s523 + $0x2] sm:$0xff]
        %v3684 = vld [vmem:[%s523 + $0xa] sm:$0xff]
        %v3685 = vstv %s3682
        %v3686 = vmul.f32 %v3683, %v3685
        %v3687 = vmul.f32 %v3684, %v3685
        %v3688 = vadd.f32 %v3680, %v3686
        %v3689 = vadd.f32 %v3681, %v3687
        %s3690 = sld [smem:[#allocation2 + $0x11e]]
        %v3691 = vstv %s3690
        %v3692 = vmul.f32 %v3683, %v3691
        %v3693 = vmul.f32 %v3684, %v3691
        %3696 = vrot.lane.b32.xlu0 %v3692, 127
        %v3697 = vpop.permute.xlu0 %3696
        %3698 = vrot.lane.b32.xlu0 %v3693, 127
        %v3699 = vpop.permute.xlu0 %3698
        %v3702 = vadd.f32 %v3688, %v3697
        %v3703 = vadd.f32 %v3689, %v3699
        %s3704 = sld [smem:[#allocation2 + $0x11f]]
        %v3705 = vstv %s3704
        %v3706 = vmul.f32 %v3683, %v3705
        %v3707 = vmul.f32 %v3684, %v3705
        %3710 = vrot.lane.b32.xlu0 %v3706, 126
        %v3711 = vpop.permute.xlu0 %3710
        %3712 = vrot.lane.b32.xlu0 %v3707, 126
        %v3713 = vpop.permute.xlu0 %3712
        %v3716 = vadd.f32 %v3702, %v3711
        %v3717 = vadd.f32 %v3703, %v3713
        %s3718 = sld [smem:[#allocation5 + $0x7]]
        %v3719 = vstv %s3718
        %v3720 = vadd.f32 %v3716, %v3719
        %v3721 = vadd.f32 %v3717, %v3719
        %v3722 = vmax.f32 %v3720, 0.0
        %v3723 = vmax.f32 %v3721, 0.0
        %s3724 = scalar_lea.vmem %s190, 112 [#allocation7]
        %3725 = vst.msk [vmem:[%s3724] sm:$0xff] %vm637, %v3722
        %3726 = vst.msk [vmem:[%s3724 + $0x8] sm:$0xff] %vm637, %v3723
        %s3727 = sand.u32 %s95, 1
        %s3728 = scalar_lea.sflag [#allocation3], %s3727
        %s3729 = sand.u32 %s95, 1
        %s3730 = smul.addr %s3729, 128
        %s3731 = scalar_lea.vmem [#allocation7], %s3730
        // Predicated region
        $region41: #{_conv2d_relu_forward.1} parent=31 // pred_check
          %p3732 = pneg %p105
        $region42: #{_conv2d_relu_forward.1} parent=31 // pred_check_branch
          %3734 = sbr.rel (%p3732) target = $region44
        $region43: #{_conv2d_relu_forward.1} parent=31 // pred_region
          %s3736 = ssub.s32 2048, 2048
          %3737 = vsyncadd %s3728, %s3736
          %s3738 = smul.addr %s19, 16
          %s3739 = smul.addr %s3738, 128
          %s3740 = scalar_lea.hbm %s3, %s3739
          %s3741 = sshll.u32 %s3731, 4
          %s3742 = int_to_ptr.vmem [resolvable:$true] %s3741
          %3747 = dma.vmem_to_hbm [thread:$0]  %s3742, 2048, %s3740, %s3728, 128, 128, 8
        $region44: #{_conv2d_relu_forward.1} parent=31 // pred_fallthru
          _
      $region32: #{_conv2d_relu_forward.1} parent=5 // pred_fallthru
        _
      %p3748 = scmp.le.s32.totalorder 2, %s14
      // Predicated region
      $region45: #{_conv2d_relu_forward.1} parent=5 // pred_check
        %p3749 = pneg %p3748
      $region46: #{_conv2d_relu_forward.1} parent=5 // pred_check_branch
        %3751 = sbr.rel (%p3749) target = $region48
      $region47: #{_conv2d_relu_forward.1} parent=5 // pred_region
        %s3752 = ssub.s32 %s14, 2
        // Predicated region
        $region49: #{_conv2d_relu_forward.1} parent=47 // pred_check
          %p3753 = pneg %p111
        $region50: #{_conv2d_relu_forward.1} parent=47 // pred_check_branch
          %3755 = sbr.rel (%p3753) target = $region52
        $region51: #{_conv2d_relu_forward.1} parent=47 // pred_region
          %s3756 = sand.u32 %s96, 1
          %s3757 = scalar_lea.sflag [#allocation3], %s3756
          %s3758 = sand.u32 %s96, 1
          %s3759 = smul.addr %s3758, 128
          %s3760 = scalar_lea.vmem [#allocation7], %s3759
          %3761 = dma.done %s3757, 2048
        $region52: #{_conv2d_relu_forward.1} parent=47 // pred_fallthru
          _
      $region48: #{_conv2d_relu_forward.1} parent=5 // pred_fallthru
        _
    $region6: #{_conv2d_relu_forward.1} parent=1 // loop_footer
      %s18 = sadd.s32 1, %s14
    $region7: #{_conv2d_relu_forward.1} parent=1 // loop_footer_branch
      %13 = sbr.rel target = $region3
    $region8: #{_conv2d_relu_forward.1} parent=1 // loop_exit
      _
    %3762 = vsyncpa [#allocation3], 1
    %s3763 = scalar_lea.sflag [#allocation3], 1
    %3764 = vsyncpa %s3763, 1
    %3765 = vsyncpa [#allocation4], 1
    %s3766 = scalar_lea.sflag [#allocation4], 1
    %3767 = vsyncpa %s3766, 1
    %3768 = vsyncpa [#allocation6], 1

</llo_original>
